<compile_context>
chip_gen: v7x
topology: tpu7x:2x2x1
jax: 0.10.0
libtpu: 0.0.40
codegen_flags: <defaults>
</compile_context>

<pallas_src>
import functools
import math

import jax
import jax.numpy as jnp
from jax import lax
from jax.experimental import pallas as pl
from jax.experimental.pallas import tpu as pltpu


# ----------------------------------------------------------------------------
# In-kernel helpers
# ----------------------------------------------------------------------------
def _mxdot(a, b):
    # bf16 MXU operands, f32 accumulation (v6e/v7x native; v5e MXU also accepts
    # bf16 operands -- elementwise math around the dot stays f32 everywhere).
    return jnp.dot(a.astype(jnp.bfloat16), b.astype(jnp.bfloat16),
                   preferred_element_type=jnp.float32)


def _leaky_relu(x):
    # F.leaky_relu default negative_slope = 0.01 (DGL EGATConv)
    return jnp.where(x >= 0.0, x, 0.01 * x)


# ----------------------------------------------------------------------------
# The fused per-graph kernel (one grid step == one graph)
# ----------------------------------------------------------------------------
def _fused_forward_kernel(*refs, H, out, n_layers, n_r, Eg):
    (nd_ref, ed_ref, sg_ref, dg_ref, dgt_ref, srq_ref, drq_ref, drqt_ref,
     bc2_ref, bc4_ref,
     npw_ref, npb_ref, elw_ref, elb_ref,
     c1wn_ref, c1wf_ref, c1b_ref, c1a_ref,
     c2wn_ref, c2wf_ref, c2b_ref, c2a_ref,
     c3wn_ref, c3wf_ref, c3b_ref, c3a_ref,
     l1w_ref, l1b_ref, l2w_ref, l2b_ref,
     l2aw_ref, l2ab_ref, l3w_ref, l3b_ref,
     r0w_ref, r0b_ref, r1w_ref, r1b_ref, r2w_ref, r2b_ref,
     edge_out_ref, node_out_ref, loc_ref) = refs

    # weights are read from VMEM refs at point of use (no up-front hoisting)
    def lin(x, w_ref, b_ref, relu=False):
        y = _mxdot(x, w_ref[...]) + b_ref[...]
        return jnp.maximum(y, 0.0) if relu else y

    def egat(nf, ef, s_ref, d_ref, dt_ref, wn_ref, wf_ref, b_ref, a_ref,
             bc_ref, HFe, relu_out):
        """DGL EGATConv on one small graph, head-vectorised.

        f_ij = leaky_relu(W_ni h_src + W_nj h_dst + W_e e_ij + bias)
        a_ij = edge_softmax_dst(sum_f f_ij * attn)
        h_i' = sum_{j->i} a_ij * (W_node h_j)
        """
        S, D, D_T = s_ref[...], d_ref[...], dt_ref[...]
        # one wide node matmul, fused weight layout = [w_ni | w_node | w_nj]
        proj = _mxdot(nf, wn_ref[...])                    # (N, HFe + HFn + HFe)
        split = proj.shape[1] - HFe
        per_src = _mxdot(S, proj[:, :split])              # (E, HFe + HFn)  src gather
        per_dst = _mxdot(D, proj[:, split:])              # (E, HFe)        dst gather
        f_e = per_src[:, :HFe] + per_dst + _mxdot(ef, wf_ref[...]) + b_ref[...]
        f_e = _leaky_relu(f_e)                            # (E, HFe)
        h_src = per_src[:, HFe:]                          # (E, HFn)

        # attention logits for all heads (block-diagonal attn weight): (E, H)
        att = _mxdot(f_e, a_ref[...])

        # edge softmax over incoming edges of each destination node
        # (head-vectorised per-destination max; exact, no Python head loop)
        masked = jnp.where(D[:, :, None] > 0.0, att[:, None, :],
                           jnp.float32(-1e30))            # (E, N, H)
        node_max = jnp.max(masked, axis=0)                # (N, H)
        exp_e = jnp.exp(att - _mxdot(D, node_max))        # (E, H)
        edge_sum = _mxdot(D, _mxdot(D_T, exp_e))          # (E, H)  (>= ~1, never 0)
        alpha = exp_e * pl.reciprocal(edge_sum, approx=True)

        # broadcast alpha over each head's feature block; aggregate at dst
        msg = h_src * _mxdot(alpha, bc_ref[...])          # (E, HFn)
        h_out = _mxdot(D_T, msg)                          # (N, HFn)
        if relu_out:
            return jnp.maximum(h_out, 0.0), jnp.maximum(f_e, 0.0)
        return h_out, f_e

    node_data = lin(nd_ref[...], npw_ref, npb_ref)        # node_proj
    edge_all = lin(ed_ref[...], elw_ref, elb_ref)         # edge_lin, one pass
    edge_data = edge_all[:Eg]
    edge_data_link = edge_all[Eg:]

    for _ in range(n_layers):                             # static unroll
        h, e = egat(node_data, edge_data, sg_ref, dg_ref, dgt_ref,
                    c1wn_ref, c1wf_ref, c1b_ref, c1a_ref, bc2_ref,
                    HFe=H * 2 * out, relu_out=True)       # conv1 + relu(h, e)
        h2, e2 = egat(h, e, sg_ref, dg_ref, dgt_ref,
                      c2wn_ref, c2wf_ref, c2b_ref, c2a_ref, bc4_ref,
                      HFe=H * out, relu_out=False)        # conv2
        edge_data = lin(e2, l1w_ref, l1b_ref, relu=True)  # lin1
        node_data = lin(h2, l2w_ref, l2b_ref, relu=True)  # lin2
        h3, e3 = egat(node_data, edge_data_link, srq_ref, drq_ref, drqt_ref,
                      c3wn_ref, c3wf_ref, c3b_ref, c3a_ref, bc2_ref,
                      HFe=H * 2 * out, relu_out=False)    # ref_query_conv
        edge_data_link = lin(e3, l3w_ref, l3b_ref, relu=True)   # lin3
        node_data = node_data + lin(h3, l2aw_ref, l2ab_ref, relu=True)

    edge_out_ref[...] = edge_data
    node_out_ref[...] = node_data

    # only_query max-pool over rows >= n_r.  NOTE: relies on node_data >= 0
    # (lin2 / lin2a are ReLU'd) so the -1e30 sentinel can never win; revisit if
    # those relu flags ever change.
    row = lax.broadcasted_iota(jnp.int32, node_data.shape, 0)
    feat = jnp.max(jnp.where(row >= n_r, node_data, jnp.float32(-1e30)),
                   axis=0, keepdims=True)                 # (1, out)
    x = lin(feat, r0w_ref, r0b_ref, relu=True)
    x = lin(x, r1w_ref, r1b_ref, relu=True)
    loc_ref[...] = lin(x, r2w_ref, r2b_ref)               # (1, 3)


# ----------------------------------------------------------------------------
# Wrapper: parameter fusion + batched pallas_call
# ----------------------------------------------------------------------------
def _fuse_egat_params(p):
    # fused node weight order matters: [w_ni | w_node | w_nj]; attn as a
    # block-diagonal (H*Fe, H) matrix so all-head logits are one matmul.
    w_n = jnp.concatenate([p["w_ni"], p["w_node"], p["w_nj"]],
                          axis=1).astype(jnp.bfloat16)
    H, Fe = p["attn"].shape
    eye = jnp.eye(H, dtype=jnp.float32)
    attn_bd = (p["attn"][:, :, None] * eye[:, None, :]).reshape(H * Fe, H)
    return w_n, p["w_fij"].astype(jnp.bfloat16), p["bias"], attn_bd.astype(jnp.bfloat16)


def _batched_index_map(nd):
    def im(b):
        return (b,) + (0,) * nd
    return im


def _const_index_map(nd):
    def im(b):
        return (0,) * nd
    return im


@functools.partial(jax.jit,
                   static_argnames=("num_heads", "out_size", "n_layers", "n_r"))
def gat_mlp_forward(params, S_g, D_g, S_rq, D_rq, all_node_data, all_edge_data,
                    *, num_heads, out_size, n_layers, n_r):
    H, out = num_heads, out_size
    B, Eg, N = S_g.shape
    Erq = S_rq.shape[1]

    # head -> per-head-feature-block broadcast matrices (0/1, exact in bf16)
    bc2 = jnp.repeat(jnp.eye(H, dtype=jnp.float32), 2 * out, axis=1).astype(jnp.bfloat16)
    bc4 = jnp.repeat(jnp.eye(H, dtype=jnp.float32), 4 * out, axis=1).astype(jnp.bfloat16)
    # pre-transposed destination incidence (avoids in-kernel XLU transposes)
    DgT = jnp.swapaxes(D_g, 1, 2)
    DrqT = jnp.swapaxes(D_rq, 1, 2)

    def bf(w):   # matmul-only weights go in as bf16
        return w.astype(jnp.bfloat16)

    inputs, in_specs = [], []

    def add_batched(x):              # per-graph data: batch dim blocked & squeezed
        inputs.append(x)
        in_specs.append(pl.BlockSpec((None,) + x.shape[1:],
                                     _batched_index_map(x.ndim - 1)))

    def add_const(x):                # weights: same block every grid step (resident)
        inputs.append(x)
        in_specs.append(pl.BlockSpec(x.shape, _const_index_map(x.ndim)))

    for x in (all_node_data, all_edge_data, S_g, D_g, DgT, S_rq, D_rq, DrqT):
        add_batched(x)
    consts = [
        bc2, bc4,
        bf(params["node_proj"]["w"]), params["node_proj"]["b"],
        bf(params["edge_lin"]["w"]), params["edge_lin"]["b"],
        *_fuse_egat_params(params["conv1"]),
        *_fuse_egat_params(params["conv2"]),
        *_fuse_egat_params(params["ref_query_conv"]),
        bf(params["lin1"]["w"]), params["lin1"]["b"],
        bf(params["lin2"]["w"]), params["lin2"]["b"],
        bf(params["lin2a"]["w"]), params["lin2a"]["b"],
        bf(params["lin3"]["w"]), params["lin3"]["b"],
        bf(params["regress0"]["w"]), params["regress0"]["b"],
        bf(params["regress1"]["w"]), params["regress1"]["b"],
        bf(params["regress2"]["w"]), params["regress2"]["b"],
    ]
    for x in consts:
        add_const(x)

    out_shapes = (jax.ShapeDtypeStruct((B, Eg, out), jnp.float32),
                  jax.ShapeDtypeStruct((B, N, out), jnp.float32),
                  jax.ShapeDtypeStruct((B, 1, 3), jnp.float32))
    out_specs = (pl.BlockSpec((None, Eg, out), lambda b: (b, 0, 0)),
                 pl.BlockSpec((None, N, out), lambda b: (b, 0, 0)),
                 pl.BlockSpec((None, 1, 3), lambda b: (b, 0, 0)))

    bytes_accessed = sum(int(math.prod(x.shape)) * x.dtype.itemsize for x in inputs)
    bytes_accessed += sum(int(math.prod(s.shape)) * 4 for s in out_shapes)
    cost = pl.CostEstimate(
        flops=B * (int(1.2e6) * n_layers + 100_000),
        transcendentals=B * n_layers * H * (2 * Eg + Erq),
        bytes_accessed=int(bytes_accessed))

    kern = functools.partial(_fused_forward_kernel, H=H, out=out,
                             n_layers=n_layers, n_r=n_r, Eg=Eg)
    edge_out, node_full, loc = pl.pallas_call(
        kern,
        grid=(B,),
        in_specs=in_specs,
        out_specs=out_specs,
        out_shape=out_shapes,
        cost_estimate=cost,
        compiler_params=pltpu.CompilerParams(
            dimension_semantics=("parallel",),            # v7x: split batch over 2 TCs
            vmem_limit_bytes=32 * 1024 * 1024),           # well under v7x 64 MiB
    )(*inputs)
    # only_query=True: trivial slice outside the kernel
    return edge_out, node_full[:, n_r:], loc


# ----------------------------------------------------------------------------
# Deterministic synthetic parameter init (shapes from GATMLPModule.__init__)
# ----------------------------------------------------------------------------
def _init_linear(key, in_dim, out_dim):
    kw, kb = jax.random.split(key)
    w = jax.random.normal(kw, (in_dim, out_dim), jnp.float32) / math.sqrt(in_dim)
    b = 0.01 * jax.random.normal(kb, (1, out_dim), jnp.float32)
    return {"w": w, "b": b}


def _init_egat(key, in_node, in_edge, out_node, out_edge, num_heads):
    ks = jax.random.split(key, 6)
    sn = 1.0 / math.sqrt(in_node)
    se = 1.0 / math.sqrt(in_edge)
    return {
        "w_ni": sn * jax.random.normal(ks[0], (in_node, num_heads * out_edge), jnp.float32),
        "w_nj": sn * jax.random.normal(ks[1], (in_node, num_heads * out_edge), jnp.float32),
        "w_fij": se * jax.random.normal(ks[2], (in_edge, num_heads * out_edge), jnp.float32),
        "w_node": sn * jax.random.normal(ks[3], (in_node, num_heads * out_node), jnp.float32),
        "bias": 0.01 * jax.random.normal(ks[4], (1, num_heads * out_edge), jnp.float32),
        "attn": 0.1 * jax.random.normal(ks[5], (num_heads, out_edge), jnp.float32),
    }


def init_params(key, num_heads, n_classes, out_size, edge_dim_in, **_):
    node_in = n_classes + 2
    ks = jax.random.split(key, 13)
    return {
        "edge_lin": _init_linear(ks[0], edge_dim_in, out_size),
        "node_proj": _init_linear(ks[1], node_in, out_size),
        "conv1": _init_egat(ks[2], out_size, out_size, 2 * out_size, 2 * out_size, num_heads),
        "conv2": _init_egat(ks[3], 2 * out_size * num_heads, 2 * out_size * num_heads,
                            4 * out_size, out_size, num_heads),
        "ref_query_conv": _init_egat(ks[4], out_size, out_size, 2 * out_size, 2 * out_size,
                                     num_heads),
        "lin1": _init_linear(ks[5], num_heads * out_size, out_size),
        "lin2": _init_linear(ks[6], num_heads * 4 * out_size, out_size),
        "lin2a": _init_linear(ks[7], num_heads * 2 * out_size, out_size),
        "lin3": _init_linear(ks[8], num_heads * 2 * out_size, out_size),
        "line_predict": _init_linear(ks[9], out_size, 1),  # present in module, unused in forward
        "regress0": _init_linear(ks[10], out_size, out_size),
        "regress1": _init_linear(ks[11], out_size, out_size),
        "regress2": _init_linear(ks[12], out_size, 3),
    }


# ----------------------------------------------------------------------------
if __name__ == "__main__":
    cfg = dict(num_heads=2, n_classes=6, n_layers=2, out_size=16, edge_dim_in=2)
    B, N, Eg, Erq, n_r = 4, 10, 16, 12, 4   # graphs, nodes, edges(g), edges(rq), #ref nodes

    key = jax.random.PRNGKey(0)
    kp, kg, kd = jax.random.split(key, 3)
    params = init_params(kp, **cfg)

    # deterministic synthetic batched graphs (dense one-hot incidence matrices)
    k1, k2, k3, k4 = jax.random.split(kg, 4)
    src_g = jax.random.randint(k1, (B, Eg), 0, N)
    dst_g = jax.random.randint(k2, (B, Eg), 0, N)
    src_rq = jax.random.randint(k3, (B, Erq), 0, N)
    dst_rq = jax.random.randint(k4, (B, Erq), 0, N)
    S_g = jax.nn.one_hot(src_g, N, dtype=jnp.float32)
    D_g = jax.nn.one_hot(dst_g, N, dtype=jnp.float32)
    S_rq = jax.nn.one_hot(src_rq, N, dtype=jnp.float32)
    D_rq = jax.nn.one_hot(dst_rq, N, dtype=jnp.float32)

    kn, ke = jax.random.split(kd)
    all_node_data = jax.random.normal(kn, (B, N, cfg["n_classes"] + 2), jnp.float32)
    all_edge_data = jax.random.normal(ke, (B, Eg + Erq, cfg["edge_dim_in"]), jnp.float32)

    edge_out, node_out, loc = gat_mlp_forward(
        params, S_g, D_g, S_rq, D_rq, all_node_data, all_edge_data,
        num_heads=cfg["num_heads"], out_size=cfg["out_size"],
        n_layers=cfg["n_layers"], n_r=n_r)
    jax.block_until_ready((edge_out, node_out, loc))

    assert edge_out.shape == (B, Eg, cfg["out_size"])
    assert node_out.shape == (B, N - n_r, cfg["out_size"])
    assert loc.shape == (B, 1, 3)
    assert bool(jnp.all(jnp.isfinite(edge_out)))
    assert bool(jnp.all(jnp.isfinite(node_out)))
    assert bool(jnp.all(jnp.isfinite(loc)))
    print("KERNEL_OK")
</pallas_src>

<mosaic_0001>
module attributes {stable_mosaic.version = 11 : i64} {
  func.func @_fused_forward_kernel(%arg0: i32, %arg1: memref<1x10x8xf32, #tpu.memory_space<vmem>>, %arg2: memref<1x28x2xf32, #tpu.memory_space<vmem>>, %arg3: memref<1x16x10xf32, #tpu.memory_space<vmem>>, %arg4: memref<1x16x10xf32, #tpu.memory_space<vmem>>, %arg5: memref<1x10x16xf32, #tpu.memory_space<vmem>>, %arg6: memref<1x12x10xf32, #tpu.memory_space<vmem>>, %arg7: memref<1x12x10xf32, #tpu.memory_space<vmem>>, %arg8: memref<1x10x12xf32, #tpu.memory_space<vmem>>, %arg9: memref<2x64xbf16, #tpu.memory_space<vmem>>, %arg10: memref<2x128xbf16, #tpu.memory_space<vmem>>, %arg11: memref<8x16xbf16, #tpu.memory_space<vmem>>, %arg12: memref<1x16xf32, #tpu.memory_space<vmem>>, %arg13: memref<2x16xbf16, #tpu.memory_space<vmem>>, %arg14: memref<1x16xf32, #tpu.memory_space<vmem>>, %arg15: memref<16x192xbf16, #tpu.memory_space<vmem>>, %arg16: memref<16x64xbf16, #tpu.memory_space<vmem>>, %arg17: memref<1x64xf32, #tpu.memory_space<vmem>>, %arg18: memref<64x2xbf16, #tpu.memory_space<vmem>>, %arg19: memref<64x192xbf16, #tpu.memory_space<vmem>>, %arg20: memref<64x32xbf16, #tpu.memory_space<vmem>>, %arg21: memref<1x32xf32, #tpu.memory_space<vmem>>, %arg22: memref<32x2xbf16, #tpu.memory_space<vmem>>, %arg23: memref<16x192xbf16, #tpu.memory_space<vmem>>, %arg24: memref<16x64xbf16, #tpu.memory_space<vmem>>, %arg25: memref<1x64xf32, #tpu.memory_space<vmem>>, %arg26: memref<64x2xbf16, #tpu.memory_space<vmem>>, %arg27: memref<32x16xbf16, #tpu.memory_space<vmem>>, %arg28: memref<1x16xf32, #tpu.memory_space<vmem>>, %arg29: memref<128x16xbf16, #tpu.memory_space<vmem>>, %arg30: memref<1x16xf32, #tpu.memory_space<vmem>>, %arg31: memref<64x16xbf16, #tpu.memory_space<vmem>>, %arg32: memref<1x16xf32, #tpu.memory_space<vmem>>, %arg33: memref<64x16xbf16, #tpu.memory_space<vmem>>, %arg34: memref<1x16xf32, #tpu.memory_space<vmem>>, %arg35: memref<16x16xbf16, #tpu.memory_space<vmem>>, %arg36: memref<1x16xf32, #tpu.memory_space<vmem>>, %arg37: memref<16x16xbf16, #tpu.memory_space<vmem>>, %arg38: memref<1x16xf32, #tpu.memory_space<vmem>>, %arg39: memref<16x3xbf16, #tpu.memory_space<vmem>>, %arg40: memref<1x3xf32, #tpu.memory_space<vmem>>, %arg41: memref<1x16x16xf32, #tpu.memory_space<vmem>>, %arg42: memref<1x10x16xf32, #tpu.memory_space<vmem>>, %arg43: memref<1x1x3xf32, #tpu.memory_space<vmem>>) attributes {dimension_semantics = [#tpu.dimension_semantics<parallel>], iteration_bounds = array<i64: 4>, scalar_prefetch = 0 : i64, scratch_operands = 0 : i64, tpu.core_type = #tpu.core_type<tc>, window_params = [{transform_indices = @transform_0, window_bounds = array<i64: 1, 10, 8>}, {transform_indices = @transform_1, window_bounds = array<i64: 1, 28, 2>}, {transform_indices = @transform_2, window_bounds = array<i64: 1, 16, 10>}, {transform_indices = @transform_3, window_bounds = array<i64: 1, 16, 10>}, {transform_indices = @transform_4, window_bounds = array<i64: 1, 10, 16>}, {transform_indices = @transform_5, window_bounds = array<i64: 1, 12, 10>}, {transform_indices = @transform_6, window_bounds = array<i64: 1, 12, 10>}, {transform_indices = @transform_7, window_bounds = array<i64: 1, 10, 12>}, {pipeline_mode = #tpu.pipeline_mode<synchronous>, transform_indices = @transform_8, window_bounds = array<i64: 2, 64>}, {pipeline_mode = #tpu.pipeline_mode<synchronous>, transform_indices = @transform_9, window_bounds = array<i64: 2, 128>}, {pipeline_mode = #tpu.pipeline_mode<synchronous>, transform_indices = @transform_10, window_bounds = array<i64: 8, 16>}, {pipeline_mode = #tpu.pipeline_mode<synchronous>, transform_indices = @transform_11, window_bounds = array<i64: 1, 16>}, {pipeline_mode = #tpu.pipeline_mode<synchronous>, transform_indices = @transform_12, window_bounds = array<i64: 2, 16>}, {pipeline_mode = #tpu.pipeline_mode<synchronous>, transform_indices = @transform_13, window_bounds = array<i64: 1, 16>}, {pipeline_mode = #tpu.pipeline_mode<synchronous>, transform_indices = @transform_14, window_bounds = array<i64: 16, 192>}, {pipeline_mode = #tpu.pipeline_mode<synchronous>, transform_indices = @transform_15, window_bounds = array<i64: 16, 64>}, {pipeline_mode = #tpu.pipeline_mode<synchronous>, transform_indices = @transform_16, window_bounds = array<i64: 1, 64>}, {pipeline_mode = #tpu.pipeline_mode<synchronous>, transform_indices = @transform_17, window_bounds = array<i64: 64, 2>}, {pipeline_mode = #tpu.pipeline_mode<synchronous>, transform_indices = @transform_18, window_bounds = array<i64: 64, 192>}, {pipeline_mode = #tpu.pipeline_mode<synchronous>, transform_indices = @transform_19, window_bounds = array<i64: 64, 32>}, {pipeline_mode = #tpu.pipeline_mode<synchronous>, transform_indices = @transform_20, window_bounds = array<i64: 1, 32>}, {pipeline_mode = #tpu.pipeline_mode<synchronous>, transform_indices = @transform_21, window_bounds = array<i64: 32, 2>}, {pipeline_mode = #tpu.pipeline_mode<synchronous>, transform_indices = @transform_22, window_bounds = array<i64: 16, 192>}, {pipeline_mode = #tpu.pipeline_mode<synchronous>, transform_indices = @transform_23, window_bounds = array<i64: 16, 64>}, {pipeline_mode = #tpu.pipeline_mode<synchronous>, transform_indices = @transform_24, window_bounds = array<i64: 1, 64>}, {pipeline_mode = #tpu.pipeline_mode<synchronous>, transform_indices = @transform_25, window_bounds = array<i64: 64, 2>}, {pipeline_mode = #tpu.pipeline_mode<synchronous>, transform_indices = @transform_26, window_bounds = array<i64: 32, 16>}, {pipeline_mode = #tpu.pipeline_mode<synchronous>, transform_indices = @transform_27, window_bounds = array<i64: 1, 16>}, {pipeline_mode = #tpu.pipeline_mode<synchronous>, transform_indices = @transform_28, window_bounds = array<i64: 128, 16>}, {pipeline_mode = #tpu.pipeline_mode<synchronous>, transform_indices = @transform_29, window_bounds = array<i64: 1, 16>}, {pipeline_mode = #tpu.pipeline_mode<synchronous>, transform_indices = @transform_30, window_bounds = array<i64: 64, 16>}, {pipeline_mode = #tpu.pipeline_mode<synchronous>, transform_indices = @transform_31, window_bounds = array<i64: 1, 16>}, {pipeline_mode = #tpu.pipeline_mode<synchronous>, transform_indices = @transform_32, window_bounds = array<i64: 64, 16>}, {pipeline_mode = #tpu.pipeline_mode<synchronous>, transform_indices = @transform_33, window_bounds = array<i64: 1, 16>}, {pipeline_mode = #tpu.pipeline_mode<synchronous>, transform_indices = @transform_34, window_bounds = array<i64: 16, 16>}, {pipeline_mode = #tpu.pipeline_mode<synchronous>, transform_indices = @transform_35, window_bounds = array<i64: 1, 16>}, {pipeline_mode = #tpu.pipeline_mode<synchronous>, transform_indices = @transform_36, window_bounds = array<i64: 16, 16>}, {pipeline_mode = #tpu.pipeline_mode<synchronous>, transform_indices = @transform_37, window_bounds = array<i64: 1, 16>}, {pipeline_mode = #tpu.pipeline_mode<synchronous>, transform_indices = @transform_38, window_bounds = array<i64: 16, 3>}, {pipeline_mode = #tpu.pipeline_mode<synchronous>, transform_indices = @transform_39, window_bounds = array<i64: 1, 3>}, {transform_indices = @transform_40, window_bounds = array<i64: 1, 16, 16>}, {transform_indices = @transform_41, window_bounds = array<i64: 1, 10, 16>}, {transform_indices = @transform_42, window_bounds = array<i64: 1, 1, 3>}]} {
    %c0 = arith.constant 0 : index
    %c0_0 = arith.constant 0 : index
    %c0_1 = arith.constant 0 : index
    %0 = vector.load %arg1[%c0, %c0_0, %c0_1] : memref<1x10x8xf32, #tpu.memory_space<vmem>>, vector<1x10x8xf32>
    %1 = vector.shape_cast %0 : vector<1x10x8xf32> to vector<10x8xf32>
    %c0_2 = arith.constant 0 : index
    %c0_3 = arith.constant 0 : index
    %2 = vector.load %arg11[%c0_2, %c0_3] : memref<8x16xbf16, #tpu.memory_space<vmem>>, vector<8x16xbf16>
    %3 = arith.truncf %1 : vector<10x8xf32> to vector<10x8xbf16>
    %cst = arith.constant dense<0.000000e+00> : vector<10x16xf32>
    %4 = tpu.matmul %3, %2, %cst {dimension_numbers = #tpu.dot_dimension_numbers<[1], [0], [0], [1], [0, 0, 1, 1], [], []>} : vector<10x8xbf16>, vector<8x16xbf16>, vector<10x16xf32> -> vector<10x16xf32>
    %c0_4 = arith.constant 0 : index
    %c0_5 = arith.constant 0 : index
    %5 = vector.load %arg12[%c0_4, %c0_5] : memref<1x16xf32, #tpu.memory_space<vmem>>, vector<1x16xf32>
    %6 = vector.broadcast %5 : vector<1x16xf32> to vector<10x16xf32>
    %7 = arith.addf %4, %6 : vector<10x16xf32>
    %c0_6 = arith.constant 0 : index
    %c0_7 = arith.constant 0 : index
    %c0_8 = arith.constant 0 : index
    %8 = vector.load %arg2[%c0_6, %c0_7, %c0_8] : memref<1x28x2xf32, #tpu.memory_space<vmem>>, vector<1x28x2xf32>
    %9 = vector.shape_cast %8 : vector<1x28x2xf32> to vector<28x2xf32>
    %c0_9 = arith.constant 0 : index
    %c0_10 = arith.constant 0 : index
    %10 = vector.load %arg13[%c0_9, %c0_10] : memref<2x16xbf16, #tpu.memory_space<vmem>>, vector<2x16xbf16>
    %11 = arith.truncf %9 : vector<28x2xf32> to vector<28x2xbf16>
    %cst_11 = arith.constant dense<0.000000e+00> : vector<28x16xf32>
    %12 = tpu.matmul %11, %10, %cst_11 {dimension_numbers = #tpu.dot_dimension_numbers<[1], [0], [0], [1], [0, 0, 1, 1], [], []>} : vector<28x2xbf16>, vector<2x16xbf16>, vector<28x16xf32> -> vector<28x16xf32>
    %c0_12 = arith.constant 0 : index
    %c0_13 = arith.constant 0 : index
    %13 = vector.load %arg14[%c0_12, %c0_13] : memref<1x16xf32, #tpu.memory_space<vmem>>, vector<1x16xf32>
    %14 = vector.broadcast %13 : vector<1x16xf32> to vector<28x16xf32>
    %15 = arith.addf %12, %14 : vector<28x16xf32>
    %16 = vector.extract_strided_slice %15 {offsets = [0, 0], sizes = [16, 16], strides = [1, 1]} : vector<28x16xf32> to vector<16x16xf32>
    %17 = vector.extract_strided_slice %15 {offsets = [16, 0], sizes = [12, 16], strides = [1, 1]} : vector<28x16xf32> to vector<12x16xf32>
    %c0_14 = arith.constant 0 : index
    %c0_15 = arith.constant 0 : index
    %c0_16 = arith.constant 0 : index
    %18 = vector.load %arg3[%c0_14, %c0_15, %c0_16] : memref<1x16x10xf32, #tpu.memory_space<vmem>>, vector<1x16x10xf32>
    %19 = vector.shape_cast %18 : vector<1x16x10xf32> to vector<16x10xf32>
    %c0_17 = arith.constant 0 : index
    %c0_18 = arith.constant 0 : index
    %c0_19 = arith.constant 0 : index
    %20 = vector.load %arg4[%c0_17, %c0_18, %c0_19] : memref<1x16x10xf32, #tpu.memory_space<vmem>>, vector<1x16x10xf32>
    %21 = vector.shape_cast %20 : vector<1x16x10xf32> to vector<16x10xf32>
    %c0_20 = arith.constant 0 : index
    %c0_21 = arith.constant 0 : index
    %c0_22 = arith.constant 0 : index
    %22 = vector.load %arg5[%c0_20, %c0_21, %c0_22] : memref<1x10x16xf32, #tpu.memory_space<vmem>>, vector<1x10x16xf32>
    %23 = vector.shape_cast %22 : vector<1x10x16xf32> to vector<10x16xf32>
    %c0_23 = arith.constant 0 : index
    %c0_24 = arith.constant 0 : index
    %24 = vector.load %arg15[%c0_23, %c0_24] : memref<16x192xbf16, #tpu.memory_space<vmem>>, vector<16x192xbf16>
    %25 = arith.truncf %7 : vector<10x16xf32> to vector<10x16xbf16>
    %cst_25 = arith.constant dense<0.000000e+00> : vector<10x192xf32>
    %26 = tpu.matmul %25, %24, %cst_25 {dimension_numbers = #tpu.dot_dimension_numbers<[1], [0], [0], [1], [0, 0, 1, 1], [], []>} : vector<10x16xbf16>, vector<16x192xbf16>, vector<10x192xf32> -> vector<10x192xf32>
    %27 = vector.extract_strided_slice %26 {offsets = [0, 0], sizes = [10, 128], strides = [1, 1]} : vector<10x192xf32> to vector<10x128xf32>
    %28 = arith.truncf %19 : vector<16x10xf32> to vector<16x10xbf16>
    %29 = arith.truncf %27 : vector<10x128xf32> to vector<10x128xbf16>
    %cst_26 = arith.constant dense<0.000000e+00> : vector<16x128xf32>
    %30 = tpu.matmul %28, %29, %cst_26 {dimension_numbers = #tpu.dot_dimension_numbers<[1], [0], [0], [1], [0, 0, 1, 1], [], []>} : vector<16x10xbf16>, vector<10x128xbf16>, vector<16x128xf32> -> vector<16x128xf32>
    %31 = vector.extract_strided_slice %26 {offsets = [0, 128], sizes = [10, 64], strides = [1, 1]} : vector<10x192xf32> to vector<10x64xf32>
    %32 = arith.truncf %21 : vector<16x10xf32> to vector<16x10xbf16>
    %33 = arith.truncf %31 : vector<10x64xf32> to vector<10x64xbf16>
    %cst_27 = arith.constant dense<0.000000e+00> : vector<16x64xf32>
    %34 = tpu.matmul %32, %33, %cst_27 {dimension_numbers = #tpu.dot_dimension_numbers<[1], [0], [0], [1], [0, 0, 1, 1], [], []>} : vector<16x10xbf16>, vector<10x64xbf16>, vector<16x64xf32> -> vector<16x64xf32>
    %35 = vector.extract_strided_slice %30 {offsets = [0, 0], sizes = [16, 64], strides = [1, 1]} : vector<16x128xf32> to vector<16x64xf32>
    %36 = arith.addf %35, %34 : vector<16x64xf32>
    %c0_28 = arith.constant 0 : index
    %c0_29 = arith.constant 0 : index
    %37 = vector.load %arg16[%c0_28, %c0_29] : memref<16x64xbf16, #tpu.memory_space<vmem>>, vector<16x64xbf16>
    %38 = arith.truncf %16 : vector<16x16xf32> to vector<16x16xbf16>
    %cst_30 = arith.constant dense<0.000000e+00> : vector<16x64xf32>
    %39 = tpu.matmul %38, %37, %cst_30 {dimension_numbers = #tpu.dot_dimension_numbers<[1], [0], [0], [1], [0, 0, 1, 1], [], []>} : vector<16x16xbf16>, vector<16x64xbf16>, vector<16x64xf32> -> vector<16x64xf32>
    %40 = arith.addf %36, %39 : vector<16x64xf32>
    %c0_31 = arith.constant 0 : index
    %c0_32 = arith.constant 0 : index
    %41 = vector.load %arg17[%c0_31, %c0_32] : memref<1x64xf32, #tpu.memory_space<vmem>>, vector<1x64xf32>
    %42 = vector.broadcast %41 : vector<1x64xf32> to vector<16x64xf32>
    %43 = arith.addf %40, %42 : vector<16x64xf32>
    %cst_33 = arith.constant 0.000000e+00 : f32
    %44 = vector.broadcast %cst_33 : f32 to vector<16x64xf32>
    %45 = arith.cmpf oge, %43, %44 : vector<16x64xf32>
    %cst_34 = arith.constant 0.00999999977 : f32
    %46 = vector.broadcast %cst_34 : f32 to vector<16x64xf32>
    %47 = arith.mulf %46, %43 : vector<16x64xf32>
    %48 = arith.select %45, %43, %47 : vector<16x64xi1>, vector<16x64xf32>
    %49 = vector.extract_strided_slice %30 {offsets = [0, 64], sizes = [16, 64], strides = [1, 1]} : vector<16x128xf32> to vector<16x64xf32>
    %c0_35 = arith.constant 0 : index
    %c0_36 = arith.constant 0 : index
    %50 = vector.load %arg18[%c0_35, %c0_36] : memref<64x2xbf16, #tpu.memory_space<vmem>>, vector<64x2xbf16>
    %51 = arith.truncf %48 : vector<16x64xf32> to vector<16x64xbf16>
    %cst_37 = arith.constant dense<0.000000e+00> : vector<16x2xf32>
    %52 = tpu.matmul %51, %50, %cst_37 {dimension_numbers = #tpu.dot_dimension_numbers<[1], [0], [0], [1], [0, 0, 1, 1], [], []>} : vector<16x64xbf16>, vector<64x2xbf16>, vector<16x2xf32> -> vector<16x2xf32>
    %53 = vector.shape_cast %21 : vector<16x10xf32> to vector<16x10x1xf32>
    %cst_38 = arith.constant 0.000000e+00 : f32
    %54 = vector.broadcast %cst_38 : f32 to vector<16x10x1xf32>
    %55 = arith.cmpf ogt, %53, %54 : vector<16x10x1xf32>
    %56 = vector.shape_cast %52 : vector<16x2xf32> to vector<16x1x2xf32>
    %cst_39 = arith.constant -1.000000e+30 : f32
    %57 = vector.shape_cast %55 : vector<16x10x1xi1> to vector<16x10x1xi1>
    %58 = vector.broadcast %57 : vector<16x10x1xi1> to vector<16x10x2xi1>
    %59 = vector.shape_cast %56 : vector<16x1x2xf32> to vector<16x1x2xf32>
    %60 = vector.broadcast %59 : vector<16x1x2xf32> to vector<16x10x2xf32>
    %61 = vector.broadcast %cst_39 : f32 to vector<16x10x2xf32>
    %62 = arith.select %58, %60, %61 : vector<16x10x2xi1>, vector<16x10x2xf32>
    %cst_40 = arith.constant dense<0xFF800000> : vector<10x2xf32>
    %63 = vector.multi_reduction <maximumf>, %62, %cst_40 [0] : vector<16x10x2xf32> to vector<10x2xf32>
    %64 = arith.truncf %21 : vector<16x10xf32> to vector<16x10xbf16>
    %65 = arith.truncf %63 : vector<10x2xf32> to vector<10x2xbf16>
    %cst_41 = arith.constant dense<0.000000e+00> : vector<16x2xf32>
    %66 = tpu.matmul %64, %65, %cst_41 {dimension_numbers = #tpu.dot_dimension_numbers<[1], [0], [0], [1], [0, 0, 1, 1], [], []>} : vector<16x10xbf16>, vector<10x2xbf16>, vector<16x2xf32> -> vector<16x2xf32>
    %67 = arith.subf %52, %66 : vector<16x2xf32>
    %68 = math.exp %67 : vector<16x2xf32>
    %69 = arith.truncf %23 : vector<10x16xf32> to vector<10x16xbf16>
    %70 = arith.truncf %68 : vector<16x2xf32> to vector<16x2xbf16>
    %cst_42 = arith.constant dense<0.000000e+00> : vector<10x2xf32>
    %71 = tpu.matmul %69, %70, %cst_42 {dimension_numbers = #tpu.dot_dimension_numbers<[1], [0], [0], [1], [0, 0, 1, 1], [], []>} : vector<10x16xbf16>, vector<16x2xbf16>, vector<10x2xf32> -> vector<10x2xf32>
    %72 = arith.truncf %21 : vector<16x10xf32> to vector<16x10xbf16>
    %73 = arith.truncf %71 : vector<10x2xf32> to vector<10x2xbf16>
    %cst_43 = arith.constant dense<0.000000e+00> : vector<16x2xf32>
    %74 = tpu.matmul %72, %73, %cst_43 {dimension_numbers = #tpu.dot_dimension_numbers<[1], [0], [0], [1], [0, 0, 1, 1], [], []>} : vector<16x10xbf16>, vector<10x2xbf16>, vector<16x2xf32> -> vector<16x2xf32>
    %75 = tpu.reciprocal %74 {approx = true} : vector<16x2xf32> -> vector<16x2xf32>
    %76 = arith.mulf %68, %75 : vector<16x2xf32>
    %c0_44 = arith.constant 0 : index
    %c0_45 = arith.constant 0 : index
    %77 = vector.load %arg9[%c0_44, %c0_45] : memref<2x64xbf16, #tpu.memory_space<vmem>>, vector<2x64xbf16>
    %78 = arith.truncf %76 : vector<16x2xf32> to vector<16x2xbf16>
    %cst_46 = arith.constant dense<0.000000e+00> : vector<16x64xf32>
    %79 = tpu.matmul %78, %77, %cst_46 {dimension_numbers = #tpu.dot_dimension_numbers<[1], [0], [0], [1], [0, 0, 1, 1], [], []>} : vector<16x2xbf16>, vector<2x64xbf16>, vector<16x64xf32> -> vector<16x64xf32>
    %80 = arith.mulf %49, %79 : vector<16x64xf32>
    %81 = arith.truncf %23 : vector<10x16xf32> to vector<10x16xbf16>
    %82 = arith.truncf %80 : vector<16x64xf32> to vector<16x64xbf16>
    %cst_47 = arith.constant dense<0.000000e+00> : vector<10x64xf32>
    %83 = tpu.matmul %81, %82, %cst_47 {dimension_numbers = #tpu.dot_dimension_numbers<[1], [0], [0], [1], [0, 0, 1, 1], [], []>} : vector<10x16xbf16>, vector<16x64xbf16>, vector<10x64xf32> -> vector<10x64xf32>
    %cst_48 = arith.constant 0.000000e+00 : f32
    %84 = vector.broadcast %cst_48 : f32 to vector<10x64xf32>
    %85 = arith.maximumf %83, %84 : vector<10x64xf32>
    %cst_49 = arith.constant 0.000000e+00 : f32
    %86 = vector.broadcast %cst_49 : f32 to vector<16x64xf32>
    %87 = arith.maximumf %48, %86 : vector<16x64xf32>
    %c0_50 = arith.constant 0 : index
    %c0_51 = arith.constant 0 : index
    %c0_52 = arith.constant 0 : index
    %88 = vector.load %arg3[%c0_50, %c0_51, %c0_52] : memref<1x16x10xf32, #tpu.memory_space<vmem>>, vector<1x16x10xf32>
    %89 = vector.shape_cast %88 : vector<1x16x10xf32> to vector<16x10xf32>
    %c0_53 = arith.constant 0 : index
    %c0_54 = arith.constant 0 : index
    %c0_55 = arith.constant 0 : index
    %90 = vector.load %arg4[%c0_53, %c0_54, %c0_55] : memref<1x16x10xf32, #tpu.memory_space<vmem>>, vector<1x16x10xf32>
    %91 = vector.shape_cast %90 : vector<1x16x10xf32> to vector<16x10xf32>
    %c0_56 = arith.constant 0 : index
    %c0_57 = arith.constant 0 : index
    %c0_58 = arith.constant 0 : index
    %92 = vector.load %arg5[%c0_56, %c0_57, %c0_58] : memref<1x10x16xf32, #tpu.memory_space<vmem>>, vector<1x10x16xf32>
    %93 = vector.shape_cast %92 : vector<1x10x16xf32> to vector<10x16xf32>
    %c0_59 = arith.constant 0 : index
    %c0_60 = arith.constant 0 : index
    %94 = vector.load %arg19[%c0_59, %c0_60] : memref<64x192xbf16, #tpu.memory_space<vmem>>, vector<64x192xbf16>
    %95 = arith.truncf %85 : vector<10x64xf32> to vector<10x64xbf16>
    %cst_61 = arith.constant dense<0.000000e+00> : vector<10x192xf32>
    %96 = tpu.matmul %95, %94, %cst_61 {dimension_numbers = #tpu.dot_dimension_numbers<[1], [0], [0], [1], [0, 0, 1, 1], [], []>} : vector<10x64xbf16>, vector<64x192xbf16>, vector<10x192xf32> -> vector<10x192xf32>
    %97 = vector.extract_strided_slice %96 {offsets = [0, 0], sizes = [10, 160], strides = [1, 1]} : vector<10x192xf32> to vector<10x160xf32>
    %98 = arith.truncf %89 : vector<16x10xf32> to vector<16x10xbf16>
    %99 = arith.truncf %97 : vector<10x160xf32> to vector<10x160xbf16>
    %cst_62 = arith.constant dense<0.000000e+00> : vector<16x160xf32>
    %100 = tpu.matmul %98, %99, %cst_62 {dimension_numbers = #tpu.dot_dimension_numbers<[1], [0], [0], [1], [0, 0, 1, 1], [], []>} : vector<16x10xbf16>, vector<10x160xbf16>, vector<16x160xf32> -> vector<16x160xf32>
    %101 = vector.extract_strided_slice %96 {offsets = [0, 160], sizes = [10, 32], strides = [1, 1]} : vector<10x192xf32> to vector<10x32xf32>
    %102 = arith.truncf %91 : vector<16x10xf32> to vector<16x10xbf16>
    %103 = arith.truncf %101 : vector<10x32xf32> to vector<10x32xbf16>
    %cst_63 = arith.constant dense<0.000000e+00> : vector<16x32xf32>
    %104 = tpu.matmul %102, %103, %cst_63 {dimension_numbers = #tpu.dot_dimension_numbers<[1], [0], [0], [1], [0, 0, 1, 1], [], []>} : vector<16x10xbf16>, vector<10x32xbf16>, vector<16x32xf32> -> vector<16x32xf32>
    %105 = vector.extract_strided_slice %100 {offsets = [0, 0], sizes = [16, 32], strides = [1, 1]} : vector<16x160xf32> to vector<16x32xf32>
    %106 = arith.addf %105, %104 : vector<16x32xf32>
    %c0_64 = arith.constant 0 : index
    %c0_65 = arith.constant 0 : index
    %107 = vector.load %arg20[%c0_64, %c0_65] : memref<64x32xbf16, #tpu.memory_space<vmem>>, vector<64x32xbf16>
    %108 = arith.truncf %87 : vector<16x64xf32> to vector<16x64xbf16>
    %cst_66 = arith.constant dense<0.000000e+00> : vector<16x32xf32>
    %109 = tpu.matmul %108, %107, %cst_66 {dimension_numbers = #tpu.dot_dimension_numbers<[1], [0], [0], [1], [0, 0, 1, 1], [], []>} : vector<16x64xbf16>, vector<64x32xbf16>, vector<16x32xf32> -> vector<16x32xf32>
    %110 = arith.addf %106, %109 : vector<16x32xf32>
    %c0_67 = arith.constant 0 : index
    %c0_68 = arith.constant 0 : index
    %111 = vector.load %arg21[%c0_67, %c0_68] : memref<1x32xf32, #tpu.memory_space<vmem>>, vector<1x32xf32>
    %112 = vector.broadcast %111 : vector<1x32xf32> to vector<16x32xf32>
    %113 = arith.addf %110, %112 : vector<16x32xf32>
    %cst_69 = arith.constant 0.000000e+00 : f32
    %114 = vector.broadcast %cst_69 : f32 to vector<16x32xf32>
    %115 = arith.cmpf oge, %113, %114 : vector<16x32xf32>
    %cst_70 = arith.constant 0.00999999977 : f32
    %116 = vector.broadcast %cst_70 : f32 to vector<16x32xf32>
    %117 = arith.mulf %116, %113 : vector<16x32xf32>
    %118 = arith.select %115, %113, %117 : vector<16x32xi1>, vector<16x32xf32>
    %119 = vector.extract_strided_slice %100 {offsets = [0, 32], sizes = [16, 128], strides = [1, 1]} : vector<16x160xf32> to vector<16x128xf32>
    %c0_71 = arith.constant 0 : index
    %c0_72 = arith.constant 0 : index
    %120 = vector.load %arg22[%c0_71, %c0_72] : memref<32x2xbf16, #tpu.memory_space<vmem>>, vector<32x2xbf16>
    %121 = arith.truncf %118 : vector<16x32xf32> to vector<16x32xbf16>
    %cst_73 = arith.constant dense<0.000000e+00> : vector<16x2xf32>
    %122 = tpu.matmul %121, %120, %cst_73 {dimension_numbers = #tpu.dot_dimension_numbers<[1], [0], [0], [1], [0, 0, 1, 1], [], []>} : vector<16x32xbf16>, vector<32x2xbf16>, vector<16x2xf32> -> vector<16x2xf32>
    %123 = vector.shape_cast %91 : vector<16x10xf32> to vector<16x10x1xf32>
    %cst_74 = arith.constant 0.000000e+00 : f32
    %124 = vector.broadcast %cst_74 : f32 to vector<16x10x1xf32>
    %125 = arith.cmpf ogt, %123, %124 : vector<16x10x1xf32>
    %126 = vector.shape_cast %122 : vector<16x2xf32> to vector<16x1x2xf32>
    %cst_75 = arith.constant -1.000000e+30 : f32
    %127 = vector.shape_cast %125 : vector<16x10x1xi1> to vector<16x10x1xi1>
    %128 = vector.broadcast %127 : vector<16x10x1xi1> to vector<16x10x2xi1>
    %129 = vector.shape_cast %126 : vector<16x1x2xf32> to vector<16x1x2xf32>
    %130 = vector.broadcast %129 : vector<16x1x2xf32> to vector<16x10x2xf32>
    %131 = vector.broadcast %cst_75 : f32 to vector<16x10x2xf32>
    %132 = arith.select %128, %130, %131 : vector<16x10x2xi1>, vector<16x10x2xf32>
    %cst_76 = arith.constant dense<0xFF800000> : vector<10x2xf32>
    %133 = vector.multi_reduction <maximumf>, %132, %cst_76 [0] : vector<16x10x2xf32> to vector<10x2xf32>
    %134 = arith.truncf %91 : vector<16x10xf32> to vector<16x10xbf16>
    %135 = arith.truncf %133 : vector<10x2xf32> to vector<10x2xbf16>
    %cst_77 = arith.constant dense<0.000000e+00> : vector<16x2xf32>
    %136 = tpu.matmul %134, %135, %cst_77 {dimension_numbers = #tpu.dot_dimension_numbers<[1], [0], [0], [1], [0, 0, 1, 1], [], []>} : vector<16x10xbf16>, vector<10x2xbf16>, vector<16x2xf32> -> vector<16x2xf32>
    %137 = arith.subf %122, %136 : vector<16x2xf32>
    %138 = math.exp %137 : vector<16x2xf32>
    %139 = arith.truncf %93 : vector<10x16xf32> to vector<10x16xbf16>
    %140 = arith.truncf %138 : vector<16x2xf32> to vector<16x2xbf16>
    %cst_78 = arith.constant dense<0.000000e+00> : vector<10x2xf32>
    %141 = tpu.matmul %139, %140, %cst_78 {dimension_numbers = #tpu.dot_dimension_numbers<[1], [0], [0], [1], [0, 0, 1, 1], [], []>} : vector<10x16xbf16>, vector<16x2xbf16>, vector<10x2xf32> -> vector<10x2xf32>
    %142 = arith.truncf %91 : vector<16x10xf32> to vector<16x10xbf16>
    %143 = arith.truncf %141 : vector<10x2xf32> to vector<10x2xbf16>
    %cst_79 = arith.constant dense<0.000000e+00> : vector<16x2xf32>
    %144 = tpu.matmul %142, %143, %cst_79 {dimension_numbers = #tpu.dot_dimension_numbers<[1], [0], [0], [1], [0, 0, 1, 1], [], []>} : vector<16x10xbf16>, vector<10x2xbf16>, vector<16x2xf32> -> vector<16x2xf32>
    %145 = tpu.reciprocal %144 {approx = true} : vector<16x2xf32> -> vector<16x2xf32>
    %146 = arith.mulf %138, %145 : vector<16x2xf32>
    %c0_80 = arith.constant 0 : index
    %c0_81 = arith.constant 0 : index
    %147 = vector.load %arg10[%c0_80, %c0_81] : memref<2x128xbf16, #tpu.memory_space<vmem>>, vector<2x128xbf16>
    %148 = arith.truncf %146 : vector<16x2xf32> to vector<16x2xbf16>
    %cst_82 = arith.constant dense<0.000000e+00> : vector<16x128xf32>
    %149 = tpu.matmul %148, %147, %cst_82 {dimension_numbers = #tpu.dot_dimension_numbers<[1], [0], [0], [1], [0, 0, 1, 1], [], []>} : vector<16x2xbf16>, vector<2x128xbf16>, vector<16x128xf32> -> vector<16x128xf32>
    %150 = arith.mulf %119, %149 : vector<16x128xf32>
    %151 = arith.truncf %93 : vector<10x16xf32> to vector<10x16xbf16>
    %152 = arith.truncf %150 : vector<16x128xf32> to vector<16x128xbf16>
    %cst_83 = arith.constant dense<0.000000e+00> : vector<10x128xf32>
    %153 = tpu.matmul %151, %152, %cst_83 {dimension_numbers = #tpu.dot_dimension_numbers<[1], [0], [0], [1], [0, 0, 1, 1], [], []>} : vector<10x16xbf16>, vector<16x128xbf16>, vector<10x128xf32> -> vector<10x128xf32>
    %c0_84 = arith.constant 0 : index
    %c0_85 = arith.constant 0 : index
    %154 = vector.load %arg27[%c0_84, %c0_85] : memref<32x16xbf16, #tpu.memory_space<vmem>>, vector<32x16xbf16>
    %155 = arith.truncf %118 : vector<16x32xf32> to vector<16x32xbf16>
    %cst_86 = arith.constant dense<0.000000e+00> : vector<16x16xf32>
    %156 = tpu.matmul %155, %154, %cst_86 {dimension_numbers = #tpu.dot_dimension_numbers<[1], [0], [0], [1], [0, 0, 1, 1], [], []>} : vector<16x32xbf16>, vector<32x16xbf16>, vector<16x16xf32> -> vector<16x16xf32>
    %c0_87 = arith.constant 0 : index
    %c0_88 = arith.constant 0 : index
    %157 = vector.load %arg28[%c0_87, %c0_88] : memref<1x16xf32, #tpu.memory_space<vmem>>, vector<1x16xf32>
    %158 = vector.broadcast %157 : vector<1x16xf32> to vector<16x16xf32>
    %159 = arith.addf %156, %158 : vector<16x16xf32>
    %cst_89 = arith.constant 0.000000e+00 : f32
    %160 = vector.broadcast %cst_89 : f32 to vector<16x16xf32>
    %161 = arith.maximumf %159, %160 : vector<16x16xf32>
    %c0_90 = arith.constant 0 : index
    %c0_91 = arith.constant 0 : index
    %162 = vector.load %arg29[%c0_90, %c0_91] : memref<128x16xbf16, #tpu.memory_space<vmem>>, vector<128x16xbf16>
    %163 = arith.truncf %153 : vector<10x128xf32> to vector<10x128xbf16>
    %cst_92 = arith.constant dense<0.000000e+00> : vector<10x16xf32>
    %164 = tpu.matmul %163, %162, %cst_92 {dimension_numbers = #tpu.dot_dimension_numbers<[1], [0], [0], [1], [0, 0, 1, 1], [], []>} : vector<10x128xbf16>, vector<128x16xbf16>, vector<10x16xf32> -> vector<10x16xf32>
    %c0_93 = arith.constant 0 : index
    %c0_94 = arith.constant 0 : index
    %165 = vector.load %arg30[%c0_93, %c0_94] : memref<1x16xf32, #tpu.memory_space<vmem>>, vector<1x16xf32>
    %166 = vector.broadcast %165 : vector<1x16xf32> to vector<10x16xf32>
    %167 = arith.addf %164, %166 : vector<10x16xf32>
    %cst_95 = arith.constant 0.000000e+00 : f32
    %168 = vector.broadcast %cst_95 : f32 to vector<10x16xf32>
    %169 = arith.maximumf %167, %168 : vector<10x16xf32>
    %c0_96 = arith.constant 0 : index
    %c0_97 = arith.constant 0 : index
    %c0_98 = arith.constant 0 : index
    %170 = vector.load %arg6[%c0_96, %c0_97, %c0_98] : memref<1x12x10xf32, #tpu.memory_space<vmem>>, vector<1x12x10xf32>
    %171 = vector.shape_cast %170 : vector<1x12x10xf32> to vector<12x10xf32>
    %c0_99 = arith.constant 0 : index
    %c0_100 = arith.constant 0 : index
    %c0_101 = arith.constant 0 : index
    %172 = vector.load %arg7[%c0_99, %c0_100, %c0_101] : memref<1x12x10xf32, #tpu.memory_space<vmem>>, vector<1x12x10xf32>
    %173 = vector.shape_cast %172 : vector<1x12x10xf32> to vector<12x10xf32>
    %c0_102 = arith.constant 0 : index
    %c0_103 = arith.constant 0 : index
    %c0_104 = arith.constant 0 : index
    %174 = vector.load %arg8[%c0_102, %c0_103, %c0_104] : memref<1x10x12xf32, #tpu.memory_space<vmem>>, vector<1x10x12xf32>
    %175 = vector.shape_cast %174 : vector<1x10x12xf32> to vector<10x12xf32>
    %c0_105 = arith.constant 0 : index
    %c0_106 = arith.constant 0 : index
    %176 = vector.load %arg23[%c0_105, %c0_106] : memref<16x192xbf16, #tpu.memory_space<vmem>>, vector<16x192xbf16>
    %177 = arith.truncf %169 : vector<10x16xf32> to vector<10x16xbf16>
    %cst_107 = arith.constant dense<0.000000e+00> : vector<10x192xf32>
    %178 = tpu.matmul %177, %176, %cst_107 {dimension_numbers = #tpu.dot_dimension_numbers<[1], [0], [0], [1], [0, 0, 1, 1], [], []>} : vector<10x16xbf16>, vector<16x192xbf16>, vector<10x192xf32> -> vector<10x192xf32>
    %179 = vector.extract_strided_slice %178 {offsets = [0, 0], sizes = [10, 128], strides = [1, 1]} : vector<10x192xf32> to vector<10x128xf32>
    %180 = arith.truncf %171 : vector<12x10xf32> to vector<12x10xbf16>
    %181 = arith.truncf %179 : vector<10x128xf32> to vector<10x128xbf16>
    %cst_108 = arith.constant dense<0.000000e+00> : vector<12x128xf32>
    %182 = tpu.matmul %180, %181, %cst_108 {dimension_numbers = #tpu.dot_dimension_numbers<[1], [0], [0], [1], [0, 0, 1, 1], [], []>} : vector<12x10xbf16>, vector<10x128xbf16>, vector<12x128xf32> -> vector<12x128xf32>
    %183 = vector.extract_strided_slice %178 {offsets = [0, 128], sizes = [10, 64], strides = [1, 1]} : vector<10x192xf32> to vector<10x64xf32>
    %184 = arith.truncf %173 : vector<12x10xf32> to vector<12x10xbf16>
    %185 = arith.truncf %183 : vector<10x64xf32> to vector<10x64xbf16>
    %cst_109 = arith.constant dense<0.000000e+00> : vector<12x64xf32>
    %186 = tpu.matmul %184, %185, %cst_109 {dimension_numbers = #tpu.dot_dimension_numbers<[1], [0], [0], [1], [0, 0, 1, 1], [], []>} : vector<12x10xbf16>, vector<10x64xbf16>, vector<12x64xf32> -> vector<12x64xf32>
    %187 = vector.extract_strided_slice %182 {offsets = [0, 0], sizes = [12, 64], strides = [1, 1]} : vector<12x128xf32> to vector<12x64xf32>
    %188 = arith.addf %187, %186 : vector<12x64xf32>
    %c0_110 = arith.constant 0 : index
    %c0_111 = arith.constant 0 : index
    %189 = vector.load %arg24[%c0_110, %c0_111] : memref<16x64xbf16, #tpu.memory_space<vmem>>, vector<16x64xbf16>
    %190 = arith.truncf %17 : vector<12x16xf32> to vector<12x16xbf16>
    %cst_112 = arith.constant dense<0.000000e+00> : vector<12x64xf32>
    %191 = tpu.matmul %190, %189, %cst_112 {dimension_numbers = #tpu.dot_dimension_numbers<[1], [0], [0], [1], [0, 0, 1, 1], [], []>} : vector<12x16xbf16>, vector<16x64xbf16>, vector<12x64xf32> -> vector<12x64xf32>
    %192 = arith.addf %188, %191 : vector<12x64xf32>
    %c0_113 = arith.constant 0 : index
    %c0_114 = arith.constant 0 : index
    %193 = vector.load %arg25[%c0_113, %c0_114] : memref<1x64xf32, #tpu.memory_space<vmem>>, vector<1x64xf32>
    %194 = vector.broadcast %193 : vector<1x64xf32> to vector<12x64xf32>
    %195 = arith.addf %192, %194 : vector<12x64xf32>
    %cst_115 = arith.constant 0.000000e+00 : f32
    %196 = vector.broadcast %cst_115 : f32 to vector<12x64xf32>
    %197 = arith.cmpf oge, %195, %196 : vector<12x64xf32>
    %cst_116 = arith.constant 0.00999999977 : f32
    %198 = vector.broadcast %cst_116 : f32 to vector<12x64xf32>
    %199 = arith.mulf %198, %195 : vector<12x64xf32>
    %200 = arith.select %197, %195, %199 : vector<12x64xi1>, vector<12x64xf32>
    %201 = vector.extract_strided_slice %182 {offsets = [0, 64], sizes = [12, 64], strides = [1, 1]} : vector<12x128xf32> to vector<12x64xf32>
    %c0_117 = arith.constant 0 : index
    %c0_118 = arith.constant 0 : index
    %202 = vector.load %arg26[%c0_117, %c0_118] : memref<64x2xbf16, #tpu.memory_space<vmem>>, vector<64x2xbf16>
    %203 = arith.truncf %200 : vector<12x64xf32> to vector<12x64xbf16>
    %cst_119 = arith.constant dense<0.000000e+00> : vector<12x2xf32>
    %204 = tpu.matmul %203, %202, %cst_119 {dimension_numbers = #tpu.dot_dimension_numbers<[1], [0], [0], [1], [0, 0, 1, 1], [], []>} : vector<12x64xbf16>, vector<64x2xbf16>, vector<12x2xf32> -> vector<12x2xf32>
    %205 = vector.shape_cast %173 : vector<12x10xf32> to vector<12x10x1xf32>
    %cst_120 = arith.constant 0.000000e+00 : f32
    %206 = vector.broadcast %cst_120 : f32 to vector<12x10x1xf32>
    %207 = arith.cmpf ogt, %205, %206 : vector<12x10x1xf32>
    %208 = vector.shape_cast %204 : vector<12x2xf32> to vector<12x1x2xf32>
    %cst_121 = arith.constant -1.000000e+30 : f32
    %209 = vector.shape_cast %207 : vector<12x10x1xi1> to vector<12x10x1xi1>
    %210 = vector.broadcast %209 : vector<12x10x1xi1> to vector<12x10x2xi1>
    %211 = vector.shape_cast %208 : vector<12x1x2xf32> to vector<12x1x2xf32>
    %212 = vector.broadcast %211 : vector<12x1x2xf32> to vector<12x10x2xf32>
    %213 = vector.broadcast %cst_121 : f32 to vector<12x10x2xf32>
    %214 = arith.select %210, %212, %213 : vector<12x10x2xi1>, vector<12x10x2xf32>
    %cst_122 = arith.constant dense<0xFF800000> : vector<10x2xf32>
    %215 = vector.multi_reduction <maximumf>, %214, %cst_122 [0] : vector<12x10x2xf32> to vector<10x2xf32>
    %216 = arith.truncf %173 : vector<12x10xf32> to vector<12x10xbf16>
    %217 = arith.truncf %215 : vector<10x2xf32> to vector<10x2xbf16>
    %cst_123 = arith.constant dense<0.000000e+00> : vector<12x2xf32>
    %218 = tpu.matmul %216, %217, %cst_123 {dimension_numbers = #tpu.dot_dimension_numbers<[1], [0], [0], [1], [0, 0, 1, 1], [], []>} : vector<12x10xbf16>, vector<10x2xbf16>, vector<12x2xf32> -> vector<12x2xf32>
    %219 = arith.subf %204, %218 : vector<12x2xf32>
    %220 = math.exp %219 : vector<12x2xf32>
    %221 = arith.truncf %175 : vector<10x12xf32> to vector<10x12xbf16>
    %222 = arith.truncf %220 : vector<12x2xf32> to vector<12x2xbf16>
    %cst_124 = arith.constant dense<0.000000e+00> : vector<10x2xf32>
    %223 = tpu.matmul %221, %222, %cst_124 {dimension_numbers = #tpu.dot_dimension_numbers<[1], [0], [0], [1], [0, 0, 1, 1], [], []>} : vector<10x12xbf16>, vector<12x2xbf16>, vector<10x2xf32> -> vector<10x2xf32>
    %224 = arith.truncf %173 : vector<12x10xf32> to vector<12x10xbf16>
    %225 = arith.truncf %223 : vector<10x2xf32> to vector<10x2xbf16>
    %cst_125 = arith.constant dense<0.000000e+00> : vector<12x2xf32>
    %226 = tpu.matmul %224, %225, %cst_125 {dimension_numbers = #tpu.dot_dimension_numbers<[1], [0], [0], [1], [0, 0, 1, 1], [], []>} : vector<12x10xbf16>, vector<10x2xbf16>, vector<12x2xf32> -> vector<12x2xf32>
    %227 = tpu.reciprocal %226 {approx = true} : vector<12x2xf32> -> vector<12x2xf32>
    %228 = arith.mulf %220, %227 : vector<12x2xf32>
    %c0_126 = arith.constant 0 : index
    %c0_127 = arith.constant 0 : index
    %229 = vector.load %arg9[%c0_126, %c0_127] : memref<2x64xbf16, #tpu.memory_space<vmem>>, vector<2x64xbf16>
    %230 = arith.truncf %228 : vector<12x2xf32> to vector<12x2xbf16>
    %cst_128 = arith.constant dense<0.000000e+00> : vector<12x64xf32>
    %231 = tpu.matmul %230, %229, %cst_128 {dimension_numbers = #tpu.dot_dimension_numbers<[1], [0], [0], [1], [0, 0, 1, 1], [], []>} : vector<12x2xbf16>, vector<2x64xbf16>, vector<12x64xf32> -> vector<12x64xf32>
    %232 = arith.mulf %201, %231 : vector<12x64xf32>
    %233 = arith.truncf %175 : vector<10x12xf32> to vector<10x12xbf16>
    %234 = arith.truncf %232 : vector<12x64xf32> to vector<12x64xbf16>
    %cst_129 = arith.constant dense<0.000000e+00> : vector<10x64xf32>
    %235 = tpu.matmul %233, %234, %cst_129 {dimension_numbers = #tpu.dot_dimension_numbers<[1], [0], [0], [1], [0, 0, 1, 1], [], []>} : vector<10x12xbf16>, vector<12x64xbf16>, vector<10x64xf32> -> vector<10x64xf32>
    %c0_130 = arith.constant 0 : index
    %c0_131 = arith.constant 0 : index
    %236 = vector.load %arg33[%c0_130, %c0_131] : memref<64x16xbf16, #tpu.memory_space<vmem>>, vector<64x16xbf16>
    %237 = arith.truncf %200 : vector<12x64xf32> to vector<12x64xbf16>
    %cst_132 = arith.constant dense<0.000000e+00> : vector<12x16xf32>
    %238 = tpu.matmul %237, %236, %cst_132 {dimension_numbers = #tpu.dot_dimension_numbers<[1], [0], [0], [1], [0, 0, 1, 1], [], []>} : vector<12x64xbf16>, vector<64x16xbf16>, vector<12x16xf32> -> vector<12x16xf32>
    %c0_133 = arith.constant 0 : index
    %c0_134 = arith.constant 0 : index
    %239 = vector.load %arg34[%c0_133, %c0_134] : memref<1x16xf32, #tpu.memory_space<vmem>>, vector<1x16xf32>
    %240 = vector.broadcast %239 : vector<1x16xf32> to vector<12x16xf32>
    %241 = arith.addf %238, %240 : vector<12x16xf32>
    %cst_135 = arith.constant 0.000000e+00 : f32
    %242 = vector.broadcast %cst_135 : f32 to vector<12x16xf32>
    %243 = arith.maximumf %241, %242 : vector<12x16xf32>
    %c0_136 = arith.constant 0 : index
    %c0_137 = arith.constant 0 : index
    %244 = vector.load %arg31[%c0_136, %c0_137] : memref<64x16xbf16, #tpu.memory_space<vmem>>, vector<64x16xbf16>
    %245 = arith.truncf %235 : vector<10x64xf32> to vector<10x64xbf16>
    %cst_138 = arith.constant dense<0.000000e+00> : vector<10x16xf32>
    %246 = tpu.matmul %245, %244, %cst_138 {dimension_numbers = #tpu.dot_dimension_numbers<[1], [0], [0], [1], [0, 0, 1, 1], [], []>} : vector<10x64xbf16>, vector<64x16xbf16>, vector<10x16xf32> -> vector<10x16xf32>
    %c0_139 = arith.constant 0 : index
    %c0_140 = arith.constant 0 : index
    %247 = vector.load %arg32[%c0_139, %c0_140] : memref<1x16xf32, #tpu.memory_space<vmem>>, vector<1x16xf32>
    %248 = vector.broadcast %247 : vector<1x16xf32> to vector<10x16xf32>
    %249 = arith.addf %246, %248 : vector<10x16xf32>
    %cst_141 = arith.constant 0.000000e+00 : f32
    %250 = vector.broadcast %cst_141 : f32 to vector<10x16xf32>
    %251 = arith.maximumf %249, %250 : vector<10x16xf32>
    %252 = arith.addf %169, %251 : vector<10x16xf32>
    %c0_142 = arith.constant 0 : index
    %c0_143 = arith.constant 0 : index
    %c0_144 = arith.constant 0 : index
    %253 = vector.load %arg3[%c0_142, %c0_143, %c0_144] : memref<1x16x10xf32, #tpu.memory_space<vmem>>, vector<1x16x10xf32>
    %254 = vector.shape_cast %253 : vector<1x16x10xf32> to vector<16x10xf32>
    %c0_145 = arith.constant 0 : index
    %c0_146 = arith.constant 0 : index
    %c0_147 = arith.constant 0 : index
    %255 = vector.load %arg4[%c0_145, %c0_146, %c0_147] : memref<1x16x10xf32, #tpu.memory_space<vmem>>, vector<1x16x10xf32>
    %256 = vector.shape_cast %255 : vector<1x16x10xf32> to vector<16x10xf32>
    %c0_148 = arith.constant 0 : index
    %c0_149 = arith.constant 0 : index
    %c0_150 = arith.constant 0 : index
    %257 = vector.load %arg5[%c0_148, %c0_149, %c0_150] : memref<1x10x16xf32, #tpu.memory_space<vmem>>, vector<1x10x16xf32>
    %258 = vector.shape_cast %257 : vector<1x10x16xf32> to vector<10x16xf32>
    %c0_151 = arith.constant 0 : index
    %c0_152 = arith.constant 0 : index
    %259 = vector.load %arg15[%c0_151, %c0_152] : memref<16x192xbf16, #tpu.memory_space<vmem>>, vector<16x192xbf16>
    %260 = arith.truncf %252 : vector<10x16xf32> to vector<10x16xbf16>
    %cst_153 = arith.constant dense<0.000000e+00> : vector<10x192xf32>
    %261 = tpu.matmul %260, %259, %cst_153 {dimension_numbers = #tpu.dot_dimension_numbers<[1], [0], [0], [1], [0, 0, 1, 1], [], []>} : vector<10x16xbf16>, vector<16x192xbf16>, vector<10x192xf32> -> vector<10x192xf32>
    %262 = vector.extract_strided_slice %261 {offsets = [0, 0], sizes = [10, 128], strides = [1, 1]} : vector<10x192xf32> to vector<10x128xf32>
    %263 = arith.truncf %254 : vector<16x10xf32> to vector<16x10xbf16>
    %264 = arith.truncf %262 : vector<10x128xf32> to vector<10x128xbf16>
    %cst_154 = arith.constant dense<0.000000e+00> : vector<16x128xf32>
    %265 = tpu.matmul %263, %264, %cst_154 {dimension_numbers = #tpu.dot_dimension_numbers<[1], [0], [0], [1], [0, 0, 1, 1], [], []>} : vector<16x10xbf16>, vector<10x128xbf16>, vector<16x128xf32> -> vector<16x128xf32>
    %266 = vector.extract_strided_slice %261 {offsets = [0, 128], sizes = [10, 64], strides = [1, 1]} : vector<10x192xf32> to vector<10x64xf32>
    %267 = arith.truncf %256 : vector<16x10xf32> to vector<16x10xbf16>
    %268 = arith.truncf %266 : vector<10x64xf32> to vector<10x64xbf16>
    %cst_155 = arith.constant dense<0.000000e+00> : vector<16x64xf32>
    %269 = tpu.matmul %267, %268, %cst_155 {dimension_numbers = #tpu.dot_dimension_numbers<[1], [0], [0], [1], [0, 0, 1, 1], [], []>} : vector<16x10xbf16>, vector<10x64xbf16>, vector<16x64xf32> -> vector<16x64xf32>
    %270 = vector.extract_strided_slice %265 {offsets = [0, 0], sizes = [16, 64], strides = [1, 1]} : vector<16x128xf32> to vector<16x64xf32>
    %271 = arith.addf %270, %269 : vector<16x64xf32>
    %c0_156 = arith.constant 0 : index
    %c0_157 = arith.constant 0 : index
    %272 = vector.load %arg16[%c0_156, %c0_157] : memref<16x64xbf16, #tpu.memory_space<vmem>>, vector<16x64xbf16>
    %273 = arith.truncf %161 : vector<16x16xf32> to vector<16x16xbf16>
    %cst_158 = arith.constant dense<0.000000e+00> : vector<16x64xf32>
    %274 = tpu.matmul %273, %272, %cst_158 {dimension_numbers = #tpu.dot_dimension_numbers<[1], [0], [0], [1], [0, 0, 1, 1], [], []>} : vector<16x16xbf16>, vector<16x64xbf16>, vector<16x64xf32> -> vector<16x64xf32>
    %275 = arith.addf %271, %274 : vector<16x64xf32>
    %c0_159 = arith.constant 0 : index
    %c0_160 = arith.constant 0 : index
    %276 = vector.load %arg17[%c0_159, %c0_160] : memref<1x64xf32, #tpu.memory_space<vmem>>, vector<1x64xf32>
    %277 = vector.broadcast %276 : vector<1x64xf32> to vector<16x64xf32>
    %278 = arith.addf %275, %277 : vector<16x64xf32>
    %cst_161 = arith.constant 0.000000e+00 : f32
    %279 = vector.broadcast %cst_161 : f32 to vector<16x64xf32>
    %280 = arith.cmpf oge, %278, %279 : vector<16x64xf32>
    %cst_162 = arith.constant 0.00999999977 : f32
    %281 = vector.broadcast %cst_162 : f32 to vector<16x64xf32>
    %282 = arith.mulf %281, %278 : vector<16x64xf32>
    %283 = arith.select %280, %278, %282 : vector<16x64xi1>, vector<16x64xf32>
    %284 = vector.extract_strided_slice %265 {offsets = [0, 64], sizes = [16, 64], strides = [1, 1]} : vector<16x128xf32> to vector<16x64xf32>
    %c0_163 = arith.constant 0 : index
    %c0_164 = arith.constant 0 : index
    %285 = vector.load %arg18[%c0_163, %c0_164] : memref<64x2xbf16, #tpu.memory_space<vmem>>, vector<64x2xbf16>
    %286 = arith.truncf %283 : vector<16x64xf32> to vector<16x64xbf16>
    %cst_165 = arith.constant dense<0.000000e+00> : vector<16x2xf32>
    %287 = tpu.matmul %286, %285, %cst_165 {dimension_numbers = #tpu.dot_dimension_numbers<[1], [0], [0], [1], [0, 0, 1, 1], [], []>} : vector<16x64xbf16>, vector<64x2xbf16>, vector<16x2xf32> -> vector<16x2xf32>
    %288 = vector.shape_cast %256 : vector<16x10xf32> to vector<16x10x1xf32>
    %cst_166 = arith.constant 0.000000e+00 : f32
    %289 = vector.broadcast %cst_166 : f32 to vector<16x10x1xf32>
    %290 = arith.cmpf ogt, %288, %289 : vector<16x10x1xf32>
    %291 = vector.shape_cast %287 : vector<16x2xf32> to vector<16x1x2xf32>
    %cst_167 = arith.constant -1.000000e+30 : f32
    %292 = vector.shape_cast %290 : vector<16x10x1xi1> to vector<16x10x1xi1>
    %293 = vector.broadcast %292 : vector<16x10x1xi1> to vector<16x10x2xi1>
    %294 = vector.shape_cast %291 : vector<16x1x2xf32> to vector<16x1x2xf32>
    %295 = vector.broadcast %294 : vector<16x1x2xf32> to vector<16x10x2xf32>
    %296 = vector.broadcast %cst_167 : f32 to vector<16x10x2xf32>
    %297 = arith.select %293, %295, %296 : vector<16x10x2xi1>, vector<16x10x2xf32>
    %cst_168 = arith.constant dense<0xFF800000> : vector<10x2xf32>
    %298 = vector.multi_reduction <maximumf>, %297, %cst_168 [0] : vector<16x10x2xf32> to vector<10x2xf32>
    %299 = arith.truncf %256 : vector<16x10xf32> to vector<16x10xbf16>
    %300 = arith.truncf %298 : vector<10x2xf32> to vector<10x2xbf16>
    %cst_169 = arith.constant dense<0.000000e+00> : vector<16x2xf32>
    %301 = tpu.matmul %299, %300, %cst_169 {dimension_numbers = #tpu.dot_dimension_numbers<[1], [0], [0], [1], [0, 0, 1, 1], [], []>} : vector<16x10xbf16>, vector<10x2xbf16>, vector<16x2xf32> -> vector<16x2xf32>
    %302 = arith.subf %287, %301 : vector<16x2xf32>
    %303 = math.exp %302 : vector<16x2xf32>
    %304 = arith.truncf %258 : vector<10x16xf32> to vector<10x16xbf16>
    %305 = arith.truncf %303 : vector<16x2xf32> to vector<16x2xbf16>
    %cst_170 = arith.constant dense<0.000000e+00> : vector<10x2xf32>
    %306 = tpu.matmul %304, %305, %cst_170 {dimension_numbers = #tpu.dot_dimension_numbers<[1], [0], [0], [1], [0, 0, 1, 1], [], []>} : vector<10x16xbf16>, vector<16x2xbf16>, vector<10x2xf32> -> vector<10x2xf32>
    %307 = arith.truncf %256 : vector<16x10xf32> to vector<16x10xbf16>
    %308 = arith.truncf %306 : vector<10x2xf32> to vector<10x2xbf16>
    %cst_171 = arith.constant dense<0.000000e+00> : vector<16x2xf32>
    %309 = tpu.matmul %307, %308, %cst_171 {dimension_numbers = #tpu.dot_dimension_numbers<[1], [0], [0], [1], [0, 0, 1, 1], [], []>} : vector<16x10xbf16>, vector<10x2xbf16>, vector<16x2xf32> -> vector<16x2xf32>
    %310 = tpu.reciprocal %309 {approx = true} : vector<16x2xf32> -> vector<16x2xf32>
    %311 = arith.mulf %303, %310 : vector<16x2xf32>
    %c0_172 = arith.constant 0 : index
    %c0_173 = arith.constant 0 : index
    %312 = vector.load %arg9[%c0_172, %c0_173] : memref<2x64xbf16, #tpu.memory_space<vmem>>, vector<2x64xbf16>
    %313 = arith.truncf %311 : vector<16x2xf32> to vector<16x2xbf16>
    %cst_174 = arith.constant dense<0.000000e+00> : vector<16x64xf32>
    %314 = tpu.matmul %313, %312, %cst_174 {dimension_numbers = #tpu.dot_dimension_numbers<[1], [0], [0], [1], [0, 0, 1, 1], [], []>} : vector<16x2xbf16>, vector<2x64xbf16>, vector<16x64xf32> -> vector<16x64xf32>
    %315 = arith.mulf %284, %314 : vector<16x64xf32>
    %316 = arith.truncf %258 : vector<10x16xf32> to vector<10x16xbf16>
    %317 = arith.truncf %315 : vector<16x64xf32> to vector<16x64xbf16>
    %cst_175 = arith.constant dense<0.000000e+00> : vector<10x64xf32>
    %318 = tpu.matmul %316, %317, %cst_175 {dimension_numbers = #tpu.dot_dimension_numbers<[1], [0], [0], [1], [0, 0, 1, 1], [], []>} : vector<10x16xbf16>, vector<16x64xbf16>, vector<10x64xf32> -> vector<10x64xf32>
    %cst_176 = arith.constant 0.000000e+00 : f32
    %319 = vector.broadcast %cst_176 : f32 to vector<10x64xf32>
    %320 = arith.maximumf %318, %319 : vector<10x64xf32>
    %cst_177 = arith.constant 0.000000e+00 : f32
    %321 = vector.broadcast %cst_177 : f32 to vector<16x64xf32>
    %322 = arith.maximumf %283, %321 : vector<16x64xf32>
    %c0_178 = arith.constant 0 : index
    %c0_179 = arith.constant 0 : index
    %c0_180 = arith.constant 0 : index
    %323 = vector.load %arg3[%c0_178, %c0_179, %c0_180] : memref<1x16x10xf32, #tpu.memory_space<vmem>>, vector<1x16x10xf32>
    %324 = vector.shape_cast %323 : vector<1x16x10xf32> to vector<16x10xf32>
    %c0_181 = arith.constant 0 : index
    %c0_182 = arith.constant 0 : index
    %c0_183 = arith.constant 0 : index
    %325 = vector.load %arg4[%c0_181, %c0_182, %c0_183] : memref<1x16x10xf32, #tpu.memory_space<vmem>>, vector<1x16x10xf32>
    %326 = vector.shape_cast %325 : vector<1x16x10xf32> to vector<16x10xf32>
    %c0_184 = arith.constant 0 : index
    %c0_185 = arith.constant 0 : index
    %c0_186 = arith.constant 0 : index
    %327 = vector.load %arg5[%c0_184, %c0_185, %c0_186] : memref<1x10x16xf32, #tpu.memory_space<vmem>>, vector<1x10x16xf32>
    %328 = vector.shape_cast %327 : vector<1x10x16xf32> to vector<10x16xf32>
    %c0_187 = arith.constant 0 : index
    %c0_188 = arith.constant 0 : index
    %329 = vector.load %arg19[%c0_187, %c0_188] : memref<64x192xbf16, #tpu.memory_space<vmem>>, vector<64x192xbf16>
    %330 = arith.truncf %320 : vector<10x64xf32> to vector<10x64xbf16>
    %cst_189 = arith.constant dense<0.000000e+00> : vector<10x192xf32>
    %331 = tpu.matmul %330, %329, %cst_189 {dimension_numbers = #tpu.dot_dimension_numbers<[1], [0], [0], [1], [0, 0, 1, 1], [], []>} : vector<10x64xbf16>, vector<64x192xbf16>, vector<10x192xf32> -> vector<10x192xf32>
    %332 = vector.extract_strided_slice %331 {offsets = [0, 0], sizes = [10, 160], strides = [1, 1]} : vector<10x192xf32> to vector<10x160xf32>
    %333 = arith.truncf %324 : vector<16x10xf32> to vector<16x10xbf16>
    %334 = arith.truncf %332 : vector<10x160xf32> to vector<10x160xbf16>
    %cst_190 = arith.constant dense<0.000000e+00> : vector<16x160xf32>
    %335 = tpu.matmul %333, %334, %cst_190 {dimension_numbers = #tpu.dot_dimension_numbers<[1], [0], [0], [1], [0, 0, 1, 1], [], []>} : vector<16x10xbf16>, vector<10x160xbf16>, vector<16x160xf32> -> vector<16x160xf32>
    %336 = vector.extract_strided_slice %331 {offsets = [0, 160], sizes = [10, 32], strides = [1, 1]} : vector<10x192xf32> to vector<10x32xf32>
    %337 = arith.truncf %326 : vector<16x10xf32> to vector<16x10xbf16>
    %338 = arith.truncf %336 : vector<10x32xf32> to vector<10x32xbf16>
    %cst_191 = arith.constant dense<0.000000e+00> : vector<16x32xf32>
    %339 = tpu.matmul %337, %338, %cst_191 {dimension_numbers = #tpu.dot_dimension_numbers<[1], [0], [0], [1], [0, 0, 1, 1], [], []>} : vector<16x10xbf16>, vector<10x32xbf16>, vector<16x32xf32> -> vector<16x32xf32>
    %340 = vector.extract_strided_slice %335 {offsets = [0, 0], sizes = [16, 32], strides = [1, 1]} : vector<16x160xf32> to vector<16x32xf32>
    %341 = arith.addf %340, %339 : vector<16x32xf32>
    %c0_192 = arith.constant 0 : index
    %c0_193 = arith.constant 0 : index
    %342 = vector.load %arg20[%c0_192, %c0_193] : memref<64x32xbf16, #tpu.memory_space<vmem>>, vector<64x32xbf16>
    %343 = arith.truncf %322 : vector<16x64xf32> to vector<16x64xbf16>
    %cst_194 = arith.constant dense<0.000000e+00> : vector<16x32xf32>
    %344 = tpu.matmul %343, %342, %cst_194 {dimension_numbers = #tpu.dot_dimension_numbers<[1], [0], [0], [1], [0, 0, 1, 1], [], []>} : vector<16x64xbf16>, vector<64x32xbf16>, vector<16x32xf32> -> vector<16x32xf32>
    %345 = arith.addf %341, %344 : vector<16x32xf32>
    %c0_195 = arith.constant 0 : index
    %c0_196 = arith.constant 0 : index
    %346 = vector.load %arg21[%c0_195, %c0_196] : memref<1x32xf32, #tpu.memory_space<vmem>>, vector<1x32xf32>
    %347 = vector.broadcast %346 : vector<1x32xf32> to vector<16x32xf32>
    %348 = arith.addf %345, %347 : vector<16x32xf32>
    %cst_197 = arith.constant 0.000000e+00 : f32
    %349 = vector.broadcast %cst_197 : f32 to vector<16x32xf32>
    %350 = arith.cmpf oge, %348, %349 : vector<16x32xf32>
    %cst_198 = arith.constant 0.00999999977 : f32
    %351 = vector.broadcast %cst_198 : f32 to vector<16x32xf32>
    %352 = arith.mulf %351, %348 : vector<16x32xf32>
    %353 = arith.select %350, %348, %352 : vector<16x32xi1>, vector<16x32xf32>
    %354 = vector.extract_strided_slice %335 {offsets = [0, 32], sizes = [16, 128], strides = [1, 1]} : vector<16x160xf32> to vector<16x128xf32>
    %c0_199 = arith.constant 0 : index
    %c0_200 = arith.constant 0 : index
    %355 = vector.load %arg22[%c0_199, %c0_200] : memref<32x2xbf16, #tpu.memory_space<vmem>>, vector<32x2xbf16>
    %356 = arith.truncf %353 : vector<16x32xf32> to vector<16x32xbf16>
    %cst_201 = arith.constant dense<0.000000e+00> : vector<16x2xf32>
    %357 = tpu.matmul %356, %355, %cst_201 {dimension_numbers = #tpu.dot_dimension_numbers<[1], [0], [0], [1], [0, 0, 1, 1], [], []>} : vector<16x32xbf16>, vector<32x2xbf16>, vector<16x2xf32> -> vector<16x2xf32>
    %358 = vector.shape_cast %326 : vector<16x10xf32> to vector<16x10x1xf32>
    %cst_202 = arith.constant 0.000000e+00 : f32
    %359 = vector.broadcast %cst_202 : f32 to vector<16x10x1xf32>
    %360 = arith.cmpf ogt, %358, %359 : vector<16x10x1xf32>
    %361 = vector.shape_cast %357 : vector<16x2xf32> to vector<16x1x2xf32>
    %cst_203 = arith.constant -1.000000e+30 : f32
    %362 = vector.shape_cast %360 : vector<16x10x1xi1> to vector<16x10x1xi1>
    %363 = vector.broadcast %362 : vector<16x10x1xi1> to vector<16x10x2xi1>
    %364 = vector.shape_cast %361 : vector<16x1x2xf32> to vector<16x1x2xf32>
    %365 = vector.broadcast %364 : vector<16x1x2xf32> to vector<16x10x2xf32>
    %366 = vector.broadcast %cst_203 : f32 to vector<16x10x2xf32>
    %367 = arith.select %363, %365, %366 : vector<16x10x2xi1>, vector<16x10x2xf32>
    %cst_204 = arith.constant dense<0xFF800000> : vector<10x2xf32>
    %368 = vector.multi_reduction <maximumf>, %367, %cst_204 [0] : vector<16x10x2xf32> to vector<10x2xf32>
    %369 = arith.truncf %326 : vector<16x10xf32> to vector<16x10xbf16>
    %370 = arith.truncf %368 : vector<10x2xf32> to vector<10x2xbf16>
    %cst_205 = arith.constant dense<0.000000e+00> : vector<16x2xf32>
    %371 = tpu.matmul %369, %370, %cst_205 {dimension_numbers = #tpu.dot_dimension_numbers<[1], [0], [0], [1], [0, 0, 1, 1], [], []>} : vector<16x10xbf16>, vector<10x2xbf16>, vector<16x2xf32> -> vector<16x2xf32>
    %372 = arith.subf %357, %371 : vector<16x2xf32>
    %373 = math.exp %372 : vector<16x2xf32>
    %374 = arith.truncf %328 : vector<10x16xf32> to vector<10x16xbf16>
    %375 = arith.truncf %373 : vector<16x2xf32> to vector<16x2xbf16>
    %cst_206 = arith.constant dense<0.000000e+00> : vector<10x2xf32>
    %376 = tpu.matmul %374, %375, %cst_206 {dimension_numbers = #tpu.dot_dimension_numbers<[1], [0], [0], [1], [0, 0, 1, 1], [], []>} : vector<10x16xbf16>, vector<16x2xbf16>, vector<10x2xf32> -> vector<10x2xf32>
    %377 = arith.truncf %326 : vector<16x10xf32> to vector<16x10xbf16>
    %378 = arith.truncf %376 : vector<10x2xf32> to vector<10x2xbf16>
    %cst_207 = arith.constant dense<0.000000e+00> : vector<16x2xf32>
    %379 = tpu.matmul %377, %378, %cst_207 {dimension_numbers = #tpu.dot_dimension_numbers<[1], [0], [0], [1], [0, 0, 1, 1], [], []>} : vector<16x10xbf16>, vector<10x2xbf16>, vector<16x2xf32> -> vector<16x2xf32>
    %380 = tpu.reciprocal %379 {approx = true} : vector<16x2xf32> -> vector<16x2xf32>
    %381 = arith.mulf %373, %380 : vector<16x2xf32>
    %c0_208 = arith.constant 0 : index
    %c0_209 = arith.constant 0 : index
    %382 = vector.load %arg10[%c0_208, %c0_209] : memref<2x128xbf16, #tpu.memory_space<vmem>>, vector<2x128xbf16>
    %383 = arith.truncf %381 : vector<16x2xf32> to vector<16x2xbf16>
    %cst_210 = arith.constant dense<0.000000e+00> : vector<16x128xf32>
    %384 = tpu.matmul %383, %382, %cst_210 {dimension_numbers = #tpu.dot_dimension_numbers<[1], [0], [0], [1], [0, 0, 1, 1], [], []>} : vector<16x2xbf16>, vector<2x128xbf16>, vector<16x128xf32> -> vector<16x128xf32>
    %385 = arith.mulf %354, %384 : vector<16x128xf32>
    %386 = arith.truncf %328 : vector<10x16xf32> to vector<10x16xbf16>
    %387 = arith.truncf %385 : vector<16x128xf32> to vector<16x128xbf16>
    %cst_211 = arith.constant dense<0.000000e+00> : vector<10x128xf32>
    %388 = tpu.matmul %386, %387, %cst_211 {dimension_numbers = #tpu.dot_dimension_numbers<[1], [0], [0], [1], [0, 0, 1, 1], [], []>} : vector<10x16xbf16>, vector<16x128xbf16>, vector<10x128xf32> -> vector<10x128xf32>
    %c0_212 = arith.constant 0 : index
    %c0_213 = arith.constant 0 : index
    %389 = vector.load %arg27[%c0_212, %c0_213] : memref<32x16xbf16, #tpu.memory_space<vmem>>, vector<32x16xbf16>
    %390 = arith.truncf %353 : vector<16x32xf32> to vector<16x32xbf16>
    %cst_214 = arith.constant dense<0.000000e+00> : vector<16x16xf32>
    %391 = tpu.matmul %390, %389, %cst_214 {dimension_numbers = #tpu.dot_dimension_numbers<[1], [0], [0], [1], [0, 0, 1, 1], [], []>} : vector<16x32xbf16>, vector<32x16xbf16>, vector<16x16xf32> -> vector<16x16xf32>
    %c0_215 = arith.constant 0 : index
    %c0_216 = arith.constant 0 : index
    %392 = vector.load %arg28[%c0_215, %c0_216] : memref<1x16xf32, #tpu.memory_space<vmem>>, vector<1x16xf32>
    %393 = vector.broadcast %392 : vector<1x16xf32> to vector<16x16xf32>
    %394 = arith.addf %391, %393 : vector<16x16xf32>
    %cst_217 = arith.constant 0.000000e+00 : f32
    %395 = vector.broadcast %cst_217 : f32 to vector<16x16xf32>
    %396 = arith.maximumf %394, %395 : vector<16x16xf32>
    %c0_218 = arith.constant 0 : index
    %c0_219 = arith.constant 0 : index
    %397 = vector.load %arg29[%c0_218, %c0_219] : memref<128x16xbf16, #tpu.memory_space<vmem>>, vector<128x16xbf16>
    %398 = arith.truncf %388 : vector<10x128xf32> to vector<10x128xbf16>
    %cst_220 = arith.constant dense<0.000000e+00> : vector<10x16xf32>
    %399 = tpu.matmul %398, %397, %cst_220 {dimension_numbers = #tpu.dot_dimension_numbers<[1], [0], [0], [1], [0, 0, 1, 1], [], []>} : vector<10x128xbf16>, vector<128x16xbf16>, vector<10x16xf32> -> vector<10x16xf32>
    %c0_221 = arith.constant 0 : index
    %c0_222 = arith.constant 0 : index
    %400 = vector.load %arg30[%c0_221, %c0_222] : memref<1x16xf32, #tpu.memory_space<vmem>>, vector<1x16xf32>
    %401 = vector.broadcast %400 : vector<1x16xf32> to vector<10x16xf32>
    %402 = arith.addf %399, %401 : vector<10x16xf32>
    %cst_223 = arith.constant 0.000000e+00 : f32
    %403 = vector.broadcast %cst_223 : f32 to vector<10x16xf32>
    %404 = arith.maximumf %402, %403 : vector<10x16xf32>
    %c0_224 = arith.constant 0 : index
    %c0_225 = arith.constant 0 : index
    %c0_226 = arith.constant 0 : index
    %405 = vector.load %arg6[%c0_224, %c0_225, %c0_226] : memref<1x12x10xf32, #tpu.memory_space<vmem>>, vector<1x12x10xf32>
    %406 = vector.shape_cast %405 : vector<1x12x10xf32> to vector<12x10xf32>
    %c0_227 = arith.constant 0 : index
    %c0_228 = arith.constant 0 : index
    %c0_229 = arith.constant 0 : index
    %407 = vector.load %arg7[%c0_227, %c0_228, %c0_229] : memref<1x12x10xf32, #tpu.memory_space<vmem>>, vector<1x12x10xf32>
    %408 = vector.shape_cast %407 : vector<1x12x10xf32> to vector<12x10xf32>
    %c0_230 = arith.constant 0 : index
    %c0_231 = arith.constant 0 : index
    %c0_232 = arith.constant 0 : index
    %409 = vector.load %arg8[%c0_230, %c0_231, %c0_232] : memref<1x10x12xf32, #tpu.memory_space<vmem>>, vector<1x10x12xf32>
    %410 = vector.shape_cast %409 : vector<1x10x12xf32> to vector<10x12xf32>
    %c0_233 = arith.constant 0 : index
    %c0_234 = arith.constant 0 : index
    %411 = vector.load %arg23[%c0_233, %c0_234] : memref<16x192xbf16, #tpu.memory_space<vmem>>, vector<16x192xbf16>
    %412 = arith.truncf %404 : vector<10x16xf32> to vector<10x16xbf16>
    %cst_235 = arith.constant dense<0.000000e+00> : vector<10x192xf32>
    %413 = tpu.matmul %412, %411, %cst_235 {dimension_numbers = #tpu.dot_dimension_numbers<[1], [0], [0], [1], [0, 0, 1, 1], [], []>} : vector<10x16xbf16>, vector<16x192xbf16>, vector<10x192xf32> -> vector<10x192xf32>
    %414 = vector.extract_strided_slice %413 {offsets = [0, 0], sizes = [10, 128], strides = [1, 1]} : vector<10x192xf32> to vector<10x128xf32>
    %415 = arith.truncf %406 : vector<12x10xf32> to vector<12x10xbf16>
    %416 = arith.truncf %414 : vector<10x128xf32> to vector<10x128xbf16>
    %cst_236 = arith.constant dense<0.000000e+00> : vector<12x128xf32>
    %417 = tpu.matmul %415, %416, %cst_236 {dimension_numbers = #tpu.dot_dimension_numbers<[1], [0], [0], [1], [0, 0, 1, 1], [], []>} : vector<12x10xbf16>, vector<10x128xbf16>, vector<12x128xf32> -> vector<12x128xf32>
    %418 = vector.extract_strided_slice %413 {offsets = [0, 128], sizes = [10, 64], strides = [1, 1]} : vector<10x192xf32> to vector<10x64xf32>
    %419 = arith.truncf %408 : vector<12x10xf32> to vector<12x10xbf16>
    %420 = arith.truncf %418 : vector<10x64xf32> to vector<10x64xbf16>
    %cst_237 = arith.constant dense<0.000000e+00> : vector<12x64xf32>
    %421 = tpu.matmul %419, %420, %cst_237 {dimension_numbers = #tpu.dot_dimension_numbers<[1], [0], [0], [1], [0, 0, 1, 1], [], []>} : vector<12x10xbf16>, vector<10x64xbf16>, vector<12x64xf32> -> vector<12x64xf32>
    %422 = vector.extract_strided_slice %417 {offsets = [0, 0], sizes = [12, 64], strides = [1, 1]} : vector<12x128xf32> to vector<12x64xf32>
    %423 = arith.addf %422, %421 : vector<12x64xf32>
    %c0_238 = arith.constant 0 : index
    %c0_239 = arith.constant 0 : index
    %424 = vector.load %arg24[%c0_238, %c0_239] : memref<16x64xbf16, #tpu.memory_space<vmem>>, vector<16x64xbf16>
    %425 = arith.truncf %243 : vector<12x16xf32> to vector<12x16xbf16>
    %cst_240 = arith.constant dense<0.000000e+00> : vector<12x64xf32>
    %426 = tpu.matmul %425, %424, %cst_240 {dimension_numbers = #tpu.dot_dimension_numbers<[1], [0], [0], [1], [0, 0, 1, 1], [], []>} : vector<12x16xbf16>, vector<16x64xbf16>, vector<12x64xf32> -> vector<12x64xf32>
    %427 = arith.addf %423, %426 : vector<12x64xf32>
    %c0_241 = arith.constant 0 : index
    %c0_242 = arith.constant 0 : index
    %428 = vector.load %arg25[%c0_241, %c0_242] : memref<1x64xf32, #tpu.memory_space<vmem>>, vector<1x64xf32>
    %429 = vector.broadcast %428 : vector<1x64xf32> to vector<12x64xf32>
    %430 = arith.addf %427, %429 : vector<12x64xf32>
    %cst_243 = arith.constant 0.000000e+00 : f32
    %431 = vector.broadcast %cst_243 : f32 to vector<12x64xf32>
    %432 = arith.cmpf oge, %430, %431 : vector<12x64xf32>
    %cst_244 = arith.constant 0.00999999977 : f32
    %433 = vector.broadcast %cst_244 : f32 to vector<12x64xf32>
    %434 = arith.mulf %433, %430 : vector<12x64xf32>
    %435 = arith.select %432, %430, %434 : vector<12x64xi1>, vector<12x64xf32>
    %436 = vector.extract_strided_slice %417 {offsets = [0, 64], sizes = [12, 64], strides = [1, 1]} : vector<12x128xf32> to vector<12x64xf32>
    %c0_245 = arith.constant 0 : index
    %c0_246 = arith.constant 0 : index
    %437 = vector.load %arg26[%c0_245, %c0_246] : memref<64x2xbf16, #tpu.memory_space<vmem>>, vector<64x2xbf16>
    %438 = arith.truncf %435 : vector<12x64xf32> to vector<12x64xbf16>
    %cst_247 = arith.constant dense<0.000000e+00> : vector<12x2xf32>
    %439 = tpu.matmul %438, %437, %cst_247 {dimension_numbers = #tpu.dot_dimension_numbers<[1], [0], [0], [1], [0, 0, 1, 1], [], []>} : vector<12x64xbf16>, vector<64x2xbf16>, vector<12x2xf32> -> vector<12x2xf32>
    %440 = vector.shape_cast %408 : vector<12x10xf32> to vector<12x10x1xf32>
    %cst_248 = arith.constant 0.000000e+00 : f32
    %441 = vector.broadcast %cst_248 : f32 to vector<12x10x1xf32>
    %442 = arith.cmpf ogt, %440, %441 : vector<12x10x1xf32>
    %443 = vector.shape_cast %439 : vector<12x2xf32> to vector<12x1x2xf32>
    %cst_249 = arith.constant -1.000000e+30 : f32
    %444 = vector.shape_cast %442 : vector<12x10x1xi1> to vector<12x10x1xi1>
    %445 = vector.broadcast %444 : vector<12x10x1xi1> to vector<12x10x2xi1>
    %446 = vector.shape_cast %443 : vector<12x1x2xf32> to vector<12x1x2xf32>
    %447 = vector.broadcast %446 : vector<12x1x2xf32> to vector<12x10x2xf32>
    %448 = vector.broadcast %cst_249 : f32 to vector<12x10x2xf32>
    %449 = arith.select %445, %447, %448 : vector<12x10x2xi1>, vector<12x10x2xf32>
    %cst_250 = arith.constant dense<0xFF800000> : vector<10x2xf32>
    %450 = vector.multi_reduction <maximumf>, %449, %cst_250 [0] : vector<12x10x2xf32> to vector<10x2xf32>
    %451 = arith.truncf %408 : vector<12x10xf32> to vector<12x10xbf16>
    %452 = arith.truncf %450 : vector<10x2xf32> to vector<10x2xbf16>
    %cst_251 = arith.constant dense<0.000000e+00> : vector<12x2xf32>
    %453 = tpu.matmul %451, %452, %cst_251 {dimension_numbers = #tpu.dot_dimension_numbers<[1], [0], [0], [1], [0, 0, 1, 1], [], []>} : vector<12x10xbf16>, vector<10x2xbf16>, vector<12x2xf32> -> vector<12x2xf32>
    %454 = arith.subf %439, %453 : vector<12x2xf32>
    %455 = math.exp %454 : vector<12x2xf32>
    %456 = arith.truncf %410 : vector<10x12xf32> to vector<10x12xbf16>
    %457 = arith.truncf %455 : vector<12x2xf32> to vector<12x2xbf16>
    %cst_252 = arith.constant dense<0.000000e+00> : vector<10x2xf32>
    %458 = tpu.matmul %456, %457, %cst_252 {dimension_numbers = #tpu.dot_dimension_numbers<[1], [0], [0], [1], [0, 0, 1, 1], [], []>} : vector<10x12xbf16>, vector<12x2xbf16>, vector<10x2xf32> -> vector<10x2xf32>
    %459 = arith.truncf %408 : vector<12x10xf32> to vector<12x10xbf16>
    %460 = arith.truncf %458 : vector<10x2xf32> to vector<10x2xbf16>
    %cst_253 = arith.constant dense<0.000000e+00> : vector<12x2xf32>
    %461 = tpu.matmul %459, %460, %cst_253 {dimension_numbers = #tpu.dot_dimension_numbers<[1], [0], [0], [1], [0, 0, 1, 1], [], []>} : vector<12x10xbf16>, vector<10x2xbf16>, vector<12x2xf32> -> vector<12x2xf32>
    %462 = tpu.reciprocal %461 {approx = true} : vector<12x2xf32> -> vector<12x2xf32>
    %463 = arith.mulf %455, %462 : vector<12x2xf32>
    %c0_254 = arith.constant 0 : index
    %c0_255 = arith.constant 0 : index
    %464 = vector.load %arg9[%c0_254, %c0_255] : memref<2x64xbf16, #tpu.memory_space<vmem>>, vector<2x64xbf16>
    %465 = arith.truncf %463 : vector<12x2xf32> to vector<12x2xbf16>
    %cst_256 = arith.constant dense<0.000000e+00> : vector<12x64xf32>
    %466 = tpu.matmul %465, %464, %cst_256 {dimension_numbers = #tpu.dot_dimension_numbers<[1], [0], [0], [1], [0, 0, 1, 1], [], []>} : vector<12x2xbf16>, vector<2x64xbf16>, vector<12x64xf32> -> vector<12x64xf32>
    %467 = arith.mulf %436, %466 : vector<12x64xf32>
    %468 = arith.truncf %410 : vector<10x12xf32> to vector<10x12xbf16>
    %469 = arith.truncf %467 : vector<12x64xf32> to vector<12x64xbf16>
    %cst_257 = arith.constant dense<0.000000e+00> : vector<10x64xf32>
    %470 = tpu.matmul %468, %469, %cst_257 {dimension_numbers = #tpu.dot_dimension_numbers<[1], [0], [0], [1], [0, 0, 1, 1], [], []>} : vector<10x12xbf16>, vector<12x64xbf16>, vector<10x64xf32> -> vector<10x64xf32>
    %c0_258 = arith.constant 0 : index
    %c0_259 = arith.constant 0 : index
    %471 = vector.load %arg31[%c0_258, %c0_259] : memref<64x16xbf16, #tpu.memory_space<vmem>>, vector<64x16xbf16>
    %472 = arith.truncf %470 : vector<10x64xf32> to vector<10x64xbf16>
    %cst_260 = arith.constant dense<0.000000e+00> : vector<10x16xf32>
    %473 = tpu.matmul %472, %471, %cst_260 {dimension_numbers = #tpu.dot_dimension_numbers<[1], [0], [0], [1], [0, 0, 1, 1], [], []>} : vector<10x64xbf16>, vector<64x16xbf16>, vector<10x16xf32> -> vector<10x16xf32>
    %c0_261 = arith.constant 0 : index
    %c0_262 = arith.constant 0 : index
    %474 = vector.load %arg32[%c0_261, %c0_262] : memref<1x16xf32, #tpu.memory_space<vmem>>, vector<1x16xf32>
    %475 = vector.broadcast %474 : vector<1x16xf32> to vector<10x16xf32>
    %476 = arith.addf %473, %475 : vector<10x16xf32>
    %cst_263 = arith.constant 0.000000e+00 : f32
    %477 = vector.broadcast %cst_263 : f32 to vector<10x16xf32>
    %478 = arith.maximumf %476, %477 : vector<10x16xf32>
    %479 = arith.addf %404, %478 : vector<10x16xf32>
    %c0_264 = arith.constant 0 : index
    %c0_265 = arith.constant 0 : index
    %c0_266 = arith.constant 0 : index
    %480 = vector.load %arg41[%c0_264, %c0_265, %c0_266] : memref<1x16x16xf32, #tpu.memory_space<vmem>>, vector<1x16x16xf32>
    %481 = vector.shape_cast %480 : vector<1x16x16xf32> to vector<16x16xf32>
    %482 = vector.shape_cast %396 : vector<16x16xf32> to vector<1x16x16xf32>
    tpu.vector_store %arg41[%c0_264, %c0_265, %c0_266], %482 {strides = array<i32>} : memref<1x16x16xf32, #tpu.memory_space<vmem>>, vector<1x16x16xf32>,
    %c0_267 = arith.constant 0 : index
    %c0_268 = arith.constant 0 : index
    %c0_269 = arith.constant 0 : index
    %483 = vector.load %arg42[%c0_267, %c0_268, %c0_269] : memref<1x10x16xf32, #tpu.memory_space<vmem>>, vector<1x10x16xf32>
    %484 = vector.shape_cast %483 : vector<1x10x16xf32> to vector<10x16xf32>
    %485 = vector.shape_cast %479 : vector<10x16xf32> to vector<1x10x16xf32>
    tpu.vector_store %arg42[%c0_267, %c0_268, %c0_269], %485 {strides = array<i32>} : memref<1x10x16xf32, #tpu.memory_space<vmem>>, vector<1x10x16xf32>,
    %486 = tpu.iota {dimensions = array<i32: 0>} : vector<10x16xi32>
    %c4_i32 = arith.constant 4 : i32
    %487 = vector.broadcast %c4_i32 : i32 to vector<10x16xi32>
    %488 = arith.cmpi sge, %486, %487 : vector<10x16xi32>
    %cst_270 = arith.constant -1.000000e+30 : f32
    %489 = vector.broadcast %cst_270 : f32 to vector<10x16xf32>
    %490 = arith.select %488, %479, %489 : vector<10x16xi1>, vector<10x16xf32>
    %cst_271 = arith.constant dense<0xFF800000> : vector<16xf32>
    %491 = vector.multi_reduction <maximumf>, %490, %cst_271 [0] : vector<10x16xf32> to vector<16xf32>
    %492 = vector.shape_cast %491 : vector<16xf32> to vector<1x16xf32>
    %c0_272 = arith.constant 0 : index
    %c0_273 = arith.constant 0 : index
    %493 = vector.load %arg35[%c0_272, %c0_273] : memref<16x16xbf16, #tpu.memory_space<vmem>>, vector<16x16xbf16>
    %494 = arith.truncf %492 : vector<1x16xf32> to vector<1x16xbf16>
    %cst_274 = arith.constant dense<0.000000e+00> : vector<1x16xf32>
    %495 = tpu.matmul %494, %493, %cst_274 {dimension_numbers = #tpu.dot_dimension_numbers<[1], [0], [0], [1], [0, 0, 1, 1], [], []>} : vector<1x16xbf16>, vector<16x16xbf16>, vector<1x16xf32> -> vector<1x16xf32>
    %c0_275 = arith.constant 0 : index
    %c0_276 = arith.constant 0 : index
    %496 = vector.load %arg36[%c0_275, %c0_276] : memref<1x16xf32, #tpu.memory_space<vmem>>, vector<1x16xf32>
    %497 = arith.addf %495, %496 : vector<1x16xf32>
    %cst_277 = arith.constant 0.000000e+00 : f32
    %498 = vector.broadcast %cst_277 : f32 to vector<1x16xf32>
    %499 = arith.maximumf %497, %498 : vector<1x16xf32>
    %c0_278 = arith.constant 0 : index
    %c0_279 = arith.constant 0 : index
    %500 = vector.load %arg37[%c0_278, %c0_279] : memref<16x16xbf16, #tpu.memory_space<vmem>>, vector<16x16xbf16>
    %501 = arith.truncf %499 : vector<1x16xf32> to vector<1x16xbf16>
    %cst_280 = arith.constant dense<0.000000e+00> : vector<1x16xf32>
    %502 = tpu.matmul %501, %500, %cst_280 {dimension_numbers = #tpu.dot_dimension_numbers<[1], [0], [0], [1], [0, 0, 1, 1], [], []>} : vector<1x16xbf16>, vector<16x16xbf16>, vector<1x16xf32> -> vector<1x16xf32>
    %c0_281 = arith.constant 0 : index
    %c0_282 = arith.constant 0 : index
    %503 = vector.load %arg38[%c0_281, %c0_282] : memref<1x16xf32, #tpu.memory_space<vmem>>, vector<1x16xf32>
    %504 = arith.addf %502, %503 : vector<1x16xf32>
    %cst_283 = arith.constant 0.000000e+00 : f32
    %505 = vector.broadcast %cst_283 : f32 to vector<1x16xf32>
    %506 = arith.maximumf %504, %505 : vector<1x16xf32>
    %c0_284 = arith.constant 0 : index
    %c0_285 = arith.constant 0 : index
    %507 = vector.load %arg39[%c0_284, %c0_285] : memref<16x3xbf16, #tpu.memory_space<vmem>>, vector<16x3xbf16>
    %508 = arith.truncf %506 : vector<1x16xf32> to vector<1x16xbf16>
    %cst_286 = arith.constant dense<0.000000e+00> : vector<1x3xf32>
    %509 = tpu.matmul %508, %507, %cst_286 {dimension_numbers = #tpu.dot_dimension_numbers<[1], [0], [0], [1], [0, 0, 1, 1], [], []>} : vector<1x16xbf16>, vector<16x3xbf16>, vector<1x3xf32> -> vector<1x3xf32>
    %c0_287 = arith.constant 0 : index
    %c0_288 = arith.constant 0 : index
    %510 = vector.load %arg40[%c0_287, %c0_288] : memref<1x3xf32, #tpu.memory_space<vmem>>, vector<1x3xf32>
    %511 = arith.addf %509, %510 : vector<1x3xf32>
    %c0_289 = arith.constant 0 : index
    %c0_290 = arith.constant 0 : index
    %c0_291 = arith.constant 0 : index
    %512 = vector.load %arg43[%c0_289, %c0_290, %c0_291] : memref<1x1x3xf32, #tpu.memory_space<vmem>>, vector<1x1x3xf32>
    %513 = vector.shape_cast %512 : vector<1x1x3xf32> to vector<1x3xf32>
    %514 = vector.shape_cast %511 : vector<1x3xf32> to vector<1x1x3xf32>
    tpu.vector_store %arg43[%c0_289, %c0_290, %c0_291], %514 {strides = array<i32>} : memref<1x1x3xf32, #tpu.memory_space<vmem>>, vector<1x1x3xf32>,
    return
  }
  func.func @transform_0(%arg0: i32) -> (i32, i32, i32) {
    %c0_i32 = arith.constant 0 : i32
    %c0_i32_0 = arith.constant 0 : i32
    %c0_i32_1 = arith.constant 0 : i32
    return %arg0, %c0_i32, %c0_i32_0 : i32, i32, i32
  }
  func.func @transform_1(%arg0: i32) -> (i32, i32, i32) {
    %c0_i32 = arith.constant 0 : i32
    %c0_i32_0 = arith.constant 0 : i32
    %c0_i32_1 = arith.constant 0 : i32
    return %arg0, %c0_i32, %c0_i32_0 : i32, i32, i32
  }
  func.func @transform_2(%arg0: i32) -> (i32, i32, i32) {
    %c0_i32 = arith.constant 0 : i32
    %c0_i32_0 = arith.constant 0 : i32
    %c0_i32_1 = arith.constant 0 : i32
    return %arg0, %c0_i32, %c0_i32_0 : i32, i32, i32
  }
  func.func @transform_3(%arg0: i32) -> (i32, i32, i32) {
    %c0_i32 = arith.constant 0 : i32
    %c0_i32_0 = arith.constant 0 : i32
    %c0_i32_1 = arith.constant 0 : i32
    return %arg0, %c0_i32, %c0_i32_0 : i32, i32, i32
  }
  func.func @transform_4(%arg0: i32) -> (i32, i32, i32) {
    %c0_i32 = arith.constant 0 : i32
    %c0_i32_0 = arith.constant 0 : i32
    %c0_i32_1 = arith.constant 0 : i32
    return %arg0, %c0_i32, %c0_i32_0 : i32, i32, i32
  }
  func.func @transform_5(%arg0: i32) -> (i32, i32, i32) {
    %c0_i32 = arith.constant 0 : i32
    %c0_i32_0 = arith.constant 0 : i32
    %c0_i32_1 = arith.constant 0 : i32
    return %arg0, %c0_i32, %c0_i32_0 : i32, i32, i32
  }
  func.func @transform_6(%arg0: i32) -> (i32, i32, i32) {
    %c0_i32 = arith.constant 0 : i32
    %c0_i32_0 = arith.constant 0 : i32
    %c0_i32_1 = arith.constant 0 : i32
    return %arg0, %c0_i32, %c0_i32_0 : i32, i32, i32
  }
  func.func @transform_7(%arg0: i32) -> (i32, i32, i32) {
    %c0_i32 = arith.constant 0 : i32
    %c0_i32_0 = arith.constant 0 : i32
    %c0_i32_1 = arith.constant 0 : i32
    return %arg0, %c0_i32, %c0_i32_0 : i32, i32, i32
  }
  func.func @transform_8(%arg0: i32) -> (i32, i32) {
    %c0_i32 = arith.constant 0 : i32
    %c0_i32_0 = arith.constant 0 : i32
    %c0_i32_1 = arith.constant 0 : i32
    return %c0_i32, %c0_i32_0 : i32, i32
  }
  func.func @transform_9(%arg0: i32) -> (i32, i32) {
    %c0_i32 = arith.constant 0 : i32
    %c0_i32_0 = arith.constant 0 : i32
    %c0_i32_1 = arith.constant 0 : i32
    return %c0_i32, %c0_i32_0 : i32, i32
  }
  func.func @transform_10(%arg0: i32) -> (i32, i32) {
    %c0_i32 = arith.constant 0 : i32
    %c0_i32_0 = arith.constant 0 : i32
    %c0_i32_1 = arith.constant 0 : i32
    return %c0_i32, %c0_i32_0 : i32, i32
  }
  func.func @transform_11(%arg0: i32) -> (i32, i32) {
    %c0_i32 = arith.constant 0 : i32
    %c0_i32_0 = arith.constant 0 : i32
    %c0_i32_1 = arith.constant 0 : i32
    return %c0_i32, %c0_i32_0 : i32, i32
  }
  func.func @transform_12(%arg0: i32) -> (i32, i32) {
    %c0_i32 = arith.constant 0 : i32
    %c0_i32_0 = arith.constant 0 : i32
    %c0_i32_1 = arith.constant 0 : i32
    return %c0_i32, %c0_i32_0 : i32, i32
  }
  func.func @transform_13(%arg0: i32) -> (i32, i32) {
    %c0_i32 = arith.constant 0 : i32
    %c0_i32_0 = arith.constant 0 : i32
    %c0_i32_1 = arith.constant 0 : i32
    return %c0_i32, %c0_i32_0 : i32, i32
  }
  func.func @transform_14(%arg0: i32) -> (i32, i32) {
    %c0_i32 = arith.constant 0 : i32
    %c0_i32_0 = arith.constant 0 : i32
    %c0_i32_1 = arith.constant 0 : i32
    return %c0_i32, %c0_i32_0 : i32, i32
  }
  func.func @transform_15(%arg0: i32) -> (i32, i32) {
    %c0_i32 = arith.constant 0 : i32
    %c0_i32_0 = arith.constant 0 : i32
    %c0_i32_1 = arith.constant 0 : i32
    return %c0_i32, %c0_i32_0 : i32, i32
  }
  func.func @transform_16(%arg0: i32) -> (i32, i32) {
    %c0_i32 = arith.constant 0 : i32
    %c0_i32_0 = arith.constant 0 : i32
    %c0_i32_1 = arith.constant 0 : i32
    return %c0_i32, %c0_i32_0 : i32, i32
  }
  func.func @transform_17(%arg0: i32) -> (i32, i32) {
    %c0_i32 = arith.constant 0 : i32
    %c0_i32_0 = arith.constant 0 : i32
    %c0_i32_1 = arith.constant 0 : i32
    return %c0_i32, %c0_i32_0 : i32, i32
  }
  func.func @transform_18(%arg0: i32) -> (i32, i32) {
    %c0_i32 = arith.constant 0 : i32
    %c0_i32_0 = arith.constant 0 : i32
    %c0_i32_1 = arith.constant 0 : i32
    return %c0_i32, %c0_i32_0 : i32, i32
  }
  func.func @transform_19(%arg0: i32) -> (i32, i32) {
    %c0_i32 = arith.constant 0 : i32
    %c0_i32_0 = arith.constant 0 : i32
    %c0_i32_1 = arith.constant 0 : i32
    return %c0_i32, %c0_i32_0 : i32, i32
  }
  func.func @transform_20(%arg0: i32) -> (i32, i32) {
    %c0_i32 = arith.constant 0 : i32
    %c0_i32_0 = arith.constant 0 : i32
    %c0_i32_1 = arith.constant 0 : i32
    return %c0_i32, %c0_i32_0 : i32, i32
  }
  func.func @transform_21(%arg0: i32) -> (i32, i32) {
    %c0_i32 = arith.constant 0 : i32
    %c0_i32_0 = arith.constant 0 : i32
    %c0_i32_1 = arith.constant 0 : i32
    return %c0_i32, %c0_i32_0 : i32, i32
  }
  func.func @transform_22(%arg0: i32) -> (i32, i32) {
    %c0_i32 = arith.constant 0 : i32
    %c0_i32_0 = arith.constant 0 : i32
    %c0_i32_1 = arith.constant 0 : i32
    return %c0_i32, %c0_i32_0 : i32, i32
  }
  func.func @transform_23(%arg0: i32) -> (i32, i32) {
    %c0_i32 = arith.constant 0 : i32
    %c0_i32_0 = arith.constant 0 : i32
    %c0_i32_1 = arith.constant 0 : i32
    return %c0_i32, %c0_i32_0 : i32, i32
  }
  func.func @transform_24(%arg0: i32) -> (i32, i32) {
    %c0_i32 = arith.constant 0 : i32
    %c0_i32_0 = arith.constant 0 : i32
    %c0_i32_1 = arith.constant 0 : i32
    return %c0_i32, %c0_i32_0 : i32, i32
  }
  func.func @transform_25(%arg0: i32) -> (i32, i32) {
    %c0_i32 = arith.constant 0 : i32
    %c0_i32_0 = arith.constant 0 : i32
    %c0_i32_1 = arith.constant 0 : i32
    return %c0_i32, %c0_i32_0 : i32, i32
  }
  func.func @transform_26(%arg0: i32) -> (i32, i32) {
    %c0_i32 = arith.constant 0 : i32
    %c0_i32_0 = arith.constant 0 : i32
    %c0_i32_1 = arith.constant 0 : i32
    return %c0_i32, %c0_i32_0 : i32, i32
  }
  func.func @transform_27(%arg0: i32) -> (i32, i32) {
    %c0_i32 = arith.constant 0 : i32
    %c0_i32_0 = arith.constant 0 : i32
    %c0_i32_1 = arith.constant 0 : i32
    return %c0_i32, %c0_i32_0 : i32, i32
  }
  func.func @transform_28(%arg0: i32) -> (i32, i32) {
    %c0_i32 = arith.constant 0 : i32
    %c0_i32_0 = arith.constant 0 : i32
    %c0_i32_1 = arith.constant 0 : i32
    return %c0_i32, %c0_i32_0 : i32, i32
  }
  func.func @transform_29(%arg0: i32) -> (i32, i32) {
    %c0_i32 = arith.constant 0 : i32
    %c0_i32_0 = arith.constant 0 : i32
    %c0_i32_1 = arith.constant 0 : i32
    return %c0_i32, %c0_i32_0 : i32, i32
  }
  func.func @transform_30(%arg0: i32) -> (i32, i32) {
    %c0_i32 = arith.constant 0 : i32
    %c0_i32_0 = arith.constant 0 : i32
    %c0_i32_1 = arith.constant 0 : i32
    return %c0_i32, %c0_i32_0 : i32, i32
  }
  func.func @transform_31(%arg0: i32) -> (i32, i32) {
    %c0_i32 = arith.constant 0 : i32
    %c0_i32_0 = arith.constant 0 : i32
    %c0_i32_1 = arith.constant 0 : i32
    return %c0_i32, %c0_i32_0 : i32, i32
  }
  func.func @transform_32(%arg0: i32) -> (i32, i32) {
    %c0_i32 = arith.constant 0 : i32
    %c0_i32_0 = arith.constant 0 : i32
    %c0_i32_1 = arith.constant 0 : i32
    return %c0_i32, %c0_i32_0 : i32, i32
  }
  func.func @transform_33(%arg0: i32) -> (i32, i32) {
    %c0_i32 = arith.constant 0 : i32
    %c0_i32_0 = arith.constant 0 : i32
    %c0_i32_1 = arith.constant 0 : i32
    return %c0_i32, %c0_i32_0 : i32, i32
  }
  func.func @transform_34(%arg0: i32) -> (i32, i32) {
    %c0_i32 = arith.constant 0 : i32
    %c0_i32_0 = arith.constant 0 : i32
    %c0_i32_1 = arith.constant 0 : i32
    return %c0_i32, %c0_i32_0 : i32, i32
  }
  func.func @transform_35(%arg0: i32) -> (i32, i32) {
    %c0_i32 = arith.constant 0 : i32
    %c0_i32_0 = arith.constant 0 : i32
    %c0_i32_1 = arith.constant 0 : i32
    return %c0_i32, %c0_i32_0 : i32, i32
  }
  func.func @transform_36(%arg0: i32) -> (i32, i32) {
    %c0_i32 = arith.constant 0 : i32
    %c0_i32_0 = arith.constant 0 : i32
    %c0_i32_1 = arith.constant 0 : i32
    return %c0_i32, %c0_i32_0 : i32, i32
  }
  func.func @transform_37(%arg0: i32) -> (i32, i32) {
    %c0_i32 = arith.constant 0 : i32
    %c0_i32_0 = arith.constant 0 : i32
    %c0_i32_1 = arith.constant 0 : i32
    return %c0_i32, %c0_i32_0 : i32, i32
  }
  func.func @transform_38(%arg0: i32) -> (i32, i32) {
    %c0_i32 = arith.constant 0 : i32
    %c0_i32_0 = arith.constant 0 : i32
    %c0_i32_1 = arith.constant 0 : i32
    return %c0_i32, %c0_i32_0 : i32, i32
  }
  func.func @transform_39(%arg0: i32) -> (i32, i32) {
    %c0_i32 = arith.constant 0 : i32
    %c0_i32_0 = arith.constant 0 : i32
    %c0_i32_1 = arith.constant 0 : i32
    return %c0_i32, %c0_i32_0 : i32, i32
  }
  func.func @transform_40(%arg0: i32) -> (i32, i32, i32) {
    %c0_i32 = arith.constant 0 : i32
    %c0_i32_0 = arith.constant 0 : i32
    %c0_i32_1 = arith.constant 0 : i32
    return %arg0, %c0_i32, %c0_i32_0 : i32, i32, i32
  }
  func.func @transform_41(%arg0: i32) -> (i32, i32, i32) {
    %c0_i32 = arith.constant 0 : i32
    %c0_i32_0 = arith.constant 0 : i32
    %c0_i32_1 = arith.constant 0 : i32
    return %arg0, %c0_i32, %c0_i32_0 : i32, i32, i32
  }
  func.func @transform_42(%arg0: i32) -> (i32, i32, i32) {
    %c0_i32 = arith.constant 0 : i32
    %c0_i32_0 = arith.constant 0 : i32
    %c0_i32_1 = arith.constant 0 : i32
    return %arg0, %c0_i32, %c0_i32_0 : i32, i32, i32
  }
}

</mosaic_0001>

<llo_original>
// kernel: gat_mlp_forward.1
$region0: #{gat_mlp_forward.1}
  #allocation0 [shape = 'u32[]', space=smem, size = 0x4, offset = 0x4, fixed_abs, tag = 'smem constant byte address 0x4 - core index']
  #allocation1 [shape = 'u32[144,128]{1,0:T(1,128)}', space=vmem, size = 0x12000, scoped, tag = 'internal scratch']
  %s0 = inlined_call_operand.smem [shape: u32[43], index: -1, kind: input, shape index: {}]
  %s1 = sld [smem:[%s0]]
  %s2 = scalar_lea.smem %s0, 1
  %s3 = sld [smem:[%s2]]
  %s4 = scalar_lea.smem %s0, 2
  %s5 = sld [smem:[%s4]]
  %s6 = scalar_lea.smem %s0, 3
  %s7 = sld [smem:[%s6]]
  %s8 = scalar_lea.smem %s0, 4
  %s9 = sld [smem:[%s8]]
  %s10 = scalar_lea.smem %s0, 5
  %s11 = sld [smem:[%s10]]
  %s12 = scalar_lea.smem %s0, 6
  %s13 = sld [smem:[%s12]]
  %s14 = scalar_lea.smem %s0, 7
  %s15 = sld [smem:[%s14]]
  %s16 = scalar_lea.smem %s0, 8
  %s17 = sld [smem:[%s16]]
  %s18 = scalar_lea.smem %s0, 9
  %s19 = sld [smem:[%s18]]
  %s20 = scalar_lea.smem %s0, 10
  %s21 = sld [smem:[%s20]]
  %s22 = scalar_lea.smem %s0, 11
  %s23 = sld [smem:[%s22]]
  %s24 = scalar_lea.smem %s0, 12
  %s25 = sld [smem:[%s24]]
  %s26 = scalar_lea.smem %s0, 13
  %s27 = sld [smem:[%s26]]
  %s28 = scalar_lea.smem %s0, 14
  %s29 = sld [smem:[%s28]]
  %s30 = scalar_lea.smem %s0, 15
  %s31 = sld [smem:[%s30]]
  %s32 = scalar_lea.smem %s0, 16
  %s33 = sld [smem:[%s32]]
  %s34 = scalar_lea.smem %s0, 17
  %s35 = sld [smem:[%s34]]
  %s36 = scalar_lea.smem %s0, 18
  %s37 = sld [smem:[%s36]]
  %s38 = scalar_lea.smem %s0, 19
  %s39 = sld [smem:[%s38]]
  %s40 = scalar_lea.smem %s0, 20
  %s41 = sld [smem:[%s40]]
  %s42 = scalar_lea.smem %s0, 21
  %s43 = sld [smem:[%s42]]
  %s44 = scalar_lea.smem %s0, 22
  %s45 = sld [smem:[%s44]]
  %s46 = scalar_lea.smem %s0, 23
  %s47 = sld [smem:[%s46]]
  %s48 = scalar_lea.smem %s0, 24
  %s49 = sld [smem:[%s48]]
  %s50 = scalar_lea.smem %s0, 25
  %s51 = sld [smem:[%s50]]
  %s52 = scalar_lea.smem %s0, 26
  %s53 = sld [smem:[%s52]]
  %s54 = scalar_lea.smem %s0, 27
  %s55 = sld [smem:[%s54]]
  %s56 = scalar_lea.smem %s0, 28
  %s57 = sld [smem:[%s56]]
  %s58 = scalar_lea.smem %s0, 29
  %s59 = sld [smem:[%s58]]
  %s60 = scalar_lea.smem %s0, 30
  %s61 = sld [smem:[%s60]]
  %s62 = scalar_lea.smem %s0, 31
  %s63 = sld [smem:[%s62]]
  %s64 = scalar_lea.smem %s0, 32
  %s65 = sld [smem:[%s64]]
  %s66 = scalar_lea.smem %s0, 33
  %s67 = sld [smem:[%s66]]
  %s68 = scalar_lea.smem %s0, 34
  %s69 = sld [smem:[%s68]]
  %s70 = scalar_lea.smem %s0, 35
  %s71 = sld [smem:[%s70]]
  %s72 = scalar_lea.smem %s0, 36
  %s73 = sld [smem:[%s72]]
  %s74 = scalar_lea.smem %s0, 37
  %s75 = sld [smem:[%s74]]
  %s76 = scalar_lea.smem %s0, 38
  %s77 = sld [smem:[%s76]]
  %s78 = scalar_lea.smem %s0, 39
  %s79 = sld [smem:[%s78]]
  %s80 = scalar_lea.smem %s0, 40
  %s81 = sld [smem:[%s80]]
  %s82 = scalar_lea.smem %s0, 41
  %s83 = sld [smem:[%s82]]
  %s84 = scalar_lea.smem %s0, 42
  %s85 = sld [smem:[%s84]]
  %86 = xla_tuple %s81, %s83, %s85
  %s87 = sld [smem:[#allocation0]]
  $region209: #{gat_mlp_forward.1} parent=0
    _
  %s89 = ssub.s32 1, %s87
  %s90 = scalar_select 0, %s89, %s87
  $region1: #{gat_mlp_forward.1} parent=0
    #allocation2 [shape = 'u8[16384]{0}', space=vmem, size = 0x4000, scoped, tag = 'output window, operand 0']
    #allocation3 [shape = 's32[2]{0}', space=sflag, size = 0x8, scoped, tag = 'scoped memory for gat_mlp_forward.1']
    %91 = vsyncpa [#allocation3], 0
    %s92 = scalar_lea.sflag [#allocation3], 1
    %93 = vsyncpa %s92, 0
    loop: start=0, step=1, limit=6
    $region2: #{gat_mlp_forward.1} parent=1 // loop_pre_header
      _
    $region3: #{gat_mlp_forward.1} parent=1 // loop_header
      %s95 = sphi 0, %s99
      %p96 = scmp.ge.s32.totalorder %s95, 6
      %s105 = sphi 0, %s107
      %s108 = sphi 0, %s105
      %s109 = sphi 0, %s108
      %s125 = sphi 0, %s109
      %s131 = sphi 0, %s133
      %s134 = sphi 0, %s131
      %s135 = sphi 0, %s134
      %s151 = sphi 0, %s135
      %s157 = sphi 0, %s159
      %s160 = sphi 0, %s157
      %s161 = sphi 0, %s160
      %s177 = sphi 0, %s161
      %s183 = sphi 0, %s185
      %s186 = sphi 0, %s183
      %s187 = sphi 0, %s186
      %s203 = sphi 0, %s187
      %s209 = sphi 0, %s211
      %s212 = sphi 0, %s209
      %s213 = sphi 0, %s212
      %s229 = sphi 0, %s213
      %s235 = sphi 0, %s237
      %s238 = sphi 0, %s235
      %s239 = sphi 0, %s238
      %s255 = sphi 0, %s239
      %s261 = sphi 0, %s263
      %s264 = sphi 0, %s261
      %s265 = sphi 0, %s264
      %s281 = sphi 0, %s265
      %s287 = sphi 0, %s289
      %s290 = sphi 0, %s287
      %s291 = sphi 0, %s290
      %s307 = sphi 0, %s291
      %s311 = sphi 0, %s311
      %s313 = sphi 0, %s311
      %s314 = sphi 0, %s313
      %s328 = sphi 0, %s314
      %s332 = sphi 0, %s332
      %s334 = sphi 0, %s332
      %s335 = sphi 0, %s334
      %s349 = sphi 0, %s335
      %s353 = sphi 0, %s353
      %s355 = sphi 0, %s353
      %s356 = sphi 0, %s355
      %s370 = sphi 0, %s356
      %s374 = sphi 0, %s374
      %s376 = sphi 0, %s374
      %s377 = sphi 0, %s376
      %s391 = sphi 0, %s377
      %s395 = sphi 0, %s395
      %s397 = sphi 0, %s395
      %s398 = sphi 0, %s397
      %s412 = sphi 0, %s398
      %s416 = sphi 0, %s416
      %s418 = sphi 0, %s416
      %s419 = sphi 0, %s418
      %s433 = sphi 0, %s419
      %s437 = sphi 0, %s437
      %s439 = sphi 0, %s437
      %s440 = sphi 0, %s439
      %s454 = sphi 0, %s440
      %s458 = sphi 0, %s458
      %s460 = sphi 0, %s458
      %s461 = sphi 0, %s460
      %s475 = sphi 0, %s461
      %s479 = sphi 0, %s479
      %s481 = sphi 0, %s479
      %s482 = sphi 0, %s481
      %s496 = sphi 0, %s482
      %s500 = sphi 0, %s500
      %s502 = sphi 0, %s500
      %s503 = sphi 0, %s502
      %s517 = sphi 0, %s503
      %s521 = sphi 0, %s521
      %s523 = sphi 0, %s521
      %s524 = sphi 0, %s523
      %s538 = sphi 0, %s524
      %s542 = sphi 0, %s542
      %s544 = sphi 0, %s542
      %s545 = sphi 0, %s544
      %s559 = sphi 0, %s545
      %s563 = sphi 0, %s563
      %s565 = sphi 0, %s563
      %s566 = sphi 0, %s565
      %s580 = sphi 0, %s566
      %s584 = sphi 0, %s584
      %s586 = sphi 0, %s584
      %s587 = sphi 0, %s586
      %s601 = sphi 0, %s587
      %s605 = sphi 0, %s605
      %s607 = sphi 0, %s605
      %s608 = sphi 0, %s607
      %s622 = sphi 0, %s608
      %s626 = sphi 0, %s626
      %s628 = sphi 0, %s626
      %s629 = sphi 0, %s628
      %s643 = sphi 0, %s629
      %s647 = sphi 0, %s647
      %s649 = sphi 0, %s647
      %s650 = sphi 0, %s649
      %s664 = sphi 0, %s650
      %s668 = sphi 0, %s668
      %s670 = sphi 0, %s668
      %s671 = sphi 0, %s670
      %s685 = sphi 0, %s671
      %s689 = sphi 0, %s689
      %s691 = sphi 0, %s689
      %s692 = sphi 0, %s691
      %s706 = sphi 0, %s692
      %s710 = sphi 0, %s710
      %s712 = sphi 0, %s710
      %s713 = sphi 0, %s712
      %s727 = sphi 0, %s713
      %s731 = sphi 0, %s731
      %s733 = sphi 0, %s731
      %s734 = sphi 0, %s733
      %s748 = sphi 0, %s734
      %s752 = sphi 0, %s752
      %s754 = sphi 0, %s752
      %s755 = sphi 0, %s754
      %s769 = sphi 0, %s755
      %s773 = sphi 0, %s773
      %s775 = sphi 0, %s773
      %s776 = sphi 0, %s775
      %s790 = sphi 0, %s776
      %s794 = sphi 0, %s794
      %s796 = sphi 0, %s794
      %s797 = sphi 0, %s796
      %s811 = sphi 0, %s797
      %s815 = sphi 0, %s815
      %s817 = sphi 0, %s815
      %s818 = sphi 0, %s817
      %s832 = sphi 0, %s818
      %s836 = sphi 0, %s836
      %s838 = sphi 0, %s836
      %s839 = sphi 0, %s838
      %s853 = sphi 0, %s839
      %s857 = sphi 0, %s857
      %s859 = sphi 0, %s857
      %s860 = sphi 0, %s859
      %s874 = sphi 0, %s860
      %s878 = sphi 0, %s878
      %s880 = sphi 0, %s878
      %s881 = sphi 0, %s880
      %s895 = sphi 0, %s881
      %s899 = sphi 0, %s899
      %s901 = sphi 0, %s899
      %s902 = sphi 0, %s901
      %s916 = sphi 0, %s902
      %s920 = sphi 0, %s920
      %s922 = sphi 0, %s920
      %s923 = sphi 0, %s922
      %s937 = sphi 0, %s923
      %s941 = sphi 0, %s941
      %s943 = sphi 0, %s941
      %s944 = sphi 0, %s943
      %s958 = sphi 0, %s944
      %s962 = sphi 0, %s962
      %s964 = sphi 0, %s962
      %s965 = sphi 0, %s964
      %s979 = sphi 0, %s965
      %s985 = sphi 0, %s987
      %s988 = sphi 0, %s985
      %s989 = sphi 0, %s988
      %s1005 = sphi 0, %s989
      %s1011 = sphi 0, %s1013
      %s1014 = sphi 0, %s1011
      %s1015 = sphi 0, %s1014
      %s1031 = sphi 0, %s1015
      %s1037 = sphi 0, %s1039
      %s1040 = sphi 0, %s1037
      %s1041 = sphi 0, %s1040
      %s1057 = sphi 0, %s1041
    $region4: #{gat_mlp_forward.1} parent=1 // loop_header_branch
      %98 = sbr.rel (%p96) target = $region8
    $region5: #{gat_mlp_forward.1} parent=1 // loop_body
      %s100 = ssub.s32 %s95, 1
      %s101 = ssub.s32 %s95, 2
      %s102 = sadd.s32 %s95, 1
      %s103 = ssub.s32 %s95, %s102
      %p104 = scmp.eq.s32.totalorder %s103, 0
      %s106 = sadd.s32 %s105, 1
      %s107 = scalar_select %p104, %s105, %s106
      %p110 = pneg %p104
      %p111 = scmp.eq.s32.totalorder %s95, 3
      %p112 = por %p110, %p111
      %p113 = scmp.ne.s32.totalorder %s105, %s108
      %p114 = scmp.eq.s32.totalorder %s95, 0
      %p115 = por %p113, %p114
      %p116 = scmp.ne.s32.totalorder %s105, %s108
      %p117 = scmp.eq.s32.totalorder %s100, 3
      %p118 = por %p116, %p117
      %p119 = scmp.ne.s32.totalorder %s108, %s109
      %p120 = scmp.eq.s32.totalorder %s100, 0
      %p121 = por %p119, %p120
      %p122 = scmp.ne.s32.totalorder %s108, %s109
      %p123 = scmp.eq.s32.totalorder %s101, 3
      %p124 = por %p122, %p123
      %p126 = scmp.ne.s32.totalorder %s109, %s125
      %p127 = scmp.eq.s32.totalorder %s101, 0
      %p128 = por %p126, %p127
      %s129 = ssub.s32 %s95, %s102
      %p130 = scmp.eq.s32.totalorder %s129, 0
      %s132 = sadd.s32 %s131, 1
      %s133 = scalar_select %p130, %s131, %s132
      %p136 = pneg %p130
      %p137 = scmp.eq.s32.totalorder %s95, 3
      %p138 = por %p136, %p137
      %p139 = scmp.ne.s32.totalorder %s131, %s134
      %p140 = scmp.eq.s32.totalorder %s95, 0
      %p141 = por %p139, %p140
      %p142 = scmp.ne.s32.totalorder %s131, %s134
      %p143 = scmp.eq.s32.totalorder %s100, 3
      %p144 = por %p142, %p143
      %p145 = scmp.ne.s32.totalorder %s134, %s135
      %p146 = scmp.eq.s32.totalorder %s100, 0
      %p147 = por %p145, %p146
      %p148 = scmp.ne.s32.totalorder %s134, %s135
      %p149 = scmp.eq.s32.totalorder %s101, 3
      %p150 = por %p148, %p149
      %p152 = scmp.ne.s32.totalorder %s135, %s151
      %p153 = scmp.eq.s32.totalorder %s101, 0
      %p154 = por %p152, %p153
      %s155 = ssub.s32 %s95, %s102
      %p156 = scmp.eq.s32.totalorder %s155, 0
      %s158 = sadd.s32 %s157, 1
      %s159 = scalar_select %p156, %s157, %s158
      %p162 = pneg %p156
      %p163 = scmp.eq.s32.totalorder %s95, 3
      %p164 = por %p162, %p163
      %p165 = scmp.ne.s32.totalorder %s157, %s160
      %p166 = scmp.eq.s32.totalorder %s95, 0
      %p167 = por %p165, %p166
      %p168 = scmp.ne.s32.totalorder %s157, %s160
      %p169 = scmp.eq.s32.totalorder %s100, 3
      %p170 = por %p168, %p169
      %p171 = scmp.ne.s32.totalorder %s160, %s161
      %p172 = scmp.eq.s32.totalorder %s100, 0
      %p173 = por %p171, %p172
      %p174 = scmp.ne.s32.totalorder %s160, %s161
      %p175 = scmp.eq.s32.totalorder %s101, 3
      %p176 = por %p174, %p175
      %p178 = scmp.ne.s32.totalorder %s161, %s177
      %p179 = scmp.eq.s32.totalorder %s101, 0
      %p180 = por %p178, %p179
      %s181 = ssub.s32 %s95, %s102
      %p182 = scmp.eq.s32.totalorder %s181, 0
      %s184 = sadd.s32 %s183, 1
      %s185 = scalar_select %p182, %s183, %s184
      %p188 = pneg %p182
      %p189 = scmp.eq.s32.totalorder %s95, 3
      %p190 = por %p188, %p189
      %p191 = scmp.ne.s32.totalorder %s183, %s186
      %p192 = scmp.eq.s32.totalorder %s95, 0
      %p193 = por %p191, %p192
      %p194 = scmp.ne.s32.totalorder %s183, %s186
      %p195 = scmp.eq.s32.totalorder %s100, 3
      %p196 = por %p194, %p195
      %p197 = scmp.ne.s32.totalorder %s186, %s187
      %p198 = scmp.eq.s32.totalorder %s100, 0
      %p199 = por %p197, %p198
      %p200 = scmp.ne.s32.totalorder %s186, %s187
      %p201 = scmp.eq.s32.totalorder %s101, 3
      %p202 = por %p200, %p201
      %p204 = scmp.ne.s32.totalorder %s187, %s203
      %p205 = scmp.eq.s32.totalorder %s101, 0
      %p206 = por %p204, %p205
      %s207 = ssub.s32 %s95, %s102
      %p208 = scmp.eq.s32.totalorder %s207, 0
      %s210 = sadd.s32 %s209, 1
      %s211 = scalar_select %p208, %s209, %s210
      %p214 = pneg %p208
      %p215 = scmp.eq.s32.totalorder %s95, 3
      %p216 = por %p214, %p215
      %p217 = scmp.ne.s32.totalorder %s209, %s212
      %p218 = scmp.eq.s32.totalorder %s95, 0
      %p219 = por %p217, %p218
      %p220 = scmp.ne.s32.totalorder %s209, %s212
      %p221 = scmp.eq.s32.totalorder %s100, 3
      %p222 = por %p220, %p221
      %p223 = scmp.ne.s32.totalorder %s212, %s213
      %p224 = scmp.eq.s32.totalorder %s100, 0
      %p225 = por %p223, %p224
      %p226 = scmp.ne.s32.totalorder %s212, %s213
      %p227 = scmp.eq.s32.totalorder %s101, 3
      %p228 = por %p226, %p227
      %p230 = scmp.ne.s32.totalorder %s213, %s229
      %p231 = scmp.eq.s32.totalorder %s101, 0
      %p232 = por %p230, %p231
      %s233 = ssub.s32 %s95, %s102
      %p234 = scmp.eq.s32.totalorder %s233, 0
      %s236 = sadd.s32 %s235, 1
      %s237 = scalar_select %p234, %s235, %s236
      %p240 = pneg %p234
      %p241 = scmp.eq.s32.totalorder %s95, 3
      %p242 = por %p240, %p241
      %p243 = scmp.ne.s32.totalorder %s235, %s238
      %p244 = scmp.eq.s32.totalorder %s95, 0
      %p245 = por %p243, %p244
      %p246 = scmp.ne.s32.totalorder %s235, %s238
      %p247 = scmp.eq.s32.totalorder %s100, 3
      %p248 = por %p246, %p247
      %p249 = scmp.ne.s32.totalorder %s238, %s239
      %p250 = scmp.eq.s32.totalorder %s100, 0
      %p251 = por %p249, %p250
      %p252 = scmp.ne.s32.totalorder %s238, %s239
      %p253 = scmp.eq.s32.totalorder %s101, 3
      %p254 = por %p252, %p253
      %p256 = scmp.ne.s32.totalorder %s239, %s255
      %p257 = scmp.eq.s32.totalorder %s101, 0
      %p258 = por %p256, %p257
      %s259 = ssub.s32 %s95, %s102
      %p260 = scmp.eq.s32.totalorder %s259, 0
      %s262 = sadd.s32 %s261, 1
      %s263 = scalar_select %p260, %s261, %s262
      %p266 = pneg %p260
      %p267 = scmp.eq.s32.totalorder %s95, 3
      %p268 = por %p266, %p267
      %p269 = scmp.ne.s32.totalorder %s261, %s264
      %p270 = scmp.eq.s32.totalorder %s95, 0
      %p271 = por %p269, %p270
      %p272 = scmp.ne.s32.totalorder %s261, %s264
      %p273 = scmp.eq.s32.totalorder %s100, 3
      %p274 = por %p272, %p273
      %p275 = scmp.ne.s32.totalorder %s264, %s265
      %p276 = scmp.eq.s32.totalorder %s100, 0
      %p277 = por %p275, %p276
      %p278 = scmp.ne.s32.totalorder %s264, %s265
      %p279 = scmp.eq.s32.totalorder %s101, 3
      %p280 = por %p278, %p279
      %p282 = scmp.ne.s32.totalorder %s265, %s281
      %p283 = scmp.eq.s32.totalorder %s101, 0
      %p284 = por %p282, %p283
      %s285 = ssub.s32 %s95, %s102
      %p286 = scmp.eq.s32.totalorder %s285, 0
      %s288 = sadd.s32 %s287, 1
      %s289 = scalar_select %p286, %s287, %s288
      %p292 = pneg %p286
      %p293 = scmp.eq.s32.totalorder %s95, 3
      %p294 = por %p292, %p293
      %p295 = scmp.ne.s32.totalorder %s287, %s290
      %p296 = scmp.eq.s32.totalorder %s95, 0
      %p297 = por %p295, %p296
      %p298 = scmp.ne.s32.totalorder %s287, %s290
      %p299 = scmp.eq.s32.totalorder %s100, 3
      %p300 = por %p298, %p299
      %p301 = scmp.ne.s32.totalorder %s290, %s291
      %p302 = scmp.eq.s32.totalorder %s100, 0
      %p303 = por %p301, %p302
      %p304 = scmp.ne.s32.totalorder %s290, %s291
      %p305 = scmp.eq.s32.totalorder %s101, 3
      %p306 = por %p304, %p305
      %p308 = scmp.ne.s32.totalorder %s291, %s307
      %p309 = scmp.eq.s32.totalorder %s101, 0
      %p310 = por %p308, %p309
      %s312 = sadd.s32 %s311, 1
      %p315 = scmp.eq.s32.totalorder %s95, 3
      %p316 = scmp.ne.s32.totalorder %s311, %s313
      %p317 = scmp.eq.s32.totalorder %s95, 0
      %p318 = por %p316, %p317
      %p319 = scmp.ne.s32.totalorder %s311, %s313
      %p320 = scmp.eq.s32.totalorder %s100, 3
      %p321 = por %p319, %p320
      %p322 = scmp.ne.s32.totalorder %s313, %s314
      %p323 = scmp.eq.s32.totalorder %s100, 0
      %p324 = por %p322, %p323
      %p325 = scmp.ne.s32.totalorder %s313, %s314
      %p326 = scmp.eq.s32.totalorder %s101, 3
      %p327 = por %p325, %p326
      %p329 = scmp.ne.s32.totalorder %s314, %s328
      %p330 = scmp.eq.s32.totalorder %s101, 0
      %p331 = por %p329, %p330
      %s333 = sadd.s32 %s332, 1
      %p336 = scmp.eq.s32.totalorder %s95, 3
      %p337 = scmp.ne.s32.totalorder %s332, %s334
      %p338 = scmp.eq.s32.totalorder %s95, 0
      %p339 = por %p337, %p338
      %p340 = scmp.ne.s32.totalorder %s332, %s334
      %p341 = scmp.eq.s32.totalorder %s100, 3
      %p342 = por %p340, %p341
      %p343 = scmp.ne.s32.totalorder %s334, %s335
      %p344 = scmp.eq.s32.totalorder %s100, 0
      %p345 = por %p343, %p344
      %p346 = scmp.ne.s32.totalorder %s334, %s335
      %p347 = scmp.eq.s32.totalorder %s101, 3
      %p348 = por %p346, %p347
      %p350 = scmp.ne.s32.totalorder %s335, %s349
      %p351 = scmp.eq.s32.totalorder %s101, 0
      %p352 = por %p350, %p351
      %s354 = sadd.s32 %s353, 1
      %p357 = scmp.eq.s32.totalorder %s95, 3
      %p358 = scmp.ne.s32.totalorder %s353, %s355
      %p359 = scmp.eq.s32.totalorder %s95, 0
      %p360 = por %p358, %p359
      %p361 = scmp.ne.s32.totalorder %s353, %s355
      %p362 = scmp.eq.s32.totalorder %s100, 3
      %p363 = por %p361, %p362
      %p364 = scmp.ne.s32.totalorder %s355, %s356
      %p365 = scmp.eq.s32.totalorder %s100, 0
      %p366 = por %p364, %p365
      %p367 = scmp.ne.s32.totalorder %s355, %s356
      %p368 = scmp.eq.s32.totalorder %s101, 3
      %p369 = por %p367, %p368
      %p371 = scmp.ne.s32.totalorder %s356, %s370
      %p372 = scmp.eq.s32.totalorder %s101, 0
      %p373 = por %p371, %p372
      %s375 = sadd.s32 %s374, 1
      %p378 = scmp.eq.s32.totalorder %s95, 3
      %p379 = scmp.ne.s32.totalorder %s374, %s376
      %p380 = scmp.eq.s32.totalorder %s95, 0
      %p381 = por %p379, %p380
      %p382 = scmp.ne.s32.totalorder %s374, %s376
      %p383 = scmp.eq.s32.totalorder %s100, 3
      %p384 = por %p382, %p383
      %p385 = scmp.ne.s32.totalorder %s376, %s377
      %p386 = scmp.eq.s32.totalorder %s100, 0
      %p387 = por %p385, %p386
      %p388 = scmp.ne.s32.totalorder %s376, %s377
      %p389 = scmp.eq.s32.totalorder %s101, 3
      %p390 = por %p388, %p389
      %p392 = scmp.ne.s32.totalorder %s377, %s391
      %p393 = scmp.eq.s32.totalorder %s101, 0
      %p394 = por %p392, %p393
      %s396 = sadd.s32 %s395, 1
      %p399 = scmp.eq.s32.totalorder %s95, 3
      %p400 = scmp.ne.s32.totalorder %s395, %s397
      %p401 = scmp.eq.s32.totalorder %s95, 0
      %p402 = por %p400, %p401
      %p403 = scmp.ne.s32.totalorder %s395, %s397
      %p404 = scmp.eq.s32.totalorder %s100, 3
      %p405 = por %p403, %p404
      %p406 = scmp.ne.s32.totalorder %s397, %s398
      %p407 = scmp.eq.s32.totalorder %s100, 0
      %p408 = por %p406, %p407
      %p409 = scmp.ne.s32.totalorder %s397, %s398
      %p410 = scmp.eq.s32.totalorder %s101, 3
      %p411 = por %p409, %p410
      %p413 = scmp.ne.s32.totalorder %s398, %s412
      %p414 = scmp.eq.s32.totalorder %s101, 0
      %p415 = por %p413, %p414
      %s417 = sadd.s32 %s416, 1
      %p420 = scmp.eq.s32.totalorder %s95, 3
      %p421 = scmp.ne.s32.totalorder %s416, %s418
      %p422 = scmp.eq.s32.totalorder %s95, 0
      %p423 = por %p421, %p422
      %p424 = scmp.ne.s32.totalorder %s416, %s418
      %p425 = scmp.eq.s32.totalorder %s100, 3
      %p426 = por %p424, %p425
      %p427 = scmp.ne.s32.totalorder %s418, %s419
      %p428 = scmp.eq.s32.totalorder %s100, 0
      %p429 = por %p427, %p428
      %p430 = scmp.ne.s32.totalorder %s418, %s419
      %p431 = scmp.eq.s32.totalorder %s101, 3
      %p432 = por %p430, %p431
      %p434 = scmp.ne.s32.totalorder %s419, %s433
      %p435 = scmp.eq.s32.totalorder %s101, 0
      %p436 = por %p434, %p435
      %s438 = sadd.s32 %s437, 1
      %p441 = scmp.eq.s32.totalorder %s95, 3
      %p442 = scmp.ne.s32.totalorder %s437, %s439
      %p443 = scmp.eq.s32.totalorder %s95, 0
      %p444 = por %p442, %p443
      %p445 = scmp.ne.s32.totalorder %s437, %s439
      %p446 = scmp.eq.s32.totalorder %s100, 3
      %p447 = por %p445, %p446
      %p448 = scmp.ne.s32.totalorder %s439, %s440
      %p449 = scmp.eq.s32.totalorder %s100, 0
      %p450 = por %p448, %p449
      %p451 = scmp.ne.s32.totalorder %s439, %s440
      %p452 = scmp.eq.s32.totalorder %s101, 3
      %p453 = por %p451, %p452
      %p455 = scmp.ne.s32.totalorder %s440, %s454
      %p456 = scmp.eq.s32.totalorder %s101, 0
      %p457 = por %p455, %p456
      %s459 = sadd.s32 %s458, 1
      %p462 = scmp.eq.s32.totalorder %s95, 3
      %p463 = scmp.ne.s32.totalorder %s458, %s460
      %p464 = scmp.eq.s32.totalorder %s95, 0
      %p465 = por %p463, %p464
      %p466 = scmp.ne.s32.totalorder %s458, %s460
      %p467 = scmp.eq.s32.totalorder %s100, 3
      %p468 = por %p466, %p467
      %p469 = scmp.ne.s32.totalorder %s460, %s461
      %p470 = scmp.eq.s32.totalorder %s100, 0
      %p471 = por %p469, %p470
      %p472 = scmp.ne.s32.totalorder %s460, %s461
      %p473 = scmp.eq.s32.totalorder %s101, 3
      %p474 = por %p472, %p473
      %p476 = scmp.ne.s32.totalorder %s461, %s475
      %p477 = scmp.eq.s32.totalorder %s101, 0
      %p478 = por %p476, %p477
      %s480 = sadd.s32 %s479, 1
      %p483 = scmp.eq.s32.totalorder %s95, 3
      %p484 = scmp.ne.s32.totalorder %s479, %s481
      %p485 = scmp.eq.s32.totalorder %s95, 0
      %p486 = por %p484, %p485
      %p487 = scmp.ne.s32.totalorder %s479, %s481
      %p488 = scmp.eq.s32.totalorder %s100, 3
      %p489 = por %p487, %p488
      %p490 = scmp.ne.s32.totalorder %s481, %s482
      %p491 = scmp.eq.s32.totalorder %s100, 0
      %p492 = por %p490, %p491
      %p493 = scmp.ne.s32.totalorder %s481, %s482
      %p494 = scmp.eq.s32.totalorder %s101, 3
      %p495 = por %p493, %p494
      %p497 = scmp.ne.s32.totalorder %s482, %s496
      %p498 = scmp.eq.s32.totalorder %s101, 0
      %p499 = por %p497, %p498
      %s501 = sadd.s32 %s500, 1
      %p504 = scmp.eq.s32.totalorder %s95, 3
      %p505 = scmp.ne.s32.totalorder %s500, %s502
      %p506 = scmp.eq.s32.totalorder %s95, 0
      %p507 = por %p505, %p506
      %p508 = scmp.ne.s32.totalorder %s500, %s502
      %p509 = scmp.eq.s32.totalorder %s100, 3
      %p510 = por %p508, %p509
      %p511 = scmp.ne.s32.totalorder %s502, %s503
      %p512 = scmp.eq.s32.totalorder %s100, 0
      %p513 = por %p511, %p512
      %p514 = scmp.ne.s32.totalorder %s502, %s503
      %p515 = scmp.eq.s32.totalorder %s101, 3
      %p516 = por %p514, %p515
      %p518 = scmp.ne.s32.totalorder %s503, %s517
      %p519 = scmp.eq.s32.totalorder %s101, 0
      %p520 = por %p518, %p519
      %s522 = sadd.s32 %s521, 1
      %p525 = scmp.eq.s32.totalorder %s95, 3
      %p526 = scmp.ne.s32.totalorder %s521, %s523
      %p527 = scmp.eq.s32.totalorder %s95, 0
      %p528 = por %p526, %p527
      %p529 = scmp.ne.s32.totalorder %s521, %s523
      %p530 = scmp.eq.s32.totalorder %s100, 3
      %p531 = por %p529, %p530
      %p532 = scmp.ne.s32.totalorder %s523, %s524
      %p533 = scmp.eq.s32.totalorder %s100, 0
      %p534 = por %p532, %p533
      %p535 = scmp.ne.s32.totalorder %s523, %s524
      %p536 = scmp.eq.s32.totalorder %s101, 3
      %p537 = por %p535, %p536
      %p539 = scmp.ne.s32.totalorder %s524, %s538
      %p540 = scmp.eq.s32.totalorder %s101, 0
      %p541 = por %p539, %p540
      %s543 = sadd.s32 %s542, 1
      %p546 = scmp.eq.s32.totalorder %s95, 3
      %p547 = scmp.ne.s32.totalorder %s542, %s544
      %p548 = scmp.eq.s32.totalorder %s95, 0
      %p549 = por %p547, %p548
      %p550 = scmp.ne.s32.totalorder %s542, %s544
      %p551 = scmp.eq.s32.totalorder %s100, 3
      %p552 = por %p550, %p551
      %p553 = scmp.ne.s32.totalorder %s544, %s545
      %p554 = scmp.eq.s32.totalorder %s100, 0
      %p555 = por %p553, %p554
      %p556 = scmp.ne.s32.totalorder %s544, %s545
      %p557 = scmp.eq.s32.totalorder %s101, 3
      %p558 = por %p556, %p557
      %p560 = scmp.ne.s32.totalorder %s545, %s559
      %p561 = scmp.eq.s32.totalorder %s101, 0
      %p562 = por %p560, %p561
      %s564 = sadd.s32 %s563, 1
      %p567 = scmp.eq.s32.totalorder %s95, 3
      %p568 = scmp.ne.s32.totalorder %s563, %s565
      %p569 = scmp.eq.s32.totalorder %s95, 0
      %p570 = por %p568, %p569
      %p571 = scmp.ne.s32.totalorder %s563, %s565
      %p572 = scmp.eq.s32.totalorder %s100, 3
      %p573 = por %p571, %p572
      %p574 = scmp.ne.s32.totalorder %s565, %s566
      %p575 = scmp.eq.s32.totalorder %s100, 0
      %p576 = por %p574, %p575
      %p577 = scmp.ne.s32.totalorder %s565, %s566
      %p578 = scmp.eq.s32.totalorder %s101, 3
      %p579 = por %p577, %p578
      %p581 = scmp.ne.s32.totalorder %s566, %s580
      %p582 = scmp.eq.s32.totalorder %s101, 0
      %p583 = por %p581, %p582
      %s585 = sadd.s32 %s584, 1
      %p588 = scmp.eq.s32.totalorder %s95, 3
      %p589 = scmp.ne.s32.totalorder %s584, %s586
      %p590 = scmp.eq.s32.totalorder %s95, 0
      %p591 = por %p589, %p590
      %p592 = scmp.ne.s32.totalorder %s584, %s586
      %p593 = scmp.eq.s32.totalorder %s100, 3
      %p594 = por %p592, %p593
      %p595 = scmp.ne.s32.totalorder %s586, %s587
      %p596 = scmp.eq.s32.totalorder %s100, 0
      %p597 = por %p595, %p596
      %p598 = scmp.ne.s32.totalorder %s586, %s587
      %p599 = scmp.eq.s32.totalorder %s101, 3
      %p600 = por %p598, %p599
      %p602 = scmp.ne.s32.totalorder %s587, %s601
      %p603 = scmp.eq.s32.totalorder %s101, 0
      %p604 = por %p602, %p603
      %s606 = sadd.s32 %s605, 1
      %p609 = scmp.eq.s32.totalorder %s95, 3
      %p610 = scmp.ne.s32.totalorder %s605, %s607
      %p611 = scmp.eq.s32.totalorder %s95, 0
      %p612 = por %p610, %p611
      %p613 = scmp.ne.s32.totalorder %s605, %s607
      %p614 = scmp.eq.s32.totalorder %s100, 3
      %p615 = por %p613, %p614
      %p616 = scmp.ne.s32.totalorder %s607, %s608
      %p617 = scmp.eq.s32.totalorder %s100, 0
      %p618 = por %p616, %p617
      %p619 = scmp.ne.s32.totalorder %s607, %s608
      %p620 = scmp.eq.s32.totalorder %s101, 3
      %p621 = por %p619, %p620
      %p623 = scmp.ne.s32.totalorder %s608, %s622
      %p624 = scmp.eq.s32.totalorder %s101, 0
      %p625 = por %p623, %p624
      %s627 = sadd.s32 %s626, 1
      %p630 = scmp.eq.s32.totalorder %s95, 3
      %p631 = scmp.ne.s32.totalorder %s626, %s628
      %p632 = scmp.eq.s32.totalorder %s95, 0
      %p633 = por %p631, %p632
      %p634 = scmp.ne.s32.totalorder %s626, %s628
      %p635 = scmp.eq.s32.totalorder %s100, 3
      %p636 = por %p634, %p635
      %p637 = scmp.ne.s32.totalorder %s628, %s629
      %p638 = scmp.eq.s32.totalorder %s100, 0
      %p639 = por %p637, %p638
      %p640 = scmp.ne.s32.totalorder %s628, %s629
      %p641 = scmp.eq.s32.totalorder %s101, 3
      %p642 = por %p640, %p641
      %p644 = scmp.ne.s32.totalorder %s629, %s643
      %p645 = scmp.eq.s32.totalorder %s101, 0
      %p646 = por %p644, %p645
      %s648 = sadd.s32 %s647, 1
      %p651 = scmp.eq.s32.totalorder %s95, 3
      %p652 = scmp.ne.s32.totalorder %s647, %s649
      %p653 = scmp.eq.s32.totalorder %s95, 0
      %p654 = por %p652, %p653
      %p655 = scmp.ne.s32.totalorder %s647, %s649
      %p656 = scmp.eq.s32.totalorder %s100, 3
      %p657 = por %p655, %p656
      %p658 = scmp.ne.s32.totalorder %s649, %s650
      %p659 = scmp.eq.s32.totalorder %s100, 0
      %p660 = por %p658, %p659
      %p661 = scmp.ne.s32.totalorder %s649, %s650
      %p662 = scmp.eq.s32.totalorder %s101, 3
      %p663 = por %p661, %p662
      %p665 = scmp.ne.s32.totalorder %s650, %s664
      %p666 = scmp.eq.s32.totalorder %s101, 0
      %p667 = por %p665, %p666
      %s669 = sadd.s32 %s668, 1
      %p672 = scmp.eq.s32.totalorder %s95, 3
      %p673 = scmp.ne.s32.totalorder %s668, %s670
      %p674 = scmp.eq.s32.totalorder %s95, 0
      %p675 = por %p673, %p674
      %p676 = scmp.ne.s32.totalorder %s668, %s670
      %p677 = scmp.eq.s32.totalorder %s100, 3
      %p678 = por %p676, %p677
      %p679 = scmp.ne.s32.totalorder %s670, %s671
      %p680 = scmp.eq.s32.totalorder %s100, 0
      %p681 = por %p679, %p680
      %p682 = scmp.ne.s32.totalorder %s670, %s671
      %p683 = scmp.eq.s32.totalorder %s101, 3
      %p684 = por %p682, %p683
      %p686 = scmp.ne.s32.totalorder %s671, %s685
      %p687 = scmp.eq.s32.totalorder %s101, 0
      %p688 = por %p686, %p687
      %s690 = sadd.s32 %s689, 1
      %p693 = scmp.eq.s32.totalorder %s95, 3
      %p694 = scmp.ne.s32.totalorder %s689, %s691
      %p695 = scmp.eq.s32.totalorder %s95, 0
      %p696 = por %p694, %p695
      %p697 = scmp.ne.s32.totalorder %s689, %s691
      %p698 = scmp.eq.s32.totalorder %s100, 3
      %p699 = por %p697, %p698
      %p700 = scmp.ne.s32.totalorder %s691, %s692
      %p701 = scmp.eq.s32.totalorder %s100, 0
      %p702 = por %p700, %p701
      %p703 = scmp.ne.s32.totalorder %s691, %s692
      %p704 = scmp.eq.s32.totalorder %s101, 3
      %p705 = por %p703, %p704
      %p707 = scmp.ne.s32.totalorder %s692, %s706
      %p708 = scmp.eq.s32.totalorder %s101, 0
      %p709 = por %p707, %p708
      %s711 = sadd.s32 %s710, 1
      %p714 = scmp.eq.s32.totalorder %s95, 3
      %p715 = scmp.ne.s32.totalorder %s710, %s712
      %p716 = scmp.eq.s32.totalorder %s95, 0
      %p717 = por %p715, %p716
      %p718 = scmp.ne.s32.totalorder %s710, %s712
      %p719 = scmp.eq.s32.totalorder %s100, 3
      %p720 = por %p718, %p719
      %p721 = scmp.ne.s32.totalorder %s712, %s713
      %p722 = scmp.eq.s32.totalorder %s100, 0
      %p723 = por %p721, %p722
      %p724 = scmp.ne.s32.totalorder %s712, %s713
      %p725 = scmp.eq.s32.totalorder %s101, 3
      %p726 = por %p724, %p725
      %p728 = scmp.ne.s32.totalorder %s713, %s727
      %p729 = scmp.eq.s32.totalorder %s101, 0
      %p730 = por %p728, %p729
      %s732 = sadd.s32 %s731, 1
      %p735 = scmp.eq.s32.totalorder %s95, 3
      %p736 = scmp.ne.s32.totalorder %s731, %s733
      %p737 = scmp.eq.s32.totalorder %s95, 0
      %p738 = por %p736, %p737
      %p739 = scmp.ne.s32.totalorder %s731, %s733
      %p740 = scmp.eq.s32.totalorder %s100, 3
      %p741 = por %p739, %p740
      %p742 = scmp.ne.s32.totalorder %s733, %s734
      %p743 = scmp.eq.s32.totalorder %s100, 0
      %p744 = por %p742, %p743
      %p745 = scmp.ne.s32.totalorder %s733, %s734
      %p746 = scmp.eq.s32.totalorder %s101, 3
      %p747 = por %p745, %p746
      %p749 = scmp.ne.s32.totalorder %s734, %s748
      %p750 = scmp.eq.s32.totalorder %s101, 0
      %p751 = por %p749, %p750
      %s753 = sadd.s32 %s752, 1
      %p756 = scmp.eq.s32.totalorder %s95, 3
      %p757 = scmp.ne.s32.totalorder %s752, %s754
      %p758 = scmp.eq.s32.totalorder %s95, 0
      %p759 = por %p757, %p758
      %p760 = scmp.ne.s32.totalorder %s752, %s754
      %p761 = scmp.eq.s32.totalorder %s100, 3
      %p762 = por %p760, %p761
      %p763 = scmp.ne.s32.totalorder %s754, %s755
      %p764 = scmp.eq.s32.totalorder %s100, 0
      %p765 = por %p763, %p764
      %p766 = scmp.ne.s32.totalorder %s754, %s755
      %p767 = scmp.eq.s32.totalorder %s101, 3
      %p768 = por %p766, %p767
      %p770 = scmp.ne.s32.totalorder %s755, %s769
      %p771 = scmp.eq.s32.totalorder %s101, 0
      %p772 = por %p770, %p771
      %s774 = sadd.s32 %s773, 1
      %p777 = scmp.eq.s32.totalorder %s95, 3
      %p778 = scmp.ne.s32.totalorder %s773, %s775
      %p779 = scmp.eq.s32.totalorder %s95, 0
      %p780 = por %p778, %p779
      %p781 = scmp.ne.s32.totalorder %s773, %s775
      %p782 = scmp.eq.s32.totalorder %s100, 3
      %p783 = por %p781, %p782
      %p784 = scmp.ne.s32.totalorder %s775, %s776
      %p785 = scmp.eq.s32.totalorder %s100, 0
      %p786 = por %p784, %p785
      %p787 = scmp.ne.s32.totalorder %s775, %s776
      %p788 = scmp.eq.s32.totalorder %s101, 3
      %p789 = por %p787, %p788
      %p791 = scmp.ne.s32.totalorder %s776, %s790
      %p792 = scmp.eq.s32.totalorder %s101, 0
      %p793 = por %p791, %p792
      %s795 = sadd.s32 %s794, 1
      %p798 = scmp.eq.s32.totalorder %s95, 3
      %p799 = scmp.ne.s32.totalorder %s794, %s796
      %p800 = scmp.eq.s32.totalorder %s95, 0
      %p801 = por %p799, %p800
      %p802 = scmp.ne.s32.totalorder %s794, %s796
      %p803 = scmp.eq.s32.totalorder %s100, 3
      %p804 = por %p802, %p803
      %p805 = scmp.ne.s32.totalorder %s796, %s797
      %p806 = scmp.eq.s32.totalorder %s100, 0
      %p807 = por %p805, %p806
      %p808 = scmp.ne.s32.totalorder %s796, %s797
      %p809 = scmp.eq.s32.totalorder %s101, 3
      %p810 = por %p808, %p809
      %p812 = scmp.ne.s32.totalorder %s797, %s811
      %p813 = scmp.eq.s32.totalorder %s101, 0
      %p814 = por %p812, %p813
      %s816 = sadd.s32 %s815, 1
      %p819 = scmp.eq.s32.totalorder %s95, 3
      %p820 = scmp.ne.s32.totalorder %s815, %s817
      %p821 = scmp.eq.s32.totalorder %s95, 0
      %p822 = por %p820, %p821
      %p823 = scmp.ne.s32.totalorder %s815, %s817
      %p824 = scmp.eq.s32.totalorder %s100, 3
      %p825 = por %p823, %p824
      %p826 = scmp.ne.s32.totalorder %s817, %s818
      %p827 = scmp.eq.s32.totalorder %s100, 0
      %p828 = por %p826, %p827
      %p829 = scmp.ne.s32.totalorder %s817, %s818
      %p830 = scmp.eq.s32.totalorder %s101, 3
      %p831 = por %p829, %p830
      %p833 = scmp.ne.s32.totalorder %s818, %s832
      %p834 = scmp.eq.s32.totalorder %s101, 0
      %p835 = por %p833, %p834
      %s837 = sadd.s32 %s836, 1
      %p840 = scmp.eq.s32.totalorder %s95, 3
      %p841 = scmp.ne.s32.totalorder %s836, %s838
      %p842 = scmp.eq.s32.totalorder %s95, 0
      %p843 = por %p841, %p842
      %p844 = scmp.ne.s32.totalorder %s836, %s838
      %p845 = scmp.eq.s32.totalorder %s100, 3
      %p846 = por %p844, %p845
      %p847 = scmp.ne.s32.totalorder %s838, %s839
      %p848 = scmp.eq.s32.totalorder %s100, 0
      %p849 = por %p847, %p848
      %p850 = scmp.ne.s32.totalorder %s838, %s839
      %p851 = scmp.eq.s32.totalorder %s101, 3
      %p852 = por %p850, %p851
      %p854 = scmp.ne.s32.totalorder %s839, %s853
      %p855 = scmp.eq.s32.totalorder %s101, 0
      %p856 = por %p854, %p855
      %s858 = sadd.s32 %s857, 1
      %p861 = scmp.eq.s32.totalorder %s95, 3
      %p862 = scmp.ne.s32.totalorder %s857, %s859
      %p863 = scmp.eq.s32.totalorder %s95, 0
      %p864 = por %p862, %p863
      %p865 = scmp.ne.s32.totalorder %s857, %s859
      %p866 = scmp.eq.s32.totalorder %s100, 3
      %p867 = por %p865, %p866
      %p868 = scmp.ne.s32.totalorder %s859, %s860
      %p869 = scmp.eq.s32.totalorder %s100, 0
      %p870 = por %p868, %p869
      %p871 = scmp.ne.s32.totalorder %s859, %s860
      %p872 = scmp.eq.s32.totalorder %s101, 3
      %p873 = por %p871, %p872
      %p875 = scmp.ne.s32.totalorder %s860, %s874
      %p876 = scmp.eq.s32.totalorder %s101, 0
      %p877 = por %p875, %p876
      %s879 = sadd.s32 %s878, 1
      %p882 = scmp.eq.s32.totalorder %s95, 3
      %p883 = scmp.ne.s32.totalorder %s878, %s880
      %p884 = scmp.eq.s32.totalorder %s95, 0
      %p885 = por %p883, %p884
      %p886 = scmp.ne.s32.totalorder %s878, %s880
      %p887 = scmp.eq.s32.totalorder %s100, 3
      %p888 = por %p886, %p887
      %p889 = scmp.ne.s32.totalorder %s880, %s881
      %p890 = scmp.eq.s32.totalorder %s100, 0
      %p891 = por %p889, %p890
      %p892 = scmp.ne.s32.totalorder %s880, %s881
      %p893 = scmp.eq.s32.totalorder %s101, 3
      %p894 = por %p892, %p893
      %p896 = scmp.ne.s32.totalorder %s881, %s895
      %p897 = scmp.eq.s32.totalorder %s101, 0
      %p898 = por %p896, %p897
      %s900 = sadd.s32 %s899, 1
      %p903 = scmp.eq.s32.totalorder %s95, 3
      %p904 = scmp.ne.s32.totalorder %s899, %s901
      %p905 = scmp.eq.s32.totalorder %s95, 0
      %p906 = por %p904, %p905
      %p907 = scmp.ne.s32.totalorder %s899, %s901
      %p908 = scmp.eq.s32.totalorder %s100, 3
      %p909 = por %p907, %p908
      %p910 = scmp.ne.s32.totalorder %s901, %s902
      %p911 = scmp.eq.s32.totalorder %s100, 0
      %p912 = por %p910, %p911
      %p913 = scmp.ne.s32.totalorder %s901, %s902
      %p914 = scmp.eq.s32.totalorder %s101, 3
      %p915 = por %p913, %p914
      %p917 = scmp.ne.s32.totalorder %s902, %s916
      %p918 = scmp.eq.s32.totalorder %s101, 0
      %p919 = por %p917, %p918
      %s921 = sadd.s32 %s920, 1
      %p924 = scmp.eq.s32.totalorder %s95, 3
      %p925 = scmp.ne.s32.totalorder %s920, %s922
      %p926 = scmp.eq.s32.totalorder %s95, 0
      %p927 = por %p925, %p926
      %p928 = scmp.ne.s32.totalorder %s920, %s922
      %p929 = scmp.eq.s32.totalorder %s100, 3
      %p930 = por %p928, %p929
      %p931 = scmp.ne.s32.totalorder %s922, %s923
      %p932 = scmp.eq.s32.totalorder %s100, 0
      %p933 = por %p931, %p932
      %p934 = scmp.ne.s32.totalorder %s922, %s923
      %p935 = scmp.eq.s32.totalorder %s101, 3
      %p936 = por %p934, %p935
      %p938 = scmp.ne.s32.totalorder %s923, %s937
      %p939 = scmp.eq.s32.totalorder %s101, 0
      %p940 = por %p938, %p939
      %s942 = sadd.s32 %s941, 1
      %p945 = scmp.eq.s32.totalorder %s95, 3
      %p946 = scmp.ne.s32.totalorder %s941, %s943
      %p947 = scmp.eq.s32.totalorder %s95, 0
      %p948 = por %p946, %p947
      %p949 = scmp.ne.s32.totalorder %s941, %s943
      %p950 = scmp.eq.s32.totalorder %s100, 3
      %p951 = por %p949, %p950
      %p952 = scmp.ne.s32.totalorder %s943, %s944
      %p953 = scmp.eq.s32.totalorder %s100, 0
      %p954 = por %p952, %p953
      %p955 = scmp.ne.s32.totalorder %s943, %s944
      %p956 = scmp.eq.s32.totalorder %s101, 3
      %p957 = por %p955, %p956
      %p959 = scmp.ne.s32.totalorder %s944, %s958
      %p960 = scmp.eq.s32.totalorder %s101, 0
      %p961 = por %p959, %p960
      %s963 = sadd.s32 %s962, 1
      %p966 = scmp.eq.s32.totalorder %s95, 3
      %p967 = scmp.ne.s32.totalorder %s962, %s964
      %p968 = scmp.eq.s32.totalorder %s95, 0
      %p969 = por %p967, %p968
      %p970 = scmp.ne.s32.totalorder %s962, %s964
      %p971 = scmp.eq.s32.totalorder %s100, 3
      %p972 = por %p970, %p971
      %p973 = scmp.ne.s32.totalorder %s964, %s965
      %p974 = scmp.eq.s32.totalorder %s100, 0
      %p975 = por %p973, %p974
      %p976 = scmp.ne.s32.totalorder %s964, %s965
      %p977 = scmp.eq.s32.totalorder %s101, 3
      %p978 = por %p976, %p977
      %p980 = scmp.ne.s32.totalorder %s965, %s979
      %p981 = scmp.eq.s32.totalorder %s101, 0
      %p982 = por %p980, %p981
      %s983 = ssub.s32 %s95, %s102
      %p984 = scmp.eq.s32.totalorder %s983, 0
      %s986 = sadd.s32 %s985, 1
      %s987 = scalar_select %p984, %s985, %s986
      %p990 = pneg %p984
      %p991 = scmp.eq.s32.totalorder %s95, 3
      %p992 = por %p990, %p991
      %p993 = scmp.ne.s32.totalorder %s985, %s988
      %p994 = scmp.eq.s32.totalorder %s95, 0
      %p995 = por %p993, %p994
      %p996 = scmp.ne.s32.totalorder %s985, %s988
      %p997 = scmp.eq.s32.totalorder %s100, 3
      %p998 = por %p996, %p997
      %p999 = scmp.ne.s32.totalorder %s988, %s989
      %p1000 = scmp.eq.s32.totalorder %s100, 0
      %p1001 = por %p999, %p1000
      %p1002 = scmp.ne.s32.totalorder %s988, %s989
      %p1003 = scmp.eq.s32.totalorder %s101, 3
      %p1004 = por %p1002, %p1003
      %p1006 = scmp.ne.s32.totalorder %s989, %s1005
      %p1007 = scmp.eq.s32.totalorder %s101, 0
      %p1008 = por %p1006, %p1007
      %s1009 = ssub.s32 %s95, %s102
      %p1010 = scmp.eq.s32.totalorder %s1009, 0
      %s1012 = sadd.s32 %s1011, 1
      %s1013 = scalar_select %p1010, %s1011, %s1012
      %p1016 = pneg %p1010
      %p1017 = scmp.eq.s32.totalorder %s95, 3
      %p1018 = por %p1016, %p1017
      %p1019 = scmp.ne.s32.totalorder %s1011, %s1014
      %p1020 = scmp.eq.s32.totalorder %s95, 0
      %p1021 = por %p1019, %p1020
      %p1022 = scmp.ne.s32.totalorder %s1011, %s1014
      %p1023 = scmp.eq.s32.totalorder %s100, 3
      %p1024 = por %p1022, %p1023
      %p1025 = scmp.ne.s32.totalorder %s1014, %s1015
      %p1026 = scmp.eq.s32.totalorder %s100, 0
      %p1027 = por %p1025, %p1026
      %p1028 = scmp.ne.s32.totalorder %s1014, %s1015
      %p1029 = scmp.eq.s32.totalorder %s101, 3
      %p1030 = por %p1028, %p1029
      %p1032 = scmp.ne.s32.totalorder %s1015, %s1031
      %p1033 = scmp.eq.s32.totalorder %s101, 0
      %p1034 = por %p1032, %p1033
      %s1035 = ssub.s32 %s95, %s102
      %p1036 = scmp.eq.s32.totalorder %s1035, 0
      %s1038 = sadd.s32 %s1037, 1
      %s1039 = scalar_select %p1036, %s1037, %s1038
      %p1042 = pneg %p1036
      %p1043 = scmp.eq.s32.totalorder %s95, 3
      %p1044 = por %p1042, %p1043
      %p1045 = scmp.ne.s32.totalorder %s1037, %s1040
      %p1046 = scmp.eq.s32.totalorder %s95, 0
      %p1047 = por %p1045, %p1046
      %p1048 = scmp.ne.s32.totalorder %s1037, %s1040
      %p1049 = scmp.eq.s32.totalorder %s100, 3
      %p1050 = por %p1048, %p1049
      %p1051 = scmp.ne.s32.totalorder %s1040, %s1041
      %p1052 = scmp.eq.s32.totalorder %s100, 0
      %p1053 = por %p1051, %p1052
      %p1054 = scmp.ne.s32.totalorder %s1040, %s1041
      %p1055 = scmp.eq.s32.totalorder %s101, 3
      %p1056 = por %p1054, %p1055
      %p1058 = scmp.ne.s32.totalorder %s1041, %s1057
      %p1059 = scmp.eq.s32.totalorder %s101, 0
      %p1060 = por %p1058, %p1059
      %p1061 = scmp.le.s32.totalorder 1, %s95
      %p1062 = scmp.lt.s32.totalorder %s95, 5
      %p1063 = pnand %p1061, %p1062
      %p1064 = pneg %p1063
      // Predicated region
      $region9: #{gat_mlp_forward.1} parent=5 // pred_check
        _
      $region10: #{gat_mlp_forward.1} parent=5 // pred_check_branch
        %1066 = sbr.rel (%p1063) target = $region12
      $region11: #{gat_mlp_forward.1} parent=5 // pred_region
        %s1067 = ssub.s32 %s95, 1
        // Predicated region
        $region13: #{gat_mlp_forward.1} parent=11 // pred_check
          %p1068 = pneg %p324
        $region14: #{gat_mlp_forward.1} parent=11 // pred_check_branch
          %1070 = sbr.rel (%p1068) target = $region16
        $region15: #{gat_mlp_forward.1} parent=11 // pred_region
          _
        $region16: #{gat_mlp_forward.1} parent=11 // pred_fallthru
          _
        // Predicated region
        $region17: #{gat_mlp_forward.1} parent=11 // pred_check
          %p1071 = pneg %p345
        $region18: #{gat_mlp_forward.1} parent=11 // pred_check_branch
          %1073 = sbr.rel (%p1071) target = $region20
        $region19: #{gat_mlp_forward.1} parent=11 // pred_region
          _
        $region20: #{gat_mlp_forward.1} parent=11 // pred_fallthru
          _
        // Predicated region
        $region21: #{gat_mlp_forward.1} parent=11 // pred_check
          %p1074 = pneg %p366
        $region22: #{gat_mlp_forward.1} parent=11 // pred_check_branch
          %1076 = sbr.rel (%p1074) target = $region24
        $region23: #{gat_mlp_forward.1} parent=11 // pred_region
          _
        $region24: #{gat_mlp_forward.1} parent=11 // pred_fallthru
          _
        // Predicated region
        $region25: #{gat_mlp_forward.1} parent=11 // pred_check
          %p1077 = pneg %p387
        $region26: #{gat_mlp_forward.1} parent=11 // pred_check_branch
          %1079 = sbr.rel (%p1077) target = $region28
        $region27: #{gat_mlp_forward.1} parent=11 // pred_region
          _
        $region28: #{gat_mlp_forward.1} parent=11 // pred_fallthru
          _
        // Predicated region
        $region29: #{gat_mlp_forward.1} parent=11 // pred_check
          %p1080 = pneg %p408
        $region30: #{gat_mlp_forward.1} parent=11 // pred_check_branch
          %1082 = sbr.rel (%p1080) target = $region32
        $region31: #{gat_mlp_forward.1} parent=11 // pred_region
          _
        $region32: #{gat_mlp_forward.1} parent=11 // pred_fallthru
          _
        // Predicated region
        $region33: #{gat_mlp_forward.1} parent=11 // pred_check
          %p1083 = pneg %p429
        $region34: #{gat_mlp_forward.1} parent=11 // pred_check_branch
          %1085 = sbr.rel (%p1083) target = $region36
        $region35: #{gat_mlp_forward.1} parent=11 // pred_region
          _
        $region36: #{gat_mlp_forward.1} parent=11 // pred_fallthru
          _
        // Predicated region
        $region37: #{gat_mlp_forward.1} parent=11 // pred_check
          %p1086 = pneg %p450
        $region38: #{gat_mlp_forward.1} parent=11 // pred_check_branch
          %1088 = sbr.rel (%p1086) target = $region40
        $region39: #{gat_mlp_forward.1} parent=11 // pred_region
          _
        $region40: #{gat_mlp_forward.1} parent=11 // pred_fallthru
          _
        // Predicated region
        $region41: #{gat_mlp_forward.1} parent=11 // pred_check
          %p1089 = pneg %p471
        $region42: #{gat_mlp_forward.1} parent=11 // pred_check_branch
          %1091 = sbr.rel (%p1089) target = $region44
        $region43: #{gat_mlp_forward.1} parent=11 // pred_region
          _
        $region44: #{gat_mlp_forward.1} parent=11 // pred_fallthru
          _
        // Predicated region
        $region45: #{gat_mlp_forward.1} parent=11 // pred_check
          %p1092 = pneg %p492
        $region46: #{gat_mlp_forward.1} parent=11 // pred_check_branch
          %1094 = sbr.rel (%p1092) target = $region48
        $region47: #{gat_mlp_forward.1} parent=11 // pred_region
          _
        $region48: #{gat_mlp_forward.1} parent=11 // pred_fallthru
          _
        // Predicated region
        $region49: #{gat_mlp_forward.1} parent=11 // pred_check
          %p1095 = pneg %p513
        $region50: #{gat_mlp_forward.1} parent=11 // pred_check_branch
          %1097 = sbr.rel (%p1095) target = $region52
        $region51: #{gat_mlp_forward.1} parent=11 // pred_region
          _
        $region52: #{gat_mlp_forward.1} parent=11 // pred_fallthru
          _
        // Predicated region
        $region53: #{gat_mlp_forward.1} parent=11 // pred_check
          %p1098 = pneg %p534
        $region54: #{gat_mlp_forward.1} parent=11 // pred_check_branch
          %1100 = sbr.rel (%p1098) target = $region56
        $region55: #{gat_mlp_forward.1} parent=11 // pred_region
          _
        $region56: #{gat_mlp_forward.1} parent=11 // pred_fallthru
          _
        // Predicated region
        $region57: #{gat_mlp_forward.1} parent=11 // pred_check
          %p1101 = pneg %p555
        $region58: #{gat_mlp_forward.1} parent=11 // pred_check_branch
          %1103 = sbr.rel (%p1101) target = $region60
        $region59: #{gat_mlp_forward.1} parent=11 // pred_region
          _
        $region60: #{gat_mlp_forward.1} parent=11 // pred_fallthru
          _
        // Predicated region
        $region61: #{gat_mlp_forward.1} parent=11 // pred_check
          %p1104 = pneg %p576
        $region62: #{gat_mlp_forward.1} parent=11 // pred_check_branch
          %1106 = sbr.rel (%p1104) target = $region64
        $region63: #{gat_mlp_forward.1} parent=11 // pred_region
          _
        $region64: #{gat_mlp_forward.1} parent=11 // pred_fallthru
          _
        // Predicated region
        $region65: #{gat_mlp_forward.1} parent=11 // pred_check
          %p1107 = pneg %p597
        $region66: #{gat_mlp_forward.1} parent=11 // pred_check_branch
          %1109 = sbr.rel (%p1107) target = $region68
        $region67: #{gat_mlp_forward.1} parent=11 // pred_region
          _
        $region68: #{gat_mlp_forward.1} parent=11 // pred_fallthru
          _
        // Predicated region
        $region69: #{gat_mlp_forward.1} parent=11 // pred_check
          %p1110 = pneg %p618
        $region70: #{gat_mlp_forward.1} parent=11 // pred_check_branch
          %1112 = sbr.rel (%p1110) target = $region72
        $region71: #{gat_mlp_forward.1} parent=11 // pred_region
          _
        $region72: #{gat_mlp_forward.1} parent=11 // pred_fallthru
          _
        // Predicated region
        $region73: #{gat_mlp_forward.1} parent=11 // pred_check
          %p1113 = pneg %p639
        $region74: #{gat_mlp_forward.1} parent=11 // pred_check_branch
          %1115 = sbr.rel (%p1113) target = $region76
        $region75: #{gat_mlp_forward.1} parent=11 // pred_region
          _
        $region76: #{gat_mlp_forward.1} parent=11 // pred_fallthru
          _
        // Predicated region
        $region77: #{gat_mlp_forward.1} parent=11 // pred_check
          %p1116 = pneg %p660
        $region78: #{gat_mlp_forward.1} parent=11 // pred_check_branch
          %1118 = sbr.rel (%p1116) target = $region80
        $region79: #{gat_mlp_forward.1} parent=11 // pred_region
          _
        $region80: #{gat_mlp_forward.1} parent=11 // pred_fallthru
          _
        // Predicated region
        $region81: #{gat_mlp_forward.1} parent=11 // pred_check
          %p1119 = pneg %p681
        $region82: #{gat_mlp_forward.1} parent=11 // pred_check_branch
          %1121 = sbr.rel (%p1119) target = $region84
        $region83: #{gat_mlp_forward.1} parent=11 // pred_region
          _
        $region84: #{gat_mlp_forward.1} parent=11 // pred_fallthru
          _
        // Predicated region
        $region85: #{gat_mlp_forward.1} parent=11 // pred_check
          %p1122 = pneg %p702
        $region86: #{gat_mlp_forward.1} parent=11 // pred_check_branch
          %1124 = sbr.rel (%p1122) target = $region88
        $region87: #{gat_mlp_forward.1} parent=11 // pred_region
          _
        $region88: #{gat_mlp_forward.1} parent=11 // pred_fallthru
          _
        // Predicated region
        $region89: #{gat_mlp_forward.1} parent=11 // pred_check
          %p1125 = pneg %p723
        $region90: #{gat_mlp_forward.1} parent=11 // pred_check_branch
          %1127 = sbr.rel (%p1125) target = $region92
        $region91: #{gat_mlp_forward.1} parent=11 // pred_region
          _
        $region92: #{gat_mlp_forward.1} parent=11 // pred_fallthru
          _
        // Predicated region
        $region93: #{gat_mlp_forward.1} parent=11 // pred_check
          %p1128 = pneg %p744
        $region94: #{gat_mlp_forward.1} parent=11 // pred_check_branch
          %1130 = sbr.rel (%p1128) target = $region96
        $region95: #{gat_mlp_forward.1} parent=11 // pred_region
          _
        $region96: #{gat_mlp_forward.1} parent=11 // pred_fallthru
          _
        // Predicated region
        $region97: #{gat_mlp_forward.1} parent=11 // pred_check
          %p1131 = pneg %p765
        $region98: #{gat_mlp_forward.1} parent=11 // pred_check_branch
          %1133 = sbr.rel (%p1131) target = $region100
        $region99: #{gat_mlp_forward.1} parent=11 // pred_region
          _
        $region100: #{gat_mlp_forward.1} parent=11 // pred_fallthru
          _
        // Predicated region
        $region101: #{gat_mlp_forward.1} parent=11 // pred_check
          %p1134 = pneg %p786
        $region102: #{gat_mlp_forward.1} parent=11 // pred_check_branch
          %1136 = sbr.rel (%p1134) target = $region104
        $region103: #{gat_mlp_forward.1} parent=11 // pred_region
          _
        $region104: #{gat_mlp_forward.1} parent=11 // pred_fallthru
          _
        // Predicated region
        $region105: #{gat_mlp_forward.1} parent=11 // pred_check
          %p1137 = pneg %p807
        $region106: #{gat_mlp_forward.1} parent=11 // pred_check_branch
          %1139 = sbr.rel (%p1137) target = $region108
        $region107: #{gat_mlp_forward.1} parent=11 // pred_region
          _
        $region108: #{gat_mlp_forward.1} parent=11 // pred_fallthru
          _
        // Predicated region
        $region109: #{gat_mlp_forward.1} parent=11 // pred_check
          %p1140 = pneg %p828
        $region110: #{gat_mlp_forward.1} parent=11 // pred_check_branch
          %1142 = sbr.rel (%p1140) target = $region112
        $region111: #{gat_mlp_forward.1} parent=11 // pred_region
          _
        $region112: #{gat_mlp_forward.1} parent=11 // pred_fallthru
          _
        // Predicated region
        $region113: #{gat_mlp_forward.1} parent=11 // pred_check
          %p1143 = pneg %p849
        $region114: #{gat_mlp_forward.1} parent=11 // pred_check_branch
          %1145 = sbr.rel (%p1143) target = $region116
        $region115: #{gat_mlp_forward.1} parent=11 // pred_region
          _
        $region116: #{gat_mlp_forward.1} parent=11 // pred_fallthru
          _
        // Predicated region
        $region117: #{gat_mlp_forward.1} parent=11 // pred_check
          %p1146 = pneg %p870
        $region118: #{gat_mlp_forward.1} parent=11 // pred_check_branch
          %1148 = sbr.rel (%p1146) target = $region120
        $region119: #{gat_mlp_forward.1} parent=11 // pred_region
          _
        $region120: #{gat_mlp_forward.1} parent=11 // pred_fallthru
          _
        // Predicated region
        $region121: #{gat_mlp_forward.1} parent=11 // pred_check
          %p1149 = pneg %p891
        $region122: #{gat_mlp_forward.1} parent=11 // pred_check_branch
          %1151 = sbr.rel (%p1149) target = $region124
        $region123: #{gat_mlp_forward.1} parent=11 // pred_region
          _
        $region124: #{gat_mlp_forward.1} parent=11 // pred_fallthru
          _
        // Predicated region
        $region125: #{gat_mlp_forward.1} parent=11 // pred_check
          %p1152 = pneg %p912
        $region126: #{gat_mlp_forward.1} parent=11 // pred_check_branch
          %1154 = sbr.rel (%p1152) target = $region128
        $region127: #{gat_mlp_forward.1} parent=11 // pred_region
          _
        $region128: #{gat_mlp_forward.1} parent=11 // pred_fallthru
          _
        // Predicated region
        $region129: #{gat_mlp_forward.1} parent=11 // pred_check
          %p1155 = pneg %p933
        $region130: #{gat_mlp_forward.1} parent=11 // pred_check_branch
          %1157 = sbr.rel (%p1155) target = $region132
        $region131: #{gat_mlp_forward.1} parent=11 // pred_region
          _
        $region132: #{gat_mlp_forward.1} parent=11 // pred_fallthru
          _
        // Predicated region
        $region133: #{gat_mlp_forward.1} parent=11 // pred_check
          %p1158 = pneg %p954
        $region134: #{gat_mlp_forward.1} parent=11 // pred_check_branch
          %1160 = sbr.rel (%p1158) target = $region136
        $region135: #{gat_mlp_forward.1} parent=11 // pred_region
          _
        $region136: #{gat_mlp_forward.1} parent=11 // pred_fallthru
          _
        // Predicated region
        $region137: #{gat_mlp_forward.1} parent=11 // pred_check
          %p1161 = pneg %p975
        $region138: #{gat_mlp_forward.1} parent=11 // pred_check_branch
          %1163 = sbr.rel (%p1161) target = $region140
        $region139: #{gat_mlp_forward.1} parent=11 // pred_region
          _
        $region140: #{gat_mlp_forward.1} parent=11 // pred_fallthru
          _
      $region12: #{gat_mlp_forward.1} parent=5 // pred_fallthru
        _
      %p1164 = scmp.lt.s32.totalorder %s95, 4
      // Predicated region
      $region141: #{gat_mlp_forward.1} parent=5 // pred_check
        %p1165 = pneg %p1164
      $region142: #{gat_mlp_forward.1} parent=5 // pred_check_branch
        %1167 = sbr.rel (%p1165) target = $region144
      $region143: #{gat_mlp_forward.1} parent=5 // pred_region
        // Predicated region
        $region145: #{gat_mlp_forward.1} parent=143 // pred_check
          %p1168 = pneg %p115
        $region146: #{gat_mlp_forward.1} parent=143 // pred_check_branch
          %1170 = sbr.rel (%p1168) target = $region148
        $region147: #{gat_mlp_forward.1} parent=143 // pred_region
          %p1171 = scmp.lt.s32.totalorder %s95, 3
          %s1172 = scalar_select %p1171, %s95, 3
          %s1173 = smul.addr %s1172, 2
          %s1174 = smul.addr %s1173, 8
          %s1175 = scalar_lea.vmem %s1, %s1174
        $region148: #{gat_mlp_forward.1} parent=143 // pred_fallthru
          _
        // Predicated region
        $region149: #{gat_mlp_forward.1} parent=143 // pred_check
          %p1176 = pneg %p141
        $region150: #{gat_mlp_forward.1} parent=143 // pred_check_branch
          %1178 = sbr.rel (%p1176) target = $region152
        $region151: #{gat_mlp_forward.1} parent=143 // pred_region
          %p1179 = scmp.lt.s32.totalorder %s95, 3
          %s1180 = scalar_select %p1179, %s95, 3
          %s1181 = smul.addr %s1180, 4
          %s1182 = smul.addr %s1181, 8
          %s1183 = scalar_lea.vmem %s3, %s1182
        $region152: #{gat_mlp_forward.1} parent=143 // pred_fallthru
          _
        // Predicated region
        $region153: #{gat_mlp_forward.1} parent=143 // pred_check
          %p1184 = pneg %p167
        $region154: #{gat_mlp_forward.1} parent=143 // pred_check_branch
          %1186 = sbr.rel (%p1184) target = $region156
        $region155: #{gat_mlp_forward.1} parent=143 // pred_region
          %p1187 = scmp.lt.s32.totalorder %s95, 3
          %s1188 = scalar_select %p1187, %s95, 3
          %s1189 = smul.addr %s1188, 2
          %s1190 = smul.addr %s1189, 8
          %s1191 = scalar_lea.vmem %s5, %s1190
        $region156: #{gat_mlp_forward.1} parent=143 // pred_fallthru
          _
        // Predicated region
        $region157: #{gat_mlp_forward.1} parent=143 // pred_check
          %p1192 = pneg %p193
        $region158: #{gat_mlp_forward.1} parent=143 // pred_check_branch
          %1194 = sbr.rel (%p1192) target = $region160
        $region159: #{gat_mlp_forward.1} parent=143 // pred_region
          %p1195 = scmp.lt.s32.totalorder %s95, 3
          %s1196 = scalar_select %p1195, %s95, 3
          %s1197 = smul.addr %s1196, 2
          %s1198 = smul.addr %s1197, 8
          %s1199 = scalar_lea.vmem %s7, %s1198
        $region160: #{gat_mlp_forward.1} parent=143 // pred_fallthru
          _
        // Predicated region
        $region161: #{gat_mlp_forward.1} parent=143 // pred_check
          %p1200 = pneg %p219
        $region162: #{gat_mlp_forward.1} parent=143 // pred_check_branch
          %1202 = sbr.rel (%p1200) target = $region164
        $region163: #{gat_mlp_forward.1} parent=143 // pred_region
          %p1203 = scmp.lt.s32.totalorder %s95, 3
          %s1204 = scalar_select %p1203, %s95, 3
          %s1205 = smul.addr %s1204, 2
          %s1206 = smul.addr %s1205, 8
          %s1207 = scalar_lea.vmem %s9, %s1206
        $region164: #{gat_mlp_forward.1} parent=143 // pred_fallthru
          _
        // Predicated region
        $region165: #{gat_mlp_forward.1} parent=143 // pred_check
          %p1208 = pneg %p245
        $region166: #{gat_mlp_forward.1} parent=143 // pred_check_branch
          %1210 = sbr.rel (%p1208) target = $region168
        $region167: #{gat_mlp_forward.1} parent=143 // pred_region
          %p1211 = scmp.lt.s32.totalorder %s95, 3
          %s1212 = scalar_select %p1211, %s95, 3
          %s1213 = smul.addr %s1212, 2
          %s1214 = smul.addr %s1213, 8
          %s1215 = scalar_lea.vmem %s11, %s1214
        $region168: #{gat_mlp_forward.1} parent=143 // pred_fallthru
          _
        // Predicated region
        $region169: #{gat_mlp_forward.1} parent=143 // pred_check
          %p1216 = pneg %p271
        $region170: #{gat_mlp_forward.1} parent=143 // pred_check_branch
          %1218 = sbr.rel (%p1216) target = $region172
        $region171: #{gat_mlp_forward.1} parent=143 // pred_region
          %p1219 = scmp.lt.s32.totalorder %s95, 3
          %s1220 = scalar_select %p1219, %s95, 3
          %s1221 = smul.addr %s1220, 2
          %s1222 = smul.addr %s1221, 8
          %s1223 = scalar_lea.vmem %s13, %s1222
        $region172: #{gat_mlp_forward.1} parent=143 // pred_fallthru
          _
        // Predicated region
        $region173: #{gat_mlp_forward.1} parent=143 // pred_check
          %p1224 = pneg %p297
        $region174: #{gat_mlp_forward.1} parent=143 // pred_check_branch
          %1226 = sbr.rel (%p1224) target = $region176
        $region175: #{gat_mlp_forward.1} parent=143 // pred_region
          %p1227 = scmp.lt.s32.totalorder %s95, 3
          %s1228 = scalar_select %p1227, %s95, 3
          %s1229 = smul.addr %s1228, 2
          %s1230 = smul.addr %s1229, 8
          %s1231 = scalar_lea.vmem %s15, %s1230
        $region176: #{gat_mlp_forward.1} parent=143 // pred_fallthru
          _
      $region144: #{gat_mlp_forward.1} parent=5 // pred_fallthru
        _
      %p1232 = scmp.le.s32.totalorder 1, %s95
      %p1233 = scmp.lt.s32.totalorder %s95, 5
      %p1234 = pnand %p1232, %p1233
      %p1235 = pneg %p1234
      // Predicated region
      $region177: #{gat_mlp_forward.1} parent=5 // pred_check
        _
      $region178: #{gat_mlp_forward.1} parent=5 // pred_check_branch
        %1237 = sbr.rel (%p1234) target = $region180
      $region179: #{gat_mlp_forward.1} parent=5 // pred_region
        %s1238 = ssub.s32 %s95, 1
        %p1239 = scmp.lt.s32.totalorder %s100, 3
        %s1240 = scalar_select %p1239, %s100, 3
        %s1241 = smul.addr %s1240, 2
        %s1242 = smul.addr %s1241, 8
        %s1243 = scalar_lea.vmem %s1, %s1242
        %p1244 = pneg %p121
        %p1245 = pneg %p118
        %p1246 = scmp.lt.s32.totalorder %s100, 3
        %s1247 = scalar_select %p1246, %s100, 3
        %s1248 = smul.addr %s1247, 4
        %s1249 = smul.addr %s1248, 8
        %s1250 = scalar_lea.vmem %s3, %s1249
        %p1251 = pneg %p147
        %p1252 = pneg %p144
        %p1253 = scmp.lt.s32.totalorder %s100, 3
        %s1254 = scalar_select %p1253, %s100, 3
        %s1255 = smul.addr %s1254, 2
        %s1256 = smul.addr %s1255, 8
        %s1257 = scalar_lea.vmem %s5, %s1256
        %p1258 = pneg %p173
        %p1259 = pneg %p170
        %p1260 = scmp.lt.s32.totalorder %s100, 3
        %s1261 = scalar_select %p1260, %s100, 3
        %s1262 = smul.addr %s1261, 2
        %s1263 = smul.addr %s1262, 8
        %s1264 = scalar_lea.vmem %s7, %s1263
        %p1265 = pneg %p199
        %p1266 = pneg %p196
        %p1267 = scmp.lt.s32.totalorder %s100, 3
        %s1268 = scalar_select %p1267, %s100, 3
        %s1269 = smul.addr %s1268, 2
        %s1270 = smul.addr %s1269, 8
        %s1271 = scalar_lea.vmem %s9, %s1270
        %p1272 = pneg %p225
        %p1273 = pneg %p222
        %p1274 = scmp.lt.s32.totalorder %s100, 3
        %s1275 = scalar_select %p1274, %s100, 3
        %s1276 = smul.addr %s1275, 2
        %s1277 = smul.addr %s1276, 8
        %s1278 = scalar_lea.vmem %s11, %s1277
        %p1279 = pneg %p251
        %p1280 = pneg %p248
        %p1281 = scmp.lt.s32.totalorder %s100, 3
        %s1282 = scalar_select %p1281, %s100, 3
        %s1283 = smul.addr %s1282, 2
        %s1284 = smul.addr %s1283, 8
        %s1285 = scalar_lea.vmem %s13, %s1284
        %p1286 = pneg %p277
        %p1287 = pneg %p274
        %p1288 = scmp.lt.s32.totalorder %s100, 3
        %s1289 = scalar_select %p1288, %s100, 3
        %s1290 = smul.addr %s1289, 2
        %s1291 = smul.addr %s1290, 8
        %s1292 = scalar_lea.vmem %s15, %s1291
        %p1293 = pneg %p303
        %p1294 = pneg %p300
        %p1295 = pneg %p324
        %p1296 = pneg %p321
        %p1297 = pneg %p345
        %p1298 = pneg %p342
        %p1299 = pneg %p366
        %p1300 = pneg %p363
        %p1301 = pneg %p387
        %p1302 = pneg %p384
        %p1303 = pneg %p408
        %p1304 = pneg %p405
        %p1305 = pneg %p429
        %p1306 = pneg %p426
        %p1307 = pneg %p450
        %p1308 = pneg %p447
        %p1309 = pneg %p471
        %p1310 = pneg %p468
        %p1311 = pneg %p492
        %p1312 = pneg %p489
        %p1313 = pneg %p513
        %p1314 = pneg %p510
        %p1315 = pneg %p534
        %p1316 = pneg %p531
        %p1317 = pneg %p555
        %p1318 = pneg %p552
        %p1319 = pneg %p576
        %p1320 = pneg %p573
        %p1321 = pneg %p597
        %p1322 = pneg %p594
        %p1323 = pneg %p618
        %p1324 = pneg %p615
        %p1325 = pneg %p639
        %p1326 = pneg %p636
        %p1327 = pneg %p660
        %p1328 = pneg %p657
        %p1329 = pneg %p681
        %p1330 = pneg %p678
        %p1331 = pneg %p702
        %p1332 = pneg %p699
        %p1333 = pneg %p723
        %p1334 = pneg %p720
        %p1335 = pneg %p744
        %p1336 = pneg %p741
        %p1337 = pneg %p765
        %p1338 = pneg %p762
        %p1339 = pneg %p786
        %p1340 = pneg %p783
        %p1341 = pneg %p807
        %p1342 = pneg %p804
        %p1343 = pneg %p828
        %p1344 = pneg %p825
        %p1345 = pneg %p849
        %p1346 = pneg %p846
        %p1347 = pneg %p870
        %p1348 = pneg %p867
        %p1349 = pneg %p891
        %p1350 = pneg %p888
        %p1351 = pneg %p912
        %p1352 = pneg %p909
        %p1353 = pneg %p933
        %p1354 = pneg %p930
        %p1355 = pneg %p954
        %p1356 = pneg %p951
        %p1357 = pneg %p975
        %p1358 = pneg %p972
        %p1359 = pneg %p1001
        %p1360 = pneg %p998
        %s1361 = sand.u32 %s988, 1
        %s1362 = scalar_lea.sflag [#allocation3], %s1361
        %s1363 = sand.u32 %s988, 1
        %s1364 = smul.addr %s1363, 16
        %s1365 = scalar_lea.vmem [#allocation2], %s1364
        %p1366 = pneg %p1027
        %p1367 = pneg %p1024
        %p1368 = scmp.lt.s32.totalorder %s100, 3
        %s1369 = scalar_select %p1368, %s100, 3
        %s1370 = smul.addr %s1369, 2
        %s1371 = smul.addr %s1370, 8
        %s1372 = scalar_lea.vmem %s83, %s1371
        %p1373 = pneg %p1053
        %p1374 = pneg %p1050
        %p1375 = scmp.lt.s32.totalorder %s100, 3
        %s1376 = scalar_select %p1375, %s100, 3
        %s1377 = scalar_lea.vmem %s85, %s1376
        %p1378 = scmp.lt.s32.totalorder %s100, 3
        %s1379 = scalar_select %p1378, %s100, 3
        %s1380 = smul.addr %s1379, 2
        %s1381 = smul.addr %s1380, 8
        %s1382 = scalar_lea.vmem %s1, %s1381
        %p1383 = scmp.lt.s32.totalorder %s100, 3
        %s1384 = scalar_select %p1383, %s100, 3
        %s1385 = smul.addr %s1384, 4
        %s1386 = smul.addr %s1385, 8
        %s1387 = scalar_lea.vmem %s3, %s1386
        %p1388 = scmp.lt.s32.totalorder %s100, 3
        %s1389 = scalar_select %p1388, %s100, 3
        %s1390 = smul.addr %s1389, 2
        %s1391 = smul.addr %s1390, 8
        %s1392 = scalar_lea.vmem %s5, %s1391
        %p1393 = scmp.lt.s32.totalorder %s100, 3
        %s1394 = scalar_select %p1393, %s100, 3
        %s1395 = smul.addr %s1394, 2
        %s1396 = smul.addr %s1395, 8
        %s1397 = scalar_lea.vmem %s7, %s1396
        %p1398 = scmp.lt.s32.totalorder %s100, 3
        %s1399 = scalar_select %p1398, %s100, 3
        %s1400 = smul.addr %s1399, 2
        %s1401 = smul.addr %s1400, 8
        %s1402 = scalar_lea.vmem %s9, %s1401
        %p1403 = scmp.lt.s32.totalorder %s100, 3
        %s1404 = scalar_select %p1403, %s100, 3
        %s1405 = smul.addr %s1404, 2
        %s1406 = smul.addr %s1405, 8
        %s1407 = scalar_lea.vmem %s11, %s1406
        %p1408 = scmp.lt.s32.totalorder %s100, 3
        %s1409 = scalar_select %p1408, %s100, 3
        %s1410 = smul.addr %s1409, 2
        %s1411 = smul.addr %s1410, 8
        %s1412 = scalar_lea.vmem %s13, %s1411
        %p1413 = scmp.lt.s32.totalorder %s100, 3
        %s1414 = scalar_select %p1413, %s100, 3
        %s1415 = smul.addr %s1414, 2
        %s1416 = smul.addr %s1415, 8
        %s1417 = scalar_lea.vmem %s15, %s1416
        %p1418 = scmp.lt.s32.totalorder %s100, 3
        %s1419 = scalar_select %p1418, %s100, 3
        %s1420 = smul.addr %s1419, 2
        %s1421 = smul.addr %s1420, 8
        %s1422 = scalar_lea.vmem %s83, %s1421
        %p1423 = scmp.lt.s32.totalorder %s100, 3
        %s1424 = scalar_select %p1423, %s100, 3
        %s1425 = scalar_lea.vmem %s85, %s1424
        %v1427 = vld [vmem:[%s1382] sm:$0xff]
        %v1428 = vld [vmem:[%s1382 + $0x8] sm:$0x3]
        %v1429 = vld [vmem:[%s21] sm:$0xf]
        %v1430 = vpack.c.bf16 %v1428, %v1427
        %v1431 = vld [vmem:[%s23] sm:$0x1]
        %v1433 = vlaneseq
        %v1434 = vshrl.u32 %v1433, 7
        %v1435 = vsub.s32 0, %v1434
        %v1436 = vrot.slane %v1431, %v1435
        %vm1438 = vcmask 64512
        %v1440 = vsel %vm1438, %v1430, 0
        %vm1442 = vcmask 1043456
        %v1444 = vsel %vm1442, %v1429, 0
        %1446 = vmatprep.subr.bf16.mxu0 0
        %1447 = vmatpush1.bf16.msra.mxu0 %v1444
        %1448 = vmatprep.subr.bf16.mxu0 0
        %1449 = vmatpush1.bf16.msra.mxu0 0
        %1450 = vmatprep.subr.bf16.mxu0 0
        %1451 = vmatpush1.bf16.msra.mxu0 0
        %1452 = vmatprep.subr.bf16.mxu0 0
        %1453 = vmatpush1.bf16.msra.mxu0 0
        %1454 = vmatprep.subr.bf16.mxu0 0
        %1455 = vmatpush1.bf16.msra.mxu0 0
        %1456 = vmatprep.subr.bf16.mxu0 0
        %1457 = vmatpush1.bf16.msra.mxu0 0
        %1458 = vmatprep.subr.bf16.mxu0 0
        %1459 = vmatpush1.bf16.msra.mxu0 0
        %1460 = vmatprep.subr.bf16.mxu0 0
        %1461 = vmatpush1.bf16.msra.mxu0 0
        %1462 = vmatprep.subr.bf16.mxu0 0
        %1463 = vmatpush1.bf16.msra.mxu0 0
        %1464 = vmatprep.subr.bf16.mxu0 0
        %1465 = vmatpush1.bf16.msra.mxu0 0
        %1466 = vmatprep.subr.bf16.mxu0 0
        %1467 = vmatpush1.bf16.msra.mxu0 0
        %1468 = vmatprep.subr.bf16.mxu0 0
        %1469 = vmatpush1.bf16.msra.mxu0 0
        %1470 = vmatprep.subr.bf16.mxu0 0
        %1471 = vmatpush1.bf16.msra.mxu0 0
        %1472 = vmatprep.subr.bf16.mxu0 0
        %1473 = vmatpush1.bf16.msra.mxu0 0
        %1474 = vmatprep.subr.bf16.mxu0 0
        %1475 = vmatpush1.bf16.msra.mxu0 0
        %1476 = vmatprep.subr.bf16.mxu0 0
        %1477 = vmatpush1.bf16.msra.mxu0 0
        %1478 = vmatprep.mubr.bf16.mxu0 0
        %1479 = vmatmul.mubr.bf16.gmra.mrb[0].mxu0 %v1440
        %v1480 = vpop.f32.mrb[0].mxu0
        %v1481 = vadd.f32 %v1436, %v1480
        %v1482 = vpop.f32.mrb[0].mxu0
        %v1483 = vpop.f32.mrb[0].mxu0
        %v1484 = vadd.f32 %v1436, %v1483
        %v1485 = vpop.f32.mrb[0].mxu0
        %1486 = vdwg.mxu0
        %v1487 = vld [vmem:[%s1387] sm:$0xff]
        %v1488 = vld [vmem:[%s1387 + $0x8] sm:$0xff]
        %v1489 = vld [vmem:[%s1387 + $0x10] sm:$0xff]
        %v1490 = vld [vmem:[%s1387 + $0x18] sm:$0xf]
        %v1491 = vld [vmem:[%s25] sm:$0x1]
        %v1492 = vpack.c.bf16 %v1488, %v1487
        %v1493 = vpack.c.bf16 %v1490, %v1489
        %v1494 = vld [vmem:[%s27] sm:$0x1]
        %v1496 = vlaneseq
        %v1497 = vshrl.u32 %v1496, 7
        %v1498 = vsub.s32 0, %v1497
        %v1499 = vrot.slane %v1494, %v1498
        %vm1501 = vcmask 15360
        %v1503 = vsel %vm1501, %v1492, 0
        %v1506 = vsel %vm1501, %v1493, 0
        %vm1508 = vcmask 1040384
        %v1510 = vsel %vm1508, %v1491, 0
        %1512 = vmatprep.subr.bf16.mxu0 0
        %1513 = vmatpush1.bf16.msra.mxu0 %v1510
        %1514 = vmatprep.subr.bf16.mxu0 0
        %1515 = vmatpush1.bf16.msra.mxu0 0
        %1516 = vmatprep.subr.bf16.mxu0 0
        %1517 = vmatpush1.bf16.msra.mxu0 0
        %1518 = vmatprep.subr.bf16.mxu0 0
        %1519 = vmatpush1.bf16.msra.mxu0 0
        %1520 = vmatprep.subr.bf16.mxu0 0
        %1521 = vmatpush1.bf16.msra.mxu0 0
        %1522 = vmatprep.subr.bf16.mxu0 0
        %1523 = vmatpush1.bf16.msra.mxu0 0
        %1524 = vmatprep.subr.bf16.mxu0 0
        %1525 = vmatpush1.bf16.msra.mxu0 0
        %1526 = vmatprep.subr.bf16.mxu0 0
        %1527 = vmatpush1.bf16.msra.mxu0 0
        %1528 = vmatprep.subr.bf16.mxu0 0
        %1529 = vmatpush1.bf16.msra.mxu0 0
        %1530 = vmatprep.subr.bf16.mxu0 0
        %1531 = vmatpush1.bf16.msra.mxu0 0
        %1532 = vmatprep.subr.bf16.mxu0 0
        %1533 = vmatpush1.bf16.msra.mxu0 0
        %1534 = vmatprep.subr.bf16.mxu0 0
        %1535 = vmatpush1.bf16.msra.mxu0 0
        %1536 = vmatprep.subr.bf16.mxu0 0
        %1537 = vmatpush1.bf16.msra.mxu0 0
        %1538 = vmatprep.subr.bf16.mxu0 0
        %1539 = vmatpush1.bf16.msra.mxu0 0
        %1540 = vmatprep.subr.bf16.mxu0 0
        %1541 = vmatpush1.bf16.msra.mxu0 0
        %1542 = vmatprep.subr.bf16.mxu0 0
        %1543 = vmatpush1.bf16.msra.mxu0 0
        %1544 = vmatprep.mubr.bf16.mxu0 0
        %1545 = vmatmul.mubr.bf16.gmra.mrb[0].mxu0 %v1503
        %v1546 = vpop.f32.mrb[0].mxu0
        %v1547 = vadd.f32 %v1499, %v1546
        %v1548 = vpop.f32.mrb[0].mxu0
        %v1549 = vpop.f32.mrb[0].mxu0
        %v1550 = vadd.f32 %v1499, %v1549
        %v1551 = vpop.f32.mrb[0].mxu0
        %1552 = vmatprep.mubr.bf16.mxu0 0
        %1553 = vmatmul.mubr.bf16.gmra.mrb[0].mxu0 %v1506
        %v1554 = vpop.f32.mrb[0].mxu0
        %v1555 = vadd.f32 %v1499, %v1554
        %v1556 = vpop.f32.mrb[0].mxu0
        %v1557 = vpop.f32.mrb[0].mxu0
        %v1558 = vadd.f32 %v1499, %v1557
        %v1559 = vpop.f32.mrb[0].mxu0
        %1560 = vdwg.mxu0
        %v1561 = vld [vmem:[%s1392] sm:$0xff]
        %v1562 = vld [vmem:[%s1392 + $0x8] sm:$0xff]
        %v1563 = vld [vmem:[%s1397] sm:$0xff]
        %v1564 = vld [vmem:[%s1397 + $0x8] sm:$0xff]
        %v1565 = vld [vmem:[%s1402] sm:$0xff]
        %v1566 = vld [vmem:[%s1402 + $0x8] sm:$0x3]
        %v1567 = vld [vmem:[%s29] sm:$0xff]
        %v1568 = vld [vmem:[%s29 + $0x8] sm:$0xff]
        %v1569 = vpack.c.bf16 %v1484, %v1481
        %v1572 = vunpack.c.l.b16 %v1567
        %v1573 = vunpack.c.h.b16 %v1567
        %v1574 = vunpack.c.l.b16 %v1568
        %v1575 = vunpack.c.h.b16 %v1568
        %v1576 = vpack.c.b16 %v1574, %v1572
        %v1577 = vpack.c.b16 %v1575, %v1573
        %vm1580 = vcmask 130048
        %v1582 = vsel %vm1580, %v1569, 0
        %1584 = vmatprep.subr.bf16.mxu0 %v1577
        %1585 = vmatpush1.bf16.msra.mxu0 %v1576
        %1586 = vmatprep.subr.bf16.mxu0 0
        %1587 = vmatpush1.bf16.msra.mxu0 0
        %1588 = vmatprep.subr.bf16.mxu0 0
        %1589 = vmatpush1.bf16.msra.mxu0 0
        %1590 = vmatprep.subr.bf16.mxu0 0
        %1591 = vmatpush1.bf16.msra.mxu0 0
        %1592 = vmatprep.subr.bf16.mxu0 0
        %1593 = vmatpush1.bf16.msra.mxu0 0
        %1594 = vmatprep.subr.bf16.mxu0 0
        %1595 = vmatpush1.bf16.msra.mxu0 0
        %1596 = vmatprep.subr.bf16.mxu0 0
        %1597 = vmatpush1.bf16.msra.mxu0 0
        %1598 = vmatprep.subr.bf16.mxu0 0
        %1599 = vmatpush1.bf16.msra.mxu0 0
        %1600 = vmatprep.subr.bf16.mxu0 0
        %1601 = vmatpush1.bf16.msra.mxu0 0
        %1602 = vmatprep.subr.bf16.mxu0 0
        %1603 = vmatpush1.bf16.msra.mxu0 0
        %1604 = vmatprep.subr.bf16.mxu0 0
        %1605 = vmatpush1.bf16.msra.mxu0 0
        %1606 = vmatprep.subr.bf16.mxu0 0
        %1607 = vmatpush1.bf16.msra.mxu0 0
        %1608 = vmatprep.subr.bf16.mxu0 0
        %1609 = vmatpush1.bf16.msra.mxu0 0
        %1610 = vmatprep.subr.bf16.mxu0 0
        %1611 = vmatpush1.bf16.msra.mxu0 0
        %1612 = vmatprep.subr.bf16.mxu0 0
        %1613 = vmatpush1.bf16.msra.mxu0 0
        %1614 = vmatprep.subr.bf16.mxu0 0
        %1615 = vmatpush1.bf16.msra.mxu0 0
        %1616 = vmatprep.mubr.bf16.mxu0 0
        %1617 = vmatmul.mubr.bf16.gmra.mrb[0].mxu0 %v1582
        %v1618 = vpop.f32.mrb[0].mxu0
        %v1619 = vadd.f32 0.0, %v1618
        %v1620 = vpop.f32.mrb[0].mxu0
        %v1621 = vadd.f32 0.0, %v1620
        %v1622 = vpop.f32.mrb[0].mxu0
        %v1623 = vadd.f32 0.0, %v1622
        %v1624 = vpop.f32.mrb[0].mxu0
        %v1625 = vadd.f32 0.0, %v1624
        %1626 = vdwg.mxu0
        %v1627 = vpack.c.bf16 %v1562, %v1561
        %v1628 = vpack.c.bf16 %v1623, %v1619
        %vm1629 = vcmask 80896
        %v1631 = vsel %vm1629, %v1627, 0
        %vm1633 = vcmask 1044480
        %v1635 = vsel %vm1633, %v1628, 0
        %1637 = vmatprep.subr.bf16.mxu0 0
        %1638 = vmatpush1.bf16.msra.mxu0 %v1635
        %1639 = vmatprep.subr.bf16.mxu0 0
        %1640 = vmatpush1.bf16.msra.mxu0 0
        %1641 = vmatprep.subr.bf16.mxu0 0
        %1642 = vmatpush1.bf16.msra.mxu0 0
        %1643 = vmatprep.subr.bf16.mxu0 0
        %1644 = vmatpush1.bf16.msra.mxu0 0
        %1645 = vmatprep.subr.bf16.mxu0 0
        %1646 = vmatpush1.bf16.msra.mxu0 0
        %1647 = vmatprep.subr.bf16.mxu0 0
        %1648 = vmatpush1.bf16.msra.mxu0 0
        %1649 = vmatprep.subr.bf16.mxu0 0
        %1650 = vmatpush1.bf16.msra.mxu0 0
        %1651 = vmatprep.subr.bf16.mxu0 0
        %1652 = vmatpush1.bf16.msra.mxu0 0
        %1653 = vmatprep.subr.bf16.mxu0 0
        %1654 = vmatpush1.bf16.msra.mxu0 0
        %1655 = vmatprep.subr.bf16.mxu0 0
        %1656 = vmatpush1.bf16.msra.mxu0 0
        %1657 = vmatprep.subr.bf16.mxu0 0
        %1658 = vmatpush1.bf16.msra.mxu0 0
        %1659 = vmatprep.subr.bf16.mxu0 0
        %1660 = vmatpush1.bf16.msra.mxu0 0
        %1661 = vmatprep.subr.bf16.mxu0 0
        %1662 = vmatpush1.bf16.msra.mxu0 0
        %1663 = vmatprep.subr.bf16.mxu0 0
        %1664 = vmatpush1.bf16.msra.mxu0 0
        %1665 = vmatprep.subr.bf16.mxu0 0
        %1666 = vmatpush1.bf16.msra.mxu0 0
        %1667 = vmatprep.subr.bf16.mxu0 0
        %1668 = vmatpush1.bf16.msra.mxu0 0
        %1669 = vmatprep.mubr.bf16.mxu0 0
        %1670 = vmatmul.mubr.bf16.gmra.mrb[0].mxu0 %v1631
        %v1671 = vpop.f32.mrb[0].mxu0
        %v1672 = vadd.f32 0.0, %v1671
        %v1673 = vpop.f32.mrb[0].mxu0
        %v1674 = vpop.f32.mrb[0].mxu0
        %v1675 = vadd.f32 0.0, %v1674
        %v1676 = vpop.f32.mrb[0].mxu0
        %1677 = vdwg.mxu0
        %v1678 = vpack.c.bf16 %v1564, %v1563
        %v1679 = vpack.c.bf16 %v1625, %v1621
        %v1681 = vsel %vm1629, %v1678, 0
        %v1684 = vsel %vm1633, %v1679, 0
        %1686 = vmatprep.subr.bf16.mxu0 0
        %1687 = vmatpush1.bf16.msra.mxu0 %v1684
        %1688 = vmatprep.subr.bf16.mxu0 0
        %1689 = vmatpush1.bf16.msra.mxu0 0
        %1690 = vmatprep.subr.bf16.mxu0 0
        %1691 = vmatpush1.bf16.msra.mxu0 0
        %1692 = vmatprep.subr.bf16.mxu0 0
        %1693 = vmatpush1.bf16.msra.mxu0 0
        %1694 = vmatprep.subr.bf16.mxu0 0
        %1695 = vmatpush1.bf16.msra.mxu0 0
        %1696 = vmatprep.subr.bf16.mxu0 0
        %1697 = vmatpush1.bf16.msra.mxu0 0
        %1698 = vmatprep.subr.bf16.mxu0 0
        %1699 = vmatpush1.bf16.msra.mxu0 0
        %1700 = vmatprep.subr.bf16.mxu0 0
        %1701 = vmatpush1.bf16.msra.mxu0 0
        %1702 = vmatprep.subr.bf16.mxu0 0
        %1703 = vmatpush1.bf16.msra.mxu0 0
        %1704 = vmatprep.subr.bf16.mxu0 0
        %1705 = vmatpush1.bf16.msra.mxu0 0
        %1706 = vmatprep.subr.bf16.mxu0 0
        %1707 = vmatpush1.bf16.msra.mxu0 0
        %1708 = vmatprep.subr.bf16.mxu0 0
        %1709 = vmatpush1.bf16.msra.mxu0 0
        %1710 = vmatprep.subr.bf16.mxu0 0
        %1711 = vmatpush1.bf16.msra.mxu0 0
        %1712 = vmatprep.subr.bf16.mxu0 0
        %1713 = vmatpush1.bf16.msra.mxu0 0
        %1714 = vmatprep.subr.bf16.mxu0 0
        %1715 = vmatpush1.bf16.msra.mxu0 0
        %1716 = vmatprep.subr.bf16.mxu0 0
        %1717 = vmatpush1.bf16.msra.mxu0 0
        %1718 = vmatprep.mubr.bf16.mxu0 0
        %1719 = vmatmul.mubr.bf16.gmra.mrb[0].mxu0 %v1681
        %v1720 = vpop.f32.mrb[0].mxu0
        %v1721 = vadd.f32 0.0, %v1720
        %v1722 = vpop.f32.mrb[0].mxu0
        %v1723 = vpop.f32.mrb[0].mxu0
        %v1724 = vadd.f32 0.0, %v1723
        %v1725 = vpop.f32.mrb[0].mxu0
        %1726 = vdwg.mxu0
        %v1727 = vadd.f32 %v1672, %v1721
        %v1728 = vadd.f32 %v1675, %v1724
        %v1729 = vld [vmem:[%s31] sm:$0xf]
        %v1730 = vld [vmem:[%s31 + $0x4] sm:$0xf]
        %v1731 = vpack.c.bf16 %v1550, %v1547
        %v1734 = vunpack.c.l.b16 %v1729
        %v1735 = vunpack.c.l.b16 %v1730
        %v1736 = vpack.c.b16 %v1735, %v1734
        %v1739 = vsel %vm1580, %v1731, 0
        %1741 = vmatprep.subr.bf16.mxu0 0
        %1742 = vmatpush1.bf16.msra.mxu0 %v1736
        %1743 = vmatprep.subr.bf16.mxu0 0
        %1744 = vmatpush1.bf16.msra.mxu0 0
        %1745 = vmatprep.subr.bf16.mxu0 0
        %1746 = vmatpush1.bf16.msra.mxu0 0
        %1747 = vmatprep.subr.bf16.mxu0 0
        %1748 = vmatpush1.bf16.msra.mxu0 0
        %1749 = vmatprep.subr.bf16.mxu0 0
        %1750 = vmatpush1.bf16.msra.mxu0 0
        %1751 = vmatprep.subr.bf16.mxu0 0
        %1752 = vmatpush1.bf16.msra.mxu0 0
        %1753 = vmatprep.subr.bf16.mxu0 0
        %1754 = vmatpush1.bf16.msra.mxu0 0
        %1755 = vmatprep.subr.bf16.mxu0 0
        %1756 = vmatpush1.bf16.msra.mxu0 0
        %1757 = vmatprep.subr.bf16.mxu0 0
        %1758 = vmatpush1.bf16.msra.mxu0 0
        %1759 = vmatprep.subr.bf16.mxu0 0
        %1760 = vmatpush1.bf16.msra.mxu0 0
        %1761 = vmatprep.subr.bf16.mxu0 0
        %1762 = vmatpush1.bf16.msra.mxu0 0
        %1763 = vmatprep.subr.bf16.mxu0 0
        %1764 = vmatpush1.bf16.msra.mxu0 0
        %1765 = vmatprep.subr.bf16.mxu0 0
        %1766 = vmatpush1.bf16.msra.mxu0 0
        %1767 = vmatprep.subr.bf16.mxu0 0
        %1768 = vmatpush1.bf16.msra.mxu0 0
        %1769 = vmatprep.subr.bf16.mxu0 0
        %1770 = vmatpush1.bf16.msra.mxu0 0
        %1771 = vmatprep.subr.bf16.mxu0 0
        %1772 = vmatpush1.bf16.msra.mxu0 0
        %1773 = vmatprep.mubr.bf16.mxu0 0
        %1774 = vmatmul.mubr.bf16.gmra.mrb[0].mxu0 %v1739
        %v1775 = vpop.f32.mrb[0].mxu0
        %v1776 = vadd.f32 0.0, %v1775
        %v1777 = vpop.f32.mrb[0].mxu0
        %v1778 = vpop.f32.mrb[0].mxu0
        %v1779 = vadd.f32 0.0, %v1778
        %v1780 = vpop.f32.mrb[0].mxu0
        %1781 = vdwg.mxu0
        %v1782 = vadd.f32 %v1727, %v1776
        %v1783 = vadd.f32 %v1728, %v1779
        %v1784 = vld [vmem:[%s33] sm:$0x1]
        %v1786 = vlaneseq
        %v1787 = vshrl.u32 %v1786, 7
        %v1788 = vsub.s32 0, %v1787
        %v1789 = vrot.slane %v1784, %v1788
        %v1791 = vadd.f32 %v1782, %v1789
        %v1792 = vadd.f32 %v1783, %v1789
        %vm1793 = vcmp.ge.f32.partialorder %v1791, 0.0
        %vm1794 = vcmp.ge.f32.partialorder %v1792, 0.0
        %v1795 = vmul.f32 %v1791, 0.01
        %v1796 = vmul.f32 %v1792, 0.01
        %v1797 = vsel %vm1793, %v1791, %v1795
        %v1798 = vsel %vm1794, %v1792, %v1796
        %v1799 = vld [vmem:[%s35] sm:$0xf]
        %v1800 = vld [vmem:[%s35 + $0x4] sm:$0xf]
        %v1801 = vld [vmem:[%s35 + $0x8] sm:$0xf]
        %v1802 = vld [vmem:[%s35 + $0xc] sm:$0xf]
        %v1803 = vld [vmem:[%s35 + $0x10] sm:$0xf]
        %v1804 = vld [vmem:[%s35 + $0x14] sm:$0xf]
        %v1805 = vld [vmem:[%s35 + $0x18] sm:$0xf]
        %v1806 = vld [vmem:[%s35 + $0x1c] sm:$0xf]
        %v1807 = vpack.c.bf16 %v1798, %v1797
        %v1816 = vunpack.c.l.b16 %v1799
        %v1817 = vunpack.c.l.b16 %v1800
        %v1818 = vunpack.c.l.b16 %v1801
        %v1819 = vunpack.c.l.b16 %v1802
        %v1820 = vunpack.c.l.b16 %v1803
        %v1821 = vunpack.c.l.b16 %v1804
        %v1822 = vunpack.c.l.b16 %v1805
        %v1823 = vunpack.c.l.b16 %v1806
        %v1824 = vpack.c.b16 %v1817, %v1816
        %v1825 = vpack.c.b16 %v1819, %v1818
        %v1826 = vpack.c.b16 %v1821, %v1820
        %v1827 = vpack.c.b16 %v1823, %v1822
        %vm1832 = vcmask 523264
        %v1834 = vsel %vm1832, %v1807, 0
        %1836 = vmatprep.subr.bf16.mxu0 0
        %1837 = vmatpush1.bf16.msra.mxu0 %v1824
        %1838 = vmatprep.subr.bf16.mxu0 0
        %1839 = vmatpush1.bf16.msra.mxu0 %v1825
        %1840 = vmatprep.subr.bf16.mxu0 0
        %1841 = vmatpush1.bf16.msra.mxu0 %v1826
        %1842 = vmatprep.subr.bf16.mxu0 0
        %1843 = vmatpush1.bf16.msra.mxu0 %v1827
        %1844 = vmatprep.subr.bf16.mxu0 0
        %1845 = vmatpush1.bf16.msra.mxu0 0
        %1846 = vmatprep.subr.bf16.mxu0 0
        %1847 = vmatpush1.bf16.msra.mxu0 0
        %1848 = vmatprep.subr.bf16.mxu0 0
        %1849 = vmatpush1.bf16.msra.mxu0 0
        %1850 = vmatprep.subr.bf16.mxu0 0
        %1851 = vmatpush1.bf16.msra.mxu0 0
        %1852 = vmatprep.subr.bf16.mxu0 0
        %1853 = vmatpush1.bf16.msra.mxu0 0
        %1854 = vmatprep.subr.bf16.mxu0 0
        %1855 = vmatpush1.bf16.msra.mxu0 0
        %1856 = vmatprep.subr.bf16.mxu0 0
        %1857 = vmatpush1.bf16.msra.mxu0 0
        %1858 = vmatprep.subr.bf16.mxu0 0
        %1859 = vmatpush1.bf16.msra.mxu0 0
        %1860 = vmatprep.subr.bf16.mxu0 0
        %1861 = vmatpush1.bf16.msra.mxu0 0
        %1862 = vmatprep.subr.bf16.mxu0 0
        %1863 = vmatpush1.bf16.msra.mxu0 0
        %1864 = vmatprep.subr.bf16.mxu0 0
        %1865 = vmatpush1.bf16.msra.mxu0 0
        %1866 = vmatprep.subr.bf16.mxu0 0
        %1867 = vmatpush1.bf16.msra.mxu0 0
        %1868 = vmatprep.mubr.bf16.mxu0 0
        %1869 = vmatmul.mubr.bf16.gmra.mrb[0].mxu0 %v1834
        %v1870 = vpop.f32.mrb[0].mxu0
        %v1871 = vadd.f32 0.0, %v1870
        %v1872 = vpop.f32.mrb[0].mxu0
        %v1873 = vpop.f32.mrb[0].mxu0
        %v1874 = vadd.f32 0.0, %v1873
        %v1875 = vpop.f32.mrb[0].mxu0
        %1876 = vdwg.mxu0
        %v1877 = vlaneseq
        %v1878 = vshrl.u32 %v1877, 7
        %v1879 = vsub.s32 0, %v1878
        %v1880 = vrot.slane %v1563, %v1879
        %1882 = vbcast.lane.b32.xlu0 %v1880, 256
        %v1883 = vpop.permute.xlu0 %1882
        %s1885 = sor.u32 256, 8
        %1886 = vbcast.lane.b32.xlu0 %v1880, %s1885
        %v1887 = vpop.permute.xlu0 %1886
        %v1888 = vlaneseq
        %v1889 = vshrl.u32 %v1888, 7
        %v1890 = vsub.s32 1, %v1889
        %v1891 = vrot.slane %v1563, %v1890
        %1893 = vbcast.lane.b32.xlu0 %v1891, 256
        %v1894 = vpop.permute.xlu0 %1893
        %s1896 = sor.u32 256, 8
        %1897 = vbcast.lane.b32.xlu0 %v1891, %s1896
        %v1898 = vpop.permute.xlu0 %1897
        %v1899 = vlaneseq
        %v1900 = vshrl.u32 %v1899, 7
        %v1901 = vsub.s32 2, %v1900
        %v1902 = vrot.slane %v1563, %v1901
        %1904 = vbcast.lane.b32.xlu0 %v1902, 256
        %v1905 = vpop.permute.xlu0 %1904
        %s1907 = sor.u32 256, 8
        %1908 = vbcast.lane.b32.xlu0 %v1902, %s1907
        %v1909 = vpop.permute.xlu0 %1908
        %v1910 = vlaneseq
        %v1911 = vshrl.u32 %v1910, 7
        %v1912 = vsub.s32 3, %v1911
        %v1913 = vrot.slane %v1563, %v1912
        %1915 = vbcast.lane.b32.xlu0 %v1913, 256
        %v1916 = vpop.permute.xlu0 %1915
        %s1918 = sor.u32 256, 8
        %1919 = vbcast.lane.b32.xlu0 %v1913, %s1918
        %v1920 = vpop.permute.xlu0 %1919
        %v1921 = vlaneseq
        %v1922 = vshrl.u32 %v1921, 7
        %v1923 = vsub.s32 4, %v1922
        %v1924 = vrot.slane %v1563, %v1923
        %1926 = vbcast.lane.b32.xlu0 %v1924, 256
        %v1927 = vpop.permute.xlu0 %1926
        %s1929 = sor.u32 256, 8
        %1930 = vbcast.lane.b32.xlu0 %v1924, %s1929
        %v1931 = vpop.permute.xlu0 %1930
        %v1932 = vlaneseq
        %v1933 = vshrl.u32 %v1932, 7
        %v1934 = vsub.s32 5, %v1933
        %v1935 = vrot.slane %v1563, %v1934
        %1937 = vbcast.lane.b32.xlu0 %v1935, 256
        %v1938 = vpop.permute.xlu0 %1937
        %s1940 = sor.u32 256, 8
        %1941 = vbcast.lane.b32.xlu0 %v1935, %s1940
        %v1942 = vpop.permute.xlu0 %1941
        %v1943 = vlaneseq
        %v1944 = vshrl.u32 %v1943, 7
        %v1945 = vsub.s32 6, %v1944
        %v1946 = vrot.slane %v1563, %v1945
        %1948 = vbcast.lane.b32.xlu0 %v1946, 256
        %v1949 = vpop.permute.xlu0 %1948
        %s1951 = sor.u32 256, 8
        %1952 = vbcast.lane.b32.xlu0 %v1946, %s1951
        %v1953 = vpop.permute.xlu0 %1952
        %v1954 = vlaneseq
        %v1955 = vshrl.u32 %v1954, 7
        %v1956 = vsub.s32 7, %v1955
        %v1957 = vrot.slane %v1563, %v1956
        %1959 = vbcast.lane.b32.xlu0 %v1957, 256
        %v1960 = vpop.permute.xlu0 %1959
        %s1962 = sor.u32 256, 8
        %1963 = vbcast.lane.b32.xlu0 %v1957, %s1962
        %v1964 = vpop.permute.xlu0 %1963
        %v1965 = vlaneseq
        %v1966 = vshrl.u32 %v1965, 7
        %v1967 = vsub.s32 0, %v1966
        %v1968 = vrot.slane %v1564, %v1967
        %1970 = vbcast.lane.b32.xlu0 %v1968, 256
        %v1971 = vpop.permute.xlu0 %1970
        %s1973 = sor.u32 256, 8
        %1974 = vbcast.lane.b32.xlu0 %v1968, %s1973
        %v1975 = vpop.permute.xlu0 %1974
        %v1976 = vlaneseq
        %v1977 = vshrl.u32 %v1976, 7
        %v1978 = vsub.s32 1, %v1977
        %v1979 = vrot.slane %v1564, %v1978
        %1981 = vbcast.lane.b32.xlu0 %v1979, 256
        %v1982 = vpop.permute.xlu0 %1981
        %s1984 = sor.u32 256, 8
        %1985 = vbcast.lane.b32.xlu0 %v1979, %s1984
        %v1986 = vpop.permute.xlu0 %1985
        %v1987 = vlaneseq
        %v1988 = vshrl.u32 %v1987, 7
        %v1989 = vsub.s32 2, %v1988
        %v1990 = vrot.slane %v1564, %v1989
        %1992 = vbcast.lane.b32.xlu0 %v1990, 256
        %v1993 = vpop.permute.xlu0 %1992
        %s1995 = sor.u32 256, 8
        %1996 = vbcast.lane.b32.xlu0 %v1990, %s1995
        %v1997 = vpop.permute.xlu0 %1996
        %v1998 = vlaneseq
        %v1999 = vshrl.u32 %v1998, 7
        %v2000 = vsub.s32 3, %v1999
        %v2001 = vrot.slane %v1564, %v2000
        %2003 = vbcast.lane.b32.xlu0 %v2001, 256
        %v2004 = vpop.permute.xlu0 %2003
        %s2006 = sor.u32 256, 8
        %2007 = vbcast.lane.b32.xlu0 %v2001, %s2006
        %v2008 = vpop.permute.xlu0 %2007
        %v2009 = vlaneseq
        %v2010 = vshrl.u32 %v2009, 7
        %v2011 = vsub.s32 4, %v2010
        %v2012 = vrot.slane %v1564, %v2011
        %2014 = vbcast.lane.b32.xlu0 %v2012, 256
        %v2015 = vpop.permute.xlu0 %2014
        %s2017 = sor.u32 256, 8
        %2018 = vbcast.lane.b32.xlu0 %v2012, %s2017
        %v2019 = vpop.permute.xlu0 %2018
        %v2020 = vlaneseq
        %v2021 = vshrl.u32 %v2020, 7
        %v2022 = vsub.s32 5, %v2021
        %v2023 = vrot.slane %v1564, %v2022
        %2025 = vbcast.lane.b32.xlu0 %v2023, 256
        %v2026 = vpop.permute.xlu0 %2025
        %s2028 = sor.u32 256, 8
        %2029 = vbcast.lane.b32.xlu0 %v2023, %s2028
        %v2030 = vpop.permute.xlu0 %2029
        %v2031 = vlaneseq
        %v2032 = vshrl.u32 %v2031, 7
        %v2033 = vsub.s32 6, %v2032
        %v2034 = vrot.slane %v1564, %v2033
        %2036 = vbcast.lane.b32.xlu0 %v2034, 256
        %v2037 = vpop.permute.xlu0 %2036
        %s2039 = sor.u32 256, 8
        %2040 = vbcast.lane.b32.xlu0 %v2034, %s2039
        %v2041 = vpop.permute.xlu0 %2040
        %v2042 = vlaneseq
        %v2043 = vshrl.u32 %v2042, 7
        %v2044 = vsub.s32 7, %v2043
        %v2045 = vrot.slane %v1564, %v2044
        %2047 = vbcast.lane.b32.xlu0 %v2045, 256
        %v2048 = vpop.permute.xlu0 %2047
        %s2050 = sor.u32 256, 8
        %2051 = vbcast.lane.b32.xlu0 %v2045, %s2050
        %v2052 = vpop.permute.xlu0 %2051
        %vm2053 = vcmp.gt.f32.partialorder %v1883, 0.0
        %vm2054 = vcmp.gt.f32.partialorder %v1887, 0.0
        %vm2055 = vcmp.gt.f32.partialorder %v1894, 0.0
        %vm2056 = vcmp.gt.f32.partialorder %v1898, 0.0
        %vm2057 = vcmp.gt.f32.partialorder %v1905, 0.0
        %vm2058 = vcmp.gt.f32.partialorder %v1909, 0.0
        %vm2059 = vcmp.gt.f32.partialorder %v1916, 0.0
        %vm2060 = vcmp.gt.f32.partialorder %v1920, 0.0
        %vm2061 = vcmp.gt.f32.partialorder %v1927, 0.0
        %vm2062 = vcmp.gt.f32.partialorder %v1931, 0.0
        %vm2063 = vcmp.gt.f32.partialorder %v1938, 0.0
        %vm2064 = vcmp.gt.f32.partialorder %v1942, 0.0
        %vm2065 = vcmp.gt.f32.partialorder %v1949, 0.0
        %vm2066 = vcmp.gt.f32.partialorder %v1953, 0.0
        %vm2067 = vcmp.gt.f32.partialorder %v1960, 0.0
        %vm2068 = vcmp.gt.f32.partialorder %v1964, 0.0
        %vm2069 = vcmp.gt.f32.partialorder %v1971, 0.0
        %vm2070 = vcmp.gt.f32.partialorder %v1975, 0.0
        %vm2071 = vcmp.gt.f32.partialorder %v1982, 0.0
        %vm2072 = vcmp.gt.f32.partialorder %v1986, 0.0
        %vm2073 = vcmp.gt.f32.partialorder %v1993, 0.0
        %vm2074 = vcmp.gt.f32.partialorder %v1997, 0.0
        %vm2075 = vcmp.gt.f32.partialorder %v2004, 0.0
        %vm2076 = vcmp.gt.f32.partialorder %v2008, 0.0
        %vm2077 = vcmp.gt.f32.partialorder %v2015, 0.0
        %vm2078 = vcmp.gt.f32.partialorder %v2019, 0.0
        %vm2079 = vcmp.gt.f32.partialorder %v2026, 0.0
        %vm2080 = vcmp.gt.f32.partialorder %v2030, 0.0
        %vm2081 = vcmp.gt.f32.partialorder %v2037, 0.0
        %vm2082 = vcmp.gt.f32.partialorder %v2041, 0.0
        %vm2083 = vcmp.gt.f32.partialorder %v2048, 0.0
        %vm2084 = vcmp.gt.f32.partialorder %v2052, 0.0
        %v2087 = vcombine.high %v1871, %v1871
        %v2089 = vunpack.c.l.s4 1966171168
        %v2090 = vunpack.c.0.s8 %v2089
        %v2091 = vlaneseq
        %v2092 = vshrl.u32 %v2091, 7
        %v2093 = vsub.s32 %v2090, %v2092
        %v2094 = vrot.slane %v1871, %v2093
        %v2096 = vunpack.c.l.s4 1966171168
        %v2097 = vunpack.c.0.s8 %v2096
        %v2098 = vlaneseq
        %v2099 = vshrl.u32 %v2098, 7
        %v2100 = vsub.s32 %v2097, %v2099
        %v2101 = vrot.slane %v2087, %v2100
        %v2102 = vcombine.high %v2094, %v2094
        %v2103 = vcombine.high %v2101, %v2101
        %v2105 = vunpack.c.l.s4 1966171168
        %v2106 = vunpack.c.0.s8 %v2105
        %v2107 = vlaneseq
        %v2108 = vshrl.u32 %v2107, 7
        %v2109 = vsub.s32 %v2106, %v2108
        %v2110 = vrot.slane %v2094, %v2109
        %v2112 = vunpack.c.l.s4 1966171168
        %v2113 = vunpack.c.0.s8 %v2112
        %v2114 = vlaneseq
        %v2115 = vshrl.u32 %v2114, 7
        %v2116 = vsub.s32 %v2113, %v2115
        %v2117 = vrot.slane %v2101, %v2116
        %v2119 = vunpack.c.l.s4 1966171168
        %v2120 = vunpack.c.0.s8 %v2119
        %v2121 = vlaneseq
        %v2122 = vshrl.u32 %v2121, 7
        %v2123 = vsub.s32 %v2120, %v2122
        %v2124 = vrot.slane %v2102, %v2123
        %v2126 = vunpack.c.l.s4 1966171168
        %v2127 = vunpack.c.0.s8 %v2126
        %v2128 = vlaneseq
        %v2129 = vshrl.u32 %v2128, 7
        %v2130 = vsub.s32 %v2127, %v2129
        %v2131 = vrot.slane %v2103, %v2130
        %v2132 = vcombine.high %v2110, %v2110
        %v2133 = vcombine.high %v2117, %v2117
        %v2134 = vcombine.high %v2124, %v2124
        %v2135 = vcombine.high %v2131, %v2131
        %v2136 = vcombine.high %v1874, %v1874
        %v2138 = vunpack.c.l.s4 1966171168
        %v2139 = vunpack.c.0.s8 %v2138
        %v2140 = vlaneseq
        %v2141 = vshrl.u32 %v2140, 7
        %v2142 = vsub.s32 %v2139, %v2141
        %v2143 = vrot.slane %v1874, %v2142
        %v2145 = vunpack.c.l.s4 1966171168
        %v2146 = vunpack.c.0.s8 %v2145
        %v2147 = vlaneseq
        %v2148 = vshrl.u32 %v2147, 7
        %v2149 = vsub.s32 %v2146, %v2148
        %v2150 = vrot.slane %v2136, %v2149
        %v2151 = vcombine.high %v2143, %v2143
        %v2152 = vcombine.high %v2150, %v2150
        %v2154 = vunpack.c.l.s4 1966171168
        %v2155 = vunpack.c.0.s8 %v2154
        %v2156 = vlaneseq
        %v2157 = vshrl.u32 %v2156, 7
        %v2158 = vsub.s32 %v2155, %v2157
        %v2159 = vrot.slane %v2143, %v2158
        %v2161 = vunpack.c.l.s4 1966171168
        %v2162 = vunpack.c.0.s8 %v2161
        %v2163 = vlaneseq
        %v2164 = vshrl.u32 %v2163, 7
        %v2165 = vsub.s32 %v2162, %v2164
        %v2166 = vrot.slane %v2150, %v2165
        %v2168 = vunpack.c.l.s4 1966171168
        %v2169 = vunpack.c.0.s8 %v2168
        %v2170 = vlaneseq
        %v2171 = vshrl.u32 %v2170, 7
        %v2172 = vsub.s32 %v2169, %v2171
        %v2173 = vrot.slane %v2151, %v2172
        %v2175 = vunpack.c.l.s4 1966171168
        %v2176 = vunpack.c.0.s8 %v2175
        %v2177 = vlaneseq
        %v2178 = vshrl.u32 %v2177, 7
        %v2179 = vsub.s32 %v2176, %v2178
        %v2180 = vrot.slane %v2152, %v2179
        %v2181 = vcombine.high %v2159, %v2159
        %v2182 = vcombine.high %v2166, %v2166
        %v2183 = vcombine.high %v2173, %v2173
        %v2184 = vcombine.high %v2180, %v2180
        %v2185 = vsel %vm2053, 1, 0
        %v2186 = vsel %vm2054, 1, 0
        %v2187 = vsel %vm2055, 1, 0
        %v2188 = vsel %vm2056, 1, 0
        %v2189 = vsel %vm2057, 1, 0
        %v2190 = vsel %vm2058, 1, 0
        %v2191 = vsel %vm2059, 1, 0
        %v2192 = vsel %vm2060, 1, 0
        %v2193 = vsel %vm2061, 1, 0
        %v2194 = vsel %vm2062, 1, 0
        %v2195 = vsel %vm2063, 1, 0
        %v2196 = vsel %vm2064, 1, 0
        %v2197 = vsel %vm2065, 1, 0
        %v2198 = vsel %vm2066, 1, 0
        %v2199 = vsel %vm2067, 1, 0
        %v2200 = vsel %vm2068, 1, 0
        %v2201 = vsel %vm2069, 1, 0
        %v2202 = vsel %vm2070, 1, 0
        %v2203 = vsel %vm2071, 1, 0
        %v2204 = vsel %vm2072, 1, 0
        %v2205 = vsel %vm2073, 1, 0
        %v2206 = vsel %vm2074, 1, 0
        %v2207 = vsel %vm2075, 1, 0
        %v2208 = vsel %vm2076, 1, 0
        %v2209 = vsel %vm2077, 1, 0
        %v2210 = vsel %vm2078, 1, 0
        %v2211 = vsel %vm2079, 1, 0
        %v2212 = vsel %vm2080, 1, 0
        %v2213 = vsel %vm2081, 1, 0
        %v2214 = vsel %vm2082, 1, 0
        %v2215 = vsel %vm2083, 1, 0
        %v2216 = vsel %vm2084, 1, 0
        %vm2217 = vcmp.eq.s32.totalorder %v2185, 1
        %vm2218 = vcmp.eq.s32.totalorder %v2186, 1
        %vm2219 = vcmp.eq.s32.totalorder %v2187, 1
        %vm2220 = vcmp.eq.s32.totalorder %v2188, 1
        %vm2221 = vcmp.eq.s32.totalorder %v2189, 1
        %vm2222 = vcmp.eq.s32.totalorder %v2190, 1
        %vm2223 = vcmp.eq.s32.totalorder %v2191, 1
        %vm2224 = vcmp.eq.s32.totalorder %v2192, 1
        %vm2225 = vcmp.eq.s32.totalorder %v2193, 1
        %vm2226 = vcmp.eq.s32.totalorder %v2194, 1
        %vm2227 = vcmp.eq.s32.totalorder %v2195, 1
        %vm2228 = vcmp.eq.s32.totalorder %v2196, 1
        %vm2229 = vcmp.eq.s32.totalorder %v2197, 1
        %vm2230 = vcmp.eq.s32.totalorder %v2198, 1
        %vm2231 = vcmp.eq.s32.totalorder %v2199, 1
        %vm2232 = vcmp.eq.s32.totalorder %v2200, 1
        %vm2233 = vcmp.eq.s32.totalorder %v2201, 1
        %vm2234 = vcmp.eq.s32.totalorder %v2202, 1
        %vm2235 = vcmp.eq.s32.totalorder %v2203, 1
        %vm2236 = vcmp.eq.s32.totalorder %v2204, 1
        %vm2237 = vcmp.eq.s32.totalorder %v2205, 1
        %vm2238 = vcmp.eq.s32.totalorder %v2206, 1
        %vm2239 = vcmp.eq.s32.totalorder %v2207, 1
        %vm2240 = vcmp.eq.s32.totalorder %v2208, 1
        %vm2241 = vcmp.eq.s32.totalorder %v2209, 1
        %vm2242 = vcmp.eq.s32.totalorder %v2210, 1
        %vm2243 = vcmp.eq.s32.totalorder %v2211, 1
        %vm2244 = vcmp.eq.s32.totalorder %v2212, 1
        %vm2245 = vcmp.eq.s32.totalorder %v2213, 1
        %vm2246 = vcmp.eq.s32.totalorder %v2214, 1
        %vm2247 = vcmp.eq.s32.totalorder %v2215, 1
        %vm2248 = vcmp.eq.s32.totalorder %v2216, 1
        %v2249 = vlaneseq
        %v2250 = vshrl.u32 %v2249, 7
        %v2251 = vsub.s32 0, %v2250
        %v2252 = vrot.slane %v2110, %v2251
        %v2253 = vlaneseq
        %v2254 = vshrl.u32 %v2253, 7
        %v2255 = vsub.s32 0, %v2254
        %v2256 = vrot.slane %v2124, %v2255
        %v2257 = vlaneseq
        %v2258 = vshrl.u32 %v2257, 7
        %v2259 = vsub.s32 0, %v2258
        %v2260 = vrot.slane %v2132, %v2259
        %v2261 = vlaneseq
        %v2262 = vshrl.u32 %v2261, 7
        %v2263 = vsub.s32 0, %v2262
        %v2264 = vrot.slane %v2134, %v2263
        %v2265 = vlaneseq
        %v2266 = vshrl.u32 %v2265, 7
        %v2267 = vsub.s32 0, %v2266
        %v2268 = vrot.slane %v2117, %v2267
        %v2269 = vlaneseq
        %v2270 = vshrl.u32 %v2269, 7
        %v2271 = vsub.s32 0, %v2270
        %v2272 = vrot.slane %v2131, %v2271
        %v2273 = vlaneseq
        %v2274 = vshrl.u32 %v2273, 7
        %v2275 = vsub.s32 0, %v2274
        %v2276 = vrot.slane %v2133, %v2275
        %v2277 = vlaneseq
        %v2278 = vshrl.u32 %v2277, 7
        %v2279 = vsub.s32 0, %v2278
        %v2280 = vrot.slane %v2135, %v2279
        %v2281 = vlaneseq
        %v2282 = vshrl.u32 %v2281, 7
        %v2283 = vsub.s32 0, %v2282
        %v2284 = vrot.slane %v2159, %v2283
        %v2285 = vlaneseq
        %v2286 = vshrl.u32 %v2285, 7
        %v2287 = vsub.s32 0, %v2286
        %v2288 = vrot.slane %v2173, %v2287
        %v2289 = vlaneseq
        %v2290 = vshrl.u32 %v2289, 7
        %v2291 = vsub.s32 0, %v2290
        %v2292 = vrot.slane %v2181, %v2291
        %v2293 = vlaneseq
        %v2294 = vshrl.u32 %v2293, 7
        %v2295 = vsub.s32 0, %v2294
        %v2296 = vrot.slane %v2183, %v2295
        %v2297 = vlaneseq
        %v2298 = vshrl.u32 %v2297, 7
        %v2299 = vsub.s32 0, %v2298
        %v2300 = vrot.slane %v2166, %v2299
        %v2301 = vlaneseq
        %v2302 = vshrl.u32 %v2301, 7
        %v2303 = vsub.s32 0, %v2302
        %v2304 = vrot.slane %v2180, %v2303
        %v2305 = vlaneseq
        %v2306 = vshrl.u32 %v2305, 7
        %v2307 = vsub.s32 0, %v2306
        %v2308 = vrot.slane %v2182, %v2307
        %v2309 = vlaneseq
        %v2310 = vshrl.u32 %v2309, 7
        %v2311 = vsub.s32 0, %v2310
        %v2312 = vrot.slane %v2184, %v2311
        %v2329 = vsel %vm2217, %v2252, -1e+30
        %v2330 = vsel %vm2218, %v2252, -1e+30
        %v2331 = vsel %vm2219, %v2256, -1e+30
        %v2332 = vsel %vm2220, %v2256, -1e+30
        %v2333 = vsel %vm2221, %v2260, -1e+30
        %v2334 = vsel %vm2222, %v2260, -1e+30
        %v2335 = vsel %vm2223, %v2264, -1e+30
        %v2336 = vsel %vm2224, %v2264, -1e+30
        %v2337 = vsel %vm2225, %v2268, -1e+30
        %v2338 = vsel %vm2226, %v2268, -1e+30
        %v2339 = vsel %vm2227, %v2272, -1e+30
        %v2340 = vsel %vm2228, %v2272, -1e+30
        %v2341 = vsel %vm2229, %v2276, -1e+30
        %v2342 = vsel %vm2230, %v2276, -1e+30
        %v2343 = vsel %vm2231, %v2280, -1e+30
        %v2344 = vsel %vm2232, %v2280, -1e+30
        %v2345 = vsel %vm2233, %v2284, -1e+30
        %v2346 = vsel %vm2234, %v2284, -1e+30
        %v2347 = vsel %vm2235, %v2288, -1e+30
        %v2348 = vsel %vm2236, %v2288, -1e+30
        %v2349 = vsel %vm2237, %v2292, -1e+30
        %v2350 = vsel %vm2238, %v2292, -1e+30
        %v2351 = vsel %vm2239, %v2296, -1e+30
        %v2352 = vsel %vm2240, %v2296, -1e+30
        %v2353 = vsel %vm2241, %v2300, -1e+30
        %v2354 = vsel %vm2242, %v2300, -1e+30
        %v2355 = vsel %vm2243, %v2304, -1e+30
        %v2356 = vsel %vm2244, %v2304, -1e+30
        %v2357 = vsel %vm2245, %v2308, -1e+30
        %v2358 = vsel %vm2246, %v2308, -1e+30
        %v2359 = vsel %vm2247, %v2312, -1e+30
        %v2360 = vsel %vm2248, %v2312, -1e+30
        %v2361 = vsel %vm1501, %v2329, -inf
        %v2362 = vsel %vm1501, %v2331, -inf
        %v2363 = vsel %vm1501, %v2333, -inf
        %v2364 = vmax.f32 %v2361, %v2363
        %v2365 = vsel %vm1501, %v2335, -inf
        %v2366 = vmax.f32 %v2362, %v2365
        %v2367 = vsel %vm1501, %v2337, -inf
        %v2368 = vmax.f32 %v2364, %v2367
        %v2369 = vsel %vm1501, %v2339, -inf
        %v2370 = vmax.f32 %v2366, %v2369
        %v2371 = vsel %vm1501, %v2341, -inf
        %v2372 = vmax.f32 %v2368, %v2371
        %v2373 = vsel %vm1501, %v2343, -inf
        %v2374 = vmax.f32 %v2370, %v2373
        %v2375 = vsel %vm1501, %v2345, -inf
        %v2376 = vmax.f32 %v2372, %v2375
        %v2377 = vsel %vm1501, %v2347, -inf
        %v2378 = vmax.f32 %v2374, %v2377
        %v2379 = vsel %vm1501, %v2349, -inf
        %v2380 = vmax.f32 %v2376, %v2379
        %v2381 = vsel %vm1501, %v2351, -inf
        %v2382 = vmax.f32 %v2378, %v2381
        %v2383 = vsel %vm1501, %v2353, -inf
        %v2384 = vmax.f32 %v2380, %v2383
        %v2385 = vsel %vm1501, %v2355, -inf
        %v2386 = vmax.f32 %v2382, %v2385
        %v2387 = vsel %vm1501, %v2357, -inf
        %v2388 = vmax.f32 %v2384, %v2387
        %v2389 = vsel %vm1501, %v2359, -inf
        %v2390 = vmax.f32 %v2386, %v2389
        %v2391 = vmax.f32 %v2388, %v2390
        %vm2392 = vcmask 9216
        %v2393 = vsel %vm2392, %v2330, -inf
        %v2394 = vsel %vm2392, %v2332, -inf
        %v2395 = vsel %vm2392, %v2334, -inf
        %v2396 = vmax.f32 %v2393, %v2395
        %v2397 = vsel %vm2392, %v2336, -inf
        %v2398 = vmax.f32 %v2394, %v2397
        %v2399 = vsel %vm2392, %v2338, -inf
        %v2400 = vmax.f32 %v2396, %v2399
        %v2401 = vsel %vm2392, %v2340, -inf
        %v2402 = vmax.f32 %v2398, %v2401
        %v2403 = vsel %vm2392, %v2342, -inf
        %v2404 = vmax.f32 %v2400, %v2403
        %v2405 = vsel %vm2392, %v2344, -inf
        %v2406 = vmax.f32 %v2402, %v2405
        %v2407 = vsel %vm2392, %v2346, -inf
        %v2408 = vmax.f32 %v2404, %v2407
        %v2409 = vsel %vm2392, %v2348, -inf
        %v2410 = vmax.f32 %v2406, %v2409
        %v2411 = vsel %vm2392, %v2350, -inf
        %v2412 = vmax.f32 %v2408, %v2411
        %v2413 = vsel %vm2392, %v2352, -inf
        %v2414 = vmax.f32 %v2410, %v2413
        %v2415 = vsel %vm2392, %v2354, -inf
        %v2416 = vmax.f32 %v2412, %v2415
        %v2417 = vsel %vm2392, %v2356, -inf
        %v2418 = vmax.f32 %v2414, %v2417
        %v2419 = vsel %vm2392, %v2358, -inf
        %v2420 = vmax.f32 %v2416, %v2419
        %v2421 = vsel %vm2392, %v2360, -inf
        %v2422 = vmax.f32 %v2418, %v2421
        %v2423 = vmax.f32 %v2420, %v2422
        %v2424 = vpack.c.bf16 %v2423, %v2391
        %v2426 = vsel %vm1633, %v2424, 0
        %2428 = vmatprep.subr.bf16.mxu0 0
        %2429 = vmatpush1.bf16.msra.mxu0 %v2426
        %2430 = vmatprep.subr.bf16.mxu0 0
        %2431 = vmatpush1.bf16.msra.mxu0 0
        %2432 = vmatprep.subr.bf16.mxu0 0
        %2433 = vmatpush1.bf16.msra.mxu0 0
        %2434 = vmatprep.subr.bf16.mxu0 0
        %2435 = vmatpush1.bf16.msra.mxu0 0
        %2436 = vmatprep.subr.bf16.mxu0 0
        %2437 = vmatpush1.bf16.msra.mxu0 0
        %2438 = vmatprep.subr.bf16.mxu0 0
        %2439 = vmatpush1.bf16.msra.mxu0 0
        %2440 = vmatprep.subr.bf16.mxu0 0
        %2441 = vmatpush1.bf16.msra.mxu0 0
        %2442 = vmatprep.subr.bf16.mxu0 0
        %2443 = vmatpush1.bf16.msra.mxu0 0
        %2444 = vmatprep.subr.bf16.mxu0 0
        %2445 = vmatpush1.bf16.msra.mxu0 0
        %2446 = vmatprep.subr.bf16.mxu0 0
        %2447 = vmatpush1.bf16.msra.mxu0 0
        %2448 = vmatprep.subr.bf16.mxu0 0
        %2449 = vmatpush1.bf16.msra.mxu0 0
        %2450 = vmatprep.subr.bf16.mxu0 0
        %2451 = vmatpush1.bf16.msra.mxu0 0
        %2452 = vmatprep.subr.bf16.mxu0 0
        %2453 = vmatpush1.bf16.msra.mxu0 0
        %2454 = vmatprep.subr.bf16.mxu0 0
        %2455 = vmatpush1.bf16.msra.mxu0 0
        %2456 = vmatprep.subr.bf16.mxu0 0
        %2457 = vmatpush1.bf16.msra.mxu0 0
        %2458 = vmatprep.subr.bf16.mxu0 0
        %2459 = vmatpush1.bf16.msra.mxu0 0
        %2460 = vmatprep.mubr.bf16.mxu0 0
        %2461 = vmatmul.mubr.bf16.gmra.mrb[0].mxu0 %v1681
        %v2462 = vpop.f32.mrb[0].mxu0
        %v2463 = vadd.f32 0.0, %v2462
        %v2464 = vpop.f32.mrb[0].mxu0
        %v2465 = vpop.f32.mrb[0].mxu0
        %v2466 = vadd.f32 0.0, %v2465
        %v2467 = vpop.f32.mrb[0].mxu0
        %2468 = vdwg.mxu0
        %v2469 = vsub.f32 %v1871, %v2463
        %v2470 = vsub.f32 %v1874, %v2466
        %v2471 = vmul.f32 %v2469, 1.442695
        %v2472 = vpow.pop %v2471
        %v2473 = vmul.f32 %v2470, 1.442695
        %v2474 = vpow.pop %v2473
        %v2475 = vpack.c.bf16 %v1566, %v1565
        %v2476 = vpack.c.bf16 %v2474, %v2472
        %v2478 = vsel %vm1580, %v2475, 0
        %2480 = vmatprep.subr.bf16.mxu0 0
        %2481 = vmatpush1.bf16.msra.mxu0 %v2476
        %2482 = vmatprep.subr.bf16.mxu0 0
        %2483 = vmatpush1.bf16.msra.mxu0 0
        %2484 = vmatprep.subr.bf16.mxu0 0
        %2485 = vmatpush1.bf16.msra.mxu0 0
        %2486 = vmatprep.subr.bf16.mxu0 0
        %2487 = vmatpush1.bf16.msra.mxu0 0
        %2488 = vmatprep.subr.bf16.mxu0 0
        %2489 = vmatpush1.bf16.msra.mxu0 0
        %2490 = vmatprep.subr.bf16.mxu0 0
        %2491 = vmatpush1.bf16.msra.mxu0 0
        %2492 = vmatprep.subr.bf16.mxu0 0
        %2493 = vmatpush1.bf16.msra.mxu0 0
        %2494 = vmatprep.subr.bf16.mxu0 0
        %2495 = vmatpush1.bf16.msra.mxu0 0
        %2496 = vmatprep.subr.bf16.mxu0 0
        %2497 = vmatpush1.bf16.msra.mxu0 0
        %2498 = vmatprep.subr.bf16.mxu0 0
        %2499 = vmatpush1.bf16.msra.mxu0 0
        %2500 = vmatprep.subr.bf16.mxu0 0
        %2501 = vmatpush1.bf16.msra.mxu0 0
        %2502 = vmatprep.subr.bf16.mxu0 0
        %2503 = vmatpush1.bf16.msra.mxu0 0
        %2504 = vmatprep.subr.bf16.mxu0 0
        %2505 = vmatpush1.bf16.msra.mxu0 0
        %2506 = vmatprep.subr.bf16.mxu0 0
        %2507 = vmatpush1.bf16.msra.mxu0 0
        %2508 = vmatprep.subr.bf16.mxu0 0
        %2509 = vmatpush1.bf16.msra.mxu0 0
        %2510 = vmatprep.subr.bf16.mxu0 0
        %2511 = vmatpush1.bf16.msra.mxu0 0
        %2512 = vmatprep.mubr.bf16.mxu0 0
        %2513 = vmatmul.mubr.bf16.gmra.mrb[0].mxu0 %v2478
        %v2514 = vpop.f32.mrb[0].mxu0
        %v2515 = vadd.f32 0.0, %v2514
        %v2516 = vpop.f32.mrb[0].mxu0
        %v2517 = vpop.f32.mrb[0].mxu0
        %v2518 = vadd.f32 0.0, %v2517
        %v2519 = vpop.f32.mrb[0].mxu0
        %2520 = vdwg.mxu0
        %v2521 = vpack.c.bf16 %v2518, %v2515
        %v2523 = vsel %vm1633, %v2521, 0
        %2525 = vmatprep.subr.bf16.mxu0 0
        %2526 = vmatpush1.bf16.msra.mxu0 %v2523
        %2527 = vmatprep.subr.bf16.mxu0 0
        %2528 = vmatpush1.bf16.msra.mxu0 0
        %2529 = vmatprep.subr.bf16.mxu0 0
        %2530 = vmatpush1.bf16.msra.mxu0 0
        %2531 = vmatprep.subr.bf16.mxu0 0
        %2532 = vmatpush1.bf16.msra.mxu0 0
        %2533 = vmatprep.subr.bf16.mxu0 0
        %2534 = vmatpush1.bf16.msra.mxu0 0
        %2535 = vmatprep.subr.bf16.mxu0 0
        %2536 = vmatpush1.bf16.msra.mxu0 0
        %2537 = vmatprep.subr.bf16.mxu0 0
        %2538 = vmatpush1.bf16.msra.mxu0 0
        %2539 = vmatprep.subr.bf16.mxu0 0
        %2540 = vmatpush1.bf16.msra.mxu0 0
        %2541 = vmatprep.subr.bf16.mxu0 0
        %2542 = vmatpush1.bf16.msra.mxu0 0
        %2543 = vmatprep.subr.bf16.mxu0 0
        %2544 = vmatpush1.bf16.msra.mxu0 0
        %2545 = vmatprep.subr.bf16.mxu0 0
        %2546 = vmatpush1.bf16.msra.mxu0 0
        %2547 = vmatprep.subr.bf16.mxu0 0
        %2548 = vmatpush1.bf16.msra.mxu0 0
        %2549 = vmatprep.subr.bf16.mxu0 0
        %2550 = vmatpush1.bf16.msra.mxu0 0
        %2551 = vmatprep.subr.bf16.mxu0 0
        %2552 = vmatpush1.bf16.msra.mxu0 0
        %2553 = vmatprep.subr.bf16.mxu0 0
        %2554 = vmatpush1.bf16.msra.mxu0 0
        %2555 = vmatprep.subr.bf16.mxu0 0
        %2556 = vmatpush1.bf16.msra.mxu0 0
        %2557 = vmatprep.mubr.bf16.mxu0 0
        %2558 = vmatmul.mubr.bf16.gmra.mrb[0].mxu0 %v1681
        %v2559 = vpop.f32.mrb[0].mxu0
        %v2560 = vadd.f32 0.0, %v2559
        %v2561 = vpop.f32.mrb[0].mxu0
        %v2562 = vpop.f32.mrb[0].mxu0
        %v2563 = vadd.f32 0.0, %v2562
        %v2564 = vpop.f32.mrb[0].mxu0
        %2565 = vdwg.mxu0
        %v2566 = vrcp.pop %v2560
        %v2567 = vrcp.pop %v2563
        %v2568 = vmul.f32 %v2472, %v2566
        %v2569 = vmul.f32 %v2474, %v2567
        %v2570 = vld [vmem:[%s17] sm:$0x1]
        %v2571 = vpack.c.bf16 %v2569, %v2568
        %v2573 = vsel %vm1501, %v2571, 0
        %v2576 = vsel %vm1508, %v2570, 0
        %2578 = vmatprep.subr.bf16.mxu0 0
        %2579 = vmatpush1.bf16.msra.mxu0 %v2576
        %2580 = vmatprep.subr.bf16.mxu0 0
        %2581 = vmatpush1.bf16.msra.mxu0 0
        %2582 = vmatprep.subr.bf16.mxu0 0
        %2583 = vmatpush1.bf16.msra.mxu0 0
        %2584 = vmatprep.subr.bf16.mxu0 0
        %2585 = vmatpush1.bf16.msra.mxu0 0
        %2586 = vmatprep.subr.bf16.mxu0 0
        %2587 = vmatpush1.bf16.msra.mxu0 0
        %2588 = vmatprep.subr.bf16.mxu0 0
        %2589 = vmatpush1.bf16.msra.mxu0 0
        %2590 = vmatprep.subr.bf16.mxu0 0
        %2591 = vmatpush1.bf16.msra.mxu0 0
        %2592 = vmatprep.subr.bf16.mxu0 0
        %2593 = vmatpush1.bf16.msra.mxu0 0
        %2594 = vmatprep.subr.bf16.mxu0 0
        %2595 = vmatpush1.bf16.msra.mxu0 0
        %2596 = vmatprep.subr.bf16.mxu0 0
        %2597 = vmatpush1.bf16.msra.mxu0 0
        %2598 = vmatprep.subr.bf16.mxu0 0
        %2599 = vmatpush1.bf16.msra.mxu0 0
        %2600 = vmatprep.subr.bf16.mxu0 0
        %2601 = vmatpush1.bf16.msra.mxu0 0
        %2602 = vmatprep.subr.bf16.mxu0 0
        %2603 = vmatpush1.bf16.msra.mxu0 0
        %2604 = vmatprep.subr.bf16.mxu0 0
        %2605 = vmatpush1.bf16.msra.mxu0 0
        %2606 = vmatprep.subr.bf16.mxu0 0
        %2607 = vmatpush1.bf16.msra.mxu0 0
        %2608 = vmatprep.subr.bf16.mxu0 0
        %2609 = vmatpush1.bf16.msra.mxu0 0
        %2610 = vmatprep.mubr.bf16.mxu0 0
        %2611 = vmatmul.mubr.bf16.gmra.mrb[0].mxu0 %v2573
        %v2612 = vpop.f32.mrb[0].mxu0
        %v2613 = vadd.f32 0.0, %v2612
        %v2614 = vpop.f32.mrb[0].mxu0
        %v2615 = vpop.f32.mrb[0].mxu0
        %v2616 = vadd.f32 0.0, %v2615
        %v2617 = vpop.f32.mrb[0].mxu0
        %2618 = vdwg.mxu0
        %2621 = vrot.lane.b32.xlu0 %v2613, 64
        %v2622 = vpop.permute.xlu0 %2621
        %2623 = vrot.lane.b32.xlu0 %v2616, 64
        %v2624 = vpop.permute.xlu0 %2623
        %v2627 = vmul.f32 %v1672, %v2622
        %v2628 = vmul.f32 %v1675, %v2624
        %v2629 = vpack.c.bf16 %v2628, %v2627
        %2631 = vrot.lane.b32.xlu0 %v2629, 64
        %v2632 = vpop.permute.xlu0 %2631
        %2634 = vmatprep.subr.bf16.mxu0 0
        %2635 = vmatpush1.bf16.msra.mxu0 %v2632
        %2636 = vmatprep.subr.bf16.mxu0 0
        %2637 = vmatpush1.bf16.msra.mxu0 0
        %2638 = vmatprep.subr.bf16.mxu0 0
        %2639 = vmatpush1.bf16.msra.mxu0 0
        %2640 = vmatprep.subr.bf16.mxu0 0
        %2641 = vmatpush1.bf16.msra.mxu0 0
        %2642 = vmatprep.subr.bf16.mxu0 0
        %2643 = vmatpush1.bf16.msra.mxu0 0
        %2644 = vmatprep.subr.bf16.mxu0 0
        %2645 = vmatpush1.bf16.msra.mxu0 0
        %2646 = vmatprep.subr.bf16.mxu0 0
        %2647 = vmatpush1.bf16.msra.mxu0 0
        %2648 = vmatprep.subr.bf16.mxu0 0
        %2649 = vmatpush1.bf16.msra.mxu0 0
        %2650 = vmatprep.subr.bf16.mxu0 0
        %2651 = vmatpush1.bf16.msra.mxu0 0
        %2652 = vmatprep.subr.bf16.mxu0 0
        %2653 = vmatpush1.bf16.msra.mxu0 0
        %2654 = vmatprep.subr.bf16.mxu0 0
        %2655 = vmatpush1.bf16.msra.mxu0 0
        %2656 = vmatprep.subr.bf16.mxu0 0
        %2657 = vmatpush1.bf16.msra.mxu0 0
        %2658 = vmatprep.subr.bf16.mxu0 0
        %2659 = vmatpush1.bf16.msra.mxu0 0
        %2660 = vmatprep.subr.bf16.mxu0 0
        %2661 = vmatpush1.bf16.msra.mxu0 0
        %2662 = vmatprep.subr.bf16.mxu0 0
        %2663 = vmatpush1.bf16.msra.mxu0 0
        %2664 = vmatprep.subr.bf16.mxu0 0
        %2665 = vmatpush1.bf16.msra.mxu0 0
        %2666 = vmatprep.mubr.bf16.mxu0 0
        %2667 = vmatmul.mubr.bf16.gmra.mrb[0].mxu0 %v2478
        %v2668 = vpop.f32.mrb[0].mxu0
        %v2669 = vadd.f32 0.0, %v2668
        %v2670 = vpop.f32.mrb[0].mxu0
        %v2671 = vpop.f32.mrb[0].mxu0
        %v2672 = vadd.f32 0.0, %v2671
        %v2673 = vpop.f32.mrb[0].mxu0
        %2674 = vdwg.mxu0
        %v2675 = vmax.f32 %v2669, 0.0
        %v2676 = vmax.f32 %v2672, 0.0
        %v2677 = vmax.f32 %v1797, 0.0
        %v2678 = vmax.f32 %v1798, 0.0
        %v2679 = vld [vmem:[%s37] sm:$0xff]
        %v2680 = vld [vmem:[%s37 + $0x8] sm:$0xff]
        %v2681 = vld [vmem:[%s37 + $0x10] sm:$0xff]
        %v2682 = vld [vmem:[%s37 + $0x18] sm:$0xff]
        %v2683 = vld [vmem:[%s37 + $0x20] sm:$0xff]
        %v2684 = vld [vmem:[%s37 + $0x28] sm:$0xff]
        %v2685 = vld [vmem:[%s37 + $0x30] sm:$0xff]
        %v2686 = vld [vmem:[%s37 + $0x38] sm:$0xff]
        %v2687 = vpack.c.bf16 %v2676, %v2675
        %v2696 = vunpack.c.l.b16 %v2679
        %v2697 = vunpack.c.h.b16 %v2679
        %v2698 = vunpack.c.l.b16 %v2680
        %v2699 = vunpack.c.h.b16 %v2680
        %v2700 = vunpack.c.l.b16 %v2681
        %v2701 = vunpack.c.h.b16 %v2681
        %v2702 = vunpack.c.l.b16 %v2682
        %v2703 = vunpack.c.h.b16 %v2682
        %v2704 = vunpack.c.l.b16 %v2683
        %v2705 = vunpack.c.h.b16 %v2683
        %v2706 = vunpack.c.l.b16 %v2684
        %v2707 = vunpack.c.h.b16 %v2684
        %v2708 = vunpack.c.l.b16 %v2685
        %v2709 = vunpack.c.h.b16 %v2685
        %v2710 = vunpack.c.l.b16 %v2686
        %v2711 = vunpack.c.h.b16 %v2686
        %v2712 = vpack.c.b16 %v2698, %v2696
        %v2713 = vpack.c.b16 %v2699, %v2697
        %v2714 = vpack.c.b16 %v2702, %v2700
        %v2715 = vpack.c.b16 %v2703, %v2701
        %v2716 = vpack.c.b16 %v2706, %v2704
        %v2717 = vpack.c.b16 %v2707, %v2705
        %v2718 = vpack.c.b16 %v2710, %v2708
        %v2719 = vpack.c.b16 %v2711, %v2709
        %v2729 = vsel %vm1832, %v2687, 0
        %2731 = vmatprep.subr.bf16.mxu0 %v2713
        %2732 = vmatpush1.bf16.msra.mxu0 %v2712
        %2733 = vmatprep.subr.bf16.mxu0 %v2715
        %2734 = vmatpush1.bf16.msra.mxu0 %v2714
        %2735 = vmatprep.subr.bf16.mxu0 %v2717
        %2736 = vmatpush1.bf16.msra.mxu0 %v2716
        %2737 = vmatprep.subr.bf16.mxu0 %v2719
        %2738 = vmatpush1.bf16.msra.mxu0 %v2718
        %2739 = vmatprep.subr.bf16.mxu0 0
        %2740 = vmatpush1.bf16.msra.mxu0 0
        %2741 = vmatprep.subr.bf16.mxu0 0
        %2742 = vmatpush1.bf16.msra.mxu0 0
        %2743 = vmatprep.subr.bf16.mxu0 0
        %2744 = vmatpush1.bf16.msra.mxu0 0
        %2745 = vmatprep.subr.bf16.mxu0 0
        %2746 = vmatpush1.bf16.msra.mxu0 0
        %2747 = vmatprep.subr.bf16.mxu0 0
        %2748 = vmatpush1.bf16.msra.mxu0 0
        %2749 = vmatprep.subr.bf16.mxu0 0
        %2750 = vmatpush1.bf16.msra.mxu0 0
        %2751 = vmatprep.subr.bf16.mxu0 0
        %2752 = vmatpush1.bf16.msra.mxu0 0
        %2753 = vmatprep.subr.bf16.mxu0 0
        %2754 = vmatpush1.bf16.msra.mxu0 0
        %2755 = vmatprep.subr.bf16.mxu0 0
        %2756 = vmatpush1.bf16.msra.mxu0 0
        %2757 = vmatprep.subr.bf16.mxu0 0
        %2758 = vmatpush1.bf16.msra.mxu0 0
        %2759 = vmatprep.subr.bf16.mxu0 0
        %2760 = vmatpush1.bf16.msra.mxu0 0
        %2761 = vmatprep.subr.bf16.mxu0 0
        %2762 = vmatpush1.bf16.msra.mxu0 0
        %2763 = vmatprep.mubr.bf16.mxu0 0
        %2764 = vmatmul.mubr.bf16.gmra.mrb[0].mxu0 %v2729
        %v2765 = vpop.f32.mrb[0].mxu0
        %v2766 = vadd.f32 0.0, %v2765
        %v2767 = vpop.f32.mrb[0].mxu0
        %v2768 = vadd.f32 0.0, %v2767
        %v2769 = vpop.f32.mrb[0].mxu0
        %v2770 = vadd.f32 0.0, %v2769
        %v2771 = vpop.f32.mrb[0].mxu0
        %v2772 = vadd.f32 0.0, %v2771
        %2773 = vdwg.mxu0
        %v2774 = vpack.c.bf16 %v2770, %v2766
        %v2775 = vpack.c.bf16 %v2772, %v2768
        %v2777 = vsel %vm1633, %v2774, 0
        %v2780 = vsel %vm1633, %v2775, 0
        %2782 = vmatprep.subr.bf16.mxu0 %v2780
        %2783 = vmatpush1.bf16.msra.mxu0 %v2777
        %2784 = vmatprep.subr.bf16.mxu0 0
        %2785 = vmatpush1.bf16.msra.mxu0 0
        %2786 = vmatprep.subr.bf16.mxu0 0
        %2787 = vmatpush1.bf16.msra.mxu0 0
        %2788 = vmatprep.subr.bf16.mxu0 0
        %2789 = vmatpush1.bf16.msra.mxu0 0
        %2790 = vmatprep.subr.bf16.mxu0 0
        %2791 = vmatpush1.bf16.msra.mxu0 0
        %2792 = vmatprep.subr.bf16.mxu0 0
        %2793 = vmatpush1.bf16.msra.mxu0 0
        %2794 = vmatprep.subr.bf16.mxu0 0
        %2795 = vmatpush1.bf16.msra.mxu0 0
        %2796 = vmatprep.subr.bf16.mxu0 0
        %2797 = vmatpush1.bf16.msra.mxu0 0
        %2798 = vmatprep.subr.bf16.mxu0 0
        %2799 = vmatpush1.bf16.msra.mxu0 0
        %2800 = vmatprep.subr.bf16.mxu0 0
        %2801 = vmatpush1.bf16.msra.mxu0 0
        %2802 = vmatprep.subr.bf16.mxu0 0
        %2803 = vmatpush1.bf16.msra.mxu0 0
        %2804 = vmatprep.subr.bf16.mxu0 0
        %2805 = vmatpush1.bf16.msra.mxu0 0
        %2806 = vmatprep.subr.bf16.mxu0 0
        %2807 = vmatpush1.bf16.msra.mxu0 0
        %2808 = vmatprep.subr.bf16.mxu0 0
        %2809 = vmatpush1.bf16.msra.mxu0 0
        %2810 = vmatprep.subr.bf16.mxu0 0
        %2811 = vmatpush1.bf16.msra.mxu0 0
        %2812 = vmatprep.subr.bf16.mxu0 0
        %2813 = vmatpush1.bf16.msra.mxu0 0
        %2814 = vmatprep.mubr.bf16.mxu0 0
        %2815 = vmatmul.mubr.bf16.gmra.mrb[0].mxu0 %v1631
        %v2816 = vpop.f32.mrb[0].mxu0
        %v2817 = vadd.f32 0.0, %v2816
        %v2818 = vpop.f32.mrb[0].mxu0
        %v2819 = vadd.f32 0.0, %v2818
        %v2820 = vpop.f32.mrb[0].mxu0
        %v2821 = vadd.f32 0.0, %v2820
        %v2822 = vpop.f32.mrb[0].mxu0
        %v2823 = vadd.f32 0.0, %v2822
        %2824 = vdwg.mxu0
        %2826 = vrot.lane.b32.xlu0 %v2775, 96
        %v2827 = vpop.permute.xlu0 %2826
        %v2829 = vsel %vm1633, %v2827, 0
        %2831 = vmatprep.subr.bf16.mxu0 0
        %2832 = vmatpush1.bf16.msra.mxu0 %v2829
        %2833 = vmatprep.subr.bf16.mxu0 0
        %2834 = vmatpush1.bf16.msra.mxu0 0
        %2835 = vmatprep.subr.bf16.mxu0 0
        %2836 = vmatpush1.bf16.msra.mxu0 0
        %2837 = vmatprep.subr.bf16.mxu0 0
        %2838 = vmatpush1.bf16.msra.mxu0 0
        %2839 = vmatprep.subr.bf16.mxu0 0
        %2840 = vmatpush1.bf16.msra.mxu0 0
        %2841 = vmatprep.subr.bf16.mxu0 0
        %2842 = vmatpush1.bf16.msra.mxu0 0
        %2843 = vmatprep.subr.bf16.mxu0 0
        %2844 = vmatpush1.bf16.msra.mxu0 0
        %2845 = vmatprep.subr.bf16.mxu0 0
        %2846 = vmatpush1.bf16.msra.mxu0 0
        %2847 = vmatprep.subr.bf16.mxu0 0
        %2848 = vmatpush1.bf16.msra.mxu0 0
        %2849 = vmatprep.subr.bf16.mxu0 0
        %2850 = vmatpush1.bf16.msra.mxu0 0
        %2851 = vmatprep.subr.bf16.mxu0 0
        %2852 = vmatpush1.bf16.msra.mxu0 0
        %2853 = vmatprep.subr.bf16.mxu0 0
        %2854 = vmatpush1.bf16.msra.mxu0 0
        %2855 = vmatprep.subr.bf16.mxu0 0
        %2856 = vmatpush1.bf16.msra.mxu0 0
        %2857 = vmatprep.subr.bf16.mxu0 0
        %2858 = vmatpush1.bf16.msra.mxu0 0
        %2859 = vmatprep.subr.bf16.mxu0 0
        %2860 = vmatpush1.bf16.msra.mxu0 0
        %2861 = vmatprep.subr.bf16.mxu0 0
        %2862 = vmatpush1.bf16.msra.mxu0 0
        %2863 = vmatprep.mubr.bf16.mxu0 0
        %2864 = vmatmul.mubr.bf16.gmra.mrb[0].mxu0 %v1681
        %v2865 = vpop.f32.mrb[0].mxu0
        %v2866 = vadd.f32 0.0, %v2865
        %v2867 = vpop.f32.mrb[0].mxu0
        %v2868 = vpop.f32.mrb[0].mxu0
        %v2869 = vadd.f32 0.0, %v2868
        %v2870 = vpop.f32.mrb[0].mxu0
        %2871 = vdwg.mxu0
        %v2872 = vadd.f32 %v2817, %v2866
        %v2873 = vadd.f32 %v2821, %v2869
        %v2874 = vld [vmem:[%s39] sm:$0xf]
        %v2875 = vld [vmem:[%s39 + $0x4] sm:$0xf]
        %v2876 = vld [vmem:[%s39 + $0x8] sm:$0xf]
        %v2877 = vld [vmem:[%s39 + $0xc] sm:$0xf]
        %v2878 = vld [vmem:[%s39 + $0x10] sm:$0xf]
        %v2879 = vld [vmem:[%s39 + $0x14] sm:$0xf]
        %v2880 = vld [vmem:[%s39 + $0x18] sm:$0xf]
        %v2881 = vld [vmem:[%s39 + $0x1c] sm:$0xf]
        %v2882 = vpack.c.bf16 %v2678, %v2677
        %v2891 = vunpack.c.l.b16 %v2874
        %v2892 = vunpack.c.l.b16 %v2875
        %v2893 = vunpack.c.l.b16 %v2876
        %v2894 = vunpack.c.l.b16 %v2877
        %v2895 = vunpack.c.l.b16 %v2878
        %v2896 = vunpack.c.l.b16 %v2879
        %v2897 = vunpack.c.l.b16 %v2880
        %v2898 = vunpack.c.l.b16 %v2881
        %v2899 = vpack.c.b16 %v2892, %v2891
        %v2900 = vpack.c.b16 %v2894, %v2893
        %v2901 = vpack.c.b16 %v2896, %v2895
        %v2902 = vpack.c.b16 %v2898, %v2897
        %v2908 = vsel %vm1832, %v2882, 0
        %2910 = vmatprep.subr.bf16.mxu0 0
        %2911 = vmatpush1.bf16.msra.mxu0 %v2899
        %2912 = vmatprep.subr.bf16.mxu0 0
        %2913 = vmatpush1.bf16.msra.mxu0 %v2900
        %2914 = vmatprep.subr.bf16.mxu0 0
        %2915 = vmatpush1.bf16.msra.mxu0 %v2901
        %2916 = vmatprep.subr.bf16.mxu0 0
        %2917 = vmatpush1.bf16.msra.mxu0 %v2902
        %2918 = vmatprep.subr.bf16.mxu0 0
        %2919 = vmatpush1.bf16.msra.mxu0 0
        %2920 = vmatprep.subr.bf16.mxu0 0
        %2921 = vmatpush1.bf16.msra.mxu0 0
        %2922 = vmatprep.subr.bf16.mxu0 0
        %2923 = vmatpush1.bf16.msra.mxu0 0
        %2924 = vmatprep.subr.bf16.mxu0 0
        %2925 = vmatpush1.bf16.msra.mxu0 0
        %2926 = vmatprep.subr.bf16.mxu0 0
        %2927 = vmatpush1.bf16.msra.mxu0 0
        %2928 = vmatprep.subr.bf16.mxu0 0
        %2929 = vmatpush1.bf16.msra.mxu0 0
        %2930 = vmatprep.subr.bf16.mxu0 0
        %2931 = vmatpush1.bf16.msra.mxu0 0
        %2932 = vmatprep.subr.bf16.mxu0 0
        %2933 = vmatpush1.bf16.msra.mxu0 0
        %2934 = vmatprep.subr.bf16.mxu0 0
        %2935 = vmatpush1.bf16.msra.mxu0 0
        %2936 = vmatprep.subr.bf16.mxu0 0
        %2937 = vmatpush1.bf16.msra.mxu0 0
        %2938 = vmatprep.subr.bf16.mxu0 0
        %2939 = vmatpush1.bf16.msra.mxu0 0
        %2940 = vmatprep.subr.bf16.mxu0 0
        %2941 = vmatpush1.bf16.msra.mxu0 0
        %2942 = vmatprep.mubr.bf16.mxu0 0
        %2943 = vmatmul.mubr.bf16.gmra.mrb[0].mxu0 %v2908
        %v2944 = vpop.f32.mrb[0].mxu0
        %v2945 = vadd.f32 0.0, %v2944
        %v2946 = vpop.f32.mrb[0].mxu0
        %v2947 = vpop.f32.mrb[0].mxu0
        %v2948 = vadd.f32 0.0, %v2947
        %v2949 = vpop.f32.mrb[0].mxu0
        %2950 = vdwg.mxu0
        %v2951 = vadd.f32 %v2872, %v2945
        %v2952 = vadd.f32 %v2873, %v2948
        %v2953 = vld [vmem:[%s41] sm:$0x1]
        %v2955 = vlaneseq
        %v2956 = vshrl.u32 %v2955, 7
        %v2957 = vsub.s32 0, %v2956
        %v2958 = vrot.slane %v2953, %v2957
        %v2960 = vadd.f32 %v2951, %v2958
        %v2961 = vadd.f32 %v2952, %v2958
        %vm2962 = vcmp.ge.f32.partialorder %v2960, 0.0
        %vm2963 = vcmp.ge.f32.partialorder %v2961, 0.0
        %v2964 = vmul.f32 %v2960, 0.01
        %v2965 = vmul.f32 %v2961, 0.01
        %v2966 = vsel %vm2962, %v2960, %v2964
        %v2967 = vsel %vm2963, %v2961, %v2965
        %v2968 = vld [vmem:[%s43] sm:$0xf]
        %v2969 = vld [vmem:[%s43 + $0x4] sm:$0xf]
        %v2970 = vld [vmem:[%s43 + $0x8] sm:$0xf]
        %v2971 = vld [vmem:[%s43 + $0xc] sm:$0xf]
        %v2972 = vpack.c.bf16 %v2967, %v2966
        %v2977 = vunpack.c.l.b16 %v2968
        %v2978 = vunpack.c.l.b16 %v2969
        %v2979 = vunpack.c.l.b16 %v2970
        %v2980 = vunpack.c.l.b16 %v2971
        %v2981 = vpack.c.b16 %v2978, %v2977
        %v2982 = vpack.c.b16 %v2980, %v2979
        %vm2985 = vcmask 261120
        %v2987 = vsel %vm2985, %v2972, 0
        %2989 = vmatprep.subr.bf16.mxu0 0
        %2990 = vmatpush1.bf16.msra.mxu0 %v2981
        %2991 = vmatprep.subr.bf16.mxu0 0
        %2992 = vmatpush1.bf16.msra.mxu0 %v2982
        %2993 = vmatprep.subr.bf16.mxu0 0
        %2994 = vmatpush1.bf16.msra.mxu0 0
        %2995 = vmatprep.subr.bf16.mxu0 0
        %2996 = vmatpush1.bf16.msra.mxu0 0
        %2997 = vmatprep.subr.bf16.mxu0 0
        %2998 = vmatpush1.bf16.msra.mxu0 0
        %2999 = vmatprep.subr.bf16.mxu0 0
        %3000 = vmatpush1.bf16.msra.mxu0 0
        %3001 = vmatprep.subr.bf16.mxu0 0
        %3002 = vmatpush1.bf16.msra.mxu0 0
        %3003 = vmatprep.subr.bf16.mxu0 0
        %3004 = vmatpush1.bf16.msra.mxu0 0
        %3005 = vmatprep.subr.bf16.mxu0 0
        %3006 = vmatpush1.bf16.msra.mxu0 0
        %3007 = vmatprep.subr.bf16.mxu0 0
        %3008 = vmatpush1.bf16.msra.mxu0 0
        %3009 = vmatprep.subr.bf16.mxu0 0
        %3010 = vmatpush1.bf16.msra.mxu0 0
        %3011 = vmatprep.subr.bf16.mxu0 0
        %3012 = vmatpush1.bf16.msra.mxu0 0
        %3013 = vmatprep.subr.bf16.mxu0 0
        %3014 = vmatpush1.bf16.msra.mxu0 0
        %3015 = vmatprep.subr.bf16.mxu0 0
        %3016 = vmatpush1.bf16.msra.mxu0 0
        %3017 = vmatprep.subr.bf16.mxu0 0
        %3018 = vmatpush1.bf16.msra.mxu0 0
        %3019 = vmatprep.subr.bf16.mxu0 0
        %3020 = vmatpush1.bf16.msra.mxu0 0
        %3021 = vmatprep.mubr.bf16.mxu0 0
        %3022 = vmatmul.mubr.bf16.gmra.mrb[0].mxu0 %v2987
        %v3023 = vpop.f32.mrb[0].mxu0
        %v3024 = vadd.f32 0.0, %v3023
        %v3025 = vpop.f32.mrb[0].mxu0
        %v3026 = vpop.f32.mrb[0].mxu0
        %v3027 = vadd.f32 0.0, %v3026
        %v3028 = vpop.f32.mrb[0].mxu0
        %3029 = vdwg.mxu0
        %v3032 = vcombine.high %v3024, %v3024
        %v3034 = vunpack.c.l.s4 1966171168
        %v3035 = vunpack.c.0.s8 %v3034
        %v3036 = vlaneseq
        %v3037 = vshrl.u32 %v3036, 7
        %v3038 = vsub.s32 %v3035, %v3037
        %v3039 = vrot.slane %v3024, %v3038
        %v3041 = vunpack.c.l.s4 1966171168
        %v3042 = vunpack.c.0.s8 %v3041
        %v3043 = vlaneseq
        %v3044 = vshrl.u32 %v3043, 7
        %v3045 = vsub.s32 %v3042, %v3044
        %v3046 = vrot.slane %v3032, %v3045
        %v3047 = vcombine.high %v3039, %v3039
        %v3048 = vcombine.high %v3046, %v3046
        %v3050 = vunpack.c.l.s4 1966171168
        %v3051 = vunpack.c.0.s8 %v3050
        %v3052 = vlaneseq
        %v3053 = vshrl.u32 %v3052, 7
        %v3054 = vsub.s32 %v3051, %v3053
        %v3055 = vrot.slane %v3039, %v3054
        %v3057 = vunpack.c.l.s4 1966171168
        %v3058 = vunpack.c.0.s8 %v3057
        %v3059 = vlaneseq
        %v3060 = vshrl.u32 %v3059, 7
        %v3061 = vsub.s32 %v3058, %v3060
        %v3062 = vrot.slane %v3046, %v3061
        %v3064 = vunpack.c.l.s4 1966171168
        %v3065 = vunpack.c.0.s8 %v3064
        %v3066 = vlaneseq
        %v3067 = vshrl.u32 %v3066, 7
        %v3068 = vsub.s32 %v3065, %v3067
        %v3069 = vrot.slane %v3047, %v3068
        %v3071 = vunpack.c.l.s4 1966171168
        %v3072 = vunpack.c.0.s8 %v3071
        %v3073 = vlaneseq
        %v3074 = vshrl.u32 %v3073, 7
        %v3075 = vsub.s32 %v3072, %v3074
        %v3076 = vrot.slane %v3048, %v3075
        %v3077 = vcombine.high %v3055, %v3055
        %v3078 = vcombine.high %v3062, %v3062
        %v3079 = vcombine.high %v3069, %v3069
        %v3080 = vcombine.high %v3076, %v3076
        %v3081 = vcombine.high %v3027, %v3027
        %v3083 = vunpack.c.l.s4 1966171168
        %v3084 = vunpack.c.0.s8 %v3083
        %v3085 = vlaneseq
        %v3086 = vshrl.u32 %v3085, 7
        %v3087 = vsub.s32 %v3084, %v3086
        %v3088 = vrot.slane %v3027, %v3087
        %v3090 = vunpack.c.l.s4 1966171168
        %v3091 = vunpack.c.0.s8 %v3090
        %v3092 = vlaneseq
        %v3093 = vshrl.u32 %v3092, 7
        %v3094 = vsub.s32 %v3091, %v3093
        %v3095 = vrot.slane %v3081, %v3094
        %v3096 = vcombine.high %v3088, %v3088
        %v3097 = vcombine.high %v3095, %v3095
        %v3099 = vunpack.c.l.s4 1966171168
        %v3100 = vunpack.c.0.s8 %v3099
        %v3101 = vlaneseq
        %v3102 = vshrl.u32 %v3101, 7
        %v3103 = vsub.s32 %v3100, %v3102
        %v3104 = vrot.slane %v3088, %v3103
        %v3106 = vunpack.c.l.s4 1966171168
        %v3107 = vunpack.c.0.s8 %v3106
        %v3108 = vlaneseq
        %v3109 = vshrl.u32 %v3108, 7
        %v3110 = vsub.s32 %v3107, %v3109
        %v3111 = vrot.slane %v3095, %v3110
        %v3113 = vunpack.c.l.s4 1966171168
        %v3114 = vunpack.c.0.s8 %v3113
        %v3115 = vlaneseq
        %v3116 = vshrl.u32 %v3115, 7
        %v3117 = vsub.s32 %v3114, %v3116
        %v3118 = vrot.slane %v3096, %v3117
        %v3120 = vunpack.c.l.s4 1966171168
        %v3121 = vunpack.c.0.s8 %v3120
        %v3122 = vlaneseq
        %v3123 = vshrl.u32 %v3122, 7
        %v3124 = vsub.s32 %v3121, %v3123
        %v3125 = vrot.slane %v3097, %v3124
        %v3126 = vcombine.high %v3104, %v3104
        %v3127 = vcombine.high %v3111, %v3111
        %v3128 = vcombine.high %v3118, %v3118
        %v3129 = vcombine.high %v3125, %v3125
        %v3130 = vlaneseq
        %v3131 = vshrl.u32 %v3130, 7
        %v3132 = vsub.s32 0, %v3131
        %v3133 = vrot.slane %v3055, %v3132
        %v3134 = vlaneseq
        %v3135 = vshrl.u32 %v3134, 7
        %v3136 = vsub.s32 0, %v3135
        %v3137 = vrot.slane %v3069, %v3136
        %v3138 = vlaneseq
        %v3139 = vshrl.u32 %v3138, 7
        %v3140 = vsub.s32 0, %v3139
        %v3141 = vrot.slane %v3077, %v3140
        %v3142 = vlaneseq
        %v3143 = vshrl.u32 %v3142, 7
        %v3144 = vsub.s32 0, %v3143
        %v3145 = vrot.slane %v3079, %v3144
        %v3146 = vlaneseq
        %v3147 = vshrl.u32 %v3146, 7
        %v3148 = vsub.s32 0, %v3147
        %v3149 = vrot.slane %v3062, %v3148
        %v3150 = vlaneseq
        %v3151 = vshrl.u32 %v3150, 7
        %v3152 = vsub.s32 0, %v3151
        %v3153 = vrot.slane %v3076, %v3152
        %v3154 = vlaneseq
        %v3155 = vshrl.u32 %v3154, 7
        %v3156 = vsub.s32 0, %v3155
        %v3157 = vrot.slane %v3078, %v3156
        %v3158 = vlaneseq
        %v3159 = vshrl.u32 %v3158, 7
        %v3160 = vsub.s32 0, %v3159
        %v3161 = vrot.slane %v3080, %v3160
        %v3162 = vlaneseq
        %v3163 = vshrl.u32 %v3162, 7
        %v3164 = vsub.s32 0, %v3163
        %v3165 = vrot.slane %v3104, %v3164
        %v3166 = vlaneseq
        %v3167 = vshrl.u32 %v3166, 7
        %v3168 = vsub.s32 0, %v3167
        %v3169 = vrot.slane %v3118, %v3168
        %v3170 = vlaneseq
        %v3171 = vshrl.u32 %v3170, 7
        %v3172 = vsub.s32 0, %v3171
        %v3173 = vrot.slane %v3126, %v3172
        %v3174 = vlaneseq
        %v3175 = vshrl.u32 %v3174, 7
        %v3176 = vsub.s32 0, %v3175
        %v3177 = vrot.slane %v3128, %v3176
        %v3178 = vlaneseq
        %v3179 = vshrl.u32 %v3178, 7
        %v3180 = vsub.s32 0, %v3179
        %v3181 = vrot.slane %v3111, %v3180
        %v3182 = vlaneseq
        %v3183 = vshrl.u32 %v3182, 7
        %v3184 = vsub.s32 0, %v3183
        %v3185 = vrot.slane %v3125, %v3184
        %v3186 = vlaneseq
        %v3187 = vshrl.u32 %v3186, 7
        %v3188 = vsub.s32 0, %v3187
        %v3189 = vrot.slane %v3127, %v3188
        %v3190 = vlaneseq
        %v3191 = vshrl.u32 %v3190, 7
        %v3192 = vsub.s32 0, %v3191
        %v3193 = vrot.slane %v3129, %v3192
        %v3210 = vsel %vm2217, %v3133, -1e+30
        %v3211 = vsel %vm2218, %v3133, -1e+30
        %v3212 = vsel %vm2219, %v3137, -1e+30
        %v3213 = vsel %vm2220, %v3137, -1e+30
        %v3214 = vsel %vm2221, %v3141, -1e+30
        %v3215 = vsel %vm2222, %v3141, -1e+30
        %v3216 = vsel %vm2223, %v3145, -1e+30
        %v3217 = vsel %vm2224, %v3145, -1e+30
        %v3218 = vsel %vm2225, %v3149, -1e+30
        %v3219 = vsel %vm2226, %v3149, -1e+30
        %v3220 = vsel %vm2227, %v3153, -1e+30
        %v3221 = vsel %vm2228, %v3153, -1e+30
        %v3222 = vsel %vm2229, %v3157, -1e+30
        %v3223 = vsel %vm2230, %v3157, -1e+30
        %v3224 = vsel %vm2231, %v3161, -1e+30
        %v3225 = vsel %vm2232, %v3161, -1e+30
        %v3226 = vsel %vm2233, %v3165, -1e+30
        %v3227 = vsel %vm2234, %v3165, -1e+30
        %v3228 = vsel %vm2235, %v3169, -1e+30
        %v3229 = vsel %vm2236, %v3169, -1e+30
        %v3230 = vsel %vm2237, %v3173, -1e+30
        %v3231 = vsel %vm2238, %v3173, -1e+30
        %v3232 = vsel %vm2239, %v3177, -1e+30
        %v3233 = vsel %vm2240, %v3177, -1e+30
        %v3234 = vsel %vm2241, %v3181, -1e+30
        %v3235 = vsel %vm2242, %v3181, -1e+30
        %v3236 = vsel %vm2243, %v3185, -1e+30
        %v3237 = vsel %vm2244, %v3185, -1e+30
        %v3238 = vsel %vm2245, %v3189, -1e+30
        %v3239 = vsel %vm2246, %v3189, -1e+30
        %v3240 = vsel %vm2247, %v3193, -1e+30
        %v3241 = vsel %vm2248, %v3193, -1e+30
        %v3242 = vsel %vm1501, %v3210, -inf
        %v3243 = vsel %vm1501, %v3212, -inf
        %v3244 = vsel %vm1501, %v3214, -inf
        %v3245 = vmax.f32 %v3242, %v3244
        %v3246 = vsel %vm1501, %v3216, -inf
        %v3247 = vmax.f32 %v3243, %v3246
        %v3248 = vsel %vm1501, %v3218, -inf
        %v3249 = vmax.f32 %v3245, %v3248
        %v3250 = vsel %vm1501, %v3220, -inf
        %v3251 = vmax.f32 %v3247, %v3250
        %v3252 = vsel %vm1501, %v3222, -inf
        %v3253 = vmax.f32 %v3249, %v3252
        %v3254 = vsel %vm1501, %v3224, -inf
        %v3255 = vmax.f32 %v3251, %v3254
        %v3256 = vsel %vm1501, %v3226, -inf
        %v3257 = vmax.f32 %v3253, %v3256
        %v3258 = vsel %vm1501, %v3228, -inf
        %v3259 = vmax.f32 %v3255, %v3258
        %v3260 = vsel %vm1501, %v3230, -inf
        %v3261 = vmax.f32 %v3257, %v3260
        %v3262 = vsel %vm1501, %v3232, -inf
        %v3263 = vmax.f32 %v3259, %v3262
        %v3264 = vsel %vm1501, %v3234, -inf
        %v3265 = vmax.f32 %v3261, %v3264
        %v3266 = vsel %vm1501, %v3236, -inf
        %v3267 = vmax.f32 %v3263, %v3266
        %v3268 = vsel %vm1501, %v3238, -inf
        %v3269 = vmax.f32 %v3265, %v3268
        %v3270 = vsel %vm1501, %v3240, -inf
        %v3271 = vmax.f32 %v3267, %v3270
        %v3272 = vmax.f32 %v3269, %v3271
        %v3273 = vsel %vm2392, %v3211, -inf
        %v3274 = vsel %vm2392, %v3213, -inf
        %v3275 = vsel %vm2392, %v3215, -inf
        %v3276 = vmax.f32 %v3273, %v3275
        %v3277 = vsel %vm2392, %v3217, -inf
        %v3278 = vmax.f32 %v3274, %v3277
        %v3279 = vsel %vm2392, %v3219, -inf
        %v3280 = vmax.f32 %v3276, %v3279
        %v3281 = vsel %vm2392, %v3221, -inf
        %v3282 = vmax.f32 %v3278, %v3281
        %v3283 = vsel %vm2392, %v3223, -inf
        %v3284 = vmax.f32 %v3280, %v3283
        %v3285 = vsel %vm2392, %v3225, -inf
        %v3286 = vmax.f32 %v3282, %v3285
        %v3287 = vsel %vm2392, %v3227, -inf
        %v3288 = vmax.f32 %v3284, %v3287
        %v3289 = vsel %vm2392, %v3229, -inf
        %v3290 = vmax.f32 %v3286, %v3289
        %v3291 = vsel %vm2392, %v3231, -inf
        %v3292 = vmax.f32 %v3288, %v3291
        %v3293 = vsel %vm2392, %v3233, -inf
        %v3294 = vmax.f32 %v3290, %v3293
        %v3295 = vsel %vm2392, %v3235, -inf
        %v3296 = vmax.f32 %v3292, %v3295
        %v3297 = vsel %vm2392, %v3237, -inf
        %v3298 = vmax.f32 %v3294, %v3297
        %v3299 = vsel %vm2392, %v3239, -inf
        %v3300 = vmax.f32 %v3296, %v3299
        %v3301 = vsel %vm2392, %v3241, -inf
        %v3302 = vmax.f32 %v3298, %v3301
        %v3303 = vmax.f32 %v3300, %v3302
        %v3304 = vpack.c.bf16 %v3303, %v3272
        %v3306 = vsel %vm1633, %v3304, 0
        %3308 = vmatprep.subr.bf16.mxu0 0
        %3309 = vmatpush1.bf16.msra.mxu0 %v3306
        %3310 = vmatprep.subr.bf16.mxu0 0
        %3311 = vmatpush1.bf16.msra.mxu0 0
        %3312 = vmatprep.subr.bf16.mxu0 0
        %3313 = vmatpush1.bf16.msra.mxu0 0
        %3314 = vmatprep.subr.bf16.mxu0 0
        %3315 = vmatpush1.bf16.msra.mxu0 0
        %3316 = vmatprep.subr.bf16.mxu0 0
        %3317 = vmatpush1.bf16.msra.mxu0 0
        %3318 = vmatprep.subr.bf16.mxu0 0
        %3319 = vmatpush1.bf16.msra.mxu0 0
        %3320 = vmatprep.subr.bf16.mxu0 0
        %3321 = vmatpush1.bf16.msra.mxu0 0
        %3322 = vmatprep.subr.bf16.mxu0 0
        %3323 = vmatpush1.bf16.msra.mxu0 0
        %3324 = vmatprep.subr.bf16.mxu0 0
        %3325 = vmatpush1.bf16.msra.mxu0 0
        %3326 = vmatprep.subr.bf16.mxu0 0
        %3327 = vmatpush1.bf16.msra.mxu0 0
        %3328 = vmatprep.subr.bf16.mxu0 0
        %3329 = vmatpush1.bf16.msra.mxu0 0
        %3330 = vmatprep.subr.bf16.mxu0 0
        %3331 = vmatpush1.bf16.msra.mxu0 0
        %3332 = vmatprep.subr.bf16.mxu0 0
        %3333 = vmatpush1.bf16.msra.mxu0 0
        %3334 = vmatprep.subr.bf16.mxu0 0
        %3335 = vmatpush1.bf16.msra.mxu0 0
        %3336 = vmatprep.subr.bf16.mxu0 0
        %3337 = vmatpush1.bf16.msra.mxu0 0
        %3338 = vmatprep.subr.bf16.mxu0 0
        %3339 = vmatpush1.bf16.msra.mxu0 0
        %3340 = vmatprep.mubr.bf16.mxu0 0
        %3341 = vmatmul.mubr.bf16.gmra.mrb[0].mxu0 %v1681
        %v3342 = vpop.f32.mrb[0].mxu0
        %v3343 = vadd.f32 0.0, %v3342
        %v3344 = vpop.f32.mrb[0].mxu0
        %v3345 = vpop.f32.mrb[0].mxu0
        %v3346 = vadd.f32 0.0, %v3345
        %v3347 = vpop.f32.mrb[0].mxu0
        %3348 = vdwg.mxu0
        %v3349 = vsub.f32 %v3024, %v3343
        %v3350 = vsub.f32 %v3027, %v3346
        %v3351 = vmul.f32 %v3349, 1.442695
        %v3352 = vpow.pop %v3351
        %v3353 = vmul.f32 %v3350, 1.442695
        %v3354 = vpow.pop %v3353
        %v3355 = vpack.c.bf16 %v3354, %v3352
        %3356 = vmatprep.subr.bf16.mxu0 0
        %3357 = vmatpush1.bf16.msra.mxu0 %v3355
        %3358 = vmatprep.subr.bf16.mxu0 0
        %3359 = vmatpush1.bf16.msra.mxu0 0
        %3360 = vmatprep.subr.bf16.mxu0 0
        %3361 = vmatpush1.bf16.msra.mxu0 0
        %3362 = vmatprep.subr.bf16.mxu0 0
        %3363 = vmatpush1.bf16.msra.mxu0 0
        %3364 = vmatprep.subr.bf16.mxu0 0
        %3365 = vmatpush1.bf16.msra.mxu0 0
        %3366 = vmatprep.subr.bf16.mxu0 0
        %3367 = vmatpush1.bf16.msra.mxu0 0
        %3368 = vmatprep.subr.bf16.mxu0 0
        %3369 = vmatpush1.bf16.msra.mxu0 0
        %3370 = vmatprep.subr.bf16.mxu0 0
        %3371 = vmatpush1.bf16.msra.mxu0 0
        %3372 = vmatprep.subr.bf16.mxu0 0
        %3373 = vmatpush1.bf16.msra.mxu0 0
        %3374 = vmatprep.subr.bf16.mxu0 0
        %3375 = vmatpush1.bf16.msra.mxu0 0
        %3376 = vmatprep.subr.bf16.mxu0 0
        %3377 = vmatpush1.bf16.msra.mxu0 0
        %3378 = vmatprep.subr.bf16.mxu0 0
        %3379 = vmatpush1.bf16.msra.mxu0 0
        %3380 = vmatprep.subr.bf16.mxu0 0
        %3381 = vmatpush1.bf16.msra.mxu0 0
        %3382 = vmatprep.subr.bf16.mxu0 0
        %3383 = vmatpush1.bf16.msra.mxu0 0
        %3384 = vmatprep.subr.bf16.mxu0 0
        %3385 = vmatpush1.bf16.msra.mxu0 0
        %3386 = vmatprep.subr.bf16.mxu0 0
        %3387 = vmatpush1.bf16.msra.mxu0 0
        %3388 = vmatprep.mubr.bf16.mxu0 0
        %3389 = vmatmul.mubr.bf16.gmra.mrb[0].mxu0 %v2478
        %v3390 = vpop.f32.mrb[0].mxu0
        %v3391 = vadd.f32 0.0, %v3390
        %v3392 = vpop.f32.mrb[0].mxu0
        %v3393 = vpop.f32.mrb[0].mxu0
        %v3394 = vadd.f32 0.0, %v3393
        %v3395 = vpop.f32.mrb[0].mxu0
        %3396 = vdwg.mxu0
        %v3397 = vpack.c.bf16 %v3394, %v3391
        %v3399 = vsel %vm1633, %v3397, 0
        %3401 = vmatprep.subr.bf16.mxu0 0
        %3402 = vmatpush1.bf16.msra.mxu0 %v3399
        %3403 = vmatprep.subr.bf16.mxu0 0
        %3404 = vmatpush1.bf16.msra.mxu0 0
        %3405 = vmatprep.subr.bf16.mxu0 0
        %3406 = vmatpush1.bf16.msra.mxu0 0
        %3407 = vmatprep.subr.bf16.mxu0 0
        %3408 = vmatpush1.bf16.msra.mxu0 0
        %3409 = vmatprep.subr.bf16.mxu0 0
        %3410 = vmatpush1.bf16.msra.mxu0 0
        %3411 = vmatprep.subr.bf16.mxu0 0
        %3412 = vmatpush1.bf16.msra.mxu0 0
        %3413 = vmatprep.subr.bf16.mxu0 0
        %3414 = vmatpush1.bf16.msra.mxu0 0
        %3415 = vmatprep.subr.bf16.mxu0 0
        %3416 = vmatpush1.bf16.msra.mxu0 0
        %3417 = vmatprep.subr.bf16.mxu0 0
        %3418 = vmatpush1.bf16.msra.mxu0 0
        %3419 = vmatprep.subr.bf16.mxu0 0
        %3420 = vmatpush1.bf16.msra.mxu0 0
        %3421 = vmatprep.subr.bf16.mxu0 0
        %3422 = vmatpush1.bf16.msra.mxu0 0
        %3423 = vmatprep.subr.bf16.mxu0 0
        %3424 = vmatpush1.bf16.msra.mxu0 0
        %3425 = vmatprep.subr.bf16.mxu0 0
        %3426 = vmatpush1.bf16.msra.mxu0 0
        %3427 = vmatprep.subr.bf16.mxu0 0
        %3428 = vmatpush1.bf16.msra.mxu0 0
        %3429 = vmatprep.subr.bf16.mxu0 0
        %3430 = vmatpush1.bf16.msra.mxu0 0
        %3431 = vmatprep.subr.bf16.mxu0 0
        %3432 = vmatpush1.bf16.msra.mxu0 0
        %3433 = vmatprep.mubr.bf16.mxu0 0
        %3434 = vmatmul.mubr.bf16.gmra.mrb[0].mxu0 %v1681
        %v3435 = vpop.f32.mrb[0].mxu0
        %v3436 = vadd.f32 0.0, %v3435
        %v3437 = vpop.f32.mrb[0].mxu0
        %v3438 = vpop.f32.mrb[0].mxu0
        %v3439 = vadd.f32 0.0, %v3438
        %v3440 = vpop.f32.mrb[0].mxu0
        %3441 = vdwg.mxu0
        %v3442 = vrcp.pop %v3436
        %v3443 = vrcp.pop %v3439
        %v3444 = vmul.f32 %v3352, %v3442
        %v3445 = vmul.f32 %v3354, %v3443
        %v3446 = vld [vmem:[%s19] sm:$0x1]
        %v3447 = vpack.c.bf16 %v3445, %v3444
        %v3449 = vsel %vm1501, %v3447, 0
        %v3452 = vsel %vm1508, %v3446, 0
        %3454 = vmatprep.subr.bf16.mxu0 0
        %3455 = vmatpush1.bf16.msra.mxu0 %v3452
        %3456 = vmatprep.subr.bf16.mxu0 0
        %3457 = vmatpush1.bf16.msra.mxu0 0
        %3458 = vmatprep.subr.bf16.mxu0 0
        %3459 = vmatpush1.bf16.msra.mxu0 0
        %3460 = vmatprep.subr.bf16.mxu0 0
        %3461 = vmatpush1.bf16.msra.mxu0 0
        %3462 = vmatprep.subr.bf16.mxu0 0
        %3463 = vmatpush1.bf16.msra.mxu0 0
        %3464 = vmatprep.subr.bf16.mxu0 0
        %3465 = vmatpush1.bf16.msra.mxu0 0
        %3466 = vmatprep.subr.bf16.mxu0 0
        %3467 = vmatpush1.bf16.msra.mxu0 0
        %3468 = vmatprep.subr.bf16.mxu0 0
        %3469 = vmatpush1.bf16.msra.mxu0 0
        %3470 = vmatprep.subr.bf16.mxu0 0
        %3471 = vmatpush1.bf16.msra.mxu0 0
        %3472 = vmatprep.subr.bf16.mxu0 0
        %3473 = vmatpush1.bf16.msra.mxu0 0
        %3474 = vmatprep.subr.bf16.mxu0 0
        %3475 = vmatpush1.bf16.msra.mxu0 0
        %3476 = vmatprep.subr.bf16.mxu0 0
        %3477 = vmatpush1.bf16.msra.mxu0 0
        %3478 = vmatprep.subr.bf16.mxu0 0
        %3479 = vmatpush1.bf16.msra.mxu0 0
        %3480 = vmatprep.subr.bf16.mxu0 0
        %3481 = vmatpush1.bf16.msra.mxu0 0
        %3482 = vmatprep.subr.bf16.mxu0 0
        %3483 = vmatpush1.bf16.msra.mxu0 0
        %3484 = vmatprep.subr.bf16.mxu0 0
        %3485 = vmatpush1.bf16.msra.mxu0 0
        %3486 = vmatprep.mubr.bf16.mxu0 0
        %3487 = vmatmul.mubr.bf16.gmra.mrb[0].mxu0 %v3449
        %v3488 = vpop.f32.mrb[0].mxu0
        %v3489 = vadd.f32 0.0, %v3488
        %v3490 = vpop.f32.mrb[0].mxu0
        %v3491 = vpop.f32.mrb[0].mxu0
        %v3492 = vadd.f32 0.0, %v3491
        %v3493 = vpop.f32.mrb[0].mxu0
        %3494 = vdwg.mxu0
        %3497 = vrot.lane.b32.xlu0 %v3489, 32
        %v3498 = vpop.permute.xlu0 %3497
        %3499 = vrot.lane.b32.xlu0 %v3492, 32
        %v3500 = vpop.permute.xlu0 %3499
        %v3503 = vmul.f32 %v2817, %v3498
        %v3504 = vmul.f32 %v2819, %v3498
        %v3505 = vmul.f32 %v2821, %v3500
        %v3506 = vmul.f32 %v2823, %v3500
        %v3507 = vpack.c.bf16 %v3505, %v3503
        %v3508 = vpack.c.bf16 %v3506, %v3504
        %3511 = vrot.lane.b32.xlu0 %v3507, 96
        %v3512 = vpop.permute.xlu0 %3511
        %3513 = vrot.lane.b32.xlu0 %v3508, 96
        %v3514 = vpop.permute.xlu0 %3513
        %vm3515 = vcmask 785408
        %v3516 = vsel %vm3515, %v3512, %v3514
        %3518 = vmatprep.subr.bf16.mxu0 0
        %3519 = vmatpush1.bf16.msra.mxu0 %v3516
        %3520 = vmatprep.subr.bf16.mxu0 0
        %3521 = vmatpush1.bf16.msra.mxu0 0
        %3522 = vmatprep.subr.bf16.mxu0 0
        %3523 = vmatpush1.bf16.msra.mxu0 0
        %3524 = vmatprep.subr.bf16.mxu0 0
        %3525 = vmatpush1.bf16.msra.mxu0 0
        %3526 = vmatprep.subr.bf16.mxu0 0
        %3527 = vmatpush1.bf16.msra.mxu0 0
        %3528 = vmatprep.subr.bf16.mxu0 0
        %3529 = vmatpush1.bf16.msra.mxu0 0
        %3530 = vmatprep.subr.bf16.mxu0 0
        %3531 = vmatpush1.bf16.msra.mxu0 0
        %3532 = vmatprep.subr.bf16.mxu0 0
        %3533 = vmatpush1.bf16.msra.mxu0 0
        %3534 = vmatprep.subr.bf16.mxu0 0
        %3535 = vmatpush1.bf16.msra.mxu0 0
        %3536 = vmatprep.subr.bf16.mxu0 0
        %3537 = vmatpush1.bf16.msra.mxu0 0
        %3538 = vmatprep.subr.bf16.mxu0 0
        %3539 = vmatpush1.bf16.msra.mxu0 0
        %3540 = vmatprep.subr.bf16.mxu0 0
        %3541 = vmatpush1.bf16.msra.mxu0 0
        %3542 = vmatprep.subr.bf16.mxu0 0
        %3543 = vmatpush1.bf16.msra.mxu0 0
        %3544 = vmatprep.subr.bf16.mxu0 0
        %3545 = vmatpush1.bf16.msra.mxu0 0
        %3546 = vmatprep.subr.bf16.mxu0 0
        %3547 = vmatpush1.bf16.msra.mxu0 0
        %3548 = vmatprep.subr.bf16.mxu0 0
        %3549 = vmatpush1.bf16.msra.mxu0 0
        %3550 = vmatprep.mubr.bf16.mxu0 0
        %3551 = vmatmul.mubr.bf16.gmra.mrb[0].mxu0 %v2478
        %v3552 = vpop.f32.mrb[0].mxu0
        %v3553 = vadd.f32 0.0, %v3552
        %v3554 = vpop.f32.mrb[0].mxu0
        %v3555 = vpop.f32.mrb[0].mxu0
        %v3556 = vadd.f32 0.0, %v3555
        %v3557 = vpop.f32.mrb[0].mxu0
        %3558 = vdwg.mxu0
        %v3559 = vld [vmem:[%s53] sm:$0xf]
        %v3560 = vld [vmem:[%s53 + $0x4] sm:$0xf]
        %v3561 = vld [vmem:[%s53 + $0x8] sm:$0xf]
        %v3562 = vld [vmem:[%s53 + $0xc] sm:$0xf]
        %v3563 = vld [vmem:[%s55] sm:$0x1]
        %v3565 = vlaneseq
        %v3566 = vshrl.u32 %v3565, 7
        %v3567 = vsub.s32 0, %v3566
        %v3568 = vrot.slane %v3563, %v3567
        %v3574 = vunpack.c.l.b16 %v3559
        %v3575 = vunpack.c.l.b16 %v3560
        %v3576 = vunpack.c.l.b16 %v3561
        %v3577 = vunpack.c.l.b16 %v3562
        %v3578 = vpack.c.b16 %v3575, %v3574
        %v3579 = vpack.c.b16 %v3577, %v3576
        %3582 = vmatprep.subr.bf16.mxu0 0
        %3583 = vmatpush1.bf16.msra.mxu0 %v3578
        %3584 = vmatprep.subr.bf16.mxu0 0
        %3585 = vmatpush1.bf16.msra.mxu0 %v3579
        %3586 = vmatprep.subr.bf16.mxu0 0
        %3587 = vmatpush1.bf16.msra.mxu0 0
        %3588 = vmatprep.subr.bf16.mxu0 0
        %3589 = vmatpush1.bf16.msra.mxu0 0
        %3590 = vmatprep.subr.bf16.mxu0 0
        %3591 = vmatpush1.bf16.msra.mxu0 0
        %3592 = vmatprep.subr.bf16.mxu0 0
        %3593 = vmatpush1.bf16.msra.mxu0 0
        %3594 = vmatprep.subr.bf16.mxu0 0
        %3595 = vmatpush1.bf16.msra.mxu0 0
        %3596 = vmatprep.subr.bf16.mxu0 0
        %3597 = vmatpush1.bf16.msra.mxu0 0
        %3598 = vmatprep.subr.bf16.mxu0 0
        %3599 = vmatpush1.bf16.msra.mxu0 0
        %3600 = vmatprep.subr.bf16.mxu0 0
        %3601 = vmatpush1.bf16.msra.mxu0 0
        %3602 = vmatprep.subr.bf16.mxu0 0
        %3603 = vmatpush1.bf16.msra.mxu0 0
        %3604 = vmatprep.subr.bf16.mxu0 0
        %3605 = vmatpush1.bf16.msra.mxu0 0
        %3606 = vmatprep.subr.bf16.mxu0 0
        %3607 = vmatpush1.bf16.msra.mxu0 0
        %3608 = vmatprep.subr.bf16.mxu0 0
        %3609 = vmatpush1.bf16.msra.mxu0 0
        %3610 = vmatprep.subr.bf16.mxu0 0
        %3611 = vmatpush1.bf16.msra.mxu0 0
        %3612 = vmatprep.subr.bf16.mxu0 0
        %3613 = vmatpush1.bf16.msra.mxu0 0
        %3614 = vmatprep.mubr.bf16.mxu0 0
        %3615 = vmatmul.mubr.bf16.gmra.mrb[0].mxu0 %v2987
        %v3616 = vpop.f32.mrb[0].mxu0
        %v3617 = vadd.f32 %v3568, %v3616
        %v3618 = vpop.f32.mrb[0].mxu0
        %v3619 = vpop.f32.mrb[0].mxu0
        %v3620 = vadd.f32 %v3568, %v3619
        %v3621 = vpop.f32.mrb[0].mxu0
        %3622 = vdwg.mxu0
        %v3623 = vmax.f32 %v3617, 0.0
        %v3624 = vmax.f32 %v3620, 0.0
        %v3625 = vld [vmem:[%s57] sm:$0xf]
        %v3626 = vld [vmem:[%s57 + $0x4] sm:$0xf]
        %v3627 = vld [vmem:[%s57 + $0x8] sm:$0xf]
        %v3628 = vld [vmem:[%s57 + $0xc] sm:$0xf]
        %v3629 = vld [vmem:[%s57 + $0x10] sm:$0xf]
        %v3630 = vld [vmem:[%s57 + $0x14] sm:$0xf]
        %v3631 = vld [vmem:[%s57 + $0x18] sm:$0xf]
        %v3632 = vld [vmem:[%s57 + $0x1c] sm:$0xf]
        %v3633 = vld [vmem:[%s57 + $0x20] sm:$0xf]
        %v3634 = vld [vmem:[%s57 + $0x24] sm:$0xf]
        %v3635 = vld [vmem:[%s57 + $0x28] sm:$0xf]
        %v3636 = vld [vmem:[%s57 + $0x2c] sm:$0xf]
        %v3637 = vld [vmem:[%s57 + $0x30] sm:$0xf]
        %v3638 = vld [vmem:[%s57 + $0x34] sm:$0xf]
        %v3639 = vld [vmem:[%s57 + $0x38] sm:$0xf]
        %v3640 = vld [vmem:[%s57 + $0x3c] sm:$0xf]
        %v3641 = vpack.c.bf16 %v3556, %v3553
        %v3642 = vld [vmem:[%s59] sm:$0x1]
        %v3644 = vlaneseq
        %v3645 = vshrl.u32 %v3644, 7
        %v3646 = vsub.s32 0, %v3645
        %v3647 = vrot.slane %v3642, %v3646
        %v3665 = vunpack.c.l.b16 %v3625
        %v3666 = vunpack.c.l.b16 %v3626
        %v3667 = vunpack.c.l.b16 %v3627
        %v3668 = vunpack.c.l.b16 %v3628
        %v3669 = vunpack.c.l.b16 %v3629
        %v3670 = vunpack.c.l.b16 %v3630
        %v3671 = vunpack.c.l.b16 %v3631
        %v3672 = vunpack.c.l.b16 %v3632
        %v3673 = vunpack.c.l.b16 %v3633
        %v3674 = vunpack.c.l.b16 %v3634
        %v3675 = vunpack.c.l.b16 %v3635
        %v3676 = vunpack.c.l.b16 %v3636
        %v3677 = vunpack.c.l.b16 %v3637
        %v3678 = vunpack.c.l.b16 %v3638
        %v3679 = vunpack.c.l.b16 %v3639
        %v3680 = vunpack.c.l.b16 %v3640
        %v3681 = vpack.c.b16 %v3666, %v3665
        %v3682 = vpack.c.b16 %v3668, %v3667
        %v3683 = vpack.c.b16 %v3670, %v3669
        %v3684 = vpack.c.b16 %v3672, %v3671
        %v3685 = vpack.c.b16 %v3674, %v3673
        %v3686 = vpack.c.b16 %v3676, %v3675
        %v3687 = vpack.c.b16 %v3678, %v3677
        %v3688 = vpack.c.b16 %v3680, %v3679
        %3697 = vmatprep.subr.bf16.mxu0 0
        %3698 = vmatpush1.bf16.msra.mxu0 %v3681
        %3699 = vmatprep.subr.bf16.mxu0 0
        %3700 = vmatpush1.bf16.msra.mxu0 %v3682
        %3701 = vmatprep.subr.bf16.mxu0 0
        %3702 = vmatpush1.bf16.msra.mxu0 %v3683
        %3703 = vmatprep.subr.bf16.mxu0 0
        %3704 = vmatpush1.bf16.msra.mxu0 %v3684
        %3705 = vmatprep.subr.bf16.mxu0 0
        %3706 = vmatpush1.bf16.msra.mxu0 %v3685
        %3707 = vmatprep.subr.bf16.mxu0 0
        %3708 = vmatpush1.bf16.msra.mxu0 %v3686
        %3709 = vmatprep.subr.bf16.mxu0 0
        %3710 = vmatpush1.bf16.msra.mxu0 %v3687
        %3711 = vmatprep.subr.bf16.mxu0 0
        %3712 = vmatpush1.bf16.msra.mxu0 %v3688
        %3713 = vmatprep.subr.bf16.mxu0 0
        %3714 = vmatpush1.bf16.msra.mxu0 0
        %3715 = vmatprep.subr.bf16.mxu0 0
        %3716 = vmatpush1.bf16.msra.mxu0 0
        %3717 = vmatprep.subr.bf16.mxu0 0
        %3718 = vmatpush1.bf16.msra.mxu0 0
        %3719 = vmatprep.subr.bf16.mxu0 0
        %3720 = vmatpush1.bf16.msra.mxu0 0
        %3721 = vmatprep.subr.bf16.mxu0 0
        %3722 = vmatpush1.bf16.msra.mxu0 0
        %3723 = vmatprep.subr.bf16.mxu0 0
        %3724 = vmatpush1.bf16.msra.mxu0 0
        %3725 = vmatprep.subr.bf16.mxu0 0
        %3726 = vmatpush1.bf16.msra.mxu0 0
        %3727 = vmatprep.subr.bf16.mxu0 0
        %3728 = vmatpush1.bf16.msra.mxu0 0
        %3729 = vmatprep.mubr.bf16.mxu0 0
        %3730 = vmatmul.mubr.bf16.gmra.mrb[0].mxu0 %v3641
        %v3731 = vpop.f32.mrb[0].mxu0
        %v3732 = vadd.f32 %v3647, %v3731
        %v3733 = vpop.f32.mrb[0].mxu0
        %v3734 = vpop.f32.mrb[0].mxu0
        %v3735 = vadd.f32 %v3647, %v3734
        %v3736 = vpop.f32.mrb[0].mxu0
        %3737 = vdwg.mxu0
        %v3738 = vmax.f32 %v3732, 0.0
        %v3739 = vmax.f32 %v3735, 0.0
        %v3740 = vld [vmem:[%s1407] sm:$0xff]
        %v3741 = vld [vmem:[%s1407 + $0x8] sm:$0xf]
        %v3742 = vld [vmem:[%s1412] sm:$0xff]
        %v3743 = vld [vmem:[%s1412 + $0x8] sm:$0xf]
        %v3744 = vld [vmem:[%s1417] sm:$0xff]
        %v3745 = vld [vmem:[%s1417 + $0x8] sm:$0x3]
        %v3746 = vld [vmem:[%s45] sm:$0xff]
        %v3747 = vld [vmem:[%s45 + $0x8] sm:$0xff]
        %v3748 = vpack.c.bf16 %v3739, %v3738
        %v3751 = vunpack.c.l.b16 %v3746
        %v3752 = vunpack.c.h.b16 %v3746
        %v3753 = vunpack.c.l.b16 %v3747
        %v3754 = vunpack.c.h.b16 %v3747
        %v3755 = vpack.c.b16 %v3753, %v3751
        %v3756 = vpack.c.b16 %v3754, %v3752
        %v3760 = vsel %vm1580, %v3748, 0
        %3762 = vmatprep.subr.bf16.mxu0 %v3756
        %3763 = vmatpush1.bf16.msra.mxu0 %v3755
        %3764 = vmatprep.subr.bf16.mxu0 0
        %3765 = vmatpush1.bf16.msra.mxu0 0
        %3766 = vmatprep.subr.bf16.mxu0 0
        %3767 = vmatpush1.bf16.msra.mxu0 0
        %3768 = vmatprep.subr.bf16.mxu0 0
        %3769 = vmatpush1.bf16.msra.mxu0 0
        %3770 = vmatprep.subr.bf16.mxu0 0
        %3771 = vmatpush1.bf16.msra.mxu0 0
        %3772 = vmatprep.subr.bf16.mxu0 0
        %3773 = vmatpush1.bf16.msra.mxu0 0
        %3774 = vmatprep.subr.bf16.mxu0 0
        %3775 = vmatpush1.bf16.msra.mxu0 0
        %3776 = vmatprep.subr.bf16.mxu0 0
        %3777 = vmatpush1.bf16.msra.mxu0 0
        %3778 = vmatprep.subr.bf16.mxu0 0
        %3779 = vmatpush1.bf16.msra.mxu0 0
        %3780 = vmatprep.subr.bf16.mxu0 0
        %3781 = vmatpush1.bf16.msra.mxu0 0
        %3782 = vmatprep.subr.bf16.mxu0 0
        %3783 = vmatpush1.bf16.msra.mxu0 0
        %3784 = vmatprep.subr.bf16.mxu0 0
        %3785 = vmatpush1.bf16.msra.mxu0 0
        %3786 = vmatprep.subr.bf16.mxu0 0
        %3787 = vmatpush1.bf16.msra.mxu0 0
        %3788 = vmatprep.subr.bf16.mxu0 0
        %3789 = vmatpush1.bf16.msra.mxu0 0
        %3790 = vmatprep.subr.bf16.mxu0 0
        %3791 = vmatpush1.bf16.msra.mxu0 0
        %3792 = vmatprep.subr.bf16.mxu0 0
        %3793 = vmatpush1.bf16.msra.mxu0 0
        %3794 = vmatprep.mubr.bf16.mxu0 0
        %3795 = vmatmul.mubr.bf16.gmra.mrb[0].mxu0 %v3760
        %v3796 = vpop.f32.mrb[0].mxu0
        %v3797 = vadd.f32 0.0, %v3796
        %v3798 = vpop.f32.mrb[0].mxu0
        %v3799 = vadd.f32 0.0, %v3798
        %v3800 = vpop.f32.mrb[0].mxu0
        %v3801 = vadd.f32 0.0, %v3800
        %v3802 = vpop.f32.mrb[0].mxu0
        %v3803 = vadd.f32 0.0, %v3802
        %3804 = vdwg.mxu0
        %v3805 = vpack.c.bf16 %v3741, %v3740
        %v3806 = vpack.c.bf16 %v3801, %v3797
        %v3808 = vsel %vm1629, %v3805, 0
        %v3811 = vsel %vm1633, %v3806, 0
        %3813 = vmatprep.subr.bf16.mxu0 0
        %3814 = vmatpush1.bf16.msra.mxu0 %v3811
        %3815 = vmatprep.subr.bf16.mxu0 0
        %3816 = vmatpush1.bf16.msra.mxu0 0
        %3817 = vmatprep.subr.bf16.mxu0 0
        %3818 = vmatpush1.bf16.msra.mxu0 0
        %3819 = vmatprep.subr.bf16.mxu0 0
        %3820 = vmatpush1.bf16.msra.mxu0 0
        %3821 = vmatprep.subr.bf16.mxu0 0
        %3822 = vmatpush1.bf16.msra.mxu0 0
        %3823 = vmatprep.subr.bf16.mxu0 0
        %3824 = vmatpush1.bf16.msra.mxu0 0
        %3825 = vmatprep.subr.bf16.mxu0 0
        %3826 = vmatpush1.bf16.msra.mxu0 0
        %3827 = vmatprep.subr.bf16.mxu0 0
        %3828 = vmatpush1.bf16.msra.mxu0 0
        %3829 = vmatprep.subr.bf16.mxu0 0
        %3830 = vmatpush1.bf16.msra.mxu0 0
        %3831 = vmatprep.subr.bf16.mxu0 0
        %3832 = vmatpush1.bf16.msra.mxu0 0
        %3833 = vmatprep.subr.bf16.mxu0 0
        %3834 = vmatpush1.bf16.msra.mxu0 0
        %3835 = vmatprep.subr.bf16.mxu0 0
        %3836 = vmatpush1.bf16.msra.mxu0 0
        %3837 = vmatprep.subr.bf16.mxu0 0
        %3838 = vmatpush1.bf16.msra.mxu0 0
        %3839 = vmatprep.subr.bf16.mxu0 0
        %3840 = vmatpush1.bf16.msra.mxu0 0
        %3841 = vmatprep.subr.bf16.mxu0 0
        %3842 = vmatpush1.bf16.msra.mxu0 0
        %3843 = vmatprep.subr.bf16.mxu0 0
        %3844 = vmatpush1.bf16.msra.mxu0 0
        %3845 = vmatprep.mubr.bf16.mxu0 0
        %3846 = vmatmul.mubr.bf16.gmra.mrb[0].mxu0 %v3808
        %v3847 = vpop.f32.mrb[0].mxu0
        %v3848 = vadd.f32 0.0, %v3847
        %v3849 = vpop.f32.mrb[0].mxu0
        %v3850 = vpop.f32.mrb[0].mxu0
        %v3851 = vadd.f32 0.0, %v3850
        %v3852 = vpop.f32.mrb[0].mxu0
        %3853 = vdwg.mxu0
        %v3854 = vpack.c.bf16 %v3743, %v3742
        %v3855 = vpack.c.bf16 %v3803, %v3799
        %v3857 = vsel %vm1629, %v3854, 0
        %v3860 = vsel %vm1633, %v3855, 0
        %3862 = vmatprep.subr.bf16.mxu0 0
        %3863 = vmatpush1.bf16.msra.mxu0 %v3860
        %3864 = vmatprep.subr.bf16.mxu0 0
        %3865 = vmatpush1.bf16.msra.mxu0 0
        %3866 = vmatprep.subr.bf16.mxu0 0
        %3867 = vmatpush1.bf16.msra.mxu0 0
        %3868 = vmatprep.subr.bf16.mxu0 0
        %3869 = vmatpush1.bf16.msra.mxu0 0
        %3870 = vmatprep.subr.bf16.mxu0 0
        %3871 = vmatpush1.bf16.msra.mxu0 0
        %3872 = vmatprep.subr.bf16.mxu0 0
        %3873 = vmatpush1.bf16.msra.mxu0 0
        %3874 = vmatprep.subr.bf16.mxu0 0
        %3875 = vmatpush1.bf16.msra.mxu0 0
        %3876 = vmatprep.subr.bf16.mxu0 0
        %3877 = vmatpush1.bf16.msra.mxu0 0
        %3878 = vmatprep.subr.bf16.mxu0 0
        %3879 = vmatpush1.bf16.msra.mxu0 0
        %3880 = vmatprep.subr.bf16.mxu0 0
        %3881 = vmatpush1.bf16.msra.mxu0 0
        %3882 = vmatprep.subr.bf16.mxu0 0
        %3883 = vmatpush1.bf16.msra.mxu0 0
        %3884 = vmatprep.subr.bf16.mxu0 0
        %3885 = vmatpush1.bf16.msra.mxu0 0
        %3886 = vmatprep.subr.bf16.mxu0 0
        %3887 = vmatpush1.bf16.msra.mxu0 0
        %3888 = vmatprep.subr.bf16.mxu0 0
        %3889 = vmatpush1.bf16.msra.mxu0 0
        %3890 = vmatprep.subr.bf16.mxu0 0
        %3891 = vmatpush1.bf16.msra.mxu0 0
        %3892 = vmatprep.subr.bf16.mxu0 0
        %3893 = vmatpush1.bf16.msra.mxu0 0
        %3894 = vmatprep.mubr.bf16.mxu0 0
        %3895 = vmatmul.mubr.bf16.gmra.mrb[0].mxu0 %v3857
        %v3896 = vpop.f32.mrb[0].mxu0
        %v3897 = vadd.f32 0.0, %v3896
        %v3898 = vpop.f32.mrb[0].mxu0
        %v3899 = vpop.f32.mrb[0].mxu0
        %v3900 = vadd.f32 0.0, %v3899
        %v3901 = vpop.f32.mrb[0].mxu0
        %3902 = vdwg.mxu0
        %v3903 = vadd.f32 %v3848, %v3897
        %v3904 = vadd.f32 %v3851, %v3900
        %v3905 = vld [vmem:[%s47] sm:$0xf]
        %v3906 = vld [vmem:[%s47 + $0x4] sm:$0xf]
        %v3907 = vpack.c.bf16 %v1558, %v1555
        %v3910 = vunpack.c.l.b16 %v3905
        %v3911 = vunpack.c.l.b16 %v3906
        %v3912 = vpack.c.b16 %v3911, %v3910
        %v3915 = vsel %vm1580, %v3907, 0
        %3917 = vmatprep.subr.bf16.mxu0 0
        %3918 = vmatpush1.bf16.msra.mxu0 %v3912
        %3919 = vmatprep.subr.bf16.mxu0 0
        %3920 = vmatpush1.bf16.msra.mxu0 0
        %3921 = vmatprep.subr.bf16.mxu0 0
        %3922 = vmatpush1.bf16.msra.mxu0 0
        %3923 = vmatprep.subr.bf16.mxu0 0
        %3924 = vmatpush1.bf16.msra.mxu0 0
        %3925 = vmatprep.subr.bf16.mxu0 0
        %3926 = vmatpush1.bf16.msra.mxu0 0
        %3927 = vmatprep.subr.bf16.mxu0 0
        %3928 = vmatpush1.bf16.msra.mxu0 0
        %3929 = vmatprep.subr.bf16.mxu0 0
        %3930 = vmatpush1.bf16.msra.mxu0 0
        %3931 = vmatprep.subr.bf16.mxu0 0
        %3932 = vmatpush1.bf16.msra.mxu0 0
        %3933 = vmatprep.subr.bf16.mxu0 0
        %3934 = vmatpush1.bf16.msra.mxu0 0
        %3935 = vmatprep.subr.bf16.mxu0 0
        %3936 = vmatpush1.bf16.msra.mxu0 0
        %3937 = vmatprep.subr.bf16.mxu0 0
        %3938 = vmatpush1.bf16.msra.mxu0 0
        %3939 = vmatprep.subr.bf16.mxu0 0
        %3940 = vmatpush1.bf16.msra.mxu0 0
        %3941 = vmatprep.subr.bf16.mxu0 0
        %3942 = vmatpush1.bf16.msra.mxu0 0
        %3943 = vmatprep.subr.bf16.mxu0 0
        %3944 = vmatpush1.bf16.msra.mxu0 0
        %3945 = vmatprep.subr.bf16.mxu0 0
        %3946 = vmatpush1.bf16.msra.mxu0 0
        %3947 = vmatprep.subr.bf16.mxu0 0
        %3948 = vmatpush1.bf16.msra.mxu0 0
        %3949 = vmatprep.mubr.bf16.mxu0 0
        %3950 = vmatmul.mubr.bf16.gmra.mrb[0].mxu0 %v3915
        %v3951 = vpop.f32.mrb[0].mxu0
        %v3952 = vadd.f32 0.0, %v3951
        %v3953 = vpop.f32.mrb[0].mxu0
        %v3954 = vpop.f32.mrb[0].mxu0
        %v3955 = vadd.f32 0.0, %v3954
        %v3956 = vpop.f32.mrb[0].mxu0
        %3957 = vdwg.mxu0
        %v3958 = vadd.f32 %v3903, %v3952
        %v3959 = vadd.f32 %v3904, %v3955
        %v3960 = vld [vmem:[%s49] sm:$0x1]
        %v3962 = vlaneseq
        %v3963 = vshrl.u32 %v3962, 7
        %v3964 = vsub.s32 0, %v3963
        %v3965 = vrot.slane %v3960, %v3964
        %v3967 = vadd.f32 %v3958, %v3965
        %v3968 = vadd.f32 %v3959, %v3965
        %vm3969 = vcmp.ge.f32.partialorder %v3967, 0.0
        %vm3970 = vcmp.ge.f32.partialorder %v3968, 0.0
        %v3971 = vmul.f32 %v3967, 0.01
        %v3972 = vmul.f32 %v3968, 0.01
        %v3973 = vsel %vm3969, %v3967, %v3971
        %v3974 = vsel %vm3970, %v3968, %v3972
        %v3975 = vld [vmem:[%s51] sm:$0xf]
        %v3976 = vld [vmem:[%s51 + $0x4] sm:$0xf]
        %v3977 = vld [vmem:[%s51 + $0x8] sm:$0xf]
        %v3978 = vld [vmem:[%s51 + $0xc] sm:$0xf]
        %v3979 = vld [vmem:[%s51 + $0x10] sm:$0xf]
        %v3980 = vld [vmem:[%s51 + $0x14] sm:$0xf]
        %v3981 = vld [vmem:[%s51 + $0x18] sm:$0xf]
        %v3982 = vld [vmem:[%s51 + $0x1c] sm:$0xf]
        %v3983 = vpack.c.bf16 %v3974, %v3973
        %v3992 = vunpack.c.l.b16 %v3975
        %v3993 = vunpack.c.l.b16 %v3976
        %v3994 = vunpack.c.l.b16 %v3977
        %v3995 = vunpack.c.l.b16 %v3978
        %v3996 = vunpack.c.l.b16 %v3979
        %v3997 = vunpack.c.l.b16 %v3980
        %v3998 = vunpack.c.l.b16 %v3981
        %v3999 = vunpack.c.l.b16 %v3982
        %v4000 = vpack.c.b16 %v3993, %v3992
        %v4001 = vpack.c.b16 %v3995, %v3994
        %v4002 = vpack.c.b16 %v3997, %v3996
        %v4003 = vpack.c.b16 %v3999, %v3998
        %v4009 = vsel %vm1832, %v3983, 0
        %4011 = vmatprep.subr.bf16.mxu0 0
        %4012 = vmatpush1.bf16.msra.mxu0 %v4000
        %4013 = vmatprep.subr.bf16.mxu0 0
        %4014 = vmatpush1.bf16.msra.mxu0 %v4001
        %4015 = vmatprep.subr.bf16.mxu0 0
        %4016 = vmatpush1.bf16.msra.mxu0 %v4002
        %4017 = vmatprep.subr.bf16.mxu0 0
        %4018 = vmatpush1.bf16.msra.mxu0 %v4003
        %4019 = vmatprep.subr.bf16.mxu0 0
        %4020 = vmatpush1.bf16.msra.mxu0 0
        %4021 = vmatprep.subr.bf16.mxu0 0
        %4022 = vmatpush1.bf16.msra.mxu0 0
        %4023 = vmatprep.subr.bf16.mxu0 0
        %4024 = vmatpush1.bf16.msra.mxu0 0
        %4025 = vmatprep.subr.bf16.mxu0 0
        %4026 = vmatpush1.bf16.msra.mxu0 0
        %4027 = vmatprep.subr.bf16.mxu0 0
        %4028 = vmatpush1.bf16.msra.mxu0 0
        %4029 = vmatprep.subr.bf16.mxu0 0
        %4030 = vmatpush1.bf16.msra.mxu0 0
        %4031 = vmatprep.subr.bf16.mxu0 0
        %4032 = vmatpush1.bf16.msra.mxu0 0
        %4033 = vmatprep.subr.bf16.mxu0 0
        %4034 = vmatpush1.bf16.msra.mxu0 0
        %4035 = vmatprep.subr.bf16.mxu0 0
        %4036 = vmatpush1.bf16.msra.mxu0 0
        %4037 = vmatprep.subr.bf16.mxu0 0
        %4038 = vmatpush1.bf16.msra.mxu0 0
        %4039 = vmatprep.subr.bf16.mxu0 0
        %4040 = vmatpush1.bf16.msra.mxu0 0
        %4041 = vmatprep.subr.bf16.mxu0 0
        %4042 = vmatpush1.bf16.msra.mxu0 0
        %4043 = vmatprep.mubr.bf16.mxu0 0
        %4044 = vmatmul.mubr.bf16.gmra.mrb[0].mxu0 %v4009
        %v4045 = vpop.f32.mrb[0].mxu0
        %v4046 = vadd.f32 0.0, %v4045
        %v4047 = vpop.f32.mrb[0].mxu0
        %v4048 = vpop.f32.mrb[0].mxu0
        %v4049 = vadd.f32 0.0, %v4048
        %v4050 = vpop.f32.mrb[0].mxu0
        %4051 = vdwg.mxu0
        %v4052 = vlaneseq
        %v4053 = vshrl.u32 %v4052, 7
        %v4054 = vsub.s32 0, %v4053
        %v4055 = vrot.slane %v3742, %v4054
        %4057 = vbcast.lane.b32.xlu0 %v4055, 256
        %v4058 = vpop.permute.xlu0 %4057
        %s4060 = sor.u32 256, 8
        %4061 = vbcast.lane.b32.xlu0 %v4055, %s4060
        %v4062 = vpop.permute.xlu0 %4061
        %v4063 = vlaneseq
        %v4064 = vshrl.u32 %v4063, 7
        %v4065 = vsub.s32 1, %v4064
        %v4066 = vrot.slane %v3742, %v4065
        %4068 = vbcast.lane.b32.xlu0 %v4066, 256
        %v4069 = vpop.permute.xlu0 %4068
        %s4071 = sor.u32 256, 8
        %4072 = vbcast.lane.b32.xlu0 %v4066, %s4071
        %v4073 = vpop.permute.xlu0 %4072
        %v4074 = vlaneseq
        %v4075 = vshrl.u32 %v4074, 7
        %v4076 = vsub.s32 2, %v4075
        %v4077 = vrot.slane %v3742, %v4076
        %4079 = vbcast.lane.b32.xlu0 %v4077, 256
        %v4080 = vpop.permute.xlu0 %4079
        %s4082 = sor.u32 256, 8
        %4083 = vbcast.lane.b32.xlu0 %v4077, %s4082
        %v4084 = vpop.permute.xlu0 %4083
        %v4085 = vlaneseq
        %v4086 = vshrl.u32 %v4085, 7
        %v4087 = vsub.s32 3, %v4086
        %v4088 = vrot.slane %v3742, %v4087
        %4090 = vbcast.lane.b32.xlu0 %v4088, 256
        %v4091 = vpop.permute.xlu0 %4090
        %s4093 = sor.u32 256, 8
        %4094 = vbcast.lane.b32.xlu0 %v4088, %s4093
        %v4095 = vpop.permute.xlu0 %4094
        %v4096 = vlaneseq
        %v4097 = vshrl.u32 %v4096, 7
        %v4098 = vsub.s32 4, %v4097
        %v4099 = vrot.slane %v3742, %v4098
        %4101 = vbcast.lane.b32.xlu0 %v4099, 256
        %v4102 = vpop.permute.xlu0 %4101
        %s4104 = sor.u32 256, 8
        %4105 = vbcast.lane.b32.xlu0 %v4099, %s4104
        %v4106 = vpop.permute.xlu0 %4105
        %v4107 = vlaneseq
        %v4108 = vshrl.u32 %v4107, 7
        %v4109 = vsub.s32 5, %v4108
        %v4110 = vrot.slane %v3742, %v4109
        %4112 = vbcast.lane.b32.xlu0 %v4110, 256
        %v4113 = vpop.permute.xlu0 %4112
        %s4115 = sor.u32 256, 8
        %4116 = vbcast.lane.b32.xlu0 %v4110, %s4115
        %v4117 = vpop.permute.xlu0 %4116
        %v4118 = vlaneseq
        %v4119 = vshrl.u32 %v4118, 7
        %v4120 = vsub.s32 6, %v4119
        %v4121 = vrot.slane %v3742, %v4120
        %4123 = vbcast.lane.b32.xlu0 %v4121, 256
        %v4124 = vpop.permute.xlu0 %4123
        %s4126 = sor.u32 256, 8
        %4127 = vbcast.lane.b32.xlu0 %v4121, %s4126
        %v4128 = vpop.permute.xlu0 %4127
        %v4129 = vlaneseq
        %v4130 = vshrl.u32 %v4129, 7
        %v4131 = vsub.s32 7, %v4130
        %v4132 = vrot.slane %v3742, %v4131
        %4134 = vbcast.lane.b32.xlu0 %v4132, 256
        %v4135 = vpop.permute.xlu0 %4134
        %s4137 = sor.u32 256, 8
        %4138 = vbcast.lane.b32.xlu0 %v4132, %s4137
        %v4139 = vpop.permute.xlu0 %4138
        %v4140 = vlaneseq
        %v4141 = vshrl.u32 %v4140, 7
        %v4142 = vsub.s32 0, %v4141
        %v4143 = vrot.slane %v3743, %v4142
        %4145 = vbcast.lane.b32.xlu0 %v4143, 256
        %v4146 = vpop.permute.xlu0 %4145
        %s4148 = sor.u32 256, 8
        %4149 = vbcast.lane.b32.xlu0 %v4143, %s4148
        %v4150 = vpop.permute.xlu0 %4149
        %v4151 = vlaneseq
        %v4152 = vshrl.u32 %v4151, 7
        %v4153 = vsub.s32 1, %v4152
        %v4154 = vrot.slane %v3743, %v4153
        %4156 = vbcast.lane.b32.xlu0 %v4154, 256
        %v4157 = vpop.permute.xlu0 %4156
        %s4159 = sor.u32 256, 8
        %4160 = vbcast.lane.b32.xlu0 %v4154, %s4159
        %v4161 = vpop.permute.xlu0 %4160
        %v4162 = vlaneseq
        %v4163 = vshrl.u32 %v4162, 7
        %v4164 = vsub.s32 2, %v4163
        %v4165 = vrot.slane %v3743, %v4164
        %4167 = vbcast.lane.b32.xlu0 %v4165, 256
        %v4168 = vpop.permute.xlu0 %4167
        %s4170 = sor.u32 256, 8
        %4171 = vbcast.lane.b32.xlu0 %v4165, %s4170
        %v4172 = vpop.permute.xlu0 %4171
        %v4173 = vlaneseq
        %v4174 = vshrl.u32 %v4173, 7
        %v4175 = vsub.s32 3, %v4174
        %v4176 = vrot.slane %v3743, %v4175
        %4178 = vbcast.lane.b32.xlu0 %v4176, 256
        %v4179 = vpop.permute.xlu0 %4178
        %s4181 = sor.u32 256, 8
        %4182 = vbcast.lane.b32.xlu0 %v4176, %s4181
        %v4183 = vpop.permute.xlu0 %4182
        %vm4184 = vcmp.gt.f32.partialorder %v4058, 0.0
        %vm4185 = vcmp.gt.f32.partialorder %v4062, 0.0
        %vm4186 = vcmp.gt.f32.partialorder %v4069, 0.0
        %vm4187 = vcmp.gt.f32.partialorder %v4073, 0.0
        %vm4188 = vcmp.gt.f32.partialorder %v4080, 0.0
        %vm4189 = vcmp.gt.f32.partialorder %v4084, 0.0
        %vm4190 = vcmp.gt.f32.partialorder %v4091, 0.0
        %vm4191 = vcmp.gt.f32.partialorder %v4095, 0.0
        %vm4192 = vcmp.gt.f32.partialorder %v4102, 0.0
        %vm4193 = vcmp.gt.f32.partialorder %v4106, 0.0
        %vm4194 = vcmp.gt.f32.partialorder %v4113, 0.0
        %vm4195 = vcmp.gt.f32.partialorder %v4117, 0.0
        %vm4196 = vcmp.gt.f32.partialorder %v4124, 0.0
        %vm4197 = vcmp.gt.f32.partialorder %v4128, 0.0
        %vm4198 = vcmp.gt.f32.partialorder %v4135, 0.0
        %vm4199 = vcmp.gt.f32.partialorder %v4139, 0.0
        %vm4200 = vcmp.gt.f32.partialorder %v4146, 0.0
        %vm4201 = vcmp.gt.f32.partialorder %v4150, 0.0
        %vm4202 = vcmp.gt.f32.partialorder %v4157, 0.0
        %vm4203 = vcmp.gt.f32.partialorder %v4161, 0.0
        %vm4204 = vcmp.gt.f32.partialorder %v4168, 0.0
        %vm4205 = vcmp.gt.f32.partialorder %v4172, 0.0
        %vm4206 = vcmp.gt.f32.partialorder %v4179, 0.0
        %vm4207 = vcmp.gt.f32.partialorder %v4183, 0.0
        %v4210 = vcombine.high %v4046, %v4046
        %v4212 = vunpack.c.l.s4 1966171168
        %v4213 = vunpack.c.0.s8 %v4212
        %v4214 = vlaneseq
        %v4215 = vshrl.u32 %v4214, 7
        %v4216 = vsub.s32 %v4213, %v4215
        %v4217 = vrot.slane %v4046, %v4216
        %v4219 = vunpack.c.l.s4 1966171168
        %v4220 = vunpack.c.0.s8 %v4219
        %v4221 = vlaneseq
        %v4222 = vshrl.u32 %v4221, 7
        %v4223 = vsub.s32 %v4220, %v4222
        %v4224 = vrot.slane %v4210, %v4223
        %v4225 = vcombine.high %v4217, %v4217
        %v4226 = vcombine.high %v4224, %v4224
        %v4228 = vunpack.c.l.s4 1966171168
        %v4229 = vunpack.c.0.s8 %v4228
        %v4230 = vlaneseq
        %v4231 = vshrl.u32 %v4230, 7
        %v4232 = vsub.s32 %v4229, %v4231
        %v4233 = vrot.slane %v4217, %v4232
        %v4235 = vunpack.c.l.s4 1966171168
        %v4236 = vunpack.c.0.s8 %v4235
        %v4237 = vlaneseq
        %v4238 = vshrl.u32 %v4237, 7
        %v4239 = vsub.s32 %v4236, %v4238
        %v4240 = vrot.slane %v4224, %v4239
        %v4242 = vunpack.c.l.s4 1966171168
        %v4243 = vunpack.c.0.s8 %v4242
        %v4244 = vlaneseq
        %v4245 = vshrl.u32 %v4244, 7
        %v4246 = vsub.s32 %v4243, %v4245
        %v4247 = vrot.slane %v4225, %v4246
        %v4249 = vunpack.c.l.s4 1966171168
        %v4250 = vunpack.c.0.s8 %v4249
        %v4251 = vlaneseq
        %v4252 = vshrl.u32 %v4251, 7
        %v4253 = vsub.s32 %v4250, %v4252
        %v4254 = vrot.slane %v4226, %v4253
        %v4255 = vcombine.high %v4233, %v4233
        %v4256 = vcombine.high %v4240, %v4240
        %v4257 = vcombine.high %v4247, %v4247
        %v4258 = vcombine.high %v4254, %v4254
        %v4260 = vunpack.c.l.s4 1966171168
        %v4261 = vunpack.c.0.s8 %v4260
        %v4262 = vlaneseq
        %v4263 = vshrl.u32 %v4262, 7
        %v4264 = vsub.s32 %v4261, %v4263
        %v4265 = vrot.slane %v4049, %v4264
        %v4266 = vcombine.high %v4265, %v4265
        %v4268 = vunpack.c.l.s4 1966171168
        %v4269 = vunpack.c.0.s8 %v4268
        %v4270 = vlaneseq
        %v4271 = vshrl.u32 %v4270, 7
        %v4272 = vsub.s32 %v4269, %v4271
        %v4273 = vrot.slane %v4265, %v4272
        %v4275 = vunpack.c.l.s4 1966171168
        %v4276 = vunpack.c.0.s8 %v4275
        %v4277 = vlaneseq
        %v4278 = vshrl.u32 %v4277, 7
        %v4279 = vsub.s32 %v4276, %v4278
        %v4280 = vrot.slane %v4266, %v4279
        %v4281 = vcombine.high %v4273, %v4273
        %v4282 = vcombine.high %v4280, %v4280
        %v4283 = vsel %vm4184, 1, 0
        %v4284 = vsel %vm4185, 1, 0
        %v4285 = vsel %vm4186, 1, 0
        %v4286 = vsel %vm4187, 1, 0
        %v4287 = vsel %vm4188, 1, 0
        %v4288 = vsel %vm4189, 1, 0
        %v4289 = vsel %vm4190, 1, 0
        %v4290 = vsel %vm4191, 1, 0
        %v4291 = vsel %vm4192, 1, 0
        %v4292 = vsel %vm4193, 1, 0
        %v4293 = vsel %vm4194, 1, 0
        %v4294 = vsel %vm4195, 1, 0
        %v4295 = vsel %vm4196, 1, 0
        %v4296 = vsel %vm4197, 1, 0
        %v4297 = vsel %vm4198, 1, 0
        %v4298 = vsel %vm4199, 1, 0
        %v4299 = vsel %vm4200, 1, 0
        %v4300 = vsel %vm4201, 1, 0
        %v4301 = vsel %vm4202, 1, 0
        %v4302 = vsel %vm4203, 1, 0
        %v4303 = vsel %vm4204, 1, 0
        %v4304 = vsel %vm4205, 1, 0
        %v4305 = vsel %vm4206, 1, 0
        %v4306 = vsel %vm4207, 1, 0
        %vm4307 = vcmp.eq.s32.totalorder %v4283, 1
        %vm4308 = vcmp.eq.s32.totalorder %v4284, 1
        %vm4309 = vcmp.eq.s32.totalorder %v4285, 1
        %vm4310 = vcmp.eq.s32.totalorder %v4286, 1
        %vm4311 = vcmp.eq.s32.totalorder %v4287, 1
        %vm4312 = vcmp.eq.s32.totalorder %v4288, 1
        %vm4313 = vcmp.eq.s32.totalorder %v4289, 1
        %vm4314 = vcmp.eq.s32.totalorder %v4290, 1
        %vm4315 = vcmp.eq.s32.totalorder %v4291, 1
        %vm4316 = vcmp.eq.s32.totalorder %v4292, 1
        %vm4317 = vcmp.eq.s32.totalorder %v4293, 1
        %vm4318 = vcmp.eq.s32.totalorder %v4294, 1
        %vm4319 = vcmp.eq.s32.totalorder %v4295, 1
        %vm4320 = vcmp.eq.s32.totalorder %v4296, 1
        %vm4321 = vcmp.eq.s32.totalorder %v4297, 1
        %vm4322 = vcmp.eq.s32.totalorder %v4298, 1
        %vm4323 = vcmp.eq.s32.totalorder %v4299, 1
        %vm4324 = vcmp.eq.s32.totalorder %v4300, 1
        %vm4325 = vcmp.eq.s32.totalorder %v4301, 1
        %vm4326 = vcmp.eq.s32.totalorder %v4302, 1
        %vm4327 = vcmp.eq.s32.totalorder %v4303, 1
        %vm4328 = vcmp.eq.s32.totalorder %v4304, 1
        %vm4329 = vcmp.eq.s32.totalorder %v4305, 1
        %vm4330 = vcmp.eq.s32.totalorder %v4306, 1
        %v4331 = vlaneseq
        %v4332 = vshrl.u32 %v4331, 7
        %v4333 = vsub.s32 0, %v4332
        %v4334 = vrot.slane %v4233, %v4333
        %v4335 = vlaneseq
        %v4336 = vshrl.u32 %v4335, 7
        %v4337 = vsub.s32 0, %v4336
        %v4338 = vrot.slane %v4247, %v4337
        %v4339 = vlaneseq
        %v4340 = vshrl.u32 %v4339, 7
        %v4341 = vsub.s32 0, %v4340
        %v4342 = vrot.slane %v4255, %v4341
        %v4343 = vlaneseq
        %v4344 = vshrl.u32 %v4343, 7
        %v4345 = vsub.s32 0, %v4344
        %v4346 = vrot.slane %v4257, %v4345
        %v4347 = vlaneseq
        %v4348 = vshrl.u32 %v4347, 7
        %v4349 = vsub.s32 0, %v4348
        %v4350 = vrot.slane %v4240, %v4349
        %v4351 = vlaneseq
        %v4352 = vshrl.u32 %v4351, 7
        %v4353 = vsub.s32 0, %v4352
        %v4354 = vrot.slane %v4254, %v4353
        %v4355 = vlaneseq
        %v4356 = vshrl.u32 %v4355, 7
        %v4357 = vsub.s32 0, %v4356
        %v4358 = vrot.slane %v4256, %v4357
        %v4359 = vlaneseq
        %v4360 = vshrl.u32 %v4359, 7
        %v4361 = vsub.s32 0, %v4360
        %v4362 = vrot.slane %v4258, %v4361
        %v4363 = vlaneseq
        %v4364 = vshrl.u32 %v4363, 7
        %v4365 = vsub.s32 0, %v4364
        %v4366 = vrot.slane %v4273, %v4365
        %v4367 = vlaneseq
        %v4368 = vshrl.u32 %v4367, 7
        %v4369 = vsub.s32 0, %v4368
        %v4370 = vrot.slane %v4280, %v4369
        %v4371 = vlaneseq
        %v4372 = vshrl.u32 %v4371, 7
        %v4373 = vsub.s32 0, %v4372
        %v4374 = vrot.slane %v4281, %v4373
        %v4375 = vlaneseq
        %v4376 = vshrl.u32 %v4375, 7
        %v4377 = vsub.s32 0, %v4376
        %v4378 = vrot.slane %v4282, %v4377
        %v4391 = vsel %vm4307, %v4334, -1e+30
        %v4392 = vsel %vm4308, %v4334, -1e+30
        %v4393 = vsel %vm4309, %v4338, -1e+30
        %v4394 = vsel %vm4310, %v4338, -1e+30
        %v4395 = vsel %vm4311, %v4342, -1e+30
        %v4396 = vsel %vm4312, %v4342, -1e+30
        %v4397 = vsel %vm4313, %v4346, -1e+30
        %v4398 = vsel %vm4314, %v4346, -1e+30
        %v4399 = vsel %vm4315, %v4350, -1e+30
        %v4400 = vsel %vm4316, %v4350, -1e+30
        %v4401 = vsel %vm4317, %v4354, -1e+30
        %v4402 = vsel %vm4318, %v4354, -1e+30
        %v4403 = vsel %vm4319, %v4358, -1e+30
        %v4404 = vsel %vm4320, %v4358, -1e+30
        %v4405 = vsel %vm4321, %v4362, -1e+30
        %v4406 = vsel %vm4322, %v4362, -1e+30
        %v4407 = vsel %vm4323, %v4366, -1e+30
        %v4408 = vsel %vm4324, %v4366, -1e+30
        %v4409 = vsel %vm4325, %v4370, -1e+30
        %v4410 = vsel %vm4326, %v4370, -1e+30
        %v4411 = vsel %vm4327, %v4374, -1e+30
        %v4412 = vsel %vm4328, %v4374, -1e+30
        %v4413 = vsel %vm4329, %v4378, -1e+30
        %v4414 = vsel %vm4330, %v4378, -1e+30
        %v4415 = vsel %vm1501, %v4391, -inf
        %v4416 = vsel %vm1501, %v4393, -inf
        %v4417 = vsel %vm1501, %v4395, -inf
        %v4418 = vmax.f32 %v4415, %v4417
        %v4419 = vsel %vm1501, %v4397, -inf
        %v4420 = vmax.f32 %v4416, %v4419
        %v4421 = vsel %vm1501, %v4399, -inf
        %v4422 = vmax.f32 %v4418, %v4421
        %v4423 = vsel %vm1501, %v4401, -inf
        %v4424 = vmax.f32 %v4420, %v4423
        %v4425 = vsel %vm1501, %v4403, -inf
        %v4426 = vmax.f32 %v4422, %v4425
        %v4427 = vsel %vm1501, %v4405, -inf
        %v4428 = vmax.f32 %v4424, %v4427
        %v4429 = vsel %vm1501, %v4407, -inf
        %v4430 = vmax.f32 %v4426, %v4429
        %v4431 = vsel %vm1501, %v4409, -inf
        %v4432 = vmax.f32 %v4428, %v4431
        %v4433 = vsel %vm1501, %v4411, -inf
        %v4434 = vmax.f32 %v4430, %v4433
        %v4435 = vsel %vm1501, %v4413, -inf
        %v4436 = vmax.f32 %v4432, %v4435
        %v4437 = vmax.f32 %v4434, %v4436
        %v4438 = vsel %vm2392, %v4392, -inf
        %v4439 = vsel %vm2392, %v4394, -inf
        %v4440 = vsel %vm2392, %v4396, -inf
        %v4441 = vmax.f32 %v4438, %v4440
        %v4442 = vsel %vm2392, %v4398, -inf
        %v4443 = vmax.f32 %v4439, %v4442
        %v4444 = vsel %vm2392, %v4400, -inf
        %v4445 = vmax.f32 %v4441, %v4444
        %v4446 = vsel %vm2392, %v4402, -inf
        %v4447 = vmax.f32 %v4443, %v4446
        %v4448 = vsel %vm2392, %v4404, -inf
        %v4449 = vmax.f32 %v4445, %v4448
        %v4450 = vsel %vm2392, %v4406, -inf
        %v4451 = vmax.f32 %v4447, %v4450
        %v4452 = vsel %vm2392, %v4408, -inf
        %v4453 = vmax.f32 %v4449, %v4452
        %v4454 = vsel %vm2392, %v4410, -inf
        %v4455 = vmax.f32 %v4451, %v4454
        %v4456 = vsel %vm2392, %v4412, -inf
        %v4457 = vmax.f32 %v4453, %v4456
        %v4458 = vsel %vm2392, %v4414, -inf
        %v4459 = vmax.f32 %v4455, %v4458
        %v4460 = vmax.f32 %v4457, %v4459
        %v4461 = vpack.c.bf16 %v4460, %v4437
        %v4463 = vsel %vm1633, %v4461, 0
        %4465 = vmatprep.subr.bf16.mxu0 0
        %4466 = vmatpush1.bf16.msra.mxu0 %v4463
        %4467 = vmatprep.subr.bf16.mxu0 0
        %4468 = vmatpush1.bf16.msra.mxu0 0
        %4469 = vmatprep.subr.bf16.mxu0 0
        %4470 = vmatpush1.bf16.msra.mxu0 0
        %4471 = vmatprep.subr.bf16.mxu0 0
        %4472 = vmatpush1.bf16.msra.mxu0 0
        %4473 = vmatprep.subr.bf16.mxu0 0
        %4474 = vmatpush1.bf16.msra.mxu0 0
        %4475 = vmatprep.subr.bf16.mxu0 0
        %4476 = vmatpush1.bf16.msra.mxu0 0
        %4477 = vmatprep.subr.bf16.mxu0 0
        %4478 = vmatpush1.bf16.msra.mxu0 0
        %4479 = vmatprep.subr.bf16.mxu0 0
        %4480 = vmatpush1.bf16.msra.mxu0 0
        %4481 = vmatprep.subr.bf16.mxu0 0
        %4482 = vmatpush1.bf16.msra.mxu0 0
        %4483 = vmatprep.subr.bf16.mxu0 0
        %4484 = vmatpush1.bf16.msra.mxu0 0
        %4485 = vmatprep.subr.bf16.mxu0 0
        %4486 = vmatpush1.bf16.msra.mxu0 0
        %4487 = vmatprep.subr.bf16.mxu0 0
        %4488 = vmatpush1.bf16.msra.mxu0 0
        %4489 = vmatprep.subr.bf16.mxu0 0
        %4490 = vmatpush1.bf16.msra.mxu0 0
        %4491 = vmatprep.subr.bf16.mxu0 0
        %4492 = vmatpush1.bf16.msra.mxu0 0
        %4493 = vmatprep.subr.bf16.mxu0 0
        %4494 = vmatpush1.bf16.msra.mxu0 0
        %4495 = vmatprep.subr.bf16.mxu0 0
        %4496 = vmatpush1.bf16.msra.mxu0 0
        %4497 = vmatprep.mubr.bf16.mxu0 0
        %4498 = vmatmul.mubr.bf16.gmra.mrb[0].mxu0 %v3857
        %v4499 = vpop.f32.mrb[0].mxu0
        %v4500 = vadd.f32 0.0, %v4499
        %v4501 = vpop.f32.mrb[0].mxu0
        %v4502 = vpop.f32.mrb[0].mxu0
        %v4503 = vadd.f32 0.0, %v4502
        %v4504 = vpop.f32.mrb[0].mxu0
        %4505 = vdwg.mxu0
        %v4506 = vsub.f32 %v4046, %v4500
        %v4507 = vsub.f32 %v4049, %v4503
        %v4508 = vmul.f32 %v4506, 1.442695
        %v4509 = vpow.pop %v4508
        %v4510 = vmul.f32 %v4507, 1.442695
        %v4511 = vpow.pop %v4510
        %v4512 = vpack.c.bf16 %v3745, %v3744
        %v4513 = vpack.c.bf16 %v4511, %v4509
        %vm4514 = vcmask 97280
        %v4516 = vsel %vm4514, %v4512, 0
        %vm4518 = vcmask 1045504
        %v4520 = vsel %vm4518, %v4513, 0
        %4522 = vmatprep.subr.bf16.mxu0 0
        %4523 = vmatpush1.bf16.msra.mxu0 %v4520
        %4524 = vmatprep.subr.bf16.mxu0 0
        %4525 = vmatpush1.bf16.msra.mxu0 0
        %4526 = vmatprep.subr.bf16.mxu0 0
        %4527 = vmatpush1.bf16.msra.mxu0 0
        %4528 = vmatprep.subr.bf16.mxu0 0
        %4529 = vmatpush1.bf16.msra.mxu0 0
        %4530 = vmatprep.subr.bf16.mxu0 0
        %4531 = vmatpush1.bf16.msra.mxu0 0
        %4532 = vmatprep.subr.bf16.mxu0 0
        %4533 = vmatpush1.bf16.msra.mxu0 0
        %4534 = vmatprep.subr.bf16.mxu0 0
        %4535 = vmatpush1.bf16.msra.mxu0 0
        %4536 = vmatprep.subr.bf16.mxu0 0
        %4537 = vmatpush1.bf16.msra.mxu0 0
        %4538 = vmatprep.subr.bf16.mxu0 0
        %4539 = vmatpush1.bf16.msra.mxu0 0
        %4540 = vmatprep.subr.bf16.mxu0 0
        %4541 = vmatpush1.bf16.msra.mxu0 0
        %4542 = vmatprep.subr.bf16.mxu0 0
        %4543 = vmatpush1.bf16.msra.mxu0 0
        %4544 = vmatprep.subr.bf16.mxu0 0
        %4545 = vmatpush1.bf16.msra.mxu0 0
        %4546 = vmatprep.subr.bf16.mxu0 0
        %4547 = vmatpush1.bf16.msra.mxu0 0
        %4548 = vmatprep.subr.bf16.mxu0 0
        %4549 = vmatpush1.bf16.msra.mxu0 0
        %4550 = vmatprep.subr.bf16.mxu0 0
        %4551 = vmatpush1.bf16.msra.mxu0 0
        %4552 = vmatprep.subr.bf16.mxu0 0
        %4553 = vmatpush1.bf16.msra.mxu0 0
        %4554 = vmatprep.mubr.bf16.mxu0 0
        %4555 = vmatmul.mubr.bf16.gmra.mrb[0].mxu0 %v4516
        %v4556 = vpop.f32.mrb[0].mxu0
        %v4557 = vadd.f32 0.0, %v4556
        %v4558 = vpop.f32.mrb[0].mxu0
        %v4559 = vpop.f32.mrb[0].mxu0
        %v4560 = vadd.f32 0.0, %v4559
        %v4561 = vpop.f32.mrb[0].mxu0
        %4562 = vdwg.mxu0
        %v4563 = vpack.c.bf16 %v4560, %v4557
        %v4565 = vsel %vm1633, %v4563, 0
        %4567 = vmatprep.subr.bf16.mxu0 0
        %4568 = vmatpush1.bf16.msra.mxu0 %v4565
        %4569 = vmatprep.subr.bf16.mxu0 0
        %4570 = vmatpush1.bf16.msra.mxu0 0
        %4571 = vmatprep.subr.bf16.mxu0 0
        %4572 = vmatpush1.bf16.msra.mxu0 0
        %4573 = vmatprep.subr.bf16.mxu0 0
        %4574 = vmatpush1.bf16.msra.mxu0 0
        %4575 = vmatprep.subr.bf16.mxu0 0
        %4576 = vmatpush1.bf16.msra.mxu0 0
        %4577 = vmatprep.subr.bf16.mxu0 0
        %4578 = vmatpush1.bf16.msra.mxu0 0
        %4579 = vmatprep.subr.bf16.mxu0 0
        %4580 = vmatpush1.bf16.msra.mxu0 0
        %4581 = vmatprep.subr.bf16.mxu0 0
        %4582 = vmatpush1.bf16.msra.mxu0 0
        %4583 = vmatprep.subr.bf16.mxu0 0
        %4584 = vmatpush1.bf16.msra.mxu0 0
        %4585 = vmatprep.subr.bf16.mxu0 0
        %4586 = vmatpush1.bf16.msra.mxu0 0
        %4587 = vmatprep.subr.bf16.mxu0 0
        %4588 = vmatpush1.bf16.msra.mxu0 0
        %4589 = vmatprep.subr.bf16.mxu0 0
        %4590 = vmatpush1.bf16.msra.mxu0 0
        %4591 = vmatprep.subr.bf16.mxu0 0
        %4592 = vmatpush1.bf16.msra.mxu0 0
        %4593 = vmatprep.subr.bf16.mxu0 0
        %4594 = vmatpush1.bf16.msra.mxu0 0
        %4595 = vmatprep.subr.bf16.mxu0 0
        %4596 = vmatpush1.bf16.msra.mxu0 0
        %4597 = vmatprep.subr.bf16.mxu0 0
        %4598 = vmatpush1.bf16.msra.mxu0 0
        %4599 = vmatprep.mubr.bf16.mxu0 0
        %4600 = vmatmul.mubr.bf16.gmra.mrb[0].mxu0 %v3857
        %v4601 = vpop.f32.mrb[0].mxu0
        %v4602 = vadd.f32 0.0, %v4601
        %v4603 = vpop.f32.mrb[0].mxu0
        %v4604 = vpop.f32.mrb[0].mxu0
        %v4605 = vadd.f32 0.0, %v4604
        %v4606 = vpop.f32.mrb[0].mxu0
        %4607 = vdwg.mxu0
        %v4608 = vrcp.pop %v4602
        %v4609 = vrcp.pop %v4605
        %v4610 = vmul.f32 %v4509, %v4608
        %v4611 = vmul.f32 %v4511, %v4609
        %v4612 = vpack.c.bf16 %v4611, %v4610
        %v4614 = vsel %vm1501, %v4612, 0
        %4616 = vmatprep.subr.bf16.mxu0 0
        %4617 = vmatpush1.bf16.msra.mxu0 %v2576
        %4618 = vmatprep.subr.bf16.mxu0 0
        %4619 = vmatpush1.bf16.msra.mxu0 0
        %4620 = vmatprep.subr.bf16.mxu0 0
        %4621 = vmatpush1.bf16.msra.mxu0 0
        %4622 = vmatprep.subr.bf16.mxu0 0
        %4623 = vmatpush1.bf16.msra.mxu0 0
        %4624 = vmatprep.subr.bf16.mxu0 0
        %4625 = vmatpush1.bf16.msra.mxu0 0
        %4626 = vmatprep.subr.bf16.mxu0 0
        %4627 = vmatpush1.bf16.msra.mxu0 0
        %4628 = vmatprep.subr.bf16.mxu0 0
        %4629 = vmatpush1.bf16.msra.mxu0 0
        %4630 = vmatprep.subr.bf16.mxu0 0
        %4631 = vmatpush1.bf16.msra.mxu0 0
        %4632 = vmatprep.subr.bf16.mxu0 0
        %4633 = vmatpush1.bf16.msra.mxu0 0
        %4634 = vmatprep.subr.bf16.mxu0 0
        %4635 = vmatpush1.bf16.msra.mxu0 0
        %4636 = vmatprep.subr.bf16.mxu0 0
        %4637 = vmatpush1.bf16.msra.mxu0 0
        %4638 = vmatprep.subr.bf16.mxu0 0
        %4639 = vmatpush1.bf16.msra.mxu0 0
        %4640 = vmatprep.subr.bf16.mxu0 0
        %4641 = vmatpush1.bf16.msra.mxu0 0
        %4642 = vmatprep.subr.bf16.mxu0 0
        %4643 = vmatpush1.bf16.msra.mxu0 0
        %4644 = vmatprep.subr.bf16.mxu0 0
        %4645 = vmatpush1.bf16.msra.mxu0 0
        %4646 = vmatprep.subr.bf16.mxu0 0
        %4647 = vmatpush1.bf16.msra.mxu0 0
        %4648 = vmatprep.mubr.bf16.mxu0 0
        %4649 = vmatmul.mubr.bf16.gmra.mrb[0].mxu0 %v4614
        %v4650 = vpop.f32.mrb[0].mxu0
        %v4651 = vadd.f32 0.0, %v4650
        %v4652 = vpop.f32.mrb[0].mxu0
        %v4653 = vpop.f32.mrb[0].mxu0
        %v4654 = vadd.f32 0.0, %v4653
        %v4655 = vpop.f32.mrb[0].mxu0
        %4656 = vdwg.mxu0
        %4659 = vrot.lane.b32.xlu0 %v4651, 64
        %v4660 = vpop.permute.xlu0 %4659
        %4661 = vrot.lane.b32.xlu0 %v4654, 64
        %v4662 = vpop.permute.xlu0 %4661
        %v4665 = vmul.f32 %v3848, %v4660
        %v4666 = vmul.f32 %v3851, %v4662
        %v4667 = vpack.c.bf16 %v4666, %v4665
        %4669 = vrot.lane.b32.xlu0 %v4667, 64
        %v4670 = vpop.permute.xlu0 %4669
        %v4672 = vsel %vm4518, %v4670, 0
        %4674 = vmatprep.subr.bf16.mxu0 0
        %4675 = vmatpush1.bf16.msra.mxu0 %v4672
        %4676 = vmatprep.subr.bf16.mxu0 0
        %4677 = vmatpush1.bf16.msra.mxu0 0
        %4678 = vmatprep.subr.bf16.mxu0 0
        %4679 = vmatpush1.bf16.msra.mxu0 0
        %4680 = vmatprep.subr.bf16.mxu0 0
        %4681 = vmatpush1.bf16.msra.mxu0 0
        %4682 = vmatprep.subr.bf16.mxu0 0
        %4683 = vmatpush1.bf16.msra.mxu0 0
        %4684 = vmatprep.subr.bf16.mxu0 0
        %4685 = vmatpush1.bf16.msra.mxu0 0
        %4686 = vmatprep.subr.bf16.mxu0 0
        %4687 = vmatpush1.bf16.msra.mxu0 0
        %4688 = vmatprep.subr.bf16.mxu0 0
        %4689 = vmatpush1.bf16.msra.mxu0 0
        %4690 = vmatprep.subr.bf16.mxu0 0
        %4691 = vmatpush1.bf16.msra.mxu0 0
        %4692 = vmatprep.subr.bf16.mxu0 0
        %4693 = vmatpush1.bf16.msra.mxu0 0
        %4694 = vmatprep.subr.bf16.mxu0 0
        %4695 = vmatpush1.bf16.msra.mxu0 0
        %4696 = vmatprep.subr.bf16.mxu0 0
        %4697 = vmatpush1.bf16.msra.mxu0 0
        %4698 = vmatprep.subr.bf16.mxu0 0
        %4699 = vmatpush1.bf16.msra.mxu0 0
        %4700 = vmatprep.subr.bf16.mxu0 0
        %4701 = vmatpush1.bf16.msra.mxu0 0
        %4702 = vmatprep.subr.bf16.mxu0 0
        %4703 = vmatpush1.bf16.msra.mxu0 0
        %4704 = vmatprep.subr.bf16.mxu0 0
        %4705 = vmatpush1.bf16.msra.mxu0 0
        %4706 = vmatprep.mubr.bf16.mxu0 0
        %4707 = vmatmul.mubr.bf16.gmra.mrb[0].mxu0 %v4516
        %v4708 = vpop.f32.mrb[0].mxu0
        %v4709 = vadd.f32 0.0, %v4708
        %v4710 = vpop.f32.mrb[0].mxu0
        %v4711 = vpop.f32.mrb[0].mxu0
        %v4712 = vadd.f32 0.0, %v4711
        %v4713 = vpop.f32.mrb[0].mxu0
        %4714 = vdwg.mxu0
        %v4715 = vld [vmem:[%s65] sm:$0xf]
        %v4716 = vld [vmem:[%s65 + $0x4] sm:$0xf]
        %v4717 = vld [vmem:[%s65 + $0x8] sm:$0xf]
        %v4718 = vld [vmem:[%s65 + $0xc] sm:$0xf]
        %v4719 = vld [vmem:[%s65 + $0x10] sm:$0xf]
        %v4720 = vld [vmem:[%s65 + $0x14] sm:$0xf]
        %v4721 = vld [vmem:[%s65 + $0x18] sm:$0xf]
        %v4722 = vld [vmem:[%s65 + $0x1c] sm:$0xf]
        %v4723 = vld [vmem:[%s67] sm:$0x1]
        %v4725 = vlaneseq
        %v4726 = vshrl.u32 %v4725, 7
        %v4727 = vsub.s32 0, %v4726
        %v4728 = vrot.slane %v4723, %v4727
        %v4738 = vunpack.c.l.b16 %v4715
        %v4739 = vunpack.c.l.b16 %v4716
        %v4740 = vunpack.c.l.b16 %v4717
        %v4741 = vunpack.c.l.b16 %v4718
        %v4742 = vunpack.c.l.b16 %v4719
        %v4743 = vunpack.c.l.b16 %v4720
        %v4744 = vunpack.c.l.b16 %v4721
        %v4745 = vunpack.c.l.b16 %v4722
        %v4746 = vpack.c.b16 %v4739, %v4738
        %v4747 = vpack.c.b16 %v4741, %v4740
        %v4748 = vpack.c.b16 %v4743, %v4742
        %v4749 = vpack.c.b16 %v4745, %v4744
        %4754 = vmatprep.subr.bf16.mxu0 0
        %4755 = vmatpush1.bf16.msra.mxu0 %v4746
        %4756 = vmatprep.subr.bf16.mxu0 0
        %4757 = vmatpush1.bf16.msra.mxu0 %v4747
        %4758 = vmatprep.subr.bf16.mxu0 0
        %4759 = vmatpush1.bf16.msra.mxu0 %v4748
        %4760 = vmatprep.subr.bf16.mxu0 0
        %4761 = vmatpush1.bf16.msra.mxu0 %v4749
        %4762 = vmatprep.subr.bf16.mxu0 0
        %4763 = vmatpush1.bf16.msra.mxu0 0
        %4764 = vmatprep.subr.bf16.mxu0 0
        %4765 = vmatpush1.bf16.msra.mxu0 0
        %4766 = vmatprep.subr.bf16.mxu0 0
        %4767 = vmatpush1.bf16.msra.mxu0 0
        %4768 = vmatprep.subr.bf16.mxu0 0
        %4769 = vmatpush1.bf16.msra.mxu0 0
        %4770 = vmatprep.subr.bf16.mxu0 0
        %4771 = vmatpush1.bf16.msra.mxu0 0
        %4772 = vmatprep.subr.bf16.mxu0 0
        %4773 = vmatpush1.bf16.msra.mxu0 0
        %4774 = vmatprep.subr.bf16.mxu0 0
        %4775 = vmatpush1.bf16.msra.mxu0 0
        %4776 = vmatprep.subr.bf16.mxu0 0
        %4777 = vmatpush1.bf16.msra.mxu0 0
        %4778 = vmatprep.subr.bf16.mxu0 0
        %4779 = vmatpush1.bf16.msra.mxu0 0
        %4780 = vmatprep.subr.bf16.mxu0 0
        %4781 = vmatpush1.bf16.msra.mxu0 0
        %4782 = vmatprep.subr.bf16.mxu0 0
        %4783 = vmatpush1.bf16.msra.mxu0 0
        %4784 = vmatprep.subr.bf16.mxu0 0
        %4785 = vmatpush1.bf16.msra.mxu0 0
        %4786 = vmatprep.mubr.bf16.mxu0 0
        %4787 = vmatmul.mubr.bf16.gmra.mrb[0].mxu0 %v4009
        %v4788 = vpop.f32.mrb[0].mxu0
        %v4789 = vadd.f32 %v4728, %v4788
        %v4790 = vpop.f32.mrb[0].mxu0
        %v4791 = vpop.f32.mrb[0].mxu0
        %v4792 = vadd.f32 %v4728, %v4791
        %v4793 = vpop.f32.mrb[0].mxu0
        %4794 = vdwg.mxu0
        %v4795 = vmax.f32 %v4789, 0.0
        %v4796 = vmax.f32 %v4792, 0.0
        %v4797 = vld [vmem:[%s61] sm:$0xf]
        %v4798 = vld [vmem:[%s61 + $0x4] sm:$0xf]
        %v4799 = vld [vmem:[%s61 + $0x8] sm:$0xf]
        %v4800 = vld [vmem:[%s61 + $0xc] sm:$0xf]
        %v4801 = vld [vmem:[%s61 + $0x10] sm:$0xf]
        %v4802 = vld [vmem:[%s61 + $0x14] sm:$0xf]
        %v4803 = vld [vmem:[%s61 + $0x18] sm:$0xf]
        %v4804 = vld [vmem:[%s61 + $0x1c] sm:$0xf]
        %v4805 = vpack.c.bf16 %v4712, %v4709
        %v4806 = vld [vmem:[%s63] sm:$0x1]
        %v4808 = vlaneseq
        %v4809 = vshrl.u32 %v4808, 7
        %v4810 = vsub.s32 0, %v4809
        %v4811 = vrot.slane %v4806, %v4810
        %v4821 = vunpack.c.l.b16 %v4797
        %v4822 = vunpack.c.l.b16 %v4798
        %v4823 = vunpack.c.l.b16 %v4799
        %v4824 = vunpack.c.l.b16 %v4800
        %v4825 = vunpack.c.l.b16 %v4801
        %v4826 = vunpack.c.l.b16 %v4802
        %v4827 = vunpack.c.l.b16 %v4803
        %v4828 = vunpack.c.l.b16 %v4804
        %v4829 = vpack.c.b16 %v4822, %v4821
        %v4830 = vpack.c.b16 %v4824, %v4823
        %v4831 = vpack.c.b16 %v4826, %v4825
        %v4832 = vpack.c.b16 %v4828, %v4827
        %v4838 = vsel %vm1832, %v4805, 0
        %4840 = vmatprep.subr.bf16.mxu0 0
        %4841 = vmatpush1.bf16.msra.mxu0 %v4829
        %4842 = vmatprep.subr.bf16.mxu0 0
        %4843 = vmatpush1.bf16.msra.mxu0 %v4830
        %4844 = vmatprep.subr.bf16.mxu0 0
        %4845 = vmatpush1.bf16.msra.mxu0 %v4831
        %4846 = vmatprep.subr.bf16.mxu0 0
        %4847 = vmatpush1.bf16.msra.mxu0 %v4832
        %4848 = vmatprep.subr.bf16.mxu0 0
        %4849 = vmatpush1.bf16.msra.mxu0 0
        %4850 = vmatprep.subr.bf16.mxu0 0
        %4851 = vmatpush1.bf16.msra.mxu0 0
        %4852 = vmatprep.subr.bf16.mxu0 0
        %4853 = vmatpush1.bf16.msra.mxu0 0
        %4854 = vmatprep.subr.bf16.mxu0 0
        %4855 = vmatpush1.bf16.msra.mxu0 0
        %4856 = vmatprep.subr.bf16.mxu0 0
        %4857 = vmatpush1.bf16.msra.mxu0 0
        %4858 = vmatprep.subr.bf16.mxu0 0
        %4859 = vmatpush1.bf16.msra.mxu0 0
        %4860 = vmatprep.subr.bf16.mxu0 0
        %4861 = vmatpush1.bf16.msra.mxu0 0
        %4862 = vmatprep.subr.bf16.mxu0 0
        %4863 = vmatpush1.bf16.msra.mxu0 0
        %4864 = vmatprep.subr.bf16.mxu0 0
        %4865 = vmatpush1.bf16.msra.mxu0 0
        %4866 = vmatprep.subr.bf16.mxu0 0
        %4867 = vmatpush1.bf16.msra.mxu0 0
        %4868 = vmatprep.subr.bf16.mxu0 0
        %4869 = vmatpush1.bf16.msra.mxu0 0
        %4870 = vmatprep.subr.bf16.mxu0 0
        %4871 = vmatpush1.bf16.msra.mxu0 0
        %4872 = vmatprep.mubr.bf16.mxu0 0
        %4873 = vmatmul.mubr.bf16.gmra.mrb[0].mxu0 %v4838
        %v4874 = vpop.f32.mrb[0].mxu0
        %v4875 = vadd.f32 %v4811, %v4874
        %v4876 = vpop.f32.mrb[0].mxu0
        %v4877 = vpop.f32.mrb[0].mxu0
        %v4878 = vadd.f32 %v4811, %v4877
        %v4879 = vpop.f32.mrb[0].mxu0
        %4880 = vdwg.mxu0
        %v4881 = vmax.f32 %v4875, 0.0
        %v4882 = vmax.f32 %v4878, 0.0
        %v4883 = vadd.f32 %v3738, %v4881
        %v4884 = vadd.f32 %v3739, %v4882
        %v4885 = vpack.c.bf16 %v4884, %v4883
        %v4887 = vsel %vm1580, %v4885, 0
        %4889 = vmatprep.subr.bf16.mxu0 %v1577
        %4890 = vmatpush1.bf16.msra.mxu0 %v1576
        %4891 = vmatprep.subr.bf16.mxu0 0
        %4892 = vmatpush1.bf16.msra.mxu0 0
        %4893 = vmatprep.subr.bf16.mxu0 0
        %4894 = vmatpush1.bf16.msra.mxu0 0
        %4895 = vmatprep.subr.bf16.mxu0 0
        %4896 = vmatpush1.bf16.msra.mxu0 0
        %4897 = vmatprep.subr.bf16.mxu0 0
        %4898 = vmatpush1.bf16.msra.mxu0 0
        %4899 = vmatprep.subr.bf16.mxu0 0
        %4900 = vmatpush1.bf16.msra.mxu0 0
        %4901 = vmatprep.subr.bf16.mxu0 0
        %4902 = vmatpush1.bf16.msra.mxu0 0
        %4903 = vmatprep.subr.bf16.mxu0 0
        %4904 = vmatpush1.bf16.msra.mxu0 0
        %4905 = vmatprep.subr.bf16.mxu0 0
        %4906 = vmatpush1.bf16.msra.mxu0 0
        %4907 = vmatprep.subr.bf16.mxu0 0
        %4908 = vmatpush1.bf16.msra.mxu0 0
        %4909 = vmatprep.subr.bf16.mxu0 0
        %4910 = vmatpush1.bf16.msra.mxu0 0
        %4911 = vmatprep.subr.bf16.mxu0 0
        %4912 = vmatpush1.bf16.msra.mxu0 0
        %4913 = vmatprep.subr.bf16.mxu0 0
        %4914 = vmatpush1.bf16.msra.mxu0 0
        %4915 = vmatprep.subr.bf16.mxu0 0
        %4916 = vmatpush1.bf16.msra.mxu0 0
        %4917 = vmatprep.subr.bf16.mxu0 0
        %4918 = vmatpush1.bf16.msra.mxu0 0
        %4919 = vmatprep.subr.bf16.mxu0 0
        %4920 = vmatpush1.bf16.msra.mxu0 0
        %4921 = vmatprep.mubr.bf16.mxu0 0
        %4922 = vmatmul.mubr.bf16.gmra.mrb[0].mxu0 %v4887
        %v4923 = vpop.f32.mrb[0].mxu0
        %v4924 = vadd.f32 0.0, %v4923
        %v4925 = vpop.f32.mrb[0].mxu0
        %v4926 = vadd.f32 0.0, %v4925
        %v4927 = vpop.f32.mrb[0].mxu0
        %v4928 = vadd.f32 0.0, %v4927
        %v4929 = vpop.f32.mrb[0].mxu0
        %v4930 = vadd.f32 0.0, %v4929
        %4931 = vdwg.mxu0
        %v4932 = vpack.c.bf16 %v4928, %v4924
        %v4934 = vsel %vm1633, %v4932, 0
        %4936 = vmatprep.subr.bf16.mxu0 0
        %4937 = vmatpush1.bf16.msra.mxu0 %v4934
        %4938 = vmatprep.subr.bf16.mxu0 0
        %4939 = vmatpush1.bf16.msra.mxu0 0
        %4940 = vmatprep.subr.bf16.mxu0 0
        %4941 = vmatpush1.bf16.msra.mxu0 0
        %4942 = vmatprep.subr.bf16.mxu0 0
        %4943 = vmatpush1.bf16.msra.mxu0 0
        %4944 = vmatprep.subr.bf16.mxu0 0
        %4945 = vmatpush1.bf16.msra.mxu0 0
        %4946 = vmatprep.subr.bf16.mxu0 0
        %4947 = vmatpush1.bf16.msra.mxu0 0
        %4948 = vmatprep.subr.bf16.mxu0 0
        %4949 = vmatpush1.bf16.msra.mxu0 0
        %4950 = vmatprep.subr.bf16.mxu0 0
        %4951 = vmatpush1.bf16.msra.mxu0 0
        %4952 = vmatprep.subr.bf16.mxu0 0
        %4953 = vmatpush1.bf16.msra.mxu0 0
        %4954 = vmatprep.subr.bf16.mxu0 0
        %4955 = vmatpush1.bf16.msra.mxu0 0
        %4956 = vmatprep.subr.bf16.mxu0 0
        %4957 = vmatpush1.bf16.msra.mxu0 0
        %4958 = vmatprep.subr.bf16.mxu0 0
        %4959 = vmatpush1.bf16.msra.mxu0 0
        %4960 = vmatprep.subr.bf16.mxu0 0
        %4961 = vmatpush1.bf16.msra.mxu0 0
        %4962 = vmatprep.subr.bf16.mxu0 0
        %4963 = vmatpush1.bf16.msra.mxu0 0
        %4964 = vmatprep.subr.bf16.mxu0 0
        %4965 = vmatpush1.bf16.msra.mxu0 0
        %4966 = vmatprep.subr.bf16.mxu0 0
        %4967 = vmatpush1.bf16.msra.mxu0 0
        %4968 = vmatprep.mubr.bf16.mxu0 0
        %4969 = vmatmul.mubr.bf16.gmra.mrb[0].mxu0 %v1631
        %v4970 = vpop.f32.mrb[0].mxu0
        %v4971 = vadd.f32 0.0, %v4970
        %v4972 = vpop.f32.mrb[0].mxu0
        %v4973 = vpop.f32.mrb[0].mxu0
        %v4974 = vadd.f32 0.0, %v4973
        %v4975 = vpop.f32.mrb[0].mxu0
        %4976 = vdwg.mxu0
        %v4977 = vpack.c.bf16 %v4930, %v4926
        %v4979 = vsel %vm1633, %v4977, 0
        %4981 = vmatprep.subr.bf16.mxu0 0
        %4982 = vmatpush1.bf16.msra.mxu0 %v4979
        %4983 = vmatprep.subr.bf16.mxu0 0
        %4984 = vmatpush1.bf16.msra.mxu0 0
        %4985 = vmatprep.subr.bf16.mxu0 0
        %4986 = vmatpush1.bf16.msra.mxu0 0
        %4987 = vmatprep.subr.bf16.mxu0 0
        %4988 = vmatpush1.bf16.msra.mxu0 0
        %4989 = vmatprep.subr.bf16.mxu0 0
        %4990 = vmatpush1.bf16.msra.mxu0 0
        %4991 = vmatprep.subr.bf16.mxu0 0
        %4992 = vmatpush1.bf16.msra.mxu0 0
        %4993 = vmatprep.subr.bf16.mxu0 0
        %4994 = vmatpush1.bf16.msra.mxu0 0
        %4995 = vmatprep.subr.bf16.mxu0 0
        %4996 = vmatpush1.bf16.msra.mxu0 0
        %4997 = vmatprep.subr.bf16.mxu0 0
        %4998 = vmatpush1.bf16.msra.mxu0 0
        %4999 = vmatprep.subr.bf16.mxu0 0
        %5000 = vmatpush1.bf16.msra.mxu0 0
        %5001 = vmatprep.subr.bf16.mxu0 0
        %5002 = vmatpush1.bf16.msra.mxu0 0
        %5003 = vmatprep.subr.bf16.mxu0 0
        %5004 = vmatpush1.bf16.msra.mxu0 0
        %5005 = vmatprep.subr.bf16.mxu0 0
        %5006 = vmatpush1.bf16.msra.mxu0 0
        %5007 = vmatprep.subr.bf16.mxu0 0
        %5008 = vmatpush1.bf16.msra.mxu0 0
        %5009 = vmatprep.subr.bf16.mxu0 0
        %5010 = vmatpush1.bf16.msra.mxu0 0
        %5011 = vmatprep.subr.bf16.mxu0 0
        %5012 = vmatpush1.bf16.msra.mxu0 0
        %5013 = vmatprep.mubr.bf16.mxu0 0
        %5014 = vmatmul.mubr.bf16.gmra.mrb[0].mxu0 %v1681
        %v5015 = vpop.f32.mrb[0].mxu0
        %v5016 = vadd.f32 0.0, %v5015
        %v5017 = vpop.f32.mrb[0].mxu0
        %v5018 = vpop.f32.mrb[0].mxu0
        %v5019 = vadd.f32 0.0, %v5018
        %v5020 = vpop.f32.mrb[0].mxu0
        %5021 = vdwg.mxu0
        %v5022 = vadd.f32 %v4971, %v5016
        %v5023 = vadd.f32 %v4974, %v5019
        %v5024 = vpack.c.bf16 %v3624, %v3623
        %v5026 = vsel %vm1580, %v5024, 0
        %5028 = vmatprep.subr.bf16.mxu0 0
        %5029 = vmatpush1.bf16.msra.mxu0 %v1736
        %5030 = vmatprep.subr.bf16.mxu0 0
        %5031 = vmatpush1.bf16.msra.mxu0 0
        %5032 = vmatprep.subr.bf16.mxu0 0
        %5033 = vmatpush1.bf16.msra.mxu0 0
        %5034 = vmatprep.subr.bf16.mxu0 0
        %5035 = vmatpush1.bf16.msra.mxu0 0
        %5036 = vmatprep.subr.bf16.mxu0 0
        %5037 = vmatpush1.bf16.msra.mxu0 0
        %5038 = vmatprep.subr.bf16.mxu0 0
        %5039 = vmatpush1.bf16.msra.mxu0 0
        %5040 = vmatprep.subr.bf16.mxu0 0
        %5041 = vmatpush1.bf16.msra.mxu0 0
        %5042 = vmatprep.subr.bf16.mxu0 0
        %5043 = vmatpush1.bf16.msra.mxu0 0
        %5044 = vmatprep.subr.bf16.mxu0 0
        %5045 = vmatpush1.bf16.msra.mxu0 0
        %5046 = vmatprep.subr.bf16.mxu0 0
        %5047 = vmatpush1.bf16.msra.mxu0 0
        %5048 = vmatprep.subr.bf16.mxu0 0
        %5049 = vmatpush1.bf16.msra.mxu0 0
        %5050 = vmatprep.subr.bf16.mxu0 0
        %5051 = vmatpush1.bf16.msra.mxu0 0
        %5052 = vmatprep.subr.bf16.mxu0 0
        %5053 = vmatpush1.bf16.msra.mxu0 0
        %5054 = vmatprep.subr.bf16.mxu0 0
        %5055 = vmatpush1.bf16.msra.mxu0 0
        %5056 = vmatprep.subr.bf16.mxu0 0
        %5057 = vmatpush1.bf16.msra.mxu0 0
        %5058 = vmatprep.subr.bf16.mxu0 0
        %5059 = vmatpush1.bf16.msra.mxu0 0
        %5060 = vmatprep.mubr.bf16.mxu0 0
        %5061 = vmatmul.mubr.bf16.gmra.mrb[0].mxu0 %v5026
        %v5062 = vpop.f32.mrb[0].mxu0
        %v5063 = vadd.f32 0.0, %v5062
        %v5064 = vpop.f32.mrb[0].mxu0
        %v5065 = vpop.f32.mrb[0].mxu0
        %v5066 = vadd.f32 0.0, %v5065
        %v5067 = vpop.f32.mrb[0].mxu0
        %5068 = vdwg.mxu0
        %v5069 = vadd.f32 %v5022, %v5063
        %v5070 = vadd.f32 %v5023, %v5066
        %v5071 = vadd.f32 %v5069, %v1789
        %v5072 = vadd.f32 %v5070, %v1789
        %vm5073 = vcmp.ge.f32.partialorder %v5071, 0.0
        %vm5074 = vcmp.ge.f32.partialorder %v5072, 0.0
        %v5075 = vmul.f32 %v5071, 0.01
        %v5076 = vmul.f32 %v5072, 0.01
        %v5077 = vsel %vm5073, %v5071, %v5075
        %v5078 = vsel %vm5074, %v5072, %v5076
        %v5079 = vpack.c.bf16 %v5078, %v5077
        %v5081 = vsel %vm1832, %v5079, 0
        %5083 = vmatprep.subr.bf16.mxu0 0
        %5084 = vmatpush1.bf16.msra.mxu0 %v1824
        %5085 = vmatprep.subr.bf16.mxu0 0
        %5086 = vmatpush1.bf16.msra.mxu0 %v1825
        %5087 = vmatprep.subr.bf16.mxu0 0
        %5088 = vmatpush1.bf16.msra.mxu0 %v1826
        %5089 = vmatprep.subr.bf16.mxu0 0
        %5090 = vmatpush1.bf16.msra.mxu0 %v1827
        %5091 = vmatprep.subr.bf16.mxu0 0
        %5092 = vmatpush1.bf16.msra.mxu0 0
        %5093 = vmatprep.subr.bf16.mxu0 0
        %5094 = vmatpush1.bf16.msra.mxu0 0
        %5095 = vmatprep.subr.bf16.mxu0 0
        %5096 = vmatpush1.bf16.msra.mxu0 0
        %5097 = vmatprep.subr.bf16.mxu0 0
        %5098 = vmatpush1.bf16.msra.mxu0 0
        %5099 = vmatprep.subr.bf16.mxu0 0
        %5100 = vmatpush1.bf16.msra.mxu0 0
        %5101 = vmatprep.subr.bf16.mxu0 0
        %5102 = vmatpush1.bf16.msra.mxu0 0
        %5103 = vmatprep.subr.bf16.mxu0 0
        %5104 = vmatpush1.bf16.msra.mxu0 0
        %5105 = vmatprep.subr.bf16.mxu0 0
        %5106 = vmatpush1.bf16.msra.mxu0 0
        %5107 = vmatprep.subr.bf16.mxu0 0
        %5108 = vmatpush1.bf16.msra.mxu0 0
        %5109 = vmatprep.subr.bf16.mxu0 0
        %5110 = vmatpush1.bf16.msra.mxu0 0
        %5111 = vmatprep.subr.bf16.mxu0 0
        %5112 = vmatpush1.bf16.msra.mxu0 0
        %5113 = vmatprep.subr.bf16.mxu0 0
        %5114 = vmatpush1.bf16.msra.mxu0 0
        %5115 = vmatprep.mubr.bf16.mxu0 0
        %5116 = vmatmul.mubr.bf16.gmra.mrb[0].mxu0 %v5081
        %v5117 = vpop.f32.mrb[0].mxu0
        %v5118 = vadd.f32 0.0, %v5117
        %v5119 = vpop.f32.mrb[0].mxu0
        %v5120 = vpop.f32.mrb[0].mxu0
        %v5121 = vadd.f32 0.0, %v5120
        %v5122 = vpop.f32.mrb[0].mxu0
        %5123 = vdwg.mxu0
        %v5126 = vcombine.high %v5118, %v5118
        %v5128 = vunpack.c.l.s4 1966171168
        %v5129 = vunpack.c.0.s8 %v5128
        %v5130 = vlaneseq
        %v5131 = vshrl.u32 %v5130, 7
        %v5132 = vsub.s32 %v5129, %v5131
        %v5133 = vrot.slane %v5118, %v5132
        %v5135 = vunpack.c.l.s4 1966171168
        %v5136 = vunpack.c.0.s8 %v5135
        %v5137 = vlaneseq
        %v5138 = vshrl.u32 %v5137, 7
        %v5139 = vsub.s32 %v5136, %v5138
        %v5140 = vrot.slane %v5126, %v5139
        %v5141 = vcombine.high %v5133, %v5133
        %v5142 = vcombine.high %v5140, %v5140
        %v5144 = vunpack.c.l.s4 1966171168
        %v5145 = vunpack.c.0.s8 %v5144
        %v5146 = vlaneseq
        %v5147 = vshrl.u32 %v5146, 7
        %v5148 = vsub.s32 %v5145, %v5147
        %v5149 = vrot.slane %v5133, %v5148
        %v5151 = vunpack.c.l.s4 1966171168
        %v5152 = vunpack.c.0.s8 %v5151
        %v5153 = vlaneseq
        %v5154 = vshrl.u32 %v5153, 7
        %v5155 = vsub.s32 %v5152, %v5154
        %v5156 = vrot.slane %v5140, %v5155
        %v5158 = vunpack.c.l.s4 1966171168
        %v5159 = vunpack.c.0.s8 %v5158
        %v5160 = vlaneseq
        %v5161 = vshrl.u32 %v5160, 7
        %v5162 = vsub.s32 %v5159, %v5161
        %v5163 = vrot.slane %v5141, %v5162
        %v5165 = vunpack.c.l.s4 1966171168
        %v5166 = vunpack.c.0.s8 %v5165
        %v5167 = vlaneseq
        %v5168 = vshrl.u32 %v5167, 7
        %v5169 = vsub.s32 %v5166, %v5168
        %v5170 = vrot.slane %v5142, %v5169
        %v5171 = vcombine.high %v5149, %v5149
        %v5172 = vcombine.high %v5156, %v5156
        %v5173 = vcombine.high %v5163, %v5163
        %v5174 = vcombine.high %v5170, %v5170
        %v5175 = vcombine.high %v5121, %v5121
        %v5177 = vunpack.c.l.s4 1966171168
        %v5178 = vunpack.c.0.s8 %v5177
        %v5179 = vlaneseq
        %v5180 = vshrl.u32 %v5179, 7
        %v5181 = vsub.s32 %v5178, %v5180
        %v5182 = vrot.slane %v5121, %v5181
        %v5184 = vunpack.c.l.s4 1966171168
        %v5185 = vunpack.c.0.s8 %v5184
        %v5186 = vlaneseq
        %v5187 = vshrl.u32 %v5186, 7
        %v5188 = vsub.s32 %v5185, %v5187
        %v5189 = vrot.slane %v5175, %v5188
        %v5190 = vcombine.high %v5182, %v5182
        %v5191 = vcombine.high %v5189, %v5189
        %v5193 = vunpack.c.l.s4 1966171168
        %v5194 = vunpack.c.0.s8 %v5193
        %v5195 = vlaneseq
        %v5196 = vshrl.u32 %v5195, 7
        %v5197 = vsub.s32 %v5194, %v5196
        %v5198 = vrot.slane %v5182, %v5197
        %v5200 = vunpack.c.l.s4 1966171168
        %v5201 = vunpack.c.0.s8 %v5200
        %v5202 = vlaneseq
        %v5203 = vshrl.u32 %v5202, 7
        %v5204 = vsub.s32 %v5201, %v5203
        %v5205 = vrot.slane %v5189, %v5204
        %v5207 = vunpack.c.l.s4 1966171168
        %v5208 = vunpack.c.0.s8 %v5207
        %v5209 = vlaneseq
        %v5210 = vshrl.u32 %v5209, 7
        %v5211 = vsub.s32 %v5208, %v5210
        %v5212 = vrot.slane %v5190, %v5211
        %v5214 = vunpack.c.l.s4 1966171168
        %v5215 = vunpack.c.0.s8 %v5214
        %v5216 = vlaneseq
        %v5217 = vshrl.u32 %v5216, 7
        %v5218 = vsub.s32 %v5215, %v5217
        %v5219 = vrot.slane %v5191, %v5218
        %v5220 = vcombine.high %v5198, %v5198
        %v5221 = vcombine.high %v5205, %v5205
        %v5222 = vcombine.high %v5212, %v5212
        %v5223 = vcombine.high %v5219, %v5219
        %v5224 = vlaneseq
        %v5225 = vshrl.u32 %v5224, 7
        %v5226 = vsub.s32 0, %v5225
        %v5227 = vrot.slane %v5149, %v5226
        %v5228 = vlaneseq
        %v5229 = vshrl.u32 %v5228, 7
        %v5230 = vsub.s32 0, %v5229
        %v5231 = vrot.slane %v5163, %v5230
        %v5232 = vlaneseq
        %v5233 = vshrl.u32 %v5232, 7
        %v5234 = vsub.s32 0, %v5233
        %v5235 = vrot.slane %v5171, %v5234
        %v5236 = vlaneseq
        %v5237 = vshrl.u32 %v5236, 7
        %v5238 = vsub.s32 0, %v5237
        %v5239 = vrot.slane %v5173, %v5238
        %v5240 = vlaneseq
        %v5241 = vshrl.u32 %v5240, 7
        %v5242 = vsub.s32 0, %v5241
        %v5243 = vrot.slane %v5156, %v5242
        %v5244 = vlaneseq
        %v5245 = vshrl.u32 %v5244, 7
        %v5246 = vsub.s32 0, %v5245
        %v5247 = vrot.slane %v5170, %v5246
        %v5248 = vlaneseq
        %v5249 = vshrl.u32 %v5248, 7
        %v5250 = vsub.s32 0, %v5249
        %v5251 = vrot.slane %v5172, %v5250
        %v5252 = vlaneseq
        %v5253 = vshrl.u32 %v5252, 7
        %v5254 = vsub.s32 0, %v5253
        %v5255 = vrot.slane %v5174, %v5254
        %v5256 = vlaneseq
        %v5257 = vshrl.u32 %v5256, 7
        %v5258 = vsub.s32 0, %v5257
        %v5259 = vrot.slane %v5198, %v5258
        %v5260 = vlaneseq
        %v5261 = vshrl.u32 %v5260, 7
        %v5262 = vsub.s32 0, %v5261
        %v5263 = vrot.slane %v5212, %v5262
        %v5264 = vlaneseq
        %v5265 = vshrl.u32 %v5264, 7
        %v5266 = vsub.s32 0, %v5265
        %v5267 = vrot.slane %v5220, %v5266
        %v5268 = vlaneseq
        %v5269 = vshrl.u32 %v5268, 7
        %v5270 = vsub.s32 0, %v5269
        %v5271 = vrot.slane %v5222, %v5270
        %v5272 = vlaneseq
        %v5273 = vshrl.u32 %v5272, 7
        %v5274 = vsub.s32 0, %v5273
        %v5275 = vrot.slane %v5205, %v5274
        %v5276 = vlaneseq
        %v5277 = vshrl.u32 %v5276, 7
        %v5278 = vsub.s32 0, %v5277
        %v5279 = vrot.slane %v5219, %v5278
        %v5280 = vlaneseq
        %v5281 = vshrl.u32 %v5280, 7
        %v5282 = vsub.s32 0, %v5281
        %v5283 = vrot.slane %v5221, %v5282
        %v5284 = vlaneseq
        %v5285 = vshrl.u32 %v5284, 7
        %v5286 = vsub.s32 0, %v5285
        %v5287 = vrot.slane %v5223, %v5286
        %v5304 = vsel %vm2217, %v5227, -1e+30
        %v5305 = vsel %vm2218, %v5227, -1e+30
        %v5306 = vsel %vm2219, %v5231, -1e+30
        %v5307 = vsel %vm2220, %v5231, -1e+30
        %v5308 = vsel %vm2221, %v5235, -1e+30
        %v5309 = vsel %vm2222, %v5235, -1e+30
        %v5310 = vsel %vm2223, %v5239, -1e+30
        %v5311 = vsel %vm2224, %v5239, -1e+30
        %v5312 = vsel %vm2225, %v5243, -1e+30
        %v5313 = vsel %vm2226, %v5243, -1e+30
        %v5314 = vsel %vm2227, %v5247, -1e+30
        %v5315 = vsel %vm2228, %v5247, -1e+30
        %v5316 = vsel %vm2229, %v5251, -1e+30
        %v5317 = vsel %vm2230, %v5251, -1e+30
        %v5318 = vsel %vm2231, %v5255, -1e+30
        %v5319 = vsel %vm2232, %v5255, -1e+30
        %v5320 = vsel %vm2233, %v5259, -1e+30
        %v5321 = vsel %vm2234, %v5259, -1e+30
        %v5322 = vsel %vm2235, %v5263, -1e+30
        %v5323 = vsel %vm2236, %v5263, -1e+30
        %v5324 = vsel %vm2237, %v5267, -1e+30
        %v5325 = vsel %vm2238, %v5267, -1e+30
        %v5326 = vsel %vm2239, %v5271, -1e+30
        %v5327 = vsel %vm2240, %v5271, -1e+30
        %v5328 = vsel %vm2241, %v5275, -1e+30
        %v5329 = vsel %vm2242, %v5275, -1e+30
        %v5330 = vsel %vm2243, %v5279, -1e+30
        %v5331 = vsel %vm2244, %v5279, -1e+30
        %v5332 = vsel %vm2245, %v5283, -1e+30
        %v5333 = vsel %vm2246, %v5283, -1e+30
        %v5334 = vsel %vm2247, %v5287, -1e+30
        %v5335 = vsel %vm2248, %v5287, -1e+30
        %v5336 = vsel %vm1501, %v5304, -inf
        %v5337 = vsel %vm1501, %v5306, -inf
        %v5338 = vsel %vm1501, %v5308, -inf
        %v5339 = vmax.f32 %v5336, %v5338
        %v5340 = vsel %vm1501, %v5310, -inf
        %v5341 = vmax.f32 %v5337, %v5340
        %v5342 = vsel %vm1501, %v5312, -inf
        %v5343 = vmax.f32 %v5339, %v5342
        %v5344 = vsel %vm1501, %v5314, -inf
        %v5345 = vmax.f32 %v5341, %v5344
        %v5346 = vsel %vm1501, %v5316, -inf
        %v5347 = vmax.f32 %v5343, %v5346
        %v5348 = vsel %vm1501, %v5318, -inf
        %v5349 = vmax.f32 %v5345, %v5348
        %v5350 = vsel %vm1501, %v5320, -inf
        %v5351 = vmax.f32 %v5347, %v5350
        %v5352 = vsel %vm1501, %v5322, -inf
        %v5353 = vmax.f32 %v5349, %v5352
        %v5354 = vsel %vm1501, %v5324, -inf
        %v5355 = vmax.f32 %v5351, %v5354
        %v5356 = vsel %vm1501, %v5326, -inf
        %v5357 = vmax.f32 %v5353, %v5356
        %v5358 = vsel %vm1501, %v5328, -inf
        %v5359 = vmax.f32 %v5355, %v5358
        %v5360 = vsel %vm1501, %v5330, -inf
        %v5361 = vmax.f32 %v5357, %v5360
        %v5362 = vsel %vm1501, %v5332, -inf
        %v5363 = vmax.f32 %v5359, %v5362
        %v5364 = vsel %vm1501, %v5334, -inf
        %v5365 = vmax.f32 %v5361, %v5364
        %v5366 = vmax.f32 %v5363, %v5365
        %v5367 = vsel %vm2392, %v5305, -inf
        %v5368 = vsel %vm2392, %v5307, -inf
        %v5369 = vsel %vm2392, %v5309, -inf
        %v5370 = vmax.f32 %v5367, %v5369
        %v5371 = vsel %vm2392, %v5311, -inf
        %v5372 = vmax.f32 %v5368, %v5371
        %v5373 = vsel %vm2392, %v5313, -inf
        %v5374 = vmax.f32 %v5370, %v5373
        %v5375 = vsel %vm2392, %v5315, -inf
        %v5376 = vmax.f32 %v5372, %v5375
        %v5377 = vsel %vm2392, %v5317, -inf
        %v5378 = vmax.f32 %v5374, %v5377
        %v5379 = vsel %vm2392, %v5319, -inf
        %v5380 = vmax.f32 %v5376, %v5379
        %v5381 = vsel %vm2392, %v5321, -inf
        %v5382 = vmax.f32 %v5378, %v5381
        %v5383 = vsel %vm2392, %v5323, -inf
        %v5384 = vmax.f32 %v5380, %v5383
        %v5385 = vsel %vm2392, %v5325, -inf
        %v5386 = vmax.f32 %v5382, %v5385
        %v5387 = vsel %vm2392, %v5327, -inf
        %v5388 = vmax.f32 %v5384, %v5387
        %v5389 = vsel %vm2392, %v5329, -inf
        %v5390 = vmax.f32 %v5386, %v5389
        %v5391 = vsel %vm2392, %v5331, -inf
        %v5392 = vmax.f32 %v5388, %v5391
        %v5393 = vsel %vm2392, %v5333, -inf
        %v5394 = vmax.f32 %v5390, %v5393
        %v5395 = vsel %vm2392, %v5335, -inf
        %v5396 = vmax.f32 %v5392, %v5395
        %v5397 = vmax.f32 %v5394, %v5396
        %v5398 = vpack.c.bf16 %v5397, %v5366
        %v5400 = vsel %vm1633, %v5398, 0
        %5402 = vmatprep.subr.bf16.mxu0 0
        %5403 = vmatpush1.bf16.msra.mxu0 %v5400
        %5404 = vmatprep.subr.bf16.mxu0 0
        %5405 = vmatpush1.bf16.msra.mxu0 0
        %5406 = vmatprep.subr.bf16.mxu0 0
        %5407 = vmatpush1.bf16.msra.mxu0 0
        %5408 = vmatprep.subr.bf16.mxu0 0
        %5409 = vmatpush1.bf16.msra.mxu0 0
        %5410 = vmatprep.subr.bf16.mxu0 0
        %5411 = vmatpush1.bf16.msra.mxu0 0
        %5412 = vmatprep.subr.bf16.mxu0 0
        %5413 = vmatpush1.bf16.msra.mxu0 0
        %5414 = vmatprep.subr.bf16.mxu0 0
        %5415 = vmatpush1.bf16.msra.mxu0 0
        %5416 = vmatprep.subr.bf16.mxu0 0
        %5417 = vmatpush1.bf16.msra.mxu0 0
        %5418 = vmatprep.subr.bf16.mxu0 0
        %5419 = vmatpush1.bf16.msra.mxu0 0
        %5420 = vmatprep.subr.bf16.mxu0 0
        %5421 = vmatpush1.bf16.msra.mxu0 0
        %5422 = vmatprep.subr.bf16.mxu0 0
        %5423 = vmatpush1.bf16.msra.mxu0 0
        %5424 = vmatprep.subr.bf16.mxu0 0
        %5425 = vmatpush1.bf16.msra.mxu0 0
        %5426 = vmatprep.subr.bf16.mxu0 0
        %5427 = vmatpush1.bf16.msra.mxu0 0
        %5428 = vmatprep.subr.bf16.mxu0 0
        %5429 = vmatpush1.bf16.msra.mxu0 0
        %5430 = vmatprep.subr.bf16.mxu0 0
        %5431 = vmatpush1.bf16.msra.mxu0 0
        %5432 = vmatprep.subr.bf16.mxu0 0
        %5433 = vmatpush1.bf16.msra.mxu0 0
        %5434 = vmatprep.mubr.bf16.mxu0 0
        %5435 = vmatmul.mubr.bf16.gmra.mrb[0].mxu0 %v1681
        %v5436 = vpop.f32.mrb[0].mxu0
        %v5437 = vadd.f32 0.0, %v5436
        %v5438 = vpop.f32.mrb[0].mxu0
        %v5439 = vpop.f32.mrb[0].mxu0
        %v5440 = vadd.f32 0.0, %v5439
        %v5441 = vpop.f32.mrb[0].mxu0
        %5442 = vdwg.mxu0
        %v5443 = vsub.f32 %v5118, %v5437
        %v5444 = vsub.f32 %v5121, %v5440
        %v5445 = vmul.f32 %v5443, 1.442695
        %v5446 = vpow.pop %v5445
        %v5447 = vmul.f32 %v5444, 1.442695
        %v5448 = vpow.pop %v5447
        %v5449 = vpack.c.bf16 %v5448, %v5446
        %5450 = vmatprep.subr.bf16.mxu0 0
        %5451 = vmatpush1.bf16.msra.mxu0 %v5449
        %5452 = vmatprep.subr.bf16.mxu0 0
        %5453 = vmatpush1.bf16.msra.mxu0 0
        %5454 = vmatprep.subr.bf16.mxu0 0
        %5455 = vmatpush1.bf16.msra.mxu0 0
        %5456 = vmatprep.subr.bf16.mxu0 0
        %5457 = vmatpush1.bf16.msra.mxu0 0
        %5458 = vmatprep.subr.bf16.mxu0 0
        %5459 = vmatpush1.bf16.msra.mxu0 0
        %5460 = vmatprep.subr.bf16.mxu0 0
        %5461 = vmatpush1.bf16.msra.mxu0 0
        %5462 = vmatprep.subr.bf16.mxu0 0
        %5463 = vmatpush1.bf16.msra.mxu0 0
        %5464 = vmatprep.subr.bf16.mxu0 0
        %5465 = vmatpush1.bf16.msra.mxu0 0
        %5466 = vmatprep.subr.bf16.mxu0 0
        %5467 = vmatpush1.bf16.msra.mxu0 0
        %5468 = vmatprep.subr.bf16.mxu0 0
        %5469 = vmatpush1.bf16.msra.mxu0 0
        %5470 = vmatprep.subr.bf16.mxu0 0
        %5471 = vmatpush1.bf16.msra.mxu0 0
        %5472 = vmatprep.subr.bf16.mxu0 0
        %5473 = vmatpush1.bf16.msra.mxu0 0
        %5474 = vmatprep.subr.bf16.mxu0 0
        %5475 = vmatpush1.bf16.msra.mxu0 0
        %5476 = vmatprep.subr.bf16.mxu0 0
        %5477 = vmatpush1.bf16.msra.mxu0 0
        %5478 = vmatprep.subr.bf16.mxu0 0
        %5479 = vmatpush1.bf16.msra.mxu0 0
        %5480 = vmatprep.subr.bf16.mxu0 0
        %5481 = vmatpush1.bf16.msra.mxu0 0
        %5482 = vmatprep.mubr.bf16.mxu0 0
        %5483 = vmatmul.mubr.bf16.gmra.mrb[0].mxu0 %v2478
        %v5484 = vpop.f32.mrb[0].mxu0
        %v5485 = vadd.f32 0.0, %v5484
        %v5486 = vpop.f32.mrb[0].mxu0
        %v5487 = vpop.f32.mrb[0].mxu0
        %v5488 = vadd.f32 0.0, %v5487
        %v5489 = vpop.f32.mrb[0].mxu0
        %5490 = vdwg.mxu0
        %v5491 = vpack.c.bf16 %v5488, %v5485
        %v5493 = vsel %vm1633, %v5491, 0
        %5495 = vmatprep.subr.bf16.mxu0 0
        %5496 = vmatpush1.bf16.msra.mxu0 %v5493
        %5497 = vmatprep.subr.bf16.mxu0 0
        %5498 = vmatpush1.bf16.msra.mxu0 0
        %5499 = vmatprep.subr.bf16.mxu0 0
        %5500 = vmatpush1.bf16.msra.mxu0 0
        %5501 = vmatprep.subr.bf16.mxu0 0
        %5502 = vmatpush1.bf16.msra.mxu0 0
        %5503 = vmatprep.subr.bf16.mxu0 0
        %5504 = vmatpush1.bf16.msra.mxu0 0
        %5505 = vmatprep.subr.bf16.mxu0 0
        %5506 = vmatpush1.bf16.msra.mxu0 0
        %5507 = vmatprep.subr.bf16.mxu0 0
        %5508 = vmatpush1.bf16.msra.mxu0 0
        %5509 = vmatprep.subr.bf16.mxu0 0
        %5510 = vmatpush1.bf16.msra.mxu0 0
        %5511 = vmatprep.subr.bf16.mxu0 0
        %5512 = vmatpush1.bf16.msra.mxu0 0
        %5513 = vmatprep.subr.bf16.mxu0 0
        %5514 = vmatpush1.bf16.msra.mxu0 0
        %5515 = vmatprep.subr.bf16.mxu0 0
        %5516 = vmatpush1.bf16.msra.mxu0 0
        %5517 = vmatprep.subr.bf16.mxu0 0
        %5518 = vmatpush1.bf16.msra.mxu0 0
        %5519 = vmatprep.subr.bf16.mxu0 0
        %5520 = vmatpush1.bf16.msra.mxu0 0
        %5521 = vmatprep.subr.bf16.mxu0 0
        %5522 = vmatpush1.bf16.msra.mxu0 0
        %5523 = vmatprep.subr.bf16.mxu0 0
        %5524 = vmatpush1.bf16.msra.mxu0 0
        %5525 = vmatprep.subr.bf16.mxu0 0
        %5526 = vmatpush1.bf16.msra.mxu0 0
        %5527 = vmatprep.mubr.bf16.mxu0 0
        %5528 = vmatmul.mubr.bf16.gmra.mrb[0].mxu0 %v1681
        %v5529 = vpop.f32.mrb[0].mxu0
        %v5530 = vadd.f32 0.0, %v5529
        %v5531 = vpop.f32.mrb[0].mxu0
        %v5532 = vpop.f32.mrb[0].mxu0
        %v5533 = vadd.f32 0.0, %v5532
        %v5534 = vpop.f32.mrb[0].mxu0
        %5535 = vdwg.mxu0
        %v5536 = vrcp.pop %v5530
        %v5537 = vrcp.pop %v5533
        %v5538 = vmul.f32 %v5446, %v5536
        %v5539 = vmul.f32 %v5448, %v5537
        %v5540 = vpack.c.bf16 %v5539, %v5538
        %v5542 = vsel %vm1501, %v5540, 0
        %5544 = vmatprep.subr.bf16.mxu0 0
        %5545 = vmatpush1.bf16.msra.mxu0 %v2576
        %5546 = vmatprep.subr.bf16.mxu0 0
        %5547 = vmatpush1.bf16.msra.mxu0 0
        %5548 = vmatprep.subr.bf16.mxu0 0
        %5549 = vmatpush1.bf16.msra.mxu0 0
        %5550 = vmatprep.subr.bf16.mxu0 0
        %5551 = vmatpush1.bf16.msra.mxu0 0
        %5552 = vmatprep.subr.bf16.mxu0 0
        %5553 = vmatpush1.bf16.msra.mxu0 0
        %5554 = vmatprep.subr.bf16.mxu0 0
        %5555 = vmatpush1.bf16.msra.mxu0 0
        %5556 = vmatprep.subr.bf16.mxu0 0
        %5557 = vmatpush1.bf16.msra.mxu0 0
        %5558 = vmatprep.subr.bf16.mxu0 0
        %5559 = vmatpush1.bf16.msra.mxu0 0
        %5560 = vmatprep.subr.bf16.mxu0 0
        %5561 = vmatpush1.bf16.msra.mxu0 0
        %5562 = vmatprep.subr.bf16.mxu0 0
        %5563 = vmatpush1.bf16.msra.mxu0 0
        %5564 = vmatprep.subr.bf16.mxu0 0
        %5565 = vmatpush1.bf16.msra.mxu0 0
        %5566 = vmatprep.subr.bf16.mxu0 0
        %5567 = vmatpush1.bf16.msra.mxu0 0
        %5568 = vmatprep.subr.bf16.mxu0 0
        %5569 = vmatpush1.bf16.msra.mxu0 0
        %5570 = vmatprep.subr.bf16.mxu0 0
        %5571 = vmatpush1.bf16.msra.mxu0 0
        %5572 = vmatprep.subr.bf16.mxu0 0
        %5573 = vmatpush1.bf16.msra.mxu0 0
        %5574 = vmatprep.subr.bf16.mxu0 0
        %5575 = vmatpush1.bf16.msra.mxu0 0
        %5576 = vmatprep.mubr.bf16.mxu0 0
        %5577 = vmatmul.mubr.bf16.gmra.mrb[0].mxu0 %v5542
        %v5578 = vpop.f32.mrb[0].mxu0
        %v5579 = vadd.f32 0.0, %v5578
        %v5580 = vpop.f32.mrb[0].mxu0
        %v5581 = vpop.f32.mrb[0].mxu0
        %v5582 = vadd.f32 0.0, %v5581
        %v5583 = vpop.f32.mrb[0].mxu0
        %5584 = vdwg.mxu0
        %5587 = vrot.lane.b32.xlu0 %v5579, 64
        %v5588 = vpop.permute.xlu0 %5587
        %5589 = vrot.lane.b32.xlu0 %v5582, 64
        %v5590 = vpop.permute.xlu0 %5589
        %v5593 = vmul.f32 %v4971, %v5588
        %v5594 = vmul.f32 %v4974, %v5590
        %v5595 = vpack.c.bf16 %v5594, %v5593
        %5597 = vrot.lane.b32.xlu0 %v5595, 64
        %v5598 = vpop.permute.xlu0 %5597
        %5600 = vmatprep.subr.bf16.mxu0 0
        %5601 = vmatpush1.bf16.msra.mxu0 %v5598
        %5602 = vmatprep.subr.bf16.mxu0 0
        %5603 = vmatpush1.bf16.msra.mxu0 0
        %5604 = vmatprep.subr.bf16.mxu0 0
        %5605 = vmatpush1.bf16.msra.mxu0 0
        %5606 = vmatprep.subr.bf16.mxu0 0
        %5607 = vmatpush1.bf16.msra.mxu0 0
        %5608 = vmatprep.subr.bf16.mxu0 0
        %5609 = vmatpush1.bf16.msra.mxu0 0
        %5610 = vmatprep.subr.bf16.mxu0 0
        %5611 = vmatpush1.bf16.msra.mxu0 0
        %5612 = vmatprep.subr.bf16.mxu0 0
        %5613 = vmatpush1.bf16.msra.mxu0 0
        %5614 = vmatprep.subr.bf16.mxu0 0
        %5615 = vmatpush1.bf16.msra.mxu0 0
        %5616 = vmatprep.subr.bf16.mxu0 0
        %5617 = vmatpush1.bf16.msra.mxu0 0
        %5618 = vmatprep.subr.bf16.mxu0 0
        %5619 = vmatpush1.bf16.msra.mxu0 0
        %5620 = vmatprep.subr.bf16.mxu0 0
        %5621 = vmatpush1.bf16.msra.mxu0 0
        %5622 = vmatprep.subr.bf16.mxu0 0
        %5623 = vmatpush1.bf16.msra.mxu0 0
        %5624 = vmatprep.subr.bf16.mxu0 0
        %5625 = vmatpush1.bf16.msra.mxu0 0
        %5626 = vmatprep.subr.bf16.mxu0 0
        %5627 = vmatpush1.bf16.msra.mxu0 0
        %5628 = vmatprep.subr.bf16.mxu0 0
        %5629 = vmatpush1.bf16.msra.mxu0 0
        %5630 = vmatprep.subr.bf16.mxu0 0
        %5631 = vmatpush1.bf16.msra.mxu0 0
        %5632 = vmatprep.mubr.bf16.mxu0 0
        %5633 = vmatmul.mubr.bf16.gmra.mrb[0].mxu0 %v2478
        %v5634 = vpop.f32.mrb[0].mxu0
        %v5635 = vadd.f32 0.0, %v5634
        %v5636 = vpop.f32.mrb[0].mxu0
        %v5637 = vpop.f32.mrb[0].mxu0
        %v5638 = vadd.f32 0.0, %v5637
        %v5639 = vpop.f32.mrb[0].mxu0
        %5640 = vdwg.mxu0
        %v5641 = vmax.f32 %v5635, 0.0
        %v5642 = vmax.f32 %v5638, 0.0
        %v5643 = vmax.f32 %v5077, 0.0
        %v5644 = vmax.f32 %v5078, 0.0
        %v5645 = vpack.c.bf16 %v5642, %v5641
        %v5647 = vsel %vm1832, %v5645, 0
        %5649 = vmatprep.subr.bf16.mxu0 %v2713
        %5650 = vmatpush1.bf16.msra.mxu0 %v2712
        %5651 = vmatprep.subr.bf16.mxu0 %v2715
        %5652 = vmatpush1.bf16.msra.mxu0 %v2714
        %5653 = vmatprep.subr.bf16.mxu0 %v2717
        %5654 = vmatpush1.bf16.msra.mxu0 %v2716
        %5655 = vmatprep.subr.bf16.mxu0 %v2719
        %5656 = vmatpush1.bf16.msra.mxu0 %v2718
        %5657 = vmatprep.subr.bf16.mxu0 0
        %5658 = vmatpush1.bf16.msra.mxu0 0
        %5659 = vmatprep.subr.bf16.mxu0 0
        %5660 = vmatpush1.bf16.msra.mxu0 0
        %5661 = vmatprep.subr.bf16.mxu0 0
        %5662 = vmatpush1.bf16.msra.mxu0 0
        %5663 = vmatprep.subr.bf16.mxu0 0
        %5664 = vmatpush1.bf16.msra.mxu0 0
        %5665 = vmatprep.subr.bf16.mxu0 0
        %5666 = vmatpush1.bf16.msra.mxu0 0
        %5667 = vmatprep.subr.bf16.mxu0 0
        %5668 = vmatpush1.bf16.msra.mxu0 0
        %5669 = vmatprep.subr.bf16.mxu0 0
        %5670 = vmatpush1.bf16.msra.mxu0 0
        %5671 = vmatprep.subr.bf16.mxu0 0
        %5672 = vmatpush1.bf16.msra.mxu0 0
        %5673 = vmatprep.subr.bf16.mxu0 0
        %5674 = vmatpush1.bf16.msra.mxu0 0
        %5675 = vmatprep.subr.bf16.mxu0 0
        %5676 = vmatpush1.bf16.msra.mxu0 0
        %5677 = vmatprep.subr.bf16.mxu0 0
        %5678 = vmatpush1.bf16.msra.mxu0 0
        %5679 = vmatprep.subr.bf16.mxu0 0
        %5680 = vmatpush1.bf16.msra.mxu0 0
        %5681 = vmatprep.mubr.bf16.mxu0 0
        %5682 = vmatmul.mubr.bf16.gmra.mrb[0].mxu0 %v5647
        %v5683 = vpop.f32.mrb[0].mxu0
        %v5684 = vadd.f32 0.0, %v5683
        %v5685 = vpop.f32.mrb[0].mxu0
        %v5686 = vadd.f32 0.0, %v5685
        %v5687 = vpop.f32.mrb[0].mxu0
        %v5688 = vadd.f32 0.0, %v5687
        %v5689 = vpop.f32.mrb[0].mxu0
        %v5690 = vadd.f32 0.0, %v5689
        %5691 = vdwg.mxu0
        %v5692 = vpack.c.bf16 %v5688, %v5684
        %v5693 = vpack.c.bf16 %v5690, %v5686
        %v5695 = vsel %vm1633, %v5692, 0
        %v5698 = vsel %vm1633, %v5693, 0
        %5700 = vmatprep.subr.bf16.mxu0 %v5698
        %5701 = vmatpush1.bf16.msra.mxu0 %v5695
        %5702 = vmatprep.subr.bf16.mxu0 0
        %5703 = vmatpush1.bf16.msra.mxu0 0
        %5704 = vmatprep.subr.bf16.mxu0 0
        %5705 = vmatpush1.bf16.msra.mxu0 0
        %5706 = vmatprep.subr.bf16.mxu0 0
        %5707 = vmatpush1.bf16.msra.mxu0 0
        %5708 = vmatprep.subr.bf16.mxu0 0
        %5709 = vmatpush1.bf16.msra.mxu0 0
        %5710 = vmatprep.subr.bf16.mxu0 0
        %5711 = vmatpush1.bf16.msra.mxu0 0
        %5712 = vmatprep.subr.bf16.mxu0 0
        %5713 = vmatpush1.bf16.msra.mxu0 0
        %5714 = vmatprep.subr.bf16.mxu0 0
        %5715 = vmatpush1.bf16.msra.mxu0 0
        %5716 = vmatprep.subr.bf16.mxu0 0
        %5717 = vmatpush1.bf16.msra.mxu0 0
        %5718 = vmatprep.subr.bf16.mxu0 0
        %5719 = vmatpush1.bf16.msra.mxu0 0
        %5720 = vmatprep.subr.bf16.mxu0 0
        %5721 = vmatpush1.bf16.msra.mxu0 0
        %5722 = vmatprep.subr.bf16.mxu0 0
        %5723 = vmatpush1.bf16.msra.mxu0 0
        %5724 = vmatprep.subr.bf16.mxu0 0
        %5725 = vmatpush1.bf16.msra.mxu0 0
        %5726 = vmatprep.subr.bf16.mxu0 0
        %5727 = vmatpush1.bf16.msra.mxu0 0
        %5728 = vmatprep.subr.bf16.mxu0 0
        %5729 = vmatpush1.bf16.msra.mxu0 0
        %5730 = vmatprep.subr.bf16.mxu0 0
        %5731 = vmatpush1.bf16.msra.mxu0 0
        %5732 = vmatprep.mubr.bf16.mxu0 0
        %5733 = vmatmul.mubr.bf16.gmra.mrb[0].mxu0 %v1631
        %v5734 = vpop.f32.mrb[0].mxu0
        %v5735 = vadd.f32 0.0, %v5734
        %v5736 = vpop.f32.mrb[0].mxu0
        %v5737 = vadd.f32 0.0, %v5736
        %v5738 = vpop.f32.mrb[0].mxu0
        %v5739 = vadd.f32 0.0, %v5738
        %v5740 = vpop.f32.mrb[0].mxu0
        %v5741 = vadd.f32 0.0, %v5740
        %5742 = vdwg.mxu0
        %5744 = vrot.lane.b32.xlu0 %v5693, 96
        %v5745 = vpop.permute.xlu0 %5744
        %v5747 = vsel %vm1633, %v5745, 0
        %5749 = vmatprep.subr.bf16.mxu0 0
        %5750 = vmatpush1.bf16.msra.mxu0 %v5747
        %5751 = vmatprep.subr.bf16.mxu0 0
        %5752 = vmatpush1.bf16.msra.mxu0 0
        %5753 = vmatprep.subr.bf16.mxu0 0
        %5754 = vmatpush1.bf16.msra.mxu0 0
        %5755 = vmatprep.subr.bf16.mxu0 0
        %5756 = vmatpush1.bf16.msra.mxu0 0
        %5757 = vmatprep.subr.bf16.mxu0 0
        %5758 = vmatpush1.bf16.msra.mxu0 0
        %5759 = vmatprep.subr.bf16.mxu0 0
        %5760 = vmatpush1.bf16.msra.mxu0 0
        %5761 = vmatprep.subr.bf16.mxu0 0
        %5762 = vmatpush1.bf16.msra.mxu0 0
        %5763 = vmatprep.subr.bf16.mxu0 0
        %5764 = vmatpush1.bf16.msra.mxu0 0
        %5765 = vmatprep.subr.bf16.mxu0 0
        %5766 = vmatpush1.bf16.msra.mxu0 0
        %5767 = vmatprep.subr.bf16.mxu0 0
        %5768 = vmatpush1.bf16.msra.mxu0 0
        %5769 = vmatprep.subr.bf16.mxu0 0
        %5770 = vmatpush1.bf16.msra.mxu0 0
        %5771 = vmatprep.subr.bf16.mxu0 0
        %5772 = vmatpush1.bf16.msra.mxu0 0
        %5773 = vmatprep.subr.bf16.mxu0 0
        %5774 = vmatpush1.bf16.msra.mxu0 0
        %5775 = vmatprep.subr.bf16.mxu0 0
        %5776 = vmatpush1.bf16.msra.mxu0 0
        %5777 = vmatprep.subr.bf16.mxu0 0
        %5778 = vmatpush1.bf16.msra.mxu0 0
        %5779 = vmatprep.subr.bf16.mxu0 0
        %5780 = vmatpush1.bf16.msra.mxu0 0
        %5781 = vmatprep.mubr.bf16.mxu0 0
        %5782 = vmatmul.mubr.bf16.gmra.mrb[0].mxu0 %v1681
        %v5783 = vpop.f32.mrb[0].mxu0
        %v5784 = vadd.f32 0.0, %v5783
        %v5785 = vpop.f32.mrb[0].mxu0
        %v5786 = vpop.f32.mrb[0].mxu0
        %v5787 = vadd.f32 0.0, %v5786
        %v5788 = vpop.f32.mrb[0].mxu0
        %5789 = vdwg.mxu0
        %v5790 = vadd.f32 %v5735, %v5784
        %v5791 = vadd.f32 %v5739, %v5787
        %v5792 = vpack.c.bf16 %v5644, %v5643
        %v5794 = vsel %vm1832, %v5792, 0
        %5796 = vmatprep.subr.bf16.mxu0 0
        %5797 = vmatpush1.bf16.msra.mxu0 %v2899
        %5798 = vmatprep.subr.bf16.mxu0 0
        %5799 = vmatpush1.bf16.msra.mxu0 %v2900
        %5800 = vmatprep.subr.bf16.mxu0 0
        %5801 = vmatpush1.bf16.msra.mxu0 %v2901
        %5802 = vmatprep.subr.bf16.mxu0 0
        %5803 = vmatpush1.bf16.msra.mxu0 %v2902
        %5804 = vmatprep.subr.bf16.mxu0 0
        %5805 = vmatpush1.bf16.msra.mxu0 0
        %5806 = vmatprep.subr.bf16.mxu0 0
        %5807 = vmatpush1.bf16.msra.mxu0 0
        %5808 = vmatprep.subr.bf16.mxu0 0
        %5809 = vmatpush1.bf16.msra.mxu0 0
        %5810 = vmatprep.subr.bf16.mxu0 0
        %5811 = vmatpush1.bf16.msra.mxu0 0
        %5812 = vmatprep.subr.bf16.mxu0 0
        %5813 = vmatpush1.bf16.msra.mxu0 0
        %5814 = vmatprep.subr.bf16.mxu0 0
        %5815 = vmatpush1.bf16.msra.mxu0 0
        %5816 = vmatprep.subr.bf16.mxu0 0
        %5817 = vmatpush1.bf16.msra.mxu0 0
        %5818 = vmatprep.subr.bf16.mxu0 0
        %5819 = vmatpush1.bf16.msra.mxu0 0
        %5820 = vmatprep.subr.bf16.mxu0 0
        %5821 = vmatpush1.bf16.msra.mxu0 0
        %5822 = vmatprep.subr.bf16.mxu0 0
        %5823 = vmatpush1.bf16.msra.mxu0 0
        %5824 = vmatprep.subr.bf16.mxu0 0
        %5825 = vmatpush1.bf16.msra.mxu0 0
        %5826 = vmatprep.subr.bf16.mxu0 0
        %5827 = vmatpush1.bf16.msra.mxu0 0
        %5828 = vmatprep.mubr.bf16.mxu0 0
        %5829 = vmatmul.mubr.bf16.gmra.mrb[0].mxu0 %v5794
        %v5830 = vpop.f32.mrb[0].mxu0
        %v5831 = vadd.f32 0.0, %v5830
        %v5832 = vpop.f32.mrb[0].mxu0
        %v5833 = vpop.f32.mrb[0].mxu0
        %v5834 = vadd.f32 0.0, %v5833
        %v5835 = vpop.f32.mrb[0].mxu0
        %5836 = vdwg.mxu0
        %v5837 = vadd.f32 %v5790, %v5831
        %v5838 = vadd.f32 %v5791, %v5834
        %v5839 = vadd.f32 %v5837, %v2958
        %v5840 = vadd.f32 %v5838, %v2958
        %vm5841 = vcmp.ge.f32.partialorder %v5839, 0.0
        %vm5842 = vcmp.ge.f32.partialorder %v5840, 0.0
        %v5843 = vmul.f32 %v5839, 0.01
        %v5844 = vmul.f32 %v5840, 0.01
        %v5845 = vsel %vm5841, %v5839, %v5843
        %v5846 = vsel %vm5842, %v5840, %v5844
        %v5847 = vpack.c.bf16 %v5846, %v5845
        %v5849 = vsel %vm2985, %v5847, 0
        %5851 = vmatprep.subr.bf16.mxu0 0
        %5852 = vmatpush1.bf16.msra.mxu0 %v2981
        %5853 = vmatprep.subr.bf16.mxu0 0
        %5854 = vmatpush1.bf16.msra.mxu0 %v2982
        %5855 = vmatprep.subr.bf16.mxu0 0
        %5856 = vmatpush1.bf16.msra.mxu0 0
        %5857 = vmatprep.subr.bf16.mxu0 0
        %5858 = vmatpush1.bf16.msra.mxu0 0
        %5859 = vmatprep.subr.bf16.mxu0 0
        %5860 = vmatpush1.bf16.msra.mxu0 0
        %5861 = vmatprep.subr.bf16.mxu0 0
        %5862 = vmatpush1.bf16.msra.mxu0 0
        %5863 = vmatprep.subr.bf16.mxu0 0
        %5864 = vmatpush1.bf16.msra.mxu0 0
        %5865 = vmatprep.subr.bf16.mxu0 0
        %5866 = vmatpush1.bf16.msra.mxu0 0
        %5867 = vmatprep.subr.bf16.mxu0 0
        %5868 = vmatpush1.bf16.msra.mxu0 0
        %5869 = vmatprep.subr.bf16.mxu0 0
        %5870 = vmatpush1.bf16.msra.mxu0 0
        %5871 = vmatprep.subr.bf16.mxu0 0
        %5872 = vmatpush1.bf16.msra.mxu0 0
        %5873 = vmatprep.subr.bf16.mxu0 0
        %5874 = vmatpush1.bf16.msra.mxu0 0
        %5875 = vmatprep.subr.bf16.mxu0 0
        %5876 = vmatpush1.bf16.msra.mxu0 0
        %5877 = vmatprep.subr.bf16.mxu0 0
        %5878 = vmatpush1.bf16.msra.mxu0 0
        %5879 = vmatprep.subr.bf16.mxu0 0
        %5880 = vmatpush1.bf16.msra.mxu0 0
        %5881 = vmatprep.subr.bf16.mxu0 0
        %5882 = vmatpush1.bf16.msra.mxu0 0
        %5883 = vmatprep.mubr.bf16.mxu0 0
        %5884 = vmatmul.mubr.bf16.gmra.mrb[0].mxu0 %v5849
        %v5885 = vpop.f32.mrb[0].mxu0
        %v5886 = vadd.f32 0.0, %v5885
        %v5887 = vpop.f32.mrb[0].mxu0
        %v5888 = vpop.f32.mrb[0].mxu0
        %v5889 = vadd.f32 0.0, %v5888
        %v5890 = vpop.f32.mrb[0].mxu0
        %5891 = vdwg.mxu0
        %v5894 = vcombine.high %v5886, %v5886
        %v5896 = vunpack.c.l.s4 1966171168
        %v5897 = vunpack.c.0.s8 %v5896
        %v5898 = vlaneseq
        %v5899 = vshrl.u32 %v5898, 7
        %v5900 = vsub.s32 %v5897, %v5899
        %v5901 = vrot.slane %v5886, %v5900
        %v5903 = vunpack.c.l.s4 1966171168
        %v5904 = vunpack.c.0.s8 %v5903
        %v5905 = vlaneseq
        %v5906 = vshrl.u32 %v5905, 7
        %v5907 = vsub.s32 %v5904, %v5906
        %v5908 = vrot.slane %v5894, %v5907
        %v5909 = vcombine.high %v5901, %v5901
        %v5910 = vcombine.high %v5908, %v5908
        %v5912 = vunpack.c.l.s4 1966171168
        %v5913 = vunpack.c.0.s8 %v5912
        %v5914 = vlaneseq
        %v5915 = vshrl.u32 %v5914, 7
        %v5916 = vsub.s32 %v5913, %v5915
        %v5917 = vrot.slane %v5901, %v5916
        %v5919 = vunpack.c.l.s4 1966171168
        %v5920 = vunpack.c.0.s8 %v5919
        %v5921 = vlaneseq
        %v5922 = vshrl.u32 %v5921, 7
        %v5923 = vsub.s32 %v5920, %v5922
        %v5924 = vrot.slane %v5908, %v5923
        %v5926 = vunpack.c.l.s4 1966171168
        %v5927 = vunpack.c.0.s8 %v5926
        %v5928 = vlaneseq
        %v5929 = vshrl.u32 %v5928, 7
        %v5930 = vsub.s32 %v5927, %v5929
        %v5931 = vrot.slane %v5909, %v5930
        %v5933 = vunpack.c.l.s4 1966171168
        %v5934 = vunpack.c.0.s8 %v5933
        %v5935 = vlaneseq
        %v5936 = vshrl.u32 %v5935, 7
        %v5937 = vsub.s32 %v5934, %v5936
        %v5938 = vrot.slane %v5910, %v5937
        %v5939 = vcombine.high %v5917, %v5917
        %v5940 = vcombine.high %v5924, %v5924
        %v5941 = vcombine.high %v5931, %v5931
        %v5942 = vcombine.high %v5938, %v5938
        %v5943 = vcombine.high %v5889, %v5889
        %v5945 = vunpack.c.l.s4 1966171168
        %v5946 = vunpack.c.0.s8 %v5945
        %v5947 = vlaneseq
        %v5948 = vshrl.u32 %v5947, 7
        %v5949 = vsub.s32 %v5946, %v5948
        %v5950 = vrot.slane %v5889, %v5949
        %v5952 = vunpack.c.l.s4 1966171168
        %v5953 = vunpack.c.0.s8 %v5952
        %v5954 = vlaneseq
        %v5955 = vshrl.u32 %v5954, 7
        %v5956 = vsub.s32 %v5953, %v5955
        %v5957 = vrot.slane %v5943, %v5956
        %v5958 = vcombine.high %v5950, %v5950
        %v5959 = vcombine.high %v5957, %v5957
        %v5961 = vunpack.c.l.s4 1966171168
        %v5962 = vunpack.c.0.s8 %v5961
        %v5963 = vlaneseq
        %v5964 = vshrl.u32 %v5963, 7
        %v5965 = vsub.s32 %v5962, %v5964
        %v5966 = vrot.slane %v5950, %v5965
        %v5968 = vunpack.c.l.s4 1966171168
        %v5969 = vunpack.c.0.s8 %v5968
        %v5970 = vlaneseq
        %v5971 = vshrl.u32 %v5970, 7
        %v5972 = vsub.s32 %v5969, %v5971
        %v5973 = vrot.slane %v5957, %v5972
        %v5975 = vunpack.c.l.s4 1966171168
        %v5976 = vunpack.c.0.s8 %v5975
        %v5977 = vlaneseq
        %v5978 = vshrl.u32 %v5977, 7
        %v5979 = vsub.s32 %v5976, %v5978
        %v5980 = vrot.slane %v5958, %v5979
        %v5982 = vunpack.c.l.s4 1966171168
        %v5983 = vunpack.c.0.s8 %v5982
        %v5984 = vlaneseq
        %v5985 = vshrl.u32 %v5984, 7
        %v5986 = vsub.s32 %v5983, %v5985
        %v5987 = vrot.slane %v5959, %v5986
        %v5988 = vcombine.high %v5966, %v5966
        %v5989 = vcombine.high %v5973, %v5973
        %v5990 = vcombine.high %v5980, %v5980
        %v5991 = vcombine.high %v5987, %v5987
        %v5992 = vlaneseq
        %v5993 = vshrl.u32 %v5992, 7
        %v5994 = vsub.s32 0, %v5993
        %v5995 = vrot.slane %v5917, %v5994
        %v5996 = vlaneseq
        %v5997 = vshrl.u32 %v5996, 7
        %v5998 = vsub.s32 0, %v5997
        %v5999 = vrot.slane %v5931, %v5998
        %v6000 = vlaneseq
        %v6001 = vshrl.u32 %v6000, 7
        %v6002 = vsub.s32 0, %v6001
        %v6003 = vrot.slane %v5939, %v6002
        %v6004 = vlaneseq
        %v6005 = vshrl.u32 %v6004, 7
        %v6006 = vsub.s32 0, %v6005
        %v6007 = vrot.slane %v5941, %v6006
        %v6008 = vlaneseq
        %v6009 = vshrl.u32 %v6008, 7
        %v6010 = vsub.s32 0, %v6009
        %v6011 = vrot.slane %v5924, %v6010
        %v6012 = vlaneseq
        %v6013 = vshrl.u32 %v6012, 7
        %v6014 = vsub.s32 0, %v6013
        %v6015 = vrot.slane %v5938, %v6014
        %v6016 = vlaneseq
        %v6017 = vshrl.u32 %v6016, 7
        %v6018 = vsub.s32 0, %v6017
        %v6019 = vrot.slane %v5940, %v6018
        %v6020 = vlaneseq
        %v6021 = vshrl.u32 %v6020, 7
        %v6022 = vsub.s32 0, %v6021
        %v6023 = vrot.slane %v5942, %v6022
        %v6024 = vlaneseq
        %v6025 = vshrl.u32 %v6024, 7
        %v6026 = vsub.s32 0, %v6025
        %v6027 = vrot.slane %v5966, %v6026
        %v6028 = vlaneseq
        %v6029 = vshrl.u32 %v6028, 7
        %v6030 = vsub.s32 0, %v6029
        %v6031 = vrot.slane %v5980, %v6030
        %v6032 = vlaneseq
        %v6033 = vshrl.u32 %v6032, 7
        %v6034 = vsub.s32 0, %v6033
        %v6035 = vrot.slane %v5988, %v6034
        %v6036 = vlaneseq
        %v6037 = vshrl.u32 %v6036, 7
        %v6038 = vsub.s32 0, %v6037
        %v6039 = vrot.slane %v5990, %v6038
        %v6040 = vlaneseq
        %v6041 = vshrl.u32 %v6040, 7
        %v6042 = vsub.s32 0, %v6041
        %v6043 = vrot.slane %v5973, %v6042
        %v6044 = vlaneseq
        %v6045 = vshrl.u32 %v6044, 7
        %v6046 = vsub.s32 0, %v6045
        %v6047 = vrot.slane %v5987, %v6046
        %v6048 = vlaneseq
        %v6049 = vshrl.u32 %v6048, 7
        %v6050 = vsub.s32 0, %v6049
        %v6051 = vrot.slane %v5989, %v6050
        %v6052 = vlaneseq
        %v6053 = vshrl.u32 %v6052, 7
        %v6054 = vsub.s32 0, %v6053
        %v6055 = vrot.slane %v5991, %v6054
        %v6072 = vsel %vm2217, %v5995, -1e+30
        %v6073 = vsel %vm2218, %v5995, -1e+30
        %v6074 = vsel %vm2219, %v5999, -1e+30
        %v6075 = vsel %vm2220, %v5999, -1e+30
        %v6076 = vsel %vm2221, %v6003, -1e+30
        %v6077 = vsel %vm2222, %v6003, -1e+30
        %v6078 = vsel %vm2223, %v6007, -1e+30
        %v6079 = vsel %vm2224, %v6007, -1e+30
        %v6080 = vsel %vm2225, %v6011, -1e+30
        %v6081 = vsel %vm2226, %v6011, -1e+30
        %v6082 = vsel %vm2227, %v6015, -1e+30
        %v6083 = vsel %vm2228, %v6015, -1e+30
        %v6084 = vsel %vm2229, %v6019, -1e+30
        %v6085 = vsel %vm2230, %v6019, -1e+30
        %v6086 = vsel %vm2231, %v6023, -1e+30
        %v6087 = vsel %vm2232, %v6023, -1e+30
        %v6088 = vsel %vm2233, %v6027, -1e+30
        %v6089 = vsel %vm2234, %v6027, -1e+30
        %v6090 = vsel %vm2235, %v6031, -1e+30
        %v6091 = vsel %vm2236, %v6031, -1e+30
        %v6092 = vsel %vm2237, %v6035, -1e+30
        %v6093 = vsel %vm2238, %v6035, -1e+30
        %v6094 = vsel %vm2239, %v6039, -1e+30
        %v6095 = vsel %vm2240, %v6039, -1e+30
        %v6096 = vsel %vm2241, %v6043, -1e+30
        %v6097 = vsel %vm2242, %v6043, -1e+30
        %v6098 = vsel %vm2243, %v6047, -1e+30
        %v6099 = vsel %vm2244, %v6047, -1e+30
        %v6100 = vsel %vm2245, %v6051, -1e+30
        %v6101 = vsel %vm2246, %v6051, -1e+30
        %v6102 = vsel %vm2247, %v6055, -1e+30
        %v6103 = vsel %vm2248, %v6055, -1e+30
        %v6104 = vsel %vm1501, %v6072, -inf
        %v6105 = vsel %vm1501, %v6074, -inf
        %v6106 = vsel %vm1501, %v6076, -inf
        %v6107 = vmax.f32 %v6104, %v6106
        %v6108 = vsel %vm1501, %v6078, -inf
        %v6109 = vmax.f32 %v6105, %v6108
        %v6110 = vsel %vm1501, %v6080, -inf
        %v6111 = vmax.f32 %v6107, %v6110
        %v6112 = vsel %vm1501, %v6082, -inf
        %v6113 = vmax.f32 %v6109, %v6112
        %v6114 = vsel %vm1501, %v6084, -inf
        %v6115 = vmax.f32 %v6111, %v6114
        %v6116 = vsel %vm1501, %v6086, -inf
        %v6117 = vmax.f32 %v6113, %v6116
        %v6118 = vsel %vm1501, %v6088, -inf
        %v6119 = vmax.f32 %v6115, %v6118
        %v6120 = vsel %vm1501, %v6090, -inf
        %v6121 = vmax.f32 %v6117, %v6120
        %v6122 = vsel %vm1501, %v6092, -inf
        %v6123 = vmax.f32 %v6119, %v6122
        %v6124 = vsel %vm1501, %v6094, -inf
        %v6125 = vmax.f32 %v6121, %v6124
        %v6126 = vsel %vm1501, %v6096, -inf
        %v6127 = vmax.f32 %v6123, %v6126
        %v6128 = vsel %vm1501, %v6098, -inf
        %v6129 = vmax.f32 %v6125, %v6128
        %v6130 = vsel %vm1501, %v6100, -inf
        %v6131 = vmax.f32 %v6127, %v6130
        %v6132 = vsel %vm1501, %v6102, -inf
        %v6133 = vmax.f32 %v6129, %v6132
        %v6134 = vmax.f32 %v6131, %v6133
        %v6135 = vsel %vm2392, %v6073, -inf
        %v6136 = vsel %vm2392, %v6075, -inf
        %v6137 = vsel %vm2392, %v6077, -inf
        %v6138 = vmax.f32 %v6135, %v6137
        %v6139 = vsel %vm2392, %v6079, -inf
        %v6140 = vmax.f32 %v6136, %v6139
        %v6141 = vsel %vm2392, %v6081, -inf
        %v6142 = vmax.f32 %v6138, %v6141
        %v6143 = vsel %vm2392, %v6083, -inf
        %v6144 = vmax.f32 %v6140, %v6143
        %v6145 = vsel %vm2392, %v6085, -inf
        %v6146 = vmax.f32 %v6142, %v6145
        %v6147 = vsel %vm2392, %v6087, -inf
        %v6148 = vmax.f32 %v6144, %v6147
        %v6149 = vsel %vm2392, %v6089, -inf
        %v6150 = vmax.f32 %v6146, %v6149
        %v6151 = vsel %vm2392, %v6091, -inf
        %v6152 = vmax.f32 %v6148, %v6151
        %v6153 = vsel %vm2392, %v6093, -inf
        %v6154 = vmax.f32 %v6150, %v6153
        %v6155 = vsel %vm2392, %v6095, -inf
        %v6156 = vmax.f32 %v6152, %v6155
        %v6157 = vsel %vm2392, %v6097, -inf
        %v6158 = vmax.f32 %v6154, %v6157
        %v6159 = vsel %vm2392, %v6099, -inf
        %v6160 = vmax.f32 %v6156, %v6159
        %v6161 = vsel %vm2392, %v6101, -inf
        %v6162 = vmax.f32 %v6158, %v6161
        %v6163 = vsel %vm2392, %v6103, -inf
        %v6164 = vmax.f32 %v6160, %v6163
        %v6165 = vmax.f32 %v6162, %v6164
        %v6166 = vpack.c.bf16 %v6165, %v6134
        %v6168 = vsel %vm1633, %v6166, 0
        %6170 = vmatprep.subr.bf16.mxu0 0
        %6171 = vmatpush1.bf16.msra.mxu0 %v6168
        %6172 = vmatprep.subr.bf16.mxu0 0
        %6173 = vmatpush1.bf16.msra.mxu0 0
        %6174 = vmatprep.subr.bf16.mxu0 0
        %6175 = vmatpush1.bf16.msra.mxu0 0
        %6176 = vmatprep.subr.bf16.mxu0 0
        %6177 = vmatpush1.bf16.msra.mxu0 0
        %6178 = vmatprep.subr.bf16.mxu0 0
        %6179 = vmatpush1.bf16.msra.mxu0 0
        %6180 = vmatprep.subr.bf16.mxu0 0
        %6181 = vmatpush1.bf16.msra.mxu0 0
        %6182 = vmatprep.subr.bf16.mxu0 0
        %6183 = vmatpush1.bf16.msra.mxu0 0
        %6184 = vmatprep.subr.bf16.mxu0 0
        %6185 = vmatpush1.bf16.msra.mxu0 0
        %6186 = vmatprep.subr.bf16.mxu0 0
        %6187 = vmatpush1.bf16.msra.mxu0 0
        %6188 = vmatprep.subr.bf16.mxu0 0
        %6189 = vmatpush1.bf16.msra.mxu0 0
        %6190 = vmatprep.subr.bf16.mxu0 0
        %6191 = vmatpush1.bf16.msra.mxu0 0
        %6192 = vmatprep.subr.bf16.mxu0 0
        %6193 = vmatpush1.bf16.msra.mxu0 0
        %6194 = vmatprep.subr.bf16.mxu0 0
        %6195 = vmatpush1.bf16.msra.mxu0 0
        %6196 = vmatprep.subr.bf16.mxu0 0
        %6197 = vmatpush1.bf16.msra.mxu0 0
        %6198 = vmatprep.subr.bf16.mxu0 0
        %6199 = vmatpush1.bf16.msra.mxu0 0
        %6200 = vmatprep.subr.bf16.mxu0 0
        %6201 = vmatpush1.bf16.msra.mxu0 0
        %6202 = vmatprep.mubr.bf16.mxu0 0
        %6203 = vmatmul.mubr.bf16.gmra.mrb[0].mxu0 %v1681
        %v6204 = vpop.f32.mrb[0].mxu0
        %v6205 = vadd.f32 0.0, %v6204
        %v6206 = vpop.f32.mrb[0].mxu0
        %v6207 = vpop.f32.mrb[0].mxu0
        %v6208 = vadd.f32 0.0, %v6207
        %v6209 = vpop.f32.mrb[0].mxu0
        %6210 = vdwg.mxu0
        %v6211 = vsub.f32 %v5886, %v6205
        %v6212 = vsub.f32 %v5889, %v6208
        %v6213 = vmul.f32 %v6211, 1.442695
        %v6214 = vpow.pop %v6213
        %v6215 = vmul.f32 %v6212, 1.442695
        %v6216 = vpow.pop %v6215
        %v6217 = vpack.c.bf16 %v6216, %v6214
        %6218 = vmatprep.subr.bf16.mxu0 0
        %6219 = vmatpush1.bf16.msra.mxu0 %v6217
        %6220 = vmatprep.subr.bf16.mxu0 0
        %6221 = vmatpush1.bf16.msra.mxu0 0
        %6222 = vmatprep.subr.bf16.mxu0 0
        %6223 = vmatpush1.bf16.msra.mxu0 0
        %6224 = vmatprep.subr.bf16.mxu0 0
        %6225 = vmatpush1.bf16.msra.mxu0 0
        %6226 = vmatprep.subr.bf16.mxu0 0
        %6227 = vmatpush1.bf16.msra.mxu0 0
        %6228 = vmatprep.subr.bf16.mxu0 0
        %6229 = vmatpush1.bf16.msra.mxu0 0
        %6230 = vmatprep.subr.bf16.mxu0 0
        %6231 = vmatpush1.bf16.msra.mxu0 0
        %6232 = vmatprep.subr.bf16.mxu0 0
        %6233 = vmatpush1.bf16.msra.mxu0 0
        %6234 = vmatprep.subr.bf16.mxu0 0
        %6235 = vmatpush1.bf16.msra.mxu0 0
        %6236 = vmatprep.subr.bf16.mxu0 0
        %6237 = vmatpush1.bf16.msra.mxu0 0
        %6238 = vmatprep.subr.bf16.mxu0 0
        %6239 = vmatpush1.bf16.msra.mxu0 0
        %6240 = vmatprep.subr.bf16.mxu0 0
        %6241 = vmatpush1.bf16.msra.mxu0 0
        %6242 = vmatprep.subr.bf16.mxu0 0
        %6243 = vmatpush1.bf16.msra.mxu0 0
        %6244 = vmatprep.subr.bf16.mxu0 0
        %6245 = vmatpush1.bf16.msra.mxu0 0
        %6246 = vmatprep.subr.bf16.mxu0 0
        %6247 = vmatpush1.bf16.msra.mxu0 0
        %6248 = vmatprep.subr.bf16.mxu0 0
        %6249 = vmatpush1.bf16.msra.mxu0 0
        %6250 = vmatprep.mubr.bf16.mxu0 0
        %6251 = vmatmul.mubr.bf16.gmra.mrb[0].mxu0 %v2478
        %v6252 = vpop.f32.mrb[0].mxu0
        %v6253 = vadd.f32 0.0, %v6252
        %v6254 = vpop.f32.mrb[0].mxu0
        %v6255 = vpop.f32.mrb[0].mxu0
        %v6256 = vadd.f32 0.0, %v6255
        %v6257 = vpop.f32.mrb[0].mxu0
        %6258 = vdwg.mxu0
        %v6259 = vpack.c.bf16 %v6256, %v6253
        %v6261 = vsel %vm1633, %v6259, 0
        %6263 = vmatprep.subr.bf16.mxu0 0
        %6264 = vmatpush1.bf16.msra.mxu0 %v6261
        %6265 = vmatprep.subr.bf16.mxu0 0
        %6266 = vmatpush1.bf16.msra.mxu0 0
        %6267 = vmatprep.subr.bf16.mxu0 0
        %6268 = vmatpush1.bf16.msra.mxu0 0
        %6269 = vmatprep.subr.bf16.mxu0 0
        %6270 = vmatpush1.bf16.msra.mxu0 0
        %6271 = vmatprep.subr.bf16.mxu0 0
        %6272 = vmatpush1.bf16.msra.mxu0 0
        %6273 = vmatprep.subr.bf16.mxu0 0
        %6274 = vmatpush1.bf16.msra.mxu0 0
        %6275 = vmatprep.subr.bf16.mxu0 0
        %6276 = vmatpush1.bf16.msra.mxu0 0
        %6277 = vmatprep.subr.bf16.mxu0 0
        %6278 = vmatpush1.bf16.msra.mxu0 0
        %6279 = vmatprep.subr.bf16.mxu0 0
        %6280 = vmatpush1.bf16.msra.mxu0 0
        %6281 = vmatprep.subr.bf16.mxu0 0
        %6282 = vmatpush1.bf16.msra.mxu0 0
        %6283 = vmatprep.subr.bf16.mxu0 0
        %6284 = vmatpush1.bf16.msra.mxu0 0
        %6285 = vmatprep.subr.bf16.mxu0 0
        %6286 = vmatpush1.bf16.msra.mxu0 0
        %6287 = vmatprep.subr.bf16.mxu0 0
        %6288 = vmatpush1.bf16.msra.mxu0 0
        %6289 = vmatprep.subr.bf16.mxu0 0
        %6290 = vmatpush1.bf16.msra.mxu0 0
        %6291 = vmatprep.subr.bf16.mxu0 0
        %6292 = vmatpush1.bf16.msra.mxu0 0
        %6293 = vmatprep.subr.bf16.mxu0 0
        %6294 = vmatpush1.bf16.msra.mxu0 0
        %6295 = vmatprep.mubr.bf16.mxu0 0
        %6296 = vmatmul.mubr.bf16.gmra.mrb[0].mxu0 %v1681
        %v6297 = vpop.f32.mrb[0].mxu0
        %v6298 = vadd.f32 0.0, %v6297
        %v6299 = vpop.f32.mrb[0].mxu0
        %v6300 = vpop.f32.mrb[0].mxu0
        %v6301 = vadd.f32 0.0, %v6300
        %v6302 = vpop.f32.mrb[0].mxu0
        %6303 = vdwg.mxu0
        %v6304 = vrcp.pop %v6298
        %v6305 = vrcp.pop %v6301
        %v6306 = vmul.f32 %v6214, %v6304
        %v6307 = vmul.f32 %v6216, %v6305
        %v6308 = vpack.c.bf16 %v6307, %v6306
        %v6310 = vsel %vm1501, %v6308, 0
        %6312 = vmatprep.subr.bf16.mxu0 0
        %6313 = vmatpush1.bf16.msra.mxu0 %v3452
        %6314 = vmatprep.subr.bf16.mxu0 0
        %6315 = vmatpush1.bf16.msra.mxu0 0
        %6316 = vmatprep.subr.bf16.mxu0 0
        %6317 = vmatpush1.bf16.msra.mxu0 0
        %6318 = vmatprep.subr.bf16.mxu0 0
        %6319 = vmatpush1.bf16.msra.mxu0 0
        %6320 = vmatprep.subr.bf16.mxu0 0
        %6321 = vmatpush1.bf16.msra.mxu0 0
        %6322 = vmatprep.subr.bf16.mxu0 0
        %6323 = vmatpush1.bf16.msra.mxu0 0
        %6324 = vmatprep.subr.bf16.mxu0 0
        %6325 = vmatpush1.bf16.msra.mxu0 0
        %6326 = vmatprep.subr.bf16.mxu0 0
        %6327 = vmatpush1.bf16.msra.mxu0 0
        %6328 = vmatprep.subr.bf16.mxu0 0
        %6329 = vmatpush1.bf16.msra.mxu0 0
        %6330 = vmatprep.subr.bf16.mxu0 0
        %6331 = vmatpush1.bf16.msra.mxu0 0
        %6332 = vmatprep.subr.bf16.mxu0 0
        %6333 = vmatpush1.bf16.msra.mxu0 0
        %6334 = vmatprep.subr.bf16.mxu0 0
        %6335 = vmatpush1.bf16.msra.mxu0 0
        %6336 = vmatprep.subr.bf16.mxu0 0
        %6337 = vmatpush1.bf16.msra.mxu0 0
        %6338 = vmatprep.subr.bf16.mxu0 0
        %6339 = vmatpush1.bf16.msra.mxu0 0
        %6340 = vmatprep.subr.bf16.mxu0 0
        %6341 = vmatpush1.bf16.msra.mxu0 0
        %6342 = vmatprep.subr.bf16.mxu0 0
        %6343 = vmatpush1.bf16.msra.mxu0 0
        %6344 = vmatprep.mubr.bf16.mxu0 0
        %6345 = vmatmul.mubr.bf16.gmra.mrb[0].mxu0 %v6310
        %v6346 = vpop.f32.mrb[0].mxu0
        %v6347 = vadd.f32 0.0, %v6346
        %v6348 = vpop.f32.mrb[0].mxu0
        %v6349 = vpop.f32.mrb[0].mxu0
        %v6350 = vadd.f32 0.0, %v6349
        %v6351 = vpop.f32.mrb[0].mxu0
        %6352 = vdwg.mxu0
        %6355 = vrot.lane.b32.xlu0 %v6347, 32
        %v6356 = vpop.permute.xlu0 %6355
        %6357 = vrot.lane.b32.xlu0 %v6350, 32
        %v6358 = vpop.permute.xlu0 %6357
        %v6361 = vmul.f32 %v5735, %v6356
        %v6362 = vmul.f32 %v5737, %v6356
        %v6363 = vmul.f32 %v5739, %v6358
        %v6364 = vmul.f32 %v5741, %v6358
        %v6365 = vpack.c.bf16 %v6363, %v6361
        %v6366 = vpack.c.bf16 %v6364, %v6362
        %6369 = vrot.lane.b32.xlu0 %v6365, 96
        %v6370 = vpop.permute.xlu0 %6369
        %6371 = vrot.lane.b32.xlu0 %v6366, 96
        %v6372 = vpop.permute.xlu0 %6371
        %v6373 = vsel %vm3515, %v6370, %v6372
        %6375 = vmatprep.subr.bf16.mxu0 0
        %6376 = vmatpush1.bf16.msra.mxu0 %v6373
        %6377 = vmatprep.subr.bf16.mxu0 0
        %6378 = vmatpush1.bf16.msra.mxu0 0
        %6379 = vmatprep.subr.bf16.mxu0 0
        %6380 = vmatpush1.bf16.msra.mxu0 0
        %6381 = vmatprep.subr.bf16.mxu0 0
        %6382 = vmatpush1.bf16.msra.mxu0 0
        %6383 = vmatprep.subr.bf16.mxu0 0
        %6384 = vmatpush1.bf16.msra.mxu0 0
        %6385 = vmatprep.subr.bf16.mxu0 0
        %6386 = vmatpush1.bf16.msra.mxu0 0
        %6387 = vmatprep.subr.bf16.mxu0 0
        %6388 = vmatpush1.bf16.msra.mxu0 0
        %6389 = vmatprep.subr.bf16.mxu0 0
        %6390 = vmatpush1.bf16.msra.mxu0 0
        %6391 = vmatprep.subr.bf16.mxu0 0
        %6392 = vmatpush1.bf16.msra.mxu0 0
        %6393 = vmatprep.subr.bf16.mxu0 0
        %6394 = vmatpush1.bf16.msra.mxu0 0
        %6395 = vmatprep.subr.bf16.mxu0 0
        %6396 = vmatpush1.bf16.msra.mxu0 0
        %6397 = vmatprep.subr.bf16.mxu0 0
        %6398 = vmatpush1.bf16.msra.mxu0 0
        %6399 = vmatprep.subr.bf16.mxu0 0
        %6400 = vmatpush1.bf16.msra.mxu0 0
        %6401 = vmatprep.subr.bf16.mxu0 0
        %6402 = vmatpush1.bf16.msra.mxu0 0
        %6403 = vmatprep.subr.bf16.mxu0 0
        %6404 = vmatpush1.bf16.msra.mxu0 0
        %6405 = vmatprep.subr.bf16.mxu0 0
        %6406 = vmatpush1.bf16.msra.mxu0 0
        %6407 = vmatprep.mubr.bf16.mxu0 0
        %6408 = vmatmul.mubr.bf16.gmra.mrb[0].mxu0 %v2478
        %v6409 = vpop.f32.mrb[0].mxu0
        %v6410 = vadd.f32 0.0, %v6409
        %v6411 = vpop.f32.mrb[0].mxu0
        %v6412 = vpop.f32.mrb[0].mxu0
        %v6413 = vadd.f32 0.0, %v6412
        %v6414 = vpop.f32.mrb[0].mxu0
        %6415 = vdwg.mxu0
        %6416 = vmatprep.subr.bf16.mxu0 0
        %6417 = vmatpush1.bf16.msra.mxu0 %v3578
        %6418 = vmatprep.subr.bf16.mxu0 0
        %6419 = vmatpush1.bf16.msra.mxu0 %v3579
        %6420 = vmatprep.subr.bf16.mxu0 0
        %6421 = vmatpush1.bf16.msra.mxu0 0
        %6422 = vmatprep.subr.bf16.mxu0 0
        %6423 = vmatpush1.bf16.msra.mxu0 0
        %6424 = vmatprep.subr.bf16.mxu0 0
        %6425 = vmatpush1.bf16.msra.mxu0 0
        %6426 = vmatprep.subr.bf16.mxu0 0
        %6427 = vmatpush1.bf16.msra.mxu0 0
        %6428 = vmatprep.subr.bf16.mxu0 0
        %6429 = vmatpush1.bf16.msra.mxu0 0
        %6430 = vmatprep.subr.bf16.mxu0 0
        %6431 = vmatpush1.bf16.msra.mxu0 0
        %6432 = vmatprep.subr.bf16.mxu0 0
        %6433 = vmatpush1.bf16.msra.mxu0 0
        %6434 = vmatprep.subr.bf16.mxu0 0
        %6435 = vmatpush1.bf16.msra.mxu0 0
        %6436 = vmatprep.subr.bf16.mxu0 0
        %6437 = vmatpush1.bf16.msra.mxu0 0
        %6438 = vmatprep.subr.bf16.mxu0 0
        %6439 = vmatpush1.bf16.msra.mxu0 0
        %6440 = vmatprep.subr.bf16.mxu0 0
        %6441 = vmatpush1.bf16.msra.mxu0 0
        %6442 = vmatprep.subr.bf16.mxu0 0
        %6443 = vmatpush1.bf16.msra.mxu0 0
        %6444 = vmatprep.subr.bf16.mxu0 0
        %6445 = vmatpush1.bf16.msra.mxu0 0
        %6446 = vmatprep.subr.bf16.mxu0 0
        %6447 = vmatpush1.bf16.msra.mxu0 0
        %6448 = vmatprep.mubr.bf16.mxu0 0
        %6449 = vmatmul.mubr.bf16.gmra.mrb[0].mxu0 %v5849
        %v6450 = vpop.f32.mrb[0].mxu0
        %v6451 = vadd.f32 %v3568, %v6450
        %v6452 = vpop.f32.mrb[0].mxu0
        %v6453 = vpop.f32.mrb[0].mxu0
        %v6454 = vadd.f32 %v3568, %v6453
        %v6455 = vpop.f32.mrb[0].mxu0
        %6456 = vdwg.mxu0
        %v6457 = vmax.f32 %v6451, 0.0
        %v6458 = vmax.f32 %v6454, 0.0
        %v6459 = vpack.c.bf16 %v6413, %v6410
        %6460 = vmatprep.subr.bf16.mxu0 0
        %6461 = vmatpush1.bf16.msra.mxu0 %v3681
        %6462 = vmatprep.subr.bf16.mxu0 0
        %6463 = vmatpush1.bf16.msra.mxu0 %v3682
        %6464 = vmatprep.subr.bf16.mxu0 0
        %6465 = vmatpush1.bf16.msra.mxu0 %v3683
        %6466 = vmatprep.subr.bf16.mxu0 0
        %6467 = vmatpush1.bf16.msra.mxu0 %v3684
        %6468 = vmatprep.subr.bf16.mxu0 0
        %6469 = vmatpush1.bf16.msra.mxu0 %v3685
        %6470 = vmatprep.subr.bf16.mxu0 0
        %6471 = vmatpush1.bf16.msra.mxu0 %v3686
        %6472 = vmatprep.subr.bf16.mxu0 0
        %6473 = vmatpush1.bf16.msra.mxu0 %v3687
        %6474 = vmatprep.subr.bf16.mxu0 0
        %6475 = vmatpush1.bf16.msra.mxu0 %v3688
        %6476 = vmatprep.subr.bf16.mxu0 0
        %6477 = vmatpush1.bf16.msra.mxu0 0
        %6478 = vmatprep.subr.bf16.mxu0 0
        %6479 = vmatpush1.bf16.msra.mxu0 0
        %6480 = vmatprep.subr.bf16.mxu0 0
        %6481 = vmatpush1.bf16.msra.mxu0 0
        %6482 = vmatprep.subr.bf16.mxu0 0
        %6483 = vmatpush1.bf16.msra.mxu0 0
        %6484 = vmatprep.subr.bf16.mxu0 0
        %6485 = vmatpush1.bf16.msra.mxu0 0
        %6486 = vmatprep.subr.bf16.mxu0 0
        %6487 = vmatpush1.bf16.msra.mxu0 0
        %6488 = vmatprep.subr.bf16.mxu0 0
        %6489 = vmatpush1.bf16.msra.mxu0 0
        %6490 = vmatprep.subr.bf16.mxu0 0
        %6491 = vmatpush1.bf16.msra.mxu0 0
        %6492 = vmatprep.mubr.bf16.mxu0 0
        %6493 = vmatmul.mubr.bf16.gmra.mrb[0].mxu0 %v6459
        %v6494 = vpop.f32.mrb[0].mxu0
        %v6495 = vadd.f32 %v3647, %v6494
        %v6496 = vpop.f32.mrb[0].mxu0
        %v6497 = vpop.f32.mrb[0].mxu0
        %v6498 = vadd.f32 %v3647, %v6497
        %v6499 = vpop.f32.mrb[0].mxu0
        %6500 = vdwg.mxu0
        %v6501 = vmax.f32 %v6495, 0.0
        %v6502 = vmax.f32 %v6498, 0.0
        %v6503 = vpack.c.bf16 %v6502, %v6501
        %v6505 = vsel %vm1580, %v6503, 0
        %6507 = vmatprep.subr.bf16.mxu0 %v3756
        %6508 = vmatpush1.bf16.msra.mxu0 %v3755
        %6509 = vmatprep.subr.bf16.mxu0 0
        %6510 = vmatpush1.bf16.msra.mxu0 0
        %6511 = vmatprep.subr.bf16.mxu0 0
        %6512 = vmatpush1.bf16.msra.mxu0 0
        %6513 = vmatprep.subr.bf16.mxu0 0
        %6514 = vmatpush1.bf16.msra.mxu0 0
        %6515 = vmatprep.subr.bf16.mxu0 0
        %6516 = vmatpush1.bf16.msra.mxu0 0
        %6517 = vmatprep.subr.bf16.mxu0 0
        %6518 = vmatpush1.bf16.msra.mxu0 0
        %6519 = vmatprep.subr.bf16.mxu0 0
        %6520 = vmatpush1.bf16.msra.mxu0 0
        %6521 = vmatprep.subr.bf16.mxu0 0
        %6522 = vmatpush1.bf16.msra.mxu0 0
        %6523 = vmatprep.subr.bf16.mxu0 0
        %6524 = vmatpush1.bf16.msra.mxu0 0
        %6525 = vmatprep.subr.bf16.mxu0 0
        %6526 = vmatpush1.bf16.msra.mxu0 0
        %6527 = vmatprep.subr.bf16.mxu0 0
        %6528 = vmatpush1.bf16.msra.mxu0 0
        %6529 = vmatprep.subr.bf16.mxu0 0
        %6530 = vmatpush1.bf16.msra.mxu0 0
        %6531 = vmatprep.subr.bf16.mxu0 0
        %6532 = vmatpush1.bf16.msra.mxu0 0
        %6533 = vmatprep.subr.bf16.mxu0 0
        %6534 = vmatpush1.bf16.msra.mxu0 0
        %6535 = vmatprep.subr.bf16.mxu0 0
        %6536 = vmatpush1.bf16.msra.mxu0 0
        %6537 = vmatprep.subr.bf16.mxu0 0
        %6538 = vmatpush1.bf16.msra.mxu0 0
        %6539 = vmatprep.mubr.bf16.mxu0 0
        %6540 = vmatmul.mubr.bf16.gmra.mrb[0].mxu0 %v6505
        %v6541 = vpop.f32.mrb[0].mxu0
        %v6542 = vadd.f32 0.0, %v6541
        %v6543 = vpop.f32.mrb[0].mxu0
        %v6544 = vadd.f32 0.0, %v6543
        %v6545 = vpop.f32.mrb[0].mxu0
        %v6546 = vadd.f32 0.0, %v6545
        %v6547 = vpop.f32.mrb[0].mxu0
        %v6548 = vadd.f32 0.0, %v6547
        %6549 = vdwg.mxu0
        %v6550 = vpack.c.bf16 %v6546, %v6542
        %v6552 = vsel %vm1633, %v6550, 0
        %6554 = vmatprep.subr.bf16.mxu0 0
        %6555 = vmatpush1.bf16.msra.mxu0 %v6552
        %6556 = vmatprep.subr.bf16.mxu0 0
        %6557 = vmatpush1.bf16.msra.mxu0 0
        %6558 = vmatprep.subr.bf16.mxu0 0
        %6559 = vmatpush1.bf16.msra.mxu0 0
        %6560 = vmatprep.subr.bf16.mxu0 0
        %6561 = vmatpush1.bf16.msra.mxu0 0
        %6562 = vmatprep.subr.bf16.mxu0 0
        %6563 = vmatpush1.bf16.msra.mxu0 0
        %6564 = vmatprep.subr.bf16.mxu0 0
        %6565 = vmatpush1.bf16.msra.mxu0 0
        %6566 = vmatprep.subr.bf16.mxu0 0
        %6567 = vmatpush1.bf16.msra.mxu0 0
        %6568 = vmatprep.subr.bf16.mxu0 0
        %6569 = vmatpush1.bf16.msra.mxu0 0
        %6570 = vmatprep.subr.bf16.mxu0 0
        %6571 = vmatpush1.bf16.msra.mxu0 0
        %6572 = vmatprep.subr.bf16.mxu0 0
        %6573 = vmatpush1.bf16.msra.mxu0 0
        %6574 = vmatprep.subr.bf16.mxu0 0
        %6575 = vmatpush1.bf16.msra.mxu0 0
        %6576 = vmatprep.subr.bf16.mxu0 0
        %6577 = vmatpush1.bf16.msra.mxu0 0
        %6578 = vmatprep.subr.bf16.mxu0 0
        %6579 = vmatpush1.bf16.msra.mxu0 0
        %6580 = vmatprep.subr.bf16.mxu0 0
        %6581 = vmatpush1.bf16.msra.mxu0 0
        %6582 = vmatprep.subr.bf16.mxu0 0
        %6583 = vmatpush1.bf16.msra.mxu0 0
        %6584 = vmatprep.subr.bf16.mxu0 0
        %6585 = vmatpush1.bf16.msra.mxu0 0
        %6586 = vmatprep.mubr.bf16.mxu0 0
        %6587 = vmatmul.mubr.bf16.gmra.mrb[0].mxu0 %v3808
        %v6588 = vpop.f32.mrb[0].mxu0
        %v6589 = vadd.f32 0.0, %v6588
        %v6590 = vpop.f32.mrb[0].mxu0
        %v6591 = vpop.f32.mrb[0].mxu0
        %v6592 = vadd.f32 0.0, %v6591
        %v6593 = vpop.f32.mrb[0].mxu0
        %6594 = vdwg.mxu0
        %v6595 = vpack.c.bf16 %v6548, %v6544
        %v6597 = vsel %vm1633, %v6595, 0
        %6599 = vmatprep.subr.bf16.mxu0 0
        %6600 = vmatpush1.bf16.msra.mxu0 %v6597
        %6601 = vmatprep.subr.bf16.mxu0 0
        %6602 = vmatpush1.bf16.msra.mxu0 0
        %6603 = vmatprep.subr.bf16.mxu0 0
        %6604 = vmatpush1.bf16.msra.mxu0 0
        %6605 = vmatprep.subr.bf16.mxu0 0
        %6606 = vmatpush1.bf16.msra.mxu0 0
        %6607 = vmatprep.subr.bf16.mxu0 0
        %6608 = vmatpush1.bf16.msra.mxu0 0
        %6609 = vmatprep.subr.bf16.mxu0 0
        %6610 = vmatpush1.bf16.msra.mxu0 0
        %6611 = vmatprep.subr.bf16.mxu0 0
        %6612 = vmatpush1.bf16.msra.mxu0 0
        %6613 = vmatprep.subr.bf16.mxu0 0
        %6614 = vmatpush1.bf16.msra.mxu0 0
        %6615 = vmatprep.subr.bf16.mxu0 0
        %6616 = vmatpush1.bf16.msra.mxu0 0
        %6617 = vmatprep.subr.bf16.mxu0 0
        %6618 = vmatpush1.bf16.msra.mxu0 0
        %6619 = vmatprep.subr.bf16.mxu0 0
        %6620 = vmatpush1.bf16.msra.mxu0 0
        %6621 = vmatprep.subr.bf16.mxu0 0
        %6622 = vmatpush1.bf16.msra.mxu0 0
        %6623 = vmatprep.subr.bf16.mxu0 0
        %6624 = vmatpush1.bf16.msra.mxu0 0
        %6625 = vmatprep.subr.bf16.mxu0 0
        %6626 = vmatpush1.bf16.msra.mxu0 0
        %6627 = vmatprep.subr.bf16.mxu0 0
        %6628 = vmatpush1.bf16.msra.mxu0 0
        %6629 = vmatprep.subr.bf16.mxu0 0
        %6630 = vmatpush1.bf16.msra.mxu0 0
        %6631 = vmatprep.mubr.bf16.mxu0 0
        %6632 = vmatmul.mubr.bf16.gmra.mrb[0].mxu0 %v3857
        %v6633 = vpop.f32.mrb[0].mxu0
        %v6634 = vadd.f32 0.0, %v6633
        %v6635 = vpop.f32.mrb[0].mxu0
        %v6636 = vpop.f32.mrb[0].mxu0
        %v6637 = vadd.f32 0.0, %v6636
        %v6638 = vpop.f32.mrb[0].mxu0
        %6639 = vdwg.mxu0
        %v6640 = vadd.f32 %v6589, %v6634
        %v6641 = vadd.f32 %v6592, %v6637
        %v6642 = vpack.c.bf16 %v4796, %v4795
        %v6644 = vsel %vm1580, %v6642, 0
        %6646 = vmatprep.subr.bf16.mxu0 0
        %6647 = vmatpush1.bf16.msra.mxu0 %v3912
        %6648 = vmatprep.subr.bf16.mxu0 0
        %6649 = vmatpush1.bf16.msra.mxu0 0
        %6650 = vmatprep.subr.bf16.mxu0 0
        %6651 = vmatpush1.bf16.msra.mxu0 0
        %6652 = vmatprep.subr.bf16.mxu0 0
        %6653 = vmatpush1.bf16.msra.mxu0 0
        %6654 = vmatprep.subr.bf16.mxu0 0
        %6655 = vmatpush1.bf16.msra.mxu0 0
        %6656 = vmatprep.subr.bf16.mxu0 0
        %6657 = vmatpush1.bf16.msra.mxu0 0
        %6658 = vmatprep.subr.bf16.mxu0 0
        %6659 = vmatpush1.bf16.msra.mxu0 0
        %6660 = vmatprep.subr.bf16.mxu0 0
        %6661 = vmatpush1.bf16.msra.mxu0 0
        %6662 = vmatprep.subr.bf16.mxu0 0
        %6663 = vmatpush1.bf16.msra.mxu0 0
        %6664 = vmatprep.subr.bf16.mxu0 0
        %6665 = vmatpush1.bf16.msra.mxu0 0
        %6666 = vmatprep.subr.bf16.mxu0 0
        %6667 = vmatpush1.bf16.msra.mxu0 0
        %6668 = vmatprep.subr.bf16.mxu0 0
        %6669 = vmatpush1.bf16.msra.mxu0 0
        %6670 = vmatprep.subr.bf16.mxu0 0
        %6671 = vmatpush1.bf16.msra.mxu0 0
        %6672 = vmatprep.subr.bf16.mxu0 0
        %6673 = vmatpush1.bf16.msra.mxu0 0
        %6674 = vmatprep.subr.bf16.mxu0 0
        %6675 = vmatpush1.bf16.msra.mxu0 0
        %6676 = vmatprep.subr.bf16.mxu0 0
        %6677 = vmatpush1.bf16.msra.mxu0 0
        %6678 = vmatprep.mubr.bf16.mxu0 0
        %6679 = vmatmul.mubr.bf16.gmra.mrb[0].mxu0 %v6644
        %v6680 = vpop.f32.mrb[0].mxu0
        %v6681 = vadd.f32 0.0, %v6680
        %v6682 = vpop.f32.mrb[0].mxu0
        %v6683 = vpop.f32.mrb[0].mxu0
        %v6684 = vadd.f32 0.0, %v6683
        %v6685 = vpop.f32.mrb[0].mxu0
        %6686 = vdwg.mxu0
        %v6687 = vadd.f32 %v6640, %v6681
        %v6688 = vadd.f32 %v6641, %v6684
        %v6689 = vadd.f32 %v6687, %v3965
        %v6690 = vadd.f32 %v6688, %v3965
        %vm6691 = vcmp.ge.f32.partialorder %v6689, 0.0
        %vm6692 = vcmp.ge.f32.partialorder %v6690, 0.0
        %v6693 = vmul.f32 %v6689, 0.01
        %v6694 = vmul.f32 %v6690, 0.01
        %v6695 = vsel %vm6691, %v6689, %v6693
        %v6696 = vsel %vm6692, %v6690, %v6694
        %v6697 = vpack.c.bf16 %v6696, %v6695
        %v6699 = vsel %vm1832, %v6697, 0
        %6701 = vmatprep.subr.bf16.mxu0 0
        %6702 = vmatpush1.bf16.msra.mxu0 %v4000
        %6703 = vmatprep.subr.bf16.mxu0 0
        %6704 = vmatpush1.bf16.msra.mxu0 %v4001
        %6705 = vmatprep.subr.bf16.mxu0 0
        %6706 = vmatpush1.bf16.msra.mxu0 %v4002
        %6707 = vmatprep.subr.bf16.mxu0 0
        %6708 = vmatpush1.bf16.msra.mxu0 %v4003
        %6709 = vmatprep.subr.bf16.mxu0 0
        %6710 = vmatpush1.bf16.msra.mxu0 0
        %6711 = vmatprep.subr.bf16.mxu0 0
        %6712 = vmatpush1.bf16.msra.mxu0 0
        %6713 = vmatprep.subr.bf16.mxu0 0
        %6714 = vmatpush1.bf16.msra.mxu0 0
        %6715 = vmatprep.subr.bf16.mxu0 0
        %6716 = vmatpush1.bf16.msra.mxu0 0
        %6717 = vmatprep.subr.bf16.mxu0 0
        %6718 = vmatpush1.bf16.msra.mxu0 0
        %6719 = vmatprep.subr.bf16.mxu0 0
        %6720 = vmatpush1.bf16.msra.mxu0 0
        %6721 = vmatprep.subr.bf16.mxu0 0
        %6722 = vmatpush1.bf16.msra.mxu0 0
        %6723 = vmatprep.subr.bf16.mxu0 0
        %6724 = vmatpush1.bf16.msra.mxu0 0
        %6725 = vmatprep.subr.bf16.mxu0 0
        %6726 = vmatpush1.bf16.msra.mxu0 0
        %6727 = vmatprep.subr.bf16.mxu0 0
        %6728 = vmatpush1.bf16.msra.mxu0 0
        %6729 = vmatprep.subr.bf16.mxu0 0
        %6730 = vmatpush1.bf16.msra.mxu0 0
        %6731 = vmatprep.subr.bf16.mxu0 0
        %6732 = vmatpush1.bf16.msra.mxu0 0
        %6733 = vmatprep.mubr.bf16.mxu0 0
        %6734 = vmatmul.mubr.bf16.gmra.mrb[0].mxu0 %v6699
        %v6735 = vpop.f32.mrb[0].mxu0
        %v6736 = vadd.f32 0.0, %v6735
        %v6737 = vpop.f32.mrb[0].mxu0
        %v6738 = vpop.f32.mrb[0].mxu0
        %v6739 = vadd.f32 0.0, %v6738
        %v6740 = vpop.f32.mrb[0].mxu0
        %6741 = vdwg.mxu0
        %v6744 = vcombine.high %v6736, %v6736
        %v6746 = vunpack.c.l.s4 1966171168
        %v6747 = vunpack.c.0.s8 %v6746
        %v6748 = vlaneseq
        %v6749 = vshrl.u32 %v6748, 7
        %v6750 = vsub.s32 %v6747, %v6749
        %v6751 = vrot.slane %v6736, %v6750
        %v6753 = vunpack.c.l.s4 1966171168
        %v6754 = vunpack.c.0.s8 %v6753
        %v6755 = vlaneseq
        %v6756 = vshrl.u32 %v6755, 7
        %v6757 = vsub.s32 %v6754, %v6756
        %v6758 = vrot.slane %v6744, %v6757
        %v6759 = vcombine.high %v6751, %v6751
        %v6760 = vcombine.high %v6758, %v6758
        %v6762 = vunpack.c.l.s4 1966171168
        %v6763 = vunpack.c.0.s8 %v6762
        %v6764 = vlaneseq
        %v6765 = vshrl.u32 %v6764, 7
        %v6766 = vsub.s32 %v6763, %v6765
        %v6767 = vrot.slane %v6751, %v6766
        %v6769 = vunpack.c.l.s4 1966171168
        %v6770 = vunpack.c.0.s8 %v6769
        %v6771 = vlaneseq
        %v6772 = vshrl.u32 %v6771, 7
        %v6773 = vsub.s32 %v6770, %v6772
        %v6774 = vrot.slane %v6758, %v6773
        %v6776 = vunpack.c.l.s4 1966171168
        %v6777 = vunpack.c.0.s8 %v6776
        %v6778 = vlaneseq
        %v6779 = vshrl.u32 %v6778, 7
        %v6780 = vsub.s32 %v6777, %v6779
        %v6781 = vrot.slane %v6759, %v6780
        %v6783 = vunpack.c.l.s4 1966171168
        %v6784 = vunpack.c.0.s8 %v6783
        %v6785 = vlaneseq
        %v6786 = vshrl.u32 %v6785, 7
        %v6787 = vsub.s32 %v6784, %v6786
        %v6788 = vrot.slane %v6760, %v6787
        %v6789 = vcombine.high %v6767, %v6767
        %v6790 = vcombine.high %v6774, %v6774
        %v6791 = vcombine.high %v6781, %v6781
        %v6792 = vcombine.high %v6788, %v6788
        %v6794 = vunpack.c.l.s4 1966171168
        %v6795 = vunpack.c.0.s8 %v6794
        %v6796 = vlaneseq
        %v6797 = vshrl.u32 %v6796, 7
        %v6798 = vsub.s32 %v6795, %v6797
        %v6799 = vrot.slane %v6739, %v6798
        %v6800 = vcombine.high %v6799, %v6799
        %v6802 = vunpack.c.l.s4 1966171168
        %v6803 = vunpack.c.0.s8 %v6802
        %v6804 = vlaneseq
        %v6805 = vshrl.u32 %v6804, 7
        %v6806 = vsub.s32 %v6803, %v6805
        %v6807 = vrot.slane %v6799, %v6806
        %v6809 = vunpack.c.l.s4 1966171168
        %v6810 = vunpack.c.0.s8 %v6809
        %v6811 = vlaneseq
        %v6812 = vshrl.u32 %v6811, 7
        %v6813 = vsub.s32 %v6810, %v6812
        %v6814 = vrot.slane %v6800, %v6813
        %v6815 = vcombine.high %v6807, %v6807
        %v6816 = vcombine.high %v6814, %v6814
        %v6817 = vlaneseq
        %v6818 = vshrl.u32 %v6817, 7
        %v6819 = vsub.s32 0, %v6818
        %v6820 = vrot.slane %v6767, %v6819
        %v6821 = vlaneseq
        %v6822 = vshrl.u32 %v6821, 7
        %v6823 = vsub.s32 0, %v6822
        %v6824 = vrot.slane %v6781, %v6823
        %v6825 = vlaneseq
        %v6826 = vshrl.u32 %v6825, 7
        %v6827 = vsub.s32 0, %v6826
        %v6828 = vrot.slane %v6789, %v6827
        %v6829 = vlaneseq
        %v6830 = vshrl.u32 %v6829, 7
        %v6831 = vsub.s32 0, %v6830
        %v6832 = vrot.slane %v6791, %v6831
        %v6833 = vlaneseq
        %v6834 = vshrl.u32 %v6833, 7
        %v6835 = vsub.s32 0, %v6834
        %v6836 = vrot.slane %v6774, %v6835
        %v6837 = vlaneseq
        %v6838 = vshrl.u32 %v6837, 7
        %v6839 = vsub.s32 0, %v6838
        %v6840 = vrot.slane %v6788, %v6839
        %v6841 = vlaneseq
        %v6842 = vshrl.u32 %v6841, 7
        %v6843 = vsub.s32 0, %v6842
        %v6844 = vrot.slane %v6790, %v6843
        %v6845 = vlaneseq
        %v6846 = vshrl.u32 %v6845, 7
        %v6847 = vsub.s32 0, %v6846
        %v6848 = vrot.slane %v6792, %v6847
        %v6849 = vlaneseq
        %v6850 = vshrl.u32 %v6849, 7
        %v6851 = vsub.s32 0, %v6850
        %v6852 = vrot.slane %v6807, %v6851
        %v6853 = vlaneseq
        %v6854 = vshrl.u32 %v6853, 7
        %v6855 = vsub.s32 0, %v6854
        %v6856 = vrot.slane %v6814, %v6855
        %v6857 = vlaneseq
        %v6858 = vshrl.u32 %v6857, 7
        %v6859 = vsub.s32 0, %v6858
        %v6860 = vrot.slane %v6815, %v6859
        %v6861 = vlaneseq
        %v6862 = vshrl.u32 %v6861, 7
        %v6863 = vsub.s32 0, %v6862
        %v6864 = vrot.slane %v6816, %v6863
        %v6877 = vsel %vm4307, %v6820, -1e+30
        %v6878 = vsel %vm4308, %v6820, -1e+30
        %v6879 = vsel %vm4309, %v6824, -1e+30
        %v6880 = vsel %vm4310, %v6824, -1e+30
        %v6881 = vsel %vm4311, %v6828, -1e+30
        %v6882 = vsel %vm4312, %v6828, -1e+30
        %v6883 = vsel %vm4313, %v6832, -1e+30
        %v6884 = vsel %vm4314, %v6832, -1e+30
        %v6885 = vsel %vm4315, %v6836, -1e+30
        %v6886 = vsel %vm4316, %v6836, -1e+30
        %v6887 = vsel %vm4317, %v6840, -1e+30
        %v6888 = vsel %vm4318, %v6840, -1e+30
        %v6889 = vsel %vm4319, %v6844, -1e+30
        %v6890 = vsel %vm4320, %v6844, -1e+30
        %v6891 = vsel %vm4321, %v6848, -1e+30
        %v6892 = vsel %vm4322, %v6848, -1e+30
        %v6893 = vsel %vm4323, %v6852, -1e+30
        %v6894 = vsel %vm4324, %v6852, -1e+30
        %v6895 = vsel %vm4325, %v6856, -1e+30
        %v6896 = vsel %vm4326, %v6856, -1e+30
        %v6897 = vsel %vm4327, %v6860, -1e+30
        %v6898 = vsel %vm4328, %v6860, -1e+30
        %v6899 = vsel %vm4329, %v6864, -1e+30
        %v6900 = vsel %vm4330, %v6864, -1e+30
        %v6901 = vsel %vm1501, %v6877, -inf
        %v6902 = vsel %vm1501, %v6879, -inf
        %v6903 = vsel %vm1501, %v6881, -inf
        %v6904 = vmax.f32 %v6901, %v6903
        %v6905 = vsel %vm1501, %v6883, -inf
        %v6906 = vmax.f32 %v6902, %v6905
        %v6907 = vsel %vm1501, %v6885, -inf
        %v6908 = vmax.f32 %v6904, %v6907
        %v6909 = vsel %vm1501, %v6887, -inf
        %v6910 = vmax.f32 %v6906, %v6909
        %v6911 = vsel %vm1501, %v6889, -inf
        %v6912 = vmax.f32 %v6908, %v6911
        %v6913 = vsel %vm1501, %v6891, -inf
        %v6914 = vmax.f32 %v6910, %v6913
        %v6915 = vsel %vm1501, %v6893, -inf
        %v6916 = vmax.f32 %v6912, %v6915
        %v6917 = vsel %vm1501, %v6895, -inf
        %v6918 = vmax.f32 %v6914, %v6917
        %v6919 = vsel %vm1501, %v6897, -inf
        %v6920 = vmax.f32 %v6916, %v6919
        %v6921 = vsel %vm1501, %v6899, -inf
        %v6922 = vmax.f32 %v6918, %v6921
        %v6923 = vmax.f32 %v6920, %v6922
        %v6924 = vsel %vm2392, %v6878, -inf
        %v6925 = vsel %vm2392, %v6880, -inf
        %v6926 = vsel %vm2392, %v6882, -inf
        %v6927 = vmax.f32 %v6924, %v6926
        %v6928 = vsel %vm2392, %v6884, -inf
        %v6929 = vmax.f32 %v6925, %v6928
        %v6930 = vsel %vm2392, %v6886, -inf
        %v6931 = vmax.f32 %v6927, %v6930
        %v6932 = vsel %vm2392, %v6888, -inf
        %v6933 = vmax.f32 %v6929, %v6932
        %v6934 = vsel %vm2392, %v6890, -inf
        %v6935 = vmax.f32 %v6931, %v6934
        %v6936 = vsel %vm2392, %v6892, -inf
        %v6937 = vmax.f32 %v6933, %v6936
        %v6938 = vsel %vm2392, %v6894, -inf
        %v6939 = vmax.f32 %v6935, %v6938
        %v6940 = vsel %vm2392, %v6896, -inf
        %v6941 = vmax.f32 %v6937, %v6940
        %v6942 = vsel %vm2392, %v6898, -inf
        %v6943 = vmax.f32 %v6939, %v6942
        %v6944 = vsel %vm2392, %v6900, -inf
        %v6945 = vmax.f32 %v6941, %v6944
        %v6946 = vmax.f32 %v6943, %v6945
        %v6947 = vpack.c.bf16 %v6946, %v6923
        %v6949 = vsel %vm1633, %v6947, 0
        %6951 = vmatprep.subr.bf16.mxu0 0
        %6952 = vmatpush1.bf16.msra.mxu0 %v6949
        %6953 = vmatprep.subr.bf16.mxu0 0
        %6954 = vmatpush1.bf16.msra.mxu0 0
        %6955 = vmatprep.subr.bf16.mxu0 0
        %6956 = vmatpush1.bf16.msra.mxu0 0
        %6957 = vmatprep.subr.bf16.mxu0 0
        %6958 = vmatpush1.bf16.msra.mxu0 0
        %6959 = vmatprep.subr.bf16.mxu0 0
        %6960 = vmatpush1.bf16.msra.mxu0 0
        %6961 = vmatprep.subr.bf16.mxu0 0
        %6962 = vmatpush1.bf16.msra.mxu0 0
        %6963 = vmatprep.subr.bf16.mxu0 0
        %6964 = vmatpush1.bf16.msra.mxu0 0
        %6965 = vmatprep.subr.bf16.mxu0 0
        %6966 = vmatpush1.bf16.msra.mxu0 0
        %6967 = vmatprep.subr.bf16.mxu0 0
        %6968 = vmatpush1.bf16.msra.mxu0 0
        %6969 = vmatprep.subr.bf16.mxu0 0
        %6970 = vmatpush1.bf16.msra.mxu0 0
        %6971 = vmatprep.subr.bf16.mxu0 0
        %6972 = vmatpush1.bf16.msra.mxu0 0
        %6973 = vmatprep.subr.bf16.mxu0 0
        %6974 = vmatpush1.bf16.msra.mxu0 0
        %6975 = vmatprep.subr.bf16.mxu0 0
        %6976 = vmatpush1.bf16.msra.mxu0 0
        %6977 = vmatprep.subr.bf16.mxu0 0
        %6978 = vmatpush1.bf16.msra.mxu0 0
        %6979 = vmatprep.subr.bf16.mxu0 0
        %6980 = vmatpush1.bf16.msra.mxu0 0
        %6981 = vmatprep.subr.bf16.mxu0 0
        %6982 = vmatpush1.bf16.msra.mxu0 0
        %6983 = vmatprep.mubr.bf16.mxu0 0
        %6984 = vmatmul.mubr.bf16.gmra.mrb[0].mxu0 %v3857
        %v6985 = vpop.f32.mrb[0].mxu0
        %v6986 = vadd.f32 0.0, %v6985
        %v6987 = vpop.f32.mrb[0].mxu0
        %v6988 = vpop.f32.mrb[0].mxu0
        %v6989 = vadd.f32 0.0, %v6988
        %v6990 = vpop.f32.mrb[0].mxu0
        %6991 = vdwg.mxu0
        %v6992 = vsub.f32 %v6736, %v6986
        %v6993 = vsub.f32 %v6739, %v6989
        %v6994 = vmul.f32 %v6992, 1.442695
        %v6995 = vpow.pop %v6994
        %v6996 = vmul.f32 %v6993, 1.442695
        %v6997 = vpow.pop %v6996
        %v6998 = vpack.c.bf16 %v6997, %v6995
        %v7000 = vsel %vm4518, %v6998, 0
        %7002 = vmatprep.subr.bf16.mxu0 0
        %7003 = vmatpush1.bf16.msra.mxu0 %v7000
        %7004 = vmatprep.subr.bf16.mxu0 0
        %7005 = vmatpush1.bf16.msra.mxu0 0
        %7006 = vmatprep.subr.bf16.mxu0 0
        %7007 = vmatpush1.bf16.msra.mxu0 0
        %7008 = vmatprep.subr.bf16.mxu0 0
        %7009 = vmatpush1.bf16.msra.mxu0 0
        %7010 = vmatprep.subr.bf16.mxu0 0
        %7011 = vmatpush1.bf16.msra.mxu0 0
        %7012 = vmatprep.subr.bf16.mxu0 0
        %7013 = vmatpush1.bf16.msra.mxu0 0
        %7014 = vmatprep.subr.bf16.mxu0 0
        %7015 = vmatpush1.bf16.msra.mxu0 0
        %7016 = vmatprep.subr.bf16.mxu0 0
        %7017 = vmatpush1.bf16.msra.mxu0 0
        %7018 = vmatprep.subr.bf16.mxu0 0
        %7019 = vmatpush1.bf16.msra.mxu0 0
        %7020 = vmatprep.subr.bf16.mxu0 0
        %7021 = vmatpush1.bf16.msra.mxu0 0
        %7022 = vmatprep.subr.bf16.mxu0 0
        %7023 = vmatpush1.bf16.msra.mxu0 0
        %7024 = vmatprep.subr.bf16.mxu0 0
        %7025 = vmatpush1.bf16.msra.mxu0 0
        %7026 = vmatprep.subr.bf16.mxu0 0
        %7027 = vmatpush1.bf16.msra.mxu0 0
        %7028 = vmatprep.subr.bf16.mxu0 0
        %7029 = vmatpush1.bf16.msra.mxu0 0
        %7030 = vmatprep.subr.bf16.mxu0 0
        %7031 = vmatpush1.bf16.msra.mxu0 0
        %7032 = vmatprep.subr.bf16.mxu0 0
        %7033 = vmatpush1.bf16.msra.mxu0 0
        %7034 = vmatprep.mubr.bf16.mxu0 0
        %7035 = vmatmul.mubr.bf16.gmra.mrb[0].mxu0 %v4516
        %v7036 = vpop.f32.mrb[0].mxu0
        %v7037 = vadd.f32 0.0, %v7036
        %v7038 = vpop.f32.mrb[0].mxu0
        %v7039 = vpop.f32.mrb[0].mxu0
        %v7040 = vadd.f32 0.0, %v7039
        %v7041 = vpop.f32.mrb[0].mxu0
        %7042 = vdwg.mxu0
        %v7043 = vpack.c.bf16 %v7040, %v7037
        %v7045 = vsel %vm1633, %v7043, 0
        %7047 = vmatprep.subr.bf16.mxu0 0
        %7048 = vmatpush1.bf16.msra.mxu0 %v7045
        %7049 = vmatprep.subr.bf16.mxu0 0
        %7050 = vmatpush1.bf16.msra.mxu0 0
        %7051 = vmatprep.subr.bf16.mxu0 0
        %7052 = vmatpush1.bf16.msra.mxu0 0
        %7053 = vmatprep.subr.bf16.mxu0 0
        %7054 = vmatpush1.bf16.msra.mxu0 0
        %7055 = vmatprep.subr.bf16.mxu0 0
        %7056 = vmatpush1.bf16.msra.mxu0 0
        %7057 = vmatprep.subr.bf16.mxu0 0
        %7058 = vmatpush1.bf16.msra.mxu0 0
        %7059 = vmatprep.subr.bf16.mxu0 0
        %7060 = vmatpush1.bf16.msra.mxu0 0
        %7061 = vmatprep.subr.bf16.mxu0 0
        %7062 = vmatpush1.bf16.msra.mxu0 0
        %7063 = vmatprep.subr.bf16.mxu0 0
        %7064 = vmatpush1.bf16.msra.mxu0 0
        %7065 = vmatprep.subr.bf16.mxu0 0
        %7066 = vmatpush1.bf16.msra.mxu0 0
        %7067 = vmatprep.subr.bf16.mxu0 0
        %7068 = vmatpush1.bf16.msra.mxu0 0
        %7069 = vmatprep.subr.bf16.mxu0 0
        %7070 = vmatpush1.bf16.msra.mxu0 0
        %7071 = vmatprep.subr.bf16.mxu0 0
        %7072 = vmatpush1.bf16.msra.mxu0 0
        %7073 = vmatprep.subr.bf16.mxu0 0
        %7074 = vmatpush1.bf16.msra.mxu0 0
        %7075 = vmatprep.subr.bf16.mxu0 0
        %7076 = vmatpush1.bf16.msra.mxu0 0
        %7077 = vmatprep.subr.bf16.mxu0 0
        %7078 = vmatpush1.bf16.msra.mxu0 0
        %7079 = vmatprep.mubr.bf16.mxu0 0
        %7080 = vmatmul.mubr.bf16.gmra.mrb[0].mxu0 %v3857
        %v7081 = vpop.f32.mrb[0].mxu0
        %v7082 = vadd.f32 0.0, %v7081
        %v7083 = vpop.f32.mrb[0].mxu0
        %v7084 = vpop.f32.mrb[0].mxu0
        %v7085 = vadd.f32 0.0, %v7084
        %v7086 = vpop.f32.mrb[0].mxu0
        %7087 = vdwg.mxu0
        %v7088 = vrcp.pop %v7082
        %v7089 = vrcp.pop %v7085
        %v7090 = vmul.f32 %v6995, %v7088
        %v7091 = vmul.f32 %v6997, %v7089
        %v7092 = vpack.c.bf16 %v7091, %v7090
        %v7094 = vsel %vm1501, %v7092, 0
        %7096 = vmatprep.subr.bf16.mxu0 0
        %7097 = vmatpush1.bf16.msra.mxu0 %v2576
        %7098 = vmatprep.subr.bf16.mxu0 0
        %7099 = vmatpush1.bf16.msra.mxu0 0
        %7100 = vmatprep.subr.bf16.mxu0 0
        %7101 = vmatpush1.bf16.msra.mxu0 0
        %7102 = vmatprep.subr.bf16.mxu0 0
        %7103 = vmatpush1.bf16.msra.mxu0 0
        %7104 = vmatprep.subr.bf16.mxu0 0
        %7105 = vmatpush1.bf16.msra.mxu0 0
        %7106 = vmatprep.subr.bf16.mxu0 0
        %7107 = vmatpush1.bf16.msra.mxu0 0
        %7108 = vmatprep.subr.bf16.mxu0 0
        %7109 = vmatpush1.bf16.msra.mxu0 0
        %7110 = vmatprep.subr.bf16.mxu0 0
        %7111 = vmatpush1.bf16.msra.mxu0 0
        %7112 = vmatprep.subr.bf16.mxu0 0
        %7113 = vmatpush1.bf16.msra.mxu0 0
        %7114 = vmatprep.subr.bf16.mxu0 0
        %7115 = vmatpush1.bf16.msra.mxu0 0
        %7116 = vmatprep.subr.bf16.mxu0 0
        %7117 = vmatpush1.bf16.msra.mxu0 0
        %7118 = vmatprep.subr.bf16.mxu0 0
        %7119 = vmatpush1.bf16.msra.mxu0 0
        %7120 = vmatprep.subr.bf16.mxu0 0
        %7121 = vmatpush1.bf16.msra.mxu0 0
        %7122 = vmatprep.subr.bf16.mxu0 0
        %7123 = vmatpush1.bf16.msra.mxu0 0
        %7124 = vmatprep.subr.bf16.mxu0 0
        %7125 = vmatpush1.bf16.msra.mxu0 0
        %7126 = vmatprep.subr.bf16.mxu0 0
        %7127 = vmatpush1.bf16.msra.mxu0 0
        %7128 = vmatprep.mubr.bf16.mxu0 0
        %7129 = vmatmul.mubr.bf16.gmra.mrb[0].mxu0 %v7094
        %v7130 = vpop.f32.mrb[0].mxu0
        %v7131 = vadd.f32 0.0, %v7130
        %v7132 = vpop.f32.mrb[0].mxu0
        %v7133 = vpop.f32.mrb[0].mxu0
        %v7134 = vadd.f32 0.0, %v7133
        %v7135 = vpop.f32.mrb[0].mxu0
        %7136 = vdwg.mxu0
        %7139 = vrot.lane.b32.xlu0 %v7131, 64
        %v7140 = vpop.permute.xlu0 %7139
        %7141 = vrot.lane.b32.xlu0 %v7134, 64
        %v7142 = vpop.permute.xlu0 %7141
        %v7145 = vmul.f32 %v6589, %v7140
        %v7146 = vmul.f32 %v6592, %v7142
        %v7147 = vpack.c.bf16 %v7146, %v7145
        %7149 = vrot.lane.b32.xlu0 %v7147, 64
        %v7150 = vpop.permute.xlu0 %7149
        %v7152 = vsel %vm4518, %v7150, 0
        %7154 = vmatprep.subr.bf16.mxu0 0
        %7155 = vmatpush1.bf16.msra.mxu0 %v7152
        %7156 = vmatprep.subr.bf16.mxu0 0
        %7157 = vmatpush1.bf16.msra.mxu0 0
        %7158 = vmatprep.subr.bf16.mxu0 0
        %7159 = vmatpush1.bf16.msra.mxu0 0
        %7160 = vmatprep.subr.bf16.mxu0 0
        %7161 = vmatpush1.bf16.msra.mxu0 0
        %7162 = vmatprep.subr.bf16.mxu0 0
        %7163 = vmatpush1.bf16.msra.mxu0 0
        %7164 = vmatprep.subr.bf16.mxu0 0
        %7165 = vmatpush1.bf16.msra.mxu0 0
        %7166 = vmatprep.subr.bf16.mxu0 0
        %7167 = vmatpush1.bf16.msra.mxu0 0
        %7168 = vmatprep.subr.bf16.mxu0 0
        %7169 = vmatpush1.bf16.msra.mxu0 0
        %7170 = vmatprep.subr.bf16.mxu0 0
        %7171 = vmatpush1.bf16.msra.mxu0 0
        %7172 = vmatprep.subr.bf16.mxu0 0
        %7173 = vmatpush1.bf16.msra.mxu0 0
        %7174 = vmatprep.subr.bf16.mxu0 0
        %7175 = vmatpush1.bf16.msra.mxu0 0
        %7176 = vmatprep.subr.bf16.mxu0 0
        %7177 = vmatpush1.bf16.msra.mxu0 0
        %7178 = vmatprep.subr.bf16.mxu0 0
        %7179 = vmatpush1.bf16.msra.mxu0 0
        %7180 = vmatprep.subr.bf16.mxu0 0
        %7181 = vmatpush1.bf16.msra.mxu0 0
        %7182 = vmatprep.subr.bf16.mxu0 0
        %7183 = vmatpush1.bf16.msra.mxu0 0
        %7184 = vmatprep.subr.bf16.mxu0 0
        %7185 = vmatpush1.bf16.msra.mxu0 0
        %7186 = vmatprep.mubr.bf16.mxu0 0
        %7187 = vmatmul.mubr.bf16.gmra.mrb[0].mxu0 %v4516
        %v7188 = vpop.f32.mrb[0].mxu0
        %v7189 = vadd.f32 0.0, %v7188
        %v7190 = vpop.f32.mrb[0].mxu0
        %v7191 = vpop.f32.mrb[0].mxu0
        %v7192 = vadd.f32 0.0, %v7191
        %v7193 = vpop.f32.mrb[0].mxu0
        %7194 = vdwg.mxu0
        %v7195 = vpack.c.bf16 %v7192, %v7189
        %v7197 = vsel %vm1832, %v7195, 0
        %7199 = vmatprep.subr.bf16.mxu0 0
        %7200 = vmatpush1.bf16.msra.mxu0 %v4829
        %7201 = vmatprep.subr.bf16.mxu0 0
        %7202 = vmatpush1.bf16.msra.mxu0 %v4830
        %7203 = vmatprep.subr.bf16.mxu0 0
        %7204 = vmatpush1.bf16.msra.mxu0 %v4831
        %7205 = vmatprep.subr.bf16.mxu0 0
        %7206 = vmatpush1.bf16.msra.mxu0 %v4832
        %7207 = vmatprep.subr.bf16.mxu0 0
        %7208 = vmatpush1.bf16.msra.mxu0 0
        %7209 = vmatprep.subr.bf16.mxu0 0
        %7210 = vmatpush1.bf16.msra.mxu0 0
        %7211 = vmatprep.subr.bf16.mxu0 0
        %7212 = vmatpush1.bf16.msra.mxu0 0
        %7213 = vmatprep.subr.bf16.mxu0 0
        %7214 = vmatpush1.bf16.msra.mxu0 0
        %7215 = vmatprep.subr.bf16.mxu0 0
        %7216 = vmatpush1.bf16.msra.mxu0 0
        %7217 = vmatprep.subr.bf16.mxu0 0
        %7218 = vmatpush1.bf16.msra.mxu0 0
        %7219 = vmatprep.subr.bf16.mxu0 0
        %7220 = vmatpush1.bf16.msra.mxu0 0
        %7221 = vmatprep.subr.bf16.mxu0 0
        %7222 = vmatpush1.bf16.msra.mxu0 0
        %7223 = vmatprep.subr.bf16.mxu0 0
        %7224 = vmatpush1.bf16.msra.mxu0 0
        %7225 = vmatprep.subr.bf16.mxu0 0
        %7226 = vmatpush1.bf16.msra.mxu0 0
        %7227 = vmatprep.subr.bf16.mxu0 0
        %7228 = vmatpush1.bf16.msra.mxu0 0
        %7229 = vmatprep.subr.bf16.mxu0 0
        %7230 = vmatpush1.bf16.msra.mxu0 0
        %7231 = vmatprep.mubr.bf16.mxu0 0
        %7232 = vmatmul.mubr.bf16.gmra.mrb[0].mxu0 %v7197
        %v7233 = vpop.f32.mrb[0].mxu0
        %v7234 = vadd.f32 %v4811, %v7233
        %v7235 = vpop.f32.mrb[0].mxu0
        %v7236 = vpop.f32.mrb[0].mxu0
        %v7237 = vadd.f32 %v4811, %v7236
        %v7238 = vpop.f32.mrb[0].mxu0
        %7239 = vdwg.mxu0
        %v7240 = vmax.f32 %v7234, 0.0
        %v7241 = vmax.f32 %v7237, 0.0
        %v7242 = vadd.f32 %v6501, %v7240
        %v7243 = vadd.f32 %v6502, %v7241
        %7244 = vst.msk [vmem:[%s1365] sm:$0xff] %vm1580, %v6457
        %7245 = vst.msk [vmem:[%s1365 + $0x8] sm:$0xff] %vm1580, %v6458
        %7246 = vst.msk [vmem:[%s1422] sm:$0xff] %vm1580, %v7242
        %vm7247 = vcmask 123904
        %7248 = vst.msk [vmem:[%s1422 + $0x8] sm:$0x3] %vm7247, %v7243
        %v7249 = vlaneseq
        %v7250 = vshrl.u32 %v7249, 7
        %v7251 = vadd.s32 %v7250, 8
        %vm7252 = vcmp.ge.s32.totalorder %v7250, 4
        %vm7253 = vcmp.ge.s32.totalorder %v7251, 4
        %v7254 = vsel %vm7252, %v7242, -1e+30
        %v7255 = vsel %vm7253, %v7243, -1e+30
        %v7256 = vsel %vm1580, %v7254, -inf
        %v7257 = vsel %vm7247, %v7255, -inf
        %v7258 = vmax.f32 %v7256, %v7257
        %v7259 = vrot.slane %v7258, 4
        %v7260 = vmax.f32 %v7258, %v7259
        %v7261 = vrot.slane %v7260, 2
        %v7262 = vmax.f32 %v7260, %v7261
        %v7263 = vrot.slane %v7262, 1
        %v7264 = vmax.f32 %v7262, %v7263
        %v7265 = vld [vmem:[%s69] sm:$0xf]
        %v7266 = vld [vmem:[%s69 + $0x4] sm:$0xf]
        %v7267 = vpack.c.bf16 %v7264, %v7264
        %v7268 = vld [vmem:[%s71] sm:$0x1]
        %v7271 = vunpack.c.l.b16 %v7265
        %v7272 = vunpack.c.l.b16 %v7266
        %v7273 = vpack.c.b16 %v7272, %v7271
        %v7276 = vsel %vm1580, %v7267, 0
        %7278 = vmatprep.subr.bf16.mxu0 0
        %7279 = vmatpush1.bf16.msra.mxu0 %v7273
        %7280 = vmatprep.subr.bf16.mxu0 0
        %7281 = vmatpush1.bf16.msra.mxu0 0
        %7282 = vmatprep.subr.bf16.mxu0 0
        %7283 = vmatpush1.bf16.msra.mxu0 0
        %7284 = vmatprep.subr.bf16.mxu0 0
        %7285 = vmatpush1.bf16.msra.mxu0 0
        %7286 = vmatprep.subr.bf16.mxu0 0
        %7287 = vmatpush1.bf16.msra.mxu0 0
        %7288 = vmatprep.subr.bf16.mxu0 0
        %7289 = vmatpush1.bf16.msra.mxu0 0
        %7290 = vmatprep.subr.bf16.mxu0 0
        %7291 = vmatpush1.bf16.msra.mxu0 0
        %7292 = vmatprep.subr.bf16.mxu0 0
        %7293 = vmatpush1.bf16.msra.mxu0 0
        %7294 = vmatprep.subr.bf16.mxu0 0
        %7295 = vmatpush1.bf16.msra.mxu0 0
        %7296 = vmatprep.subr.bf16.mxu0 0
        %7297 = vmatpush1.bf16.msra.mxu0 0
        %7298 = vmatprep.subr.bf16.mxu0 0
        %7299 = vmatpush1.bf16.msra.mxu0 0
        %7300 = vmatprep.subr.bf16.mxu0 0
        %7301 = vmatpush1.bf16.msra.mxu0 0
        %7302 = vmatprep.subr.bf16.mxu0 0
        %7303 = vmatpush1.bf16.msra.mxu0 0
        %7304 = vmatprep.subr.bf16.mxu0 0
        %7305 = vmatpush1.bf16.msra.mxu0 0
        %7306 = vmatprep.subr.bf16.mxu0 0
        %7307 = vmatpush1.bf16.msra.mxu0 0
        %7308 = vmatprep.subr.bf16.mxu0 0
        %7309 = vmatpush1.bf16.msra.mxu0 0
        %7310 = vmatprep.mubr.bf16.mxu0 0
        %7311 = vmatmul.mubr.bf16.gmra.mrb[0].mxu0 %v7276
        %v7312 = vpop.f32.mrb[0].mxu0
        %v7313 = vadd.f32 %v7268, %v7312
        %v7314 = vpop.f32.mrb[0].mxu0
        %v7315 = vpop.f32.mrb[0].mxu0
        %v7316 = vpop.f32.mrb[0].mxu0
        %7317 = vdwg.mxu0
        %v7318 = vmax.f32 %v7313, 0.0
        %v7319 = vld [vmem:[%s73] sm:$0xf]
        %v7320 = vld [vmem:[%s73 + $0x4] sm:$0xf]
        %v7321 = vpack.c.bf16 %v7318, %v7318
        %v7322 = vld [vmem:[%s75] sm:$0x1]
        %v7325 = vunpack.c.l.b16 %v7319
        %v7326 = vunpack.c.l.b16 %v7320
        %v7327 = vpack.c.b16 %v7326, %v7325
        %v7330 = vsel %vm1580, %v7321, 0
        %7332 = vmatprep.subr.bf16.mxu0 0
        %7333 = vmatpush1.bf16.msra.mxu0 %v7327
        %7334 = vmatprep.subr.bf16.mxu0 0
        %7335 = vmatpush1.bf16.msra.mxu0 0
        %7336 = vmatprep.subr.bf16.mxu0 0
        %7337 = vmatpush1.bf16.msra.mxu0 0
        %7338 = vmatprep.subr.bf16.mxu0 0
        %7339 = vmatpush1.bf16.msra.mxu0 0
        %7340 = vmatprep.subr.bf16.mxu0 0
        %7341 = vmatpush1.bf16.msra.mxu0 0
        %7342 = vmatprep.subr.bf16.mxu0 0
        %7343 = vmatpush1.bf16.msra.mxu0 0
        %7344 = vmatprep.subr.bf16.mxu0 0
        %7345 = vmatpush1.bf16.msra.mxu0 0
        %7346 = vmatprep.subr.bf16.mxu0 0
        %7347 = vmatpush1.bf16.msra.mxu0 0
        %7348 = vmatprep.subr.bf16.mxu0 0
        %7349 = vmatpush1.bf16.msra.mxu0 0
        %7350 = vmatprep.subr.bf16.mxu0 0
        %7351 = vmatpush1.bf16.msra.mxu0 0
        %7352 = vmatprep.subr.bf16.mxu0 0
        %7353 = vmatpush1.bf16.msra.mxu0 0
        %7354 = vmatprep.subr.bf16.mxu0 0
        %7355 = vmatpush1.bf16.msra.mxu0 0
        %7356 = vmatprep.subr.bf16.mxu0 0
        %7357 = vmatpush1.bf16.msra.mxu0 0
        %7358 = vmatprep.subr.bf16.mxu0 0
        %7359 = vmatpush1.bf16.msra.mxu0 0
        %7360 = vmatprep.subr.bf16.mxu0 0
        %7361 = vmatpush1.bf16.msra.mxu0 0
        %7362 = vmatprep.subr.bf16.mxu0 0
        %7363 = vmatpush1.bf16.msra.mxu0 0
        %7364 = vmatprep.mubr.bf16.mxu0 0
        %7365 = vmatmul.mubr.bf16.gmra.mrb[0].mxu0 %v7330
        %v7366 = vpop.f32.mrb[0].mxu0
        %v7367 = vadd.f32 %v7322, %v7366
        %v7368 = vpop.f32.mrb[0].mxu0
        %v7369 = vpop.f32.mrb[0].mxu0
        %v7370 = vpop.f32.mrb[0].mxu0
        %7371 = vdwg.mxu0
        %v7372 = vmax.f32 %v7367, 0.0
        %v7373 = vld [vmem:[%s77] sm:$0xf]
        %v7374 = vld [vmem:[%s77 + $0x4] sm:$0xf]
        %v7375 = vpack.c.bf16 %v7372, %v7372
        %v7376 = vld [vmem:[%s79] sm:$0x1]
        %v7379 = vunpack.c.l.b16 %v7373
        %v7380 = vunpack.c.l.b16 %v7374
        %v7381 = vpack.c.b16 %v7380, %v7379
        %v7384 = vsel %vm1580, %v7375, 0
        %7386 = vmatprep.subr.bf16.mxu0 0
        %7387 = vmatpush1.bf16.msra.mxu0 %v7381
        %7388 = vmatprep.subr.bf16.mxu0 0
        %7389 = vmatpush1.bf16.msra.mxu0 0
        %7390 = vmatprep.subr.bf16.mxu0 0
        %7391 = vmatpush1.bf16.msra.mxu0 0
        %7392 = vmatprep.subr.bf16.mxu0 0
        %7393 = vmatpush1.bf16.msra.mxu0 0
        %7394 = vmatprep.subr.bf16.mxu0 0
        %7395 = vmatpush1.bf16.msra.mxu0 0
        %7396 = vmatprep.subr.bf16.mxu0 0
        %7397 = vmatpush1.bf16.msra.mxu0 0
        %7398 = vmatprep.subr.bf16.mxu0 0
        %7399 = vmatpush1.bf16.msra.mxu0 0
        %7400 = vmatprep.subr.bf16.mxu0 0
        %7401 = vmatpush1.bf16.msra.mxu0 0
        %7402 = vmatprep.subr.bf16.mxu0 0
        %7403 = vmatpush1.bf16.msra.mxu0 0
        %7404 = vmatprep.subr.bf16.mxu0 0
        %7405 = vmatpush1.bf16.msra.mxu0 0
        %7406 = vmatprep.subr.bf16.mxu0 0
        %7407 = vmatpush1.bf16.msra.mxu0 0
        %7408 = vmatprep.subr.bf16.mxu0 0
        %7409 = vmatpush1.bf16.msra.mxu0 0
        %7410 = vmatprep.subr.bf16.mxu0 0
        %7411 = vmatpush1.bf16.msra.mxu0 0
        %7412 = vmatprep.subr.bf16.mxu0 0
        %7413 = vmatpush1.bf16.msra.mxu0 0
        %7414 = vmatprep.subr.bf16.mxu0 0
        %7415 = vmatpush1.bf16.msra.mxu0 0
        %7416 = vmatprep.subr.bf16.mxu0 0
        %7417 = vmatpush1.bf16.msra.mxu0 0
        %7418 = vmatprep.mubr.bf16.mxu0 0
        %7419 = vmatmul.mubr.bf16.gmra.mrb[0].mxu0 %v7384
        %v7420 = vpop.f32.mrb[0].mxu0
        %v7421 = vadd.f32 %v7376, %v7420
        %v7422 = vpop.f32.mrb[0].mxu0
        %v7423 = vpop.f32.mrb[0].mxu0
        %v7424 = vpop.f32.mrb[0].mxu0
        %7425 = vdwg.mxu0
        %vm7426 = vcmask 16384
        %7427 = vst.msk [vmem:[%s1425] sm:$0x1] %vm7426, %v7421
        %s7428 = sand.u32 %s988, 1
        %s7429 = scalar_lea.sflag [#allocation3], %s7428
        %s7430 = sand.u32 %s988, 1
        %s7431 = smul.addr %s7430, 16
        %s7432 = scalar_lea.vmem [#allocation2], %s7431
        %p7433 = scmp.lt.s32.totalorder %s100, 3
        %s7434 = scalar_select %p7433, %s100, 3
        %s7435 = smul.addr %s7434, 2
        %s7436 = smul.addr %s7435, 8
        %s7437 = scalar_lea.vmem %s83, %s7436
        %p7438 = scmp.lt.s32.totalorder %s100, 3
        %s7439 = scalar_select %p7438, %s100, 3
        %s7440 = scalar_lea.vmem %s85, %s7439
        // Predicated region
        $region181: #{gat_mlp_forward.1} parent=179 // pred_check
          %p7441 = pneg %p998
        $region182: #{gat_mlp_forward.1} parent=179 // pred_check_branch
          %7443 = sbr.rel (%p7441) target = $region184
        $region183: #{gat_mlp_forward.1} parent=179 // pred_region
          %s7445 = ssub.s32 256, 256
          %7446 = vsyncadd %s7429, %s7445
          %s7447 = smul.addr %s100, 2
          %s7448 = smul.addr %s7447, 128
          %s7449 = scalar_lea.hbm %s81, %s7448
          %s7450 = sshll.u32 %s7432, 4
          %s7451 = int_to_ptr.vmem [resolvable:$true] %s7450
          %7456 = dma.vmem_to_hbm [thread:$0]  %s7451, 256, %s7449, %s7429, 128, 128, 8
        $region184: #{gat_mlp_forward.1} parent=179 // pred_fallthru
          _
        // Predicated region
        $region185: #{gat_mlp_forward.1} parent=179 // pred_check
          %p7457 = pneg %p1024
        $region186: #{gat_mlp_forward.1} parent=179 // pred_check_branch
          %7459 = sbr.rel (%p7457) target = $region188
        $region187: #{gat_mlp_forward.1} parent=179 // pred_region
          _
        $region188: #{gat_mlp_forward.1} parent=179 // pred_fallthru
          _
        // Predicated region
        $region189: #{gat_mlp_forward.1} parent=179 // pred_check
          %p7460 = pneg %p1050
        $region190: #{gat_mlp_forward.1} parent=179 // pred_check_branch
          %7462 = sbr.rel (%p7460) target = $region192
        $region191: #{gat_mlp_forward.1} parent=179 // pred_region
          _
        $region192: #{gat_mlp_forward.1} parent=179 // pred_fallthru
          _
      $region180: #{gat_mlp_forward.1} parent=5 // pred_fallthru
        _
      %p7463 = scmp.le.s32.totalorder 2, %s95
      // Predicated region
      $region193: #{gat_mlp_forward.1} parent=5 // pred_check
        %p7464 = pneg %p7463
      $region194: #{gat_mlp_forward.1} parent=5 // pred_check_branch
        %7466 = sbr.rel (%p7464) target = $region196
      $region195: #{gat_mlp_forward.1} parent=5 // pred_region
        %s7467 = ssub.s32 %s95, 2
        // Predicated region
        $region197: #{gat_mlp_forward.1} parent=195 // pred_check
          %p7468 = pneg %p1004
        $region198: #{gat_mlp_forward.1} parent=195 // pred_check_branch
          %7470 = sbr.rel (%p7468) target = $region200
        $region199: #{gat_mlp_forward.1} parent=195 // pred_region
          %s7471 = sand.u32 %s989, 1
          %s7472 = scalar_lea.sflag [#allocation3], %s7471
          %s7473 = sand.u32 %s989, 1
          %s7474 = smul.addr %s7473, 16
          %s7475 = scalar_lea.vmem [#allocation2], %s7474
          %7476 = dma.done %s7472, 256
        $region200: #{gat_mlp_forward.1} parent=195 // pred_fallthru
          _
        // Predicated region
        $region201: #{gat_mlp_forward.1} parent=195 // pred_check
          %p7477 = pneg %p1030
        $region202: #{gat_mlp_forward.1} parent=195 // pred_check_branch
          %7479 = sbr.rel (%p7477) target = $region204
        $region203: #{gat_mlp_forward.1} parent=195 // pred_region
          %p7480 = scmp.lt.s32.totalorder %s101, 3
          %s7481 = scalar_select %p7480, %s101, 3
          %s7482 = smul.addr %s7481, 2
          %s7483 = smul.addr %s7482, 8
          %s7484 = scalar_lea.vmem %s83, %s7483
        $region204: #{gat_mlp_forward.1} parent=195 // pred_fallthru
          _
        // Predicated region
        $region205: #{gat_mlp_forward.1} parent=195 // pred_check
          %p7485 = pneg %p1056
        $region206: #{gat_mlp_forward.1} parent=195 // pred_check_branch
          %7487 = sbr.rel (%p7485) target = $region208
        $region207: #{gat_mlp_forward.1} parent=195 // pred_region
          %p7488 = scmp.lt.s32.totalorder %s101, 3
          %s7489 = scalar_select %p7488, %s101, 3
          %s7490 = scalar_lea.vmem %s85, %s7489
        $region208: #{gat_mlp_forward.1} parent=195 // pred_fallthru
          _
      $region196: #{gat_mlp_forward.1} parent=5 // pred_fallthru
        _
    $region6: #{gat_mlp_forward.1} parent=1 // loop_footer
      %s99 = sadd.s32 1, %s95
    $region7: #{gat_mlp_forward.1} parent=1 // loop_footer_branch
      %94 = sbr.rel target = $region3
    $region8: #{gat_mlp_forward.1} parent=1 // loop_exit
      _
    %7491 = vsyncpa [#allocation3], 1
    %s7492 = scalar_lea.sflag [#allocation3], 1
    %7493 = vsyncpa %s7492, 1

</llo_original>
